<compile_context>
chip_gen: v7x
topology: tpu7x:2x2x1
jax: 0.10.0
libtpu: 0.0.40
codegen_flags: <defaults>
</compile_context>

<pallas_src>
import numpy as np
import jax
import jax.numpy as jnp
from jax.experimental import pallas as pl
from jax.experimental.pallas import tpu as pltpu

CP = 128          # all stage channels are zero-padded to 128 lanes (lane-dense)
KCP = 9 * CP      # im2col contraction depth per stage

# (cin, cout, stride) per stage — mirrors efficientnet_v2_s.features[:-1]
STAGE_CFG = [
    (4, 8, 2),    # 0  stem
    (8, 8, 1),    # 1
    (8, 16, 2),   # 2  <- pooled
    (16, 24, 1),  # 3  <- pooled
    (24, 32, 2),  # 4  <- pooled
    (32, 40, 1),  # 5  <- pooled
    (40, 64, 1),  # 6  <- pooled
]
N_STAGES = len(STAGE_CFG)
POOL_START = 2
N_POOL = N_STAGES - POOL_START
OUT_ROWS = 8      # N_POOL (=5) padded to a full sublane tile -> unmasked store


def _stage_geometry(h0, w0):
    geo, h, w = [], h0, w0
    for (cin, cout, s) in STAGE_CFG:
        hp, wp = h + 2, w + 2
        ho, wo = (h - 1) // s + 1, (w - 1) // s + 1
        geo.append(dict(h=h, w=w, hp=hp, wp=wp, ho=ho, wo=wo, s=s,
                        cin=cin, cout=cout, rows=hp * wp,
                        rv=hp * wp - 2 * wp - 2))
        h, w = ho, wo
    return geo


def _build_scatter(gk, gk1):
    """[rows_{k+1}, rv_k] 0/1 matrix: places the valid (strided) conv outputs of
    stage k into the interior of stage k+1's zero-padded buffer (borders 0)."""
    P = np.zeros((gk1['rows'], gk['rv']), np.float32)
    for ho in range(gk['ho']):
        for wo in range(gk['wo']):
            src = gk['s'] * (ho * gk['wp'] + wo)
            dst = (1 + ho) * gk1['wp'] + (1 + wo)
            P[dst, src] = 1.0
    return P


def _build_mean(gk):
    """[1, rv_k]: selects the valid output rows of stage k and averages them."""
    M = np.zeros((1, gk['rv']), np.float32)
    inv = 1.0 / (gk['ho'] * gk['wo'])
    for ho in range(gk['ho']):
        for wo in range(gk['wo']):
            M[0, gk['s'] * (ho * gk['wp'] + wo)] = inv
    return M


def _make_kernel(geo):
    n_p = N_STAGES - 1   # scatter matrices (stages 0..5)
    n_m = N_POOL         # mean matrices (stages 2..6)

    def kernel(x_ref, w_ref, b_ref, *refs):
        p_refs = refs[:n_p]
        m_refs = refs[n_p:n_p + n_m]
        o_ref = refs[n_p + n_m]
        pad_refs = refs[n_p + n_m + 1:]   # padded activations of stages 1..6

        def read_x(sh, n):
            return x_ref[0, sh:sh + n, :]

        def make_pad_reader(ref):
            return lambda sh, n: ref[sh:sh + n, :]

        readers = [read_x] + [make_pad_reader(r) for r in pad_refs]

        means = []
        for k, g in enumerate(geo):
            wp, rv = g['wp'], g['rv']
            # im2col in VMEM: 9 statically shifted lane-dense views of the
            # zero-padded activation, concatenated along lanes -> single
            # [rv, 1152] x [1152, 128] bf16 MXU matmul, f32 accumulation.
            # (garbage "wrap" rows are computed but never selected by P_k/M_k)
            taps = []
            for t in range(9):
                kh, kw = divmod(t, 3)
                taps.append(readers[k](kh * wp + kw, rv).astype(jnp.bfloat16))
            a_cat = jnp.concatenate(taps, axis=-1)
            acc = jnp.dot(a_cat, w_ref[k], preferred_element_type=jnp.float32)
            acc = acc + b_ref[k]
            y = acc * jax.nn.sigmoid(acc)          # SiLU, f32 epilogue (EUP)
            if k >= POOL_START:                    # fused per-channel spatial mean
                means.append(jnp.dot(m_refs[k - POOL_START][...], y,
                                     preferred_element_type=jnp.float32))
            if k + 1 < N_STAGES:                   # stride + zero-pad next buffer
                pad_refs[k][...] = jnp.dot(p_refs[k][...], y,
                                           preferred_element_type=jnp.float32)

        # single lane-dense, sublane-full [1, 8, 128] store of all stage means
        o_ref[...] = jnp.concatenate(
            means + [jnp.zeros((OUT_ROWS - N_POOL, CP), jnp.float32)],
            axis=0)[None]

    return kernel


def _pack_params(params, geo):
    w_all, b_all = [], []
    for (w, b), g in zip(params, geo):
        cin, cout = g['cin'], g['cout']
        w9 = w.reshape(9, cin, cout)
        wk = jnp.zeros((9, CP, CP), jnp.float32).at[:, :cin, :cout].set(w9)
        w_all.append(wk.reshape(KCP, CP))          # im2col layout: tap-major
        b_all.append(jnp.zeros((1, CP), jnp.float32).at[0, :cout].set(b))
    return jnp.stack(w_all).astype(jnp.bfloat16), jnp.stack(b_all)


@jax.jit
def efficientnetv2_multilevel_forward(x_nchw, params):
    n, c, h, w = x_nchw.shape
    geo = _stage_geometry(h, w)

    # NCHW -> NHWC, zero-pad spatial (+1 border) and channels (-> 128 lanes),
    # flatten spatial so the kernel sees a lane-dense [rows, 128] slab.
    x = jnp.transpose(x_nchw, (0, 2, 3, 1)).astype(jnp.float32)
    x = jnp.pad(x, ((0, 0), (1, 1), (1, 1), (0, CP - c)))
    x = x.reshape(n, geo[0]['rows'], CP)

    w_all, b_all = _pack_params(params, geo)
    p_mats = [jnp.asarray(_build_scatter(geo[k], geo[k + 1]))
              for k in range(N_STAGES - 1)]
    m_mats = [jnp.asarray(_build_mean(geo[k]))
              for k in range(POOL_START, N_STAGES)]

    # advisory cost estimate for XLA's scheduler
    flops = trans = 0
    for k, g in enumerate(geo):
        flops += 2 * g['rv'] * KCP * CP
        trans += g['rv'] * CP
        if k + 1 < N_STAGES:
            flops += 2 * geo[k + 1]['rows'] * g['rv'] * CP
        if k >= POOL_START:
            flops += 2 * g['rv'] * CP
    flops, trans = n * flops, n * trans
    bytes_accessed = int(x.size * 4 + w_all.size * 2 + b_all.size * 4
                         + sum(p.size for p in p_mats) * 4
                         + sum(m.size for m in m_mats) * 4
                         + n * OUT_ROWS * CP * 4)

    in_specs = (
        [pl.BlockSpec((1, geo[0]['rows'], CP), lambda i: (i, 0, 0)),
         pl.BlockSpec((N_STAGES, KCP, CP), lambda i: (0, 0, 0)),
         pl.BlockSpec((N_STAGES, 1, CP), lambda i: (0, 0, 0))]
        + [pl.BlockSpec(p.shape, lambda i: (0, 0)) for p in p_mats]
        + [pl.BlockSpec(m.shape, lambda i: (0, 0)) for m in m_mats]
    )
    out_specs = pl.BlockSpec((1, OUT_ROWS, CP), lambda i: (i, 0, 0))
    scratch_shapes = [pltpu.VMEM((geo[k]['rows'], CP), jnp.float32)
                      for k in range(1, N_STAGES)]

    means_pad = pl.pallas_call(
        _make_kernel(geo),
        out_shape=jax.ShapeDtypeStruct((n, OUT_ROWS, CP), jnp.float32),
        grid=(n,),
        in_specs=in_specs,
        out_specs=out_specs,
        scratch_shapes=scratch_shapes,
        compiler_params=pltpu.CompilerParams(
            dimension_semantics=("parallel",),
            vmem_limit_bytes=32 * 1024 * 1024),
        cost_estimate=pl.CostEstimate(flops=int(flops),
                                      transcendentals=int(trans),
                                      bytes_accessed=bytes_accessed),
    )(x, w_all, b_all, *p_mats, *m_mats)

    # un-pad channels and concat the stage means (torch: cat(features_mean_list, 1))
    return jnp.concatenate(
        [means_pad[:, j, :geo[POOL_START + j]['cout']] for j in range(N_POOL)],
        axis=1)


def _reference_forward(x_nchw, params):
    """Pure-JAX f32 reference of the same synthetic network (for validation)."""
    x = jnp.transpose(x_nchw, (0, 2, 3, 1)).astype(jnp.float32)  # NHWC
    means = []
    for k, ((w, b), (_, _, s)) in enumerate(zip(params, STAGE_CFG)):
        y = jax.lax.conv_general_dilated(
            x, w, window_strides=(s, s), padding=((1, 1), (1, 1)),
            dimension_numbers=('NHWC', 'HWIO', 'NHWC'))
        y = y + b
        y = y * jax.nn.sigmoid(y)
        if k >= POOL_START:
            means.append(jnp.mean(y, axis=(1, 2)))
        x = y
    return jnp.concatenate(means, axis=1)


def init_params(key):
    params = []
    for i, (cin, cout, _) in enumerate(STAGE_CFG):
        k_w, k_b = jax.random.split(jax.random.fold_in(key, i))
        fan_in = 9 * cin
        w = jax.random.normal(k_w, (3, 3, cin, cout), jnp.float32) / jnp.sqrt(fan_in)
        b = 0.01 * jax.random.normal(k_b, (cout,), jnp.float32)
        params.append((w, b))
    return params


if __name__ == "__main__":
    key = jax.random.PRNGKey(0)
    k_x, k_p = jax.random.split(key)
    x = jax.random.normal(k_x, (2, 4, 16, 16), jnp.float32)  # NCHW, like torch

    params = init_params(k_p)
    out = jax.block_until_ready(efficientnetv2_multilevel_forward(x, params))

    expected_c = sum(c for _, c, _ in STAGE_CFG[POOL_START:])  # 176
    assert out.shape == (2, expected_c), out.shape
    assert out.dtype == jnp.float32
    assert bool(jnp.all(jnp.isfinite(out)))

    # numerical check against the pure-JAX f32 reference (kernel matmuls use
    # bf16 MXU inputs -> loose tolerance)
    ref = jax.block_until_ready(_reference_forward(x, params))
    np.testing.assert_allclose(np.asarray(out), np.asarray(ref),
                               rtol=1e-1, atol=1e-1)
    print("KERNEL_OK")
</pallas_src>

<mosaic_0001>
module attributes {stable_mosaic.version = 11 : i64} {
  func.func @kernel(%arg0: i32, %arg1: memref<1x324x128xf32, #tpu.memory_space<vmem>>, %arg2: memref<7x1152x128xbf16, #tpu.memory_space<vmem>>, %arg3: memref<7x1x128xf32, #tpu.memory_space<vmem>>, %arg4: memref<100x286xf32, #tpu.memory_space<vmem>>, %arg5: memref<100x78xf32, #tpu.memory_space<vmem>>, %arg6: memref<36x78xf32, #tpu.memory_space<vmem>>, %arg7: memref<36x22xf32, #tpu.memory_space<vmem>>, %arg8: memref<16x22xf32, #tpu.memory_space<vmem>>, %arg9: memref<16x6xf32, #tpu.memory_space<vmem>>, %arg10: memref<1x78xf32, #tpu.memory_space<vmem>>, %arg11: memref<1x22xf32, #tpu.memory_space<vmem>>, %arg12: memref<1x22xf32, #tpu.memory_space<vmem>>, %arg13: memref<1x6xf32, #tpu.memory_space<vmem>>, %arg14: memref<1x6xf32, #tpu.memory_space<vmem>>, %arg15: memref<1x8x128xf32, #tpu.memory_space<vmem>>, %arg16: memref<100x128xf32, #tpu.memory_space<vmem>>, %arg17: memref<100x128xf32, #tpu.memory_space<vmem>>, %arg18: memref<36x128xf32, #tpu.memory_space<vmem>>, %arg19: memref<36x128xf32, #tpu.memory_space<vmem>>, %arg20: memref<16x128xf32, #tpu.memory_space<vmem>>, %arg21: memref<16x128xf32, #tpu.memory_space<vmem>>) attributes {dimension_semantics = [#tpu.dimension_semantics<parallel>], iteration_bounds = array<i64: 2>, scalar_prefetch = 0 : i64, scratch_operands = 6 : i64, tpu.core_type = #tpu.core_type<tc>, window_params = [{transform_indices = @transform_0, window_bounds = array<i64: 1, 324, 128>}, {pipeline_mode = #tpu.pipeline_mode<synchronous>, transform_indices = @transform_1, window_bounds = array<i64: 7, 1152, 128>}, {pipeline_mode = #tpu.pipeline_mode<synchronous>, transform_indices = @transform_2, window_bounds = array<i64: 7, 1, 128>}, {pipeline_mode = #tpu.pipeline_mode<synchronous>, transform_indices = @transform_3, window_bounds = array<i64: 100, 286>}, {pipeline_mode = #tpu.pipeline_mode<synchronous>, transform_indices = @transform_4, window_bounds = array<i64: 100, 78>}, {pipeline_mode = #tpu.pipeline_mode<synchronous>, transform_indices = @transform_5, window_bounds = array<i64: 36, 78>}, {pipeline_mode = #tpu.pipeline_mode<synchronous>, transform_indices = @transform_6, window_bounds = array<i64: 36, 22>}, {pipeline_mode = #tpu.pipeline_mode<synchronous>, transform_indices = @transform_7, window_bounds = array<i64: 16, 22>}, {pipeline_mode = #tpu.pipeline_mode<synchronous>, transform_indices = @transform_8, window_bounds = array<i64: 16, 6>}, {pipeline_mode = #tpu.pipeline_mode<synchronous>, transform_indices = @transform_9, window_bounds = array<i64: 1, 78>}, {pipeline_mode = #tpu.pipeline_mode<synchronous>, transform_indices = @transform_10, window_bounds = array<i64: 1, 22>}, {pipeline_mode = #tpu.pipeline_mode<synchronous>, transform_indices = @transform_11, window_bounds = array<i64: 1, 22>}, {pipeline_mode = #tpu.pipeline_mode<synchronous>, transform_indices = @transform_12, window_bounds = array<i64: 1, 6>}, {pipeline_mode = #tpu.pipeline_mode<synchronous>, transform_indices = @transform_13, window_bounds = array<i64: 1, 6>}, {transform_indices = @transform_14, window_bounds = array<i64: 1, 8, 128>}]} {
    %c0 = arith.constant 0 : index
    %c0_0 = arith.constant 0 : index
    %c0_1 = arith.constant 0 : index
    %0 = vector.load %arg1[%c0, %c0_0, %c0_1] : memref<1x324x128xf32, #tpu.memory_space<vmem>>, vector<1x286x128xf32>
    %1 = vector.shape_cast %0 : vector<1x286x128xf32> to vector<286x128xf32>
    %2 = arith.truncf %1 : vector<286x128xf32> to vector<286x128xbf16>
    %c0_2 = arith.constant 0 : index
    %c1 = arith.constant 1 : index
    %c0_3 = arith.constant 0 : index
    %3 = vector.load %arg1[%c0_2, %c1, %c0_3] : memref<1x324x128xf32, #tpu.memory_space<vmem>>, vector<1x286x128xf32>
    %4 = vector.shape_cast %3 : vector<1x286x128xf32> to vector<286x128xf32>
    %5 = arith.truncf %4 : vector<286x128xf32> to vector<286x128xbf16>
    %c0_4 = arith.constant 0 : index
    %c2 = arith.constant 2 : index
    %c0_5 = arith.constant 0 : index
    %6 = vector.load %arg1[%c0_4, %c2, %c0_5] : memref<1x324x128xf32, #tpu.memory_space<vmem>>, vector<1x286x128xf32>
    %7 = vector.shape_cast %6 : vector<1x286x128xf32> to vector<286x128xf32>
    %8 = arith.truncf %7 : vector<286x128xf32> to vector<286x128xbf16>
    %c0_6 = arith.constant 0 : index
    %c18 = arith.constant 18 : index
    %c0_7 = arith.constant 0 : index
    %9 = vector.load %arg1[%c0_6, %c18, %c0_7] : memref<1x324x128xf32, #tpu.memory_space<vmem>>, vector<1x286x128xf32>
    %10 = vector.shape_cast %9 : vector<1x286x128xf32> to vector<286x128xf32>
    %11 = arith.truncf %10 : vector<286x128xf32> to vector<286x128xbf16>
    %c0_8 = arith.constant 0 : index
    %c19 = arith.constant 19 : index
    %c0_9 = arith.constant 0 : index
    %12 = vector.load %arg1[%c0_8, %c19, %c0_9] : memref<1x324x128xf32, #tpu.memory_space<vmem>>, vector<1x286x128xf32>
    %13 = vector.shape_cast %12 : vector<1x286x128xf32> to vector<286x128xf32>
    %14 = arith.truncf %13 : vector<286x128xf32> to vector<286x128xbf16>
    %c0_10 = arith.constant 0 : index
    %c20 = arith.constant 20 : index
    %c0_11 = arith.constant 0 : index
    %15 = vector.load %arg1[%c0_10, %c20, %c0_11] : memref<1x324x128xf32, #tpu.memory_space<vmem>>, vector<1x286x128xf32>
    %16 = vector.shape_cast %15 : vector<1x286x128xf32> to vector<286x128xf32>
    %17 = arith.truncf %16 : vector<286x128xf32> to vector<286x128xbf16>
    %c0_12 = arith.constant 0 : index
    %c36 = arith.constant 36 : index
    %c0_13 = arith.constant 0 : index
    %18 = vector.load %arg1[%c0_12, %c36, %c0_13] : memref<1x324x128xf32, #tpu.memory_space<vmem>>, vector<1x286x128xf32>
    %19 = vector.shape_cast %18 : vector<1x286x128xf32> to vector<286x128xf32>
    %20 = arith.truncf %19 : vector<286x128xf32> to vector<286x128xbf16>
    %c0_14 = arith.constant 0 : index
    %c37 = arith.constant 37 : index
    %c0_15 = arith.constant 0 : index
    %21 = vector.load %arg1[%c0_14, %c37, %c0_15] : memref<1x324x128xf32, #tpu.memory_space<vmem>>, vector<1x286x128xf32>
    %22 = vector.shape_cast %21 : vector<1x286x128xf32> to vector<286x128xf32>
    %23 = arith.truncf %22 : vector<286x128xf32> to vector<286x128xbf16>
    %c0_16 = arith.constant 0 : index
    %c38 = arith.constant 38 : index
    %c0_17 = arith.constant 0 : index
    %24 = vector.load %arg1[%c0_16, %c38, %c0_17] : memref<1x324x128xf32, #tpu.memory_space<vmem>>, vector<1x286x128xf32>
    %25 = vector.shape_cast %24 : vector<1x286x128xf32> to vector<286x128xf32>
    %26 = arith.truncf %25 : vector<286x128xf32> to vector<286x128xbf16>
    %27 = tpu.concatenate %2, %5, %8, %11, %14, %17, %20, %23, %26 in 1 : vector<286x128xbf16>, vector<286x128xbf16>, vector<286x128xbf16>, vector<286x128xbf16>, vector<286x128xbf16>, vector<286x128xbf16>, vector<286x128xbf16>, vector<286x128xbf16>, vector<286x128xbf16> -> vector<286x1152xbf16>
    %c0_18 = arith.constant 0 : index
    %c0_19 = arith.constant 0 : index
    %c0_20 = arith.constant 0 : index
    %28 = vector.load %arg2[%c0_18, %c0_19, %c0_20] : memref<7x1152x128xbf16, #tpu.memory_space<vmem>>, vector<1x1152x128xbf16>
    %29 = vector.shape_cast %28 : vector<1x1152x128xbf16> to vector<1152x128xbf16>
    %cst = arith.constant dense<0.000000e+00> : vector<286x128xf32>
    %30 = tpu.matmul %27, %29, %cst {dimension_numbers = #tpu.dot_dimension_numbers<[1], [0], [0], [1], [0, 0, 1, 1], [], []>} : vector<286x1152xbf16>, vector<1152x128xbf16>, vector<286x128xf32> -> vector<286x128xf32>
    %c0_21 = arith.constant 0 : index
    %c0_22 = arith.constant 0 : index
    %c0_23 = arith.constant 0 : index
    %31 = vector.load %arg3[%c0_21, %c0_22, %c0_23] : memref<7x1x128xf32, #tpu.memory_space<vmem>>, vector<1x1x128xf32>
    %32 = vector.shape_cast %31 : vector<1x1x128xf32> to vector<1x128xf32>
    %33 = vector.broadcast %32 : vector<1x128xf32> to vector<286x128xf32>
    %34 = arith.addf %30, %33 : vector<286x128xf32>
    %35 = arith.negf %34 : vector<286x128xf32>
    %36 = math.exp %35 : vector<286x128xf32>
    %cst_24 = arith.constant 1.000000e+00 : f32
    %37 = vector.broadcast %cst_24 : f32 to vector<286x128xf32>
    %38 = arith.addf %37, %36 : vector<286x128xf32>
    %39 = arith.divf %37, %38 : vector<286x128xf32>
    %40 = arith.mulf %34, %39 : vector<286x128xf32>
    %c0_25 = arith.constant 0 : index
    %c0_26 = arith.constant 0 : index
    %41 = vector.load %arg4[%c0_25, %c0_26] : memref<100x286xf32, #tpu.memory_space<vmem>>, vector<100x286xf32>
    %cst_27 = arith.constant dense<0.000000e+00> : vector<100x128xf32>
    %42 = tpu.matmul %41, %40, %cst_27 {dimension_numbers = #tpu.dot_dimension_numbers<[1], [0], [0], [1], [0, 0, 1, 1], [], []>} : vector<100x286xf32>, vector<286x128xf32>, vector<100x128xf32> -> vector<100x128xf32>
    %c0_28 = arith.constant 0 : index
    %c0_29 = arith.constant 0 : index
    %43 = vector.load %arg16[%c0_28, %c0_29] : memref<100x128xf32, #tpu.memory_space<vmem>>, vector<100x128xf32>
    tpu.vector_store %arg16[%c0_28, %c0_29], %42 {strides = array<i32>} : memref<100x128xf32, #tpu.memory_space<vmem>>, vector<100x128xf32>,
    %c0_30 = arith.constant 0 : index
    %c0_31 = arith.constant 0 : index
    %44 = vector.load %arg16[%c0_30, %c0_31] : memref<100x128xf32, #tpu.memory_space<vmem>>, vector<78x128xf32>
    %45 = arith.truncf %44 : vector<78x128xf32> to vector<78x128xbf16>
    %c1_32 = arith.constant 1 : index
    %c0_33 = arith.constant 0 : index
    %46 = vector.load %arg16[%c1_32, %c0_33] : memref<100x128xf32, #tpu.memory_space<vmem>>, vector<78x128xf32>
    %47 = arith.truncf %46 : vector<78x128xf32> to vector<78x128xbf16>
    %c2_34 = arith.constant 2 : index
    %c0_35 = arith.constant 0 : index
    %48 = vector.load %arg16[%c2_34, %c0_35] : memref<100x128xf32, #tpu.memory_space<vmem>>, vector<78x128xf32>
    %49 = arith.truncf %48 : vector<78x128xf32> to vector<78x128xbf16>
    %c10 = arith.constant 10 : index
    %c0_36 = arith.constant 0 : index
    %50 = vector.load %arg16[%c10, %c0_36] : memref<100x128xf32, #tpu.memory_space<vmem>>, vector<78x128xf32>
    %51 = arith.truncf %50 : vector<78x128xf32> to vector<78x128xbf16>
    %c11 = arith.constant 11 : index
    %c0_37 = arith.constant 0 : index
    %52 = vector.load %arg16[%c11, %c0_37] : memref<100x128xf32, #tpu.memory_space<vmem>>, vector<78x128xf32>
    %53 = arith.truncf %52 : vector<78x128xf32> to vector<78x128xbf16>
    %c12 = arith.constant 12 : index
    %c0_38 = arith.constant 0 : index
    %54 = vector.load %arg16[%c12, %c0_38] : memref<100x128xf32, #tpu.memory_space<vmem>>, vector<78x128xf32>
    %55 = arith.truncf %54 : vector<78x128xf32> to vector<78x128xbf16>
    %c20_39 = arith.constant 20 : index
    %c0_40 = arith.constant 0 : index
    %56 = vector.load %arg16[%c20_39, %c0_40] : memref<100x128xf32, #tpu.memory_space<vmem>>, vector<78x128xf32>
    %57 = arith.truncf %56 : vector<78x128xf32> to vector<78x128xbf16>
    %c21 = arith.constant 21 : index
    %c0_41 = arith.constant 0 : index
    %58 = vector.load %arg16[%c21, %c0_41] : memref<100x128xf32, #tpu.memory_space<vmem>>, vector<78x128xf32>
    %59 = arith.truncf %58 : vector<78x128xf32> to vector<78x128xbf16>
    %c22 = arith.constant 22 : index
    %c0_42 = arith.constant 0 : index
    %60 = vector.load %arg16[%c22, %c0_42] : memref<100x128xf32, #tpu.memory_space<vmem>>, vector<78x128xf32>
    %61 = arith.truncf %60 : vector<78x128xf32> to vector<78x128xbf16>
    %62 = tpu.concatenate %45, %47, %49, %51, %53, %55, %57, %59, %61 in 1 : vector<78x128xbf16>, vector<78x128xbf16>, vector<78x128xbf16>, vector<78x128xbf16>, vector<78x128xbf16>, vector<78x128xbf16>, vector<78x128xbf16>, vector<78x128xbf16>, vector<78x128xbf16> -> vector<78x1152xbf16>
    %c1_43 = arith.constant 1 : index
    %c0_44 = arith.constant 0 : index
    %c0_45 = arith.constant 0 : index
    %63 = vector.load %arg2[%c1_43, %c0_44, %c0_45] : memref<7x1152x128xbf16, #tpu.memory_space<vmem>>, vector<1x1152x128xbf16>
    %64 = vector.shape_cast %63 : vector<1x1152x128xbf16> to vector<1152x128xbf16>
    %cst_46 = arith.constant dense<0.000000e+00> : vector<78x128xf32>
    %65 = tpu.matmul %62, %64, %cst_46 {dimension_numbers = #tpu.dot_dimension_numbers<[1], [0], [0], [1], [0, 0, 1, 1], [], []>} : vector<78x1152xbf16>, vector<1152x128xbf16>, vector<78x128xf32> -> vector<78x128xf32>
    %c1_47 = arith.constant 1 : index
    %c0_48 = arith.constant 0 : index
    %c0_49 = arith.constant 0 : index
    %66 = vector.load %arg3[%c1_47, %c0_48, %c0_49] : memref<7x1x128xf32, #tpu.memory_space<vmem>>, vector<1x1x128xf32>
    %67 = vector.shape_cast %66 : vector<1x1x128xf32> to vector<1x128xf32>
    %68 = vector.broadcast %67 : vector<1x128xf32> to vector<78x128xf32>
    %69 = arith.addf %65, %68 : vector<78x128xf32>
    %70 = arith.negf %69 : vector<78x128xf32>
    %71 = math.exp %70 : vector<78x128xf32>
    %cst_50 = arith.constant 1.000000e+00 : f32
    %72 = vector.broadcast %cst_50 : f32 to vector<78x128xf32>
    %73 = arith.addf %72, %71 : vector<78x128xf32>
    %74 = arith.divf %72, %73 : vector<78x128xf32>
    %75 = arith.mulf %69, %74 : vector<78x128xf32>
    %c0_51 = arith.constant 0 : index
    %c0_52 = arith.constant 0 : index
    %76 = vector.load %arg5[%c0_51, %c0_52] : memref<100x78xf32, #tpu.memory_space<vmem>>, vector<100x78xf32>
    %cst_53 = arith.constant dense<0.000000e+00> : vector<100x128xf32>
    %77 = tpu.matmul %76, %75, %cst_53 {dimension_numbers = #tpu.dot_dimension_numbers<[1], [0], [0], [1], [0, 0, 1, 1], [], []>} : vector<100x78xf32>, vector<78x128xf32>, vector<100x128xf32> -> vector<100x128xf32>
    %c0_54 = arith.constant 0 : index
    %c0_55 = arith.constant 0 : index
    %78 = vector.load %arg17[%c0_54, %c0_55] : memref<100x128xf32, #tpu.memory_space<vmem>>, vector<100x128xf32>
    tpu.vector_store %arg17[%c0_54, %c0_55], %77 {strides = array<i32>} : memref<100x128xf32, #tpu.memory_space<vmem>>, vector<100x128xf32>,
    %c0_56 = arith.constant 0 : index
    %c0_57 = arith.constant 0 : index
    %79 = vector.load %arg17[%c0_56, %c0_57] : memref<100x128xf32, #tpu.memory_space<vmem>>, vector<78x128xf32>
    %80 = arith.truncf %79 : vector<78x128xf32> to vector<78x128xbf16>
    %c1_58 = arith.constant 1 : index
    %c0_59 = arith.constant 0 : index
    %81 = vector.load %arg17[%c1_58, %c0_59] : memref<100x128xf32, #tpu.memory_space<vmem>>, vector<78x128xf32>
    %82 = arith.truncf %81 : vector<78x128xf32> to vector<78x128xbf16>
    %c2_60 = arith.constant 2 : index
    %c0_61 = arith.constant 0 : index
    %83 = vector.load %arg17[%c2_60, %c0_61] : memref<100x128xf32, #tpu.memory_space<vmem>>, vector<78x128xf32>
    %84 = arith.truncf %83 : vector<78x128xf32> to vector<78x128xbf16>
    %c10_62 = arith.constant 10 : index
    %c0_63 = arith.constant 0 : index
    %85 = vector.load %arg17[%c10_62, %c0_63] : memref<100x128xf32, #tpu.memory_space<vmem>>, vector<78x128xf32>
    %86 = arith.truncf %85 : vector<78x128xf32> to vector<78x128xbf16>
    %c11_64 = arith.constant 11 : index
    %c0_65 = arith.constant 0 : index
    %87 = vector.load %arg17[%c11_64, %c0_65] : memref<100x128xf32, #tpu.memory_space<vmem>>, vector<78x128xf32>
    %88 = arith.truncf %87 : vector<78x128xf32> to vector<78x128xbf16>
    %c12_66 = arith.constant 12 : index
    %c0_67 = arith.constant 0 : index
    %89 = vector.load %arg17[%c12_66, %c0_67] : memref<100x128xf32, #tpu.memory_space<vmem>>, vector<78x128xf32>
    %90 = arith.truncf %89 : vector<78x128xf32> to vector<78x128xbf16>
    %c20_68 = arith.constant 20 : index
    %c0_69 = arith.constant 0 : index
    %91 = vector.load %arg17[%c20_68, %c0_69] : memref<100x128xf32, #tpu.memory_space<vmem>>, vector<78x128xf32>
    %92 = arith.truncf %91 : vector<78x128xf32> to vector<78x128xbf16>
    %c21_70 = arith.constant 21 : index
    %c0_71 = arith.constant 0 : index
    %93 = vector.load %arg17[%c21_70, %c0_71] : memref<100x128xf32, #tpu.memory_space<vmem>>, vector<78x128xf32>
    %94 = arith.truncf %93 : vector<78x128xf32> to vector<78x128xbf16>
    %c22_72 = arith.constant 22 : index
    %c0_73 = arith.constant 0 : index
    %95 = vector.load %arg17[%c22_72, %c0_73] : memref<100x128xf32, #tpu.memory_space<vmem>>, vector<78x128xf32>
    %96 = arith.truncf %95 : vector<78x128xf32> to vector<78x128xbf16>
    %97 = tpu.concatenate %80, %82, %84, %86, %88, %90, %92, %94, %96 in 1 : vector<78x128xbf16>, vector<78x128xbf16>, vector<78x128xbf16>, vector<78x128xbf16>, vector<78x128xbf16>, vector<78x128xbf16>, vector<78x128xbf16>, vector<78x128xbf16>, vector<78x128xbf16> -> vector<78x1152xbf16>
    %c2_74 = arith.constant 2 : index
    %c0_75 = arith.constant 0 : index
    %c0_76 = arith.constant 0 : index
    %98 = vector.load %arg2[%c2_74, %c0_75, %c0_76] : memref<7x1152x128xbf16, #tpu.memory_space<vmem>>, vector<1x1152x128xbf16>
    %99 = vector.shape_cast %98 : vector<1x1152x128xbf16> to vector<1152x128xbf16>
    %cst_77 = arith.constant dense<0.000000e+00> : vector<78x128xf32>
    %100 = tpu.matmul %97, %99, %cst_77 {dimension_numbers = #tpu.dot_dimension_numbers<[1], [0], [0], [1], [0, 0, 1, 1], [], []>} : vector<78x1152xbf16>, vector<1152x128xbf16>, vector<78x128xf32> -> vector<78x128xf32>
    %c2_78 = arith.constant 2 : index
    %c0_79 = arith.constant 0 : index
    %c0_80 = arith.constant 0 : index
    %101 = vector.load %arg3[%c2_78, %c0_79, %c0_80] : memref<7x1x128xf32, #tpu.memory_space<vmem>>, vector<1x1x128xf32>
    %102 = vector.shape_cast %101 : vector<1x1x128xf32> to vector<1x128xf32>
    %103 = vector.broadcast %102 : vector<1x128xf32> to vector<78x128xf32>
    %104 = arith.addf %100, %103 : vector<78x128xf32>
    %105 = arith.negf %104 : vector<78x128xf32>
    %106 = math.exp %105 : vector<78x128xf32>
    %cst_81 = arith.constant 1.000000e+00 : f32
    %107 = vector.broadcast %cst_81 : f32 to vector<78x128xf32>
    %108 = arith.addf %107, %106 : vector<78x128xf32>
    %109 = arith.divf %107, %108 : vector<78x128xf32>
    %110 = arith.mulf %104, %109 : vector<78x128xf32>
    %c0_82 = arith.constant 0 : index
    %c0_83 = arith.constant 0 : index
    %111 = vector.load %arg10[%c0_82, %c0_83] : memref<1x78xf32, #tpu.memory_space<vmem>>, vector<1x78xf32>
    %cst_84 = arith.constant dense<0.000000e+00> : vector<1x128xf32>
    %112 = tpu.matmul %111, %110, %cst_84 {dimension_numbers = #tpu.dot_dimension_numbers<[1], [0], [0], [1], [0, 0, 1, 1], [], []>} : vector<1x78xf32>, vector<78x128xf32>, vector<1x128xf32> -> vector<1x128xf32>
    %c0_85 = arith.constant 0 : index
    %c0_86 = arith.constant 0 : index
    %113 = vector.load %arg6[%c0_85, %c0_86] : memref<36x78xf32, #tpu.memory_space<vmem>>, vector<36x78xf32>
    %cst_87 = arith.constant dense<0.000000e+00> : vector<36x128xf32>
    %114 = tpu.matmul %113, %110, %cst_87 {dimension_numbers = #tpu.dot_dimension_numbers<[1], [0], [0], [1], [0, 0, 1, 1], [], []>} : vector<36x78xf32>, vector<78x128xf32>, vector<36x128xf32> -> vector<36x128xf32>
    %c0_88 = arith.constant 0 : index
    %c0_89 = arith.constant 0 : index
    %115 = vector.load %arg18[%c0_88, %c0_89] : memref<36x128xf32, #tpu.memory_space<vmem>>, vector<36x128xf32>
    tpu.vector_store %arg18[%c0_88, %c0_89], %114 {strides = array<i32>} : memref<36x128xf32, #tpu.memory_space<vmem>>, vector<36x128xf32>,
    %c0_90 = arith.constant 0 : index
    %c0_91 = arith.constant 0 : index
    %116 = vector.load %arg18[%c0_90, %c0_91] : memref<36x128xf32, #tpu.memory_space<vmem>>, vector<22x128xf32>
    %117 = arith.truncf %116 : vector<22x128xf32> to vector<22x128xbf16>
    %c1_92 = arith.constant 1 : index
    %c0_93 = arith.constant 0 : index
    %118 = vector.load %arg18[%c1_92, %c0_93] : memref<36x128xf32, #tpu.memory_space<vmem>>, vector<22x128xf32>
    %119 = arith.truncf %118 : vector<22x128xf32> to vector<22x128xbf16>
    %c2_94 = arith.constant 2 : index
    %c0_95 = arith.constant 0 : index
    %120 = vector.load %arg18[%c2_94, %c0_95] : memref<36x128xf32, #tpu.memory_space<vmem>>, vector<22x128xf32>
    %121 = arith.truncf %120 : vector<22x128xf32> to vector<22x128xbf16>
    %c6 = arith.constant 6 : index
    %c0_96 = arith.constant 0 : index
    %122 = vector.load %arg18[%c6, %c0_96] : memref<36x128xf32, #tpu.memory_space<vmem>>, vector<22x128xf32>
    %123 = arith.truncf %122 : vector<22x128xf32> to vector<22x128xbf16>
    %c7 = arith.constant 7 : index
    %c0_97 = arith.constant 0 : index
    %124 = vector.load %arg18[%c7, %c0_97] : memref<36x128xf32, #tpu.memory_space<vmem>>, vector<22x128xf32>
    %125 = arith.truncf %124 : vector<22x128xf32> to vector<22x128xbf16>
    %c8 = arith.constant 8 : index
    %c0_98 = arith.constant 0 : index
    %126 = vector.load %arg18[%c8, %c0_98] : memref<36x128xf32, #tpu.memory_space<vmem>>, vector<22x128xf32>
    %127 = arith.truncf %126 : vector<22x128xf32> to vector<22x128xbf16>
    %c12_99 = arith.constant 12 : index
    %c0_100 = arith.constant 0 : index
    %128 = vector.load %arg18[%c12_99, %c0_100] : memref<36x128xf32, #tpu.memory_space<vmem>>, vector<22x128xf32>
    %129 = arith.truncf %128 : vector<22x128xf32> to vector<22x128xbf16>
    %c13 = arith.constant 13 : index
    %c0_101 = arith.constant 0 : index
    %130 = vector.load %arg18[%c13, %c0_101] : memref<36x128xf32, #tpu.memory_space<vmem>>, vector<22x128xf32>
    %131 = arith.truncf %130 : vector<22x128xf32> to vector<22x128xbf16>
    %c14 = arith.constant 14 : index
    %c0_102 = arith.constant 0 : index
    %132 = vector.load %arg18[%c14, %c0_102] : memref<36x128xf32, #tpu.memory_space<vmem>>, vector<22x128xf32>
    %133 = arith.truncf %132 : vector<22x128xf32> to vector<22x128xbf16>
    %134 = tpu.concatenate %117, %119, %121, %123, %125, %127, %129, %131, %133 in 1 : vector<22x128xbf16>, vector<22x128xbf16>, vector<22x128xbf16>, vector<22x128xbf16>, vector<22x128xbf16>, vector<22x128xbf16>, vector<22x128xbf16>, vector<22x128xbf16>, vector<22x128xbf16> -> vector<22x1152xbf16>
    %c3 = arith.constant 3 : index
    %c0_103 = arith.constant 0 : index
    %c0_104 = arith.constant 0 : index
    %135 = vector.load %arg2[%c3, %c0_103, %c0_104] : memref<7x1152x128xbf16, #tpu.memory_space<vmem>>, vector<1x1152x128xbf16>
    %136 = vector.shape_cast %135 : vector<1x1152x128xbf16> to vector<1152x128xbf16>
    %cst_105 = arith.constant dense<0.000000e+00> : vector<22x128xf32>
    %137 = tpu.matmul %134, %136, %cst_105 {dimension_numbers = #tpu.dot_dimension_numbers<[1], [0], [0], [1], [0, 0, 1, 1], [], []>} : vector<22x1152xbf16>, vector<1152x128xbf16>, vector<22x128xf32> -> vector<22x128xf32>
    %c3_106 = arith.constant 3 : index
    %c0_107 = arith.constant 0 : index
    %c0_108 = arith.constant 0 : index
    %138 = vector.load %arg3[%c3_106, %c0_107, %c0_108] : memref<7x1x128xf32, #tpu.memory_space<vmem>>, vector<1x1x128xf32>
    %139 = vector.shape_cast %138 : vector<1x1x128xf32> to vector<1x128xf32>
    %140 = vector.broadcast %139 : vector<1x128xf32> to vector<22x128xf32>
    %141 = arith.addf %137, %140 : vector<22x128xf32>
    %142 = arith.negf %141 : vector<22x128xf32>
    %143 = math.exp %142 : vector<22x128xf32>
    %cst_109 = arith.constant 1.000000e+00 : f32
    %144 = vector.broadcast %cst_109 : f32 to vector<22x128xf32>
    %145 = arith.addf %144, %143 : vector<22x128xf32>
    %146 = arith.divf %144, %145 : vector<22x128xf32>
    %147 = arith.mulf %141, %146 : vector<22x128xf32>
    %c0_110 = arith.constant 0 : index
    %c0_111 = arith.constant 0 : index
    %148 = vector.load %arg11[%c0_110, %c0_111] : memref<1x22xf32, #tpu.memory_space<vmem>>, vector<1x22xf32>
    %cst_112 = arith.constant dense<0.000000e+00> : vector<1x128xf32>
    %149 = tpu.matmul %148, %147, %cst_112 {dimension_numbers = #tpu.dot_dimension_numbers<[1], [0], [0], [1], [0, 0, 1, 1], [], []>} : vector<1x22xf32>, vector<22x128xf32>, vector<1x128xf32> -> vector<1x128xf32>
    %c0_113 = arith.constant 0 : index
    %c0_114 = arith.constant 0 : index
    %150 = vector.load %arg7[%c0_113, %c0_114] : memref<36x22xf32, #tpu.memory_space<vmem>>, vector<36x22xf32>
    %cst_115 = arith.constant dense<0.000000e+00> : vector<36x128xf32>
    %151 = tpu.matmul %150, %147, %cst_115 {dimension_numbers = #tpu.dot_dimension_numbers<[1], [0], [0], [1], [0, 0, 1, 1], [], []>} : vector<36x22xf32>, vector<22x128xf32>, vector<36x128xf32> -> vector<36x128xf32>
    %c0_116 = arith.constant 0 : index
    %c0_117 = arith.constant 0 : index
    %152 = vector.load %arg19[%c0_116, %c0_117] : memref<36x128xf32, #tpu.memory_space<vmem>>, vector<36x128xf32>
    tpu.vector_store %arg19[%c0_116, %c0_117], %151 {strides = array<i32>} : memref<36x128xf32, #tpu.memory_space<vmem>>, vector<36x128xf32>,
    %c0_118 = arith.constant 0 : index
    %c0_119 = arith.constant 0 : index
    %153 = vector.load %arg19[%c0_118, %c0_119] : memref<36x128xf32, #tpu.memory_space<vmem>>, vector<22x128xf32>
    %154 = arith.truncf %153 : vector<22x128xf32> to vector<22x128xbf16>
    %c1_120 = arith.constant 1 : index
    %c0_121 = arith.constant 0 : index
    %155 = vector.load %arg19[%c1_120, %c0_121] : memref<36x128xf32, #tpu.memory_space<vmem>>, vector<22x128xf32>
    %156 = arith.truncf %155 : vector<22x128xf32> to vector<22x128xbf16>
    %c2_122 = arith.constant 2 : index
    %c0_123 = arith.constant 0 : index
    %157 = vector.load %arg19[%c2_122, %c0_123] : memref<36x128xf32, #tpu.memory_space<vmem>>, vector<22x128xf32>
    %158 = arith.truncf %157 : vector<22x128xf32> to vector<22x128xbf16>
    %c6_124 = arith.constant 6 : index
    %c0_125 = arith.constant 0 : index
    %159 = vector.load %arg19[%c6_124, %c0_125] : memref<36x128xf32, #tpu.memory_space<vmem>>, vector<22x128xf32>
    %160 = arith.truncf %159 : vector<22x128xf32> to vector<22x128xbf16>
    %c7_126 = arith.constant 7 : index
    %c0_127 = arith.constant 0 : index
    %161 = vector.load %arg19[%c7_126, %c0_127] : memref<36x128xf32, #tpu.memory_space<vmem>>, vector<22x128xf32>
    %162 = arith.truncf %161 : vector<22x128xf32> to vector<22x128xbf16>
    %c8_128 = arith.constant 8 : index
    %c0_129 = arith.constant 0 : index
    %163 = vector.load %arg19[%c8_128, %c0_129] : memref<36x128xf32, #tpu.memory_space<vmem>>, vector<22x128xf32>
    %164 = arith.truncf %163 : vector<22x128xf32> to vector<22x128xbf16>
    %c12_130 = arith.constant 12 : index
    %c0_131 = arith.constant 0 : index
    %165 = vector.load %arg19[%c12_130, %c0_131] : memref<36x128xf32, #tpu.memory_space<vmem>>, vector<22x128xf32>
    %166 = arith.truncf %165 : vector<22x128xf32> to vector<22x128xbf16>
    %c13_132 = arith.constant 13 : index
    %c0_133 = arith.constant 0 : index
    %167 = vector.load %arg19[%c13_132, %c0_133] : memref<36x128xf32, #tpu.memory_space<vmem>>, vector<22x128xf32>
    %168 = arith.truncf %167 : vector<22x128xf32> to vector<22x128xbf16>
    %c14_134 = arith.constant 14 : index
    %c0_135 = arith.constant 0 : index
    %169 = vector.load %arg19[%c14_134, %c0_135] : memref<36x128xf32, #tpu.memory_space<vmem>>, vector<22x128xf32>
    %170 = arith.truncf %169 : vector<22x128xf32> to vector<22x128xbf16>
    %171 = tpu.concatenate %154, %156, %158, %160, %162, %164, %166, %168, %170 in 1 : vector<22x128xbf16>, vector<22x128xbf16>, vector<22x128xbf16>, vector<22x128xbf16>, vector<22x128xbf16>, vector<22x128xbf16>, vector<22x128xbf16>, vector<22x128xbf16>, vector<22x128xbf16> -> vector<22x1152xbf16>
    %c4 = arith.constant 4 : index
    %c0_136 = arith.constant 0 : index
    %c0_137 = arith.constant 0 : index
    %172 = vector.load %arg2[%c4, %c0_136, %c0_137] : memref<7x1152x128xbf16, #tpu.memory_space<vmem>>, vector<1x1152x128xbf16>
    %173 = vector.shape_cast %172 : vector<1x1152x128xbf16> to vector<1152x128xbf16>
    %cst_138 = arith.constant dense<0.000000e+00> : vector<22x128xf32>
    %174 = tpu.matmul %171, %173, %cst_138 {dimension_numbers = #tpu.dot_dimension_numbers<[1], [0], [0], [1], [0, 0, 1, 1], [], []>} : vector<22x1152xbf16>, vector<1152x128xbf16>, vector<22x128xf32> -> vector<22x128xf32>
    %c4_139 = arith.constant 4 : index
    %c0_140 = arith.constant 0 : index
    %c0_141 = arith.constant 0 : index
    %175 = vector.load %arg3[%c4_139, %c0_140, %c0_141] : memref<7x1x128xf32, #tpu.memory_space<vmem>>, vector<1x1x128xf32>
    %176 = vector.shape_cast %175 : vector<1x1x128xf32> to vector<1x128xf32>
    %177 = vector.broadcast %176 : vector<1x128xf32> to vector<22x128xf32>
    %178 = arith.addf %174, %177 : vector<22x128xf32>
    %179 = arith.negf %178 : vector<22x128xf32>
    %180 = math.exp %179 : vector<22x128xf32>
    %cst_142 = arith.constant 1.000000e+00 : f32
    %181 = vector.broadcast %cst_142 : f32 to vector<22x128xf32>
    %182 = arith.addf %181, %180 : vector<22x128xf32>
    %183 = arith.divf %181, %182 : vector<22x128xf32>
    %184 = arith.mulf %178, %183 : vector<22x128xf32>
    %c0_143 = arith.constant 0 : index
    %c0_144 = arith.constant 0 : index
    %185 = vector.load %arg12[%c0_143, %c0_144] : memref<1x22xf32, #tpu.memory_space<vmem>>, vector<1x22xf32>
    %cst_145 = arith.constant dense<0.000000e+00> : vector<1x128xf32>
    %186 = tpu.matmul %185, %184, %cst_145 {dimension_numbers = #tpu.dot_dimension_numbers<[1], [0], [0], [1], [0, 0, 1, 1], [], []>} : vector<1x22xf32>, vector<22x128xf32>, vector<1x128xf32> -> vector<1x128xf32>
    %c0_146 = arith.constant 0 : index
    %c0_147 = arith.constant 0 : index
    %187 = vector.load %arg8[%c0_146, %c0_147] : memref<16x22xf32, #tpu.memory_space<vmem>>, vector<16x22xf32>
    %cst_148 = arith.constant dense<0.000000e+00> : vector<16x128xf32>
    %188 = tpu.matmul %187, %184, %cst_148 {dimension_numbers = #tpu.dot_dimension_numbers<[1], [0], [0], [1], [0, 0, 1, 1], [], []>} : vector<16x22xf32>, vector<22x128xf32>, vector<16x128xf32> -> vector<16x128xf32>
    %c0_149 = arith.constant 0 : index
    %c0_150 = arith.constant 0 : index
    %189 = vector.load %arg20[%c0_149, %c0_150] : memref<16x128xf32, #tpu.memory_space<vmem>>, vector<16x128xf32>
    tpu.vector_store %arg20[%c0_149, %c0_150], %188 {strides = array<i32>} : memref<16x128xf32, #tpu.memory_space<vmem>>, vector<16x128xf32>,
    %c0_151 = arith.constant 0 : index
    %c0_152 = arith.constant 0 : index
    %190 = vector.load %arg20[%c0_151, %c0_152] : memref<16x128xf32, #tpu.memory_space<vmem>>, vector<6x128xf32>
    %191 = arith.truncf %190 : vector<6x128xf32> to vector<6x128xbf16>
    %c1_153 = arith.constant 1 : index
    %c0_154 = arith.constant 0 : index
    %192 = vector.load %arg20[%c1_153, %c0_154] : memref<16x128xf32, #tpu.memory_space<vmem>>, vector<6x128xf32>
    %193 = arith.truncf %192 : vector<6x128xf32> to vector<6x128xbf16>
    %c2_155 = arith.constant 2 : index
    %c0_156 = arith.constant 0 : index
    %194 = vector.load %arg20[%c2_155, %c0_156] : memref<16x128xf32, #tpu.memory_space<vmem>>, vector<6x128xf32>
    %195 = arith.truncf %194 : vector<6x128xf32> to vector<6x128xbf16>
    %c4_157 = arith.constant 4 : index
    %c0_158 = arith.constant 0 : index
    %196 = vector.load %arg20[%c4_157, %c0_158] : memref<16x128xf32, #tpu.memory_space<vmem>>, vector<6x128xf32>
    %197 = arith.truncf %196 : vector<6x128xf32> to vector<6x128xbf16>
    %c5 = arith.constant 5 : index
    %c0_159 = arith.constant 0 : index
    %198 = vector.load %arg20[%c5, %c0_159] : memref<16x128xf32, #tpu.memory_space<vmem>>, vector<6x128xf32>
    %199 = arith.truncf %198 : vector<6x128xf32> to vector<6x128xbf16>
    %c6_160 = arith.constant 6 : index
    %c0_161 = arith.constant 0 : index
    %200 = vector.load %arg20[%c6_160, %c0_161] : memref<16x128xf32, #tpu.memory_space<vmem>>, vector<6x128xf32>
    %201 = arith.truncf %200 : vector<6x128xf32> to vector<6x128xbf16>
    %c8_162 = arith.constant 8 : index
    %c0_163 = arith.constant 0 : index
    %202 = vector.load %arg20[%c8_162, %c0_163] : memref<16x128xf32, #tpu.memory_space<vmem>>, vector<6x128xf32>
    %203 = arith.truncf %202 : vector<6x128xf32> to vector<6x128xbf16>
    %c9 = arith.constant 9 : index
    %c0_164 = arith.constant 0 : index
    %204 = vector.load %arg20[%c9, %c0_164] : memref<16x128xf32, #tpu.memory_space<vmem>>, vector<6x128xf32>
    %205 = arith.truncf %204 : vector<6x128xf32> to vector<6x128xbf16>
    %c10_165 = arith.constant 10 : index
    %c0_166 = arith.constant 0 : index
    %206 = vector.load %arg20[%c10_165, %c0_166] : memref<16x128xf32, #tpu.memory_space<vmem>>, vector<6x128xf32>
    %207 = arith.truncf %206 : vector<6x128xf32> to vector<6x128xbf16>
    %208 = tpu.concatenate %191, %193, %195, %197, %199, %201, %203, %205, %207 in 1 : vector<6x128xbf16>, vector<6x128xbf16>, vector<6x128xbf16>, vector<6x128xbf16>, vector<6x128xbf16>, vector<6x128xbf16>, vector<6x128xbf16>, vector<6x128xbf16>, vector<6x128xbf16> -> vector<6x1152xbf16>
    %c5_167 = arith.constant 5 : index
    %c0_168 = arith.constant 0 : index
    %c0_169 = arith.constant 0 : index
    %209 = vector.load %arg2[%c5_167, %c0_168, %c0_169] : memref<7x1152x128xbf16, #tpu.memory_space<vmem>>, vector<1x1152x128xbf16>
    %210 = vector.shape_cast %209 : vector<1x1152x128xbf16> to vector<1152x128xbf16>
    %cst_170 = arith.constant dense<0.000000e+00> : vector<6x128xf32>
    %211 = tpu.matmul %208, %210, %cst_170 {dimension_numbers = #tpu.dot_dimension_numbers<[1], [0], [0], [1], [0, 0, 1, 1], [], []>} : vector<6x1152xbf16>, vector<1152x128xbf16>, vector<6x128xf32> -> vector<6x128xf32>
    %c5_171 = arith.constant 5 : index
    %c0_172 = arith.constant 0 : index
    %c0_173 = arith.constant 0 : index
    %212 = vector.load %arg3[%c5_171, %c0_172, %c0_173] : memref<7x1x128xf32, #tpu.memory_space<vmem>>, vector<1x1x128xf32>
    %213 = vector.shape_cast %212 : vector<1x1x128xf32> to vector<1x128xf32>
    %214 = vector.broadcast %213 : vector<1x128xf32> to vector<6x128xf32>
    %215 = arith.addf %211, %214 : vector<6x128xf32>
    %216 = arith.negf %215 : vector<6x128xf32>
    %217 = math.exp %216 : vector<6x128xf32>
    %cst_174 = arith.constant 1.000000e+00 : f32
    %218 = vector.broadcast %cst_174 : f32 to vector<6x128xf32>
    %219 = arith.addf %218, %217 : vector<6x128xf32>
    %220 = arith.divf %218, %219 : vector<6x128xf32>
    %221 = arith.mulf %215, %220 : vector<6x128xf32>
    %c0_175 = arith.constant 0 : index
    %c0_176 = arith.constant 0 : index
    %222 = vector.load %arg13[%c0_175, %c0_176] : memref<1x6xf32, #tpu.memory_space<vmem>>, vector<1x6xf32>
    %cst_177 = arith.constant dense<0.000000e+00> : vector<1x128xf32>
    %223 = tpu.matmul %222, %221, %cst_177 {dimension_numbers = #tpu.dot_dimension_numbers<[1], [0], [0], [1], [0, 0, 1, 1], [], []>} : vector<1x6xf32>, vector<6x128xf32>, vector<1x128xf32> -> vector<1x128xf32>
    %c0_178 = arith.constant 0 : index
    %c0_179 = arith.constant 0 : index
    %224 = vector.load %arg9[%c0_178, %c0_179] : memref<16x6xf32, #tpu.memory_space<vmem>>, vector<16x6xf32>
    %cst_180 = arith.constant dense<0.000000e+00> : vector<16x128xf32>
    %225 = tpu.matmul %224, %221, %cst_180 {dimension_numbers = #tpu.dot_dimension_numbers<[1], [0], [0], [1], [0, 0, 1, 1], [], []>} : vector<16x6xf32>, vector<6x128xf32>, vector<16x128xf32> -> vector<16x128xf32>
    %c0_181 = arith.constant 0 : index
    %c0_182 = arith.constant 0 : index
    %226 = vector.load %arg21[%c0_181, %c0_182] : memref<16x128xf32, #tpu.memory_space<vmem>>, vector<16x128xf32>
    tpu.vector_store %arg21[%c0_181, %c0_182], %225 {strides = array<i32>} : memref<16x128xf32, #tpu.memory_space<vmem>>, vector<16x128xf32>,
    %c0_183 = arith.constant 0 : index
    %c0_184 = arith.constant 0 : index
    %227 = vector.load %arg21[%c0_183, %c0_184] : memref<16x128xf32, #tpu.memory_space<vmem>>, vector<6x128xf32>
    %228 = arith.truncf %227 : vector<6x128xf32> to vector<6x128xbf16>
    %c1_185 = arith.constant 1 : index
    %c0_186 = arith.constant 0 : index
    %229 = vector.load %arg21[%c1_185, %c0_186] : memref<16x128xf32, #tpu.memory_space<vmem>>, vector<6x128xf32>
    %230 = arith.truncf %229 : vector<6x128xf32> to vector<6x128xbf16>
    %c2_187 = arith.constant 2 : index
    %c0_188 = arith.constant 0 : index
    %231 = vector.load %arg21[%c2_187, %c0_188] : memref<16x128xf32, #tpu.memory_space<vmem>>, vector<6x128xf32>
    %232 = arith.truncf %231 : vector<6x128xf32> to vector<6x128xbf16>
    %c4_189 = arith.constant 4 : index
    %c0_190 = arith.constant 0 : index
    %233 = vector.load %arg21[%c4_189, %c0_190] : memref<16x128xf32, #tpu.memory_space<vmem>>, vector<6x128xf32>
    %234 = arith.truncf %233 : vector<6x128xf32> to vector<6x128xbf16>
    %c5_191 = arith.constant 5 : index
    %c0_192 = arith.constant 0 : index
    %235 = vector.load %arg21[%c5_191, %c0_192] : memref<16x128xf32, #tpu.memory_space<vmem>>, vector<6x128xf32>
    %236 = arith.truncf %235 : vector<6x128xf32> to vector<6x128xbf16>
    %c6_193 = arith.constant 6 : index
    %c0_194 = arith.constant 0 : index
    %237 = vector.load %arg21[%c6_193, %c0_194] : memref<16x128xf32, #tpu.memory_space<vmem>>, vector<6x128xf32>
    %238 = arith.truncf %237 : vector<6x128xf32> to vector<6x128xbf16>
    %c8_195 = arith.constant 8 : index
    %c0_196 = arith.constant 0 : index
    %239 = vector.load %arg21[%c8_195, %c0_196] : memref<16x128xf32, #tpu.memory_space<vmem>>, vector<6x128xf32>
    %240 = arith.truncf %239 : vector<6x128xf32> to vector<6x128xbf16>
    %c9_197 = arith.constant 9 : index
    %c0_198 = arith.constant 0 : index
    %241 = vector.load %arg21[%c9_197, %c0_198] : memref<16x128xf32, #tpu.memory_space<vmem>>, vector<6x128xf32>
    %242 = arith.truncf %241 : vector<6x128xf32> to vector<6x128xbf16>
    %c10_199 = arith.constant 10 : index
    %c0_200 = arith.constant 0 : index
    %243 = vector.load %arg21[%c10_199, %c0_200] : memref<16x128xf32, #tpu.memory_space<vmem>>, vector<6x128xf32>
    %244 = arith.truncf %243 : vector<6x128xf32> to vector<6x128xbf16>
    %245 = tpu.concatenate %228, %230, %232, %234, %236, %238, %240, %242, %244 in 1 : vector<6x128xbf16>, vector<6x128xbf16>, vector<6x128xbf16>, vector<6x128xbf16>, vector<6x128xbf16>, vector<6x128xbf16>, vector<6x128xbf16>, vector<6x128xbf16>, vector<6x128xbf16> -> vector<6x1152xbf16>
    %c6_201 = arith.constant 6 : index
    %c0_202 = arith.constant 0 : index
    %c0_203 = arith.constant 0 : index
    %246 = vector.load %arg2[%c6_201, %c0_202, %c0_203] : memref<7x1152x128xbf16, #tpu.memory_space<vmem>>, vector<1x1152x128xbf16>
    %247 = vector.shape_cast %246 : vector<1x1152x128xbf16> to vector<1152x128xbf16>
    %cst_204 = arith.constant dense<0.000000e+00> : vector<6x128xf32>
    %248 = tpu.matmul %245, %247, %cst_204 {dimension_numbers = #tpu.dot_dimension_numbers<[1], [0], [0], [1], [0, 0, 1, 1], [], []>} : vector<6x1152xbf16>, vector<1152x128xbf16>, vector<6x128xf32> -> vector<6x128xf32>
    %c6_205 = arith.constant 6 : index
    %c0_206 = arith.constant 0 : index
    %c0_207 = arith.constant 0 : index
    %249 = vector.load %arg3[%c6_205, %c0_206, %c0_207] : memref<7x1x128xf32, #tpu.memory_space<vmem>>, vector<1x1x128xf32>
    %250 = vector.shape_cast %249 : vector<1x1x128xf32> to vector<1x128xf32>
    %251 = vector.broadcast %250 : vector<1x128xf32> to vector<6x128xf32>
    %252 = arith.addf %248, %251 : vector<6x128xf32>
    %253 = arith.negf %252 : vector<6x128xf32>
    %254 = math.exp %253 : vector<6x128xf32>
    %cst_208 = arith.constant 1.000000e+00 : f32
    %255 = vector.broadcast %cst_208 : f32 to vector<6x128xf32>
    %256 = arith.addf %255, %254 : vector<6x128xf32>
    %257 = arith.divf %255, %256 : vector<6x128xf32>
    %258 = arith.mulf %252, %257 : vector<6x128xf32>
    %c0_209 = arith.constant 0 : index
    %c0_210 = arith.constant 0 : index
    %259 = vector.load %arg14[%c0_209, %c0_210] : memref<1x6xf32, #tpu.memory_space<vmem>>, vector<1x6xf32>
    %cst_211 = arith.constant dense<0.000000e+00> : vector<1x128xf32>
    %260 = tpu.matmul %259, %258, %cst_211 {dimension_numbers = #tpu.dot_dimension_numbers<[1], [0], [0], [1], [0, 0, 1, 1], [], []>} : vector<1x6xf32>, vector<6x128xf32>, vector<1x128xf32> -> vector<1x128xf32>
    %cst_212 = arith.constant 0.000000e+00 : f32
    %261 = vector.broadcast %cst_212 : f32 to vector<3x128xf32>
    %262 = tpu.concatenate %112, %149, %186, %223, %260, %261 in 0 : vector<1x128xf32>, vector<1x128xf32>, vector<1x128xf32>, vector<1x128xf32>, vector<1x128xf32>, vector<3x128xf32> -> vector<8x128xf32>
    %263 = vector.shape_cast %262 : vector<8x128xf32> to vector<1x8x128xf32>
    %c0_213 = arith.constant 0 : index
    %c0_214 = arith.constant 0 : index
    %c0_215 = arith.constant 0 : index
    %264 = vector.load %arg15[%c0_213, %c0_214, %c0_215] : memref<1x8x128xf32, #tpu.memory_space<vmem>>, vector<1x8x128xf32>
    tpu.vector_store %arg15[%c0_213, %c0_214, %c0_215], %263 {strides = array<i32>} : memref<1x8x128xf32, #tpu.memory_space<vmem>>, vector<1x8x128xf32>,
    return
  }
  func.func @transform_0(%arg0: i32) -> (i32, i32, i32) {
    %c0_i32 = arith.constant 0 : i32
    %c0_i32_0 = arith.constant 0 : i32
    %c0_i32_1 = arith.constant 0 : i32
    return %arg0, %c0_i32, %c0_i32_0 : i32, i32, i32
  }
  func.func @transform_1(%arg0: i32) -> (i32, i32, i32) {
    %c0_i32 = arith.constant 0 : i32
    %c0_i32_0 = arith.constant 0 : i32
    %c0_i32_1 = arith.constant 0 : i32
    %c0_i32_2 = arith.constant 0 : i32
    return %c0_i32, %c0_i32_0, %c0_i32_1 : i32, i32, i32
  }
  func.func @transform_2(%arg0: i32) -> (i32, i32, i32) {
    %c0_i32 = arith.constant 0 : i32
    %c0_i32_0 = arith.constant 0 : i32
    %c0_i32_1 = arith.constant 0 : i32
    %c0_i32_2 = arith.constant 0 : i32
    return %c0_i32, %c0_i32_0, %c0_i32_1 : i32, i32, i32
  }
  func.func @transform_3(%arg0: i32) -> (i32, i32) {
    %c0_i32 = arith.constant 0 : i32
    %c0_i32_0 = arith.constant 0 : i32
    %c0_i32_1 = arith.constant 0 : i32
    return %c0_i32, %c0_i32_0 : i32, i32
  }
  func.func @transform_4(%arg0: i32) -> (i32, i32) {
    %c0_i32 = arith.constant 0 : i32
    %c0_i32_0 = arith.constant 0 : i32
    %c0_i32_1 = arith.constant 0 : i32
    return %c0_i32, %c0_i32_0 : i32, i32
  }
  func.func @transform_5(%arg0: i32) -> (i32, i32) {
    %c0_i32 = arith.constant 0 : i32
    %c0_i32_0 = arith.constant 0 : i32
    %c0_i32_1 = arith.constant 0 : i32
    return %c0_i32, %c0_i32_0 : i32, i32
  }
  func.func @transform_6(%arg0: i32) -> (i32, i32) {
    %c0_i32 = arith.constant 0 : i32
    %c0_i32_0 = arith.constant 0 : i32
    %c0_i32_1 = arith.constant 0 : i32
    return %c0_i32, %c0_i32_0 : i32, i32
  }
  func.func @transform_7(%arg0: i32) -> (i32, i32) {
    %c0_i32 = arith.constant 0 : i32
    %c0_i32_0 = arith.constant 0 : i32
    %c0_i32_1 = arith.constant 0 : i32
    return %c0_i32, %c0_i32_0 : i32, i32
  }
  func.func @transform_8(%arg0: i32) -> (i32, i32) {
    %c0_i32 = arith.constant 0 : i32
    %c0_i32_0 = arith.constant 0 : i32
    %c0_i32_1 = arith.constant 0 : i32
    return %c0_i32, %c0_i32_0 : i32, i32
  }
  func.func @transform_9(%arg0: i32) -> (i32, i32) {
    %c0_i32 = arith.constant 0 : i32
    %c0_i32_0 = arith.constant 0 : i32
    %c0_i32_1 = arith.constant 0 : i32
    return %c0_i32, %c0_i32_0 : i32, i32
  }
  func.func @transform_10(%arg0: i32) -> (i32, i32) {
    %c0_i32 = arith.constant 0 : i32
    %c0_i32_0 = arith.constant 0 : i32
    %c0_i32_1 = arith.constant 0 : i32
    return %c0_i32, %c0_i32_0 : i32, i32
  }
  func.func @transform_11(%arg0: i32) -> (i32, i32) {
    %c0_i32 = arith.constant 0 : i32
    %c0_i32_0 = arith.constant 0 : i32
    %c0_i32_1 = arith.constant 0 : i32
    return %c0_i32, %c0_i32_0 : i32, i32
  }
  func.func @transform_12(%arg0: i32) -> (i32, i32) {
    %c0_i32 = arith.constant 0 : i32
    %c0_i32_0 = arith.constant 0 : i32
    %c0_i32_1 = arith.constant 0 : i32
    return %c0_i32, %c0_i32_0 : i32, i32
  }
  func.func @transform_13(%arg0: i32) -> (i32, i32) {
    %c0_i32 = arith.constant 0 : i32
    %c0_i32_0 = arith.constant 0 : i32
    %c0_i32_1 = arith.constant 0 : i32
    return %c0_i32, %c0_i32_0 : i32, i32
  }
  func.func @transform_14(%arg0: i32) -> (i32, i32, i32) {
    %c0_i32 = arith.constant 0 : i32
    %c0_i32_0 = arith.constant 0 : i32
    %c0_i32_1 = arith.constant 0 : i32
    return %arg0, %c0_i32, %c0_i32_0 : i32, i32, i32
  }
}

</mosaic_0001>

<llo_original>
// kernel: efficientnetv2_multilevel_forward.1
$region0: #{efficientnetv2_multilevel_forward.1}
  #allocation0 [shape = 'u32[]', space=smem, size = 0x4, offset = 0x4, fixed_abs, tag = 'smem constant byte address 0x4 - core index']
  #allocation1 [shape = 'u32[144,128]{1,0:T(1,128)}', space=vmem, size = 0x12000, scoped, tag = 'internal scratch']
  #allocation2 [shape = 'f32[100,128]{1,0:T(8,128)}', space=vmem, size = 0xd000, scoped, tag = 'scratch operand']
  #allocation3 [shape = 'f32[100,128]{1,0:T(8,128)}', space=vmem, size = 0xd000, scoped, tag = 'scratch operand']
  #allocation4 [shape = 'f32[36,128]{1,0:T(8,128)}', space=vmem, size = 0x5000, scoped, tag = 'scratch operand']
  #allocation5 [shape = 'f32[36,128]{1,0:T(8,128)}', space=vmem, size = 0x5000, scoped, tag = 'scratch operand']
  #allocation6 [shape = 'f32[16,128]{1,0:T(8,128)}', space=vmem, size = 0x2000, scoped, tag = 'scratch operand']
  #allocation7 [shape = 'f32[16,128]{1,0:T(8,128)}', space=vmem, size = 0x2000, scoped, tag = 'scratch operand']
  %s0 = inlined_call_operand.vmem [shape: f32[2,324,128], index: 0, kind: input, shape index: {}]
  %s1 = inlined_call_operand.vmem [shape: bf16[7,1152,128], index: 1, kind: input, shape index: {}]
  %s2 = inlined_call_operand.vmem [shape: f32[7,1,128], index: 2, kind: input, shape index: {}]
  %s3 = inlined_call_operand.vmem [shape: f32[100,286], index: 3, kind: input, shape index: {}]
  %s4 = inlined_call_operand.vmem [shape: f32[100,78], index: 4, kind: input, shape index: {}]
  %s5 = inlined_call_operand.vmem [shape: f32[36,78], index: 5, kind: input, shape index: {}]
  %s6 = inlined_call_operand.vmem [shape: f32[36,22], index: 6, kind: input, shape index: {}]
  %s7 = inlined_call_operand.vmem [shape: f32[16,22], index: 7, kind: input, shape index: {}]
  %s8 = inlined_call_operand.vmem [shape: f32[16,6], index: 8, kind: input, shape index: {}]
  %s9 = inlined_call_operand.vmem [shape: f32[1,78], index: 9, kind: input, shape index: {}]
  %s10 = inlined_call_operand.vmem [shape: f32[1,22], index: 10, kind: input, shape index: {}]
  %s11 = inlined_call_operand.vmem [shape: f32[1,22], index: 11, kind: input, shape index: {}]
  %s12 = inlined_call_operand.vmem [shape: f32[1,6], index: 12, kind: input, shape index: {}, may-alias: {12,13}]
  %s13 = inlined_call_operand.vmem [shape: f32[1,6], index: 13, kind: input, shape index: {}, may-alias: {12,13}]
  %s14 = inlined_call_operand.vmem [shape: f32[2,8,128], index: 14, kind: output, shape index: {}]
  %s15 = sld [smem:[#allocation0]]
  $region89: #{efficientnetv2_multilevel_forward.1} parent=0
    _
  %s17 = ssub.s32 1, %s15
  %s18 = scalar_select 0, %s17, %s15
  loop: start=0, step=1, limit=4
  $region2: #{efficientnetv2_multilevel_forward.1} parent=0 // loop_pre_header
    _
  $region3: #{efficientnetv2_multilevel_forward.1} parent=0 // loop_header
    %s20 = sphi 0, %s24
    %p21 = scmp.ge.s32.totalorder %s20, 4
    %s30 = sphi 0, %s32
    %s33 = sphi 0, %s30
    %s34 = sphi 0, %s33
    %s50 = sphi 0, %s34
    %s54 = sphi 0, %s54
    %s56 = sphi 0, %s54
    %s57 = sphi 0, %s56
    %s71 = sphi 0, %s57
    %s75 = sphi 0, %s75
    %s77 = sphi 0, %s75
    %s78 = sphi 0, %s77
    %s92 = sphi 0, %s78
    %s96 = sphi 0, %s96
    %s98 = sphi 0, %s96
    %s99 = sphi 0, %s98
    %s113 = sphi 0, %s99
    %s117 = sphi 0, %s117
    %s119 = sphi 0, %s117
    %s120 = sphi 0, %s119
    %s134 = sphi 0, %s120
    %s138 = sphi 0, %s138
    %s140 = sphi 0, %s138
    %s141 = sphi 0, %s140
    %s155 = sphi 0, %s141
    %s159 = sphi 0, %s159
    %s161 = sphi 0, %s159
    %s162 = sphi 0, %s161
    %s176 = sphi 0, %s162
    %s180 = sphi 0, %s180
    %s182 = sphi 0, %s180
    %s183 = sphi 0, %s182
    %s197 = sphi 0, %s183
    %s201 = sphi 0, %s201
    %s203 = sphi 0, %s201
    %s204 = sphi 0, %s203
    %s218 = sphi 0, %s204
    %s222 = sphi 0, %s222
    %s224 = sphi 0, %s222
    %s225 = sphi 0, %s224
    %s239 = sphi 0, %s225
    %s243 = sphi 0, %s243
    %s245 = sphi 0, %s243
    %s246 = sphi 0, %s245
    %s260 = sphi 0, %s246
    %s264 = sphi 0, %s264
    %s266 = sphi 0, %s264
    %s267 = sphi 0, %s266
    %s281 = sphi 0, %s267
    %s285 = sphi 0, %s285
    %s287 = sphi 0, %s285
    %s288 = sphi 0, %s287
    %s302 = sphi 0, %s288
    %s306 = sphi 0, %s306
    %s308 = sphi 0, %s306
    %s309 = sphi 0, %s308
    %s323 = sphi 0, %s309
    %s329 = sphi 0, %s331
    %s332 = sphi 0, %s329
    %s333 = sphi 0, %s332
    %s349 = sphi 0, %s333
  $region4: #{efficientnetv2_multilevel_forward.1} parent=0 // loop_header_branch
    %23 = sbr.rel (%p21) target = $region8
  $region5: #{efficientnetv2_multilevel_forward.1} parent=0 // loop_body
    %s25 = ssub.s32 %s20, 1
    %s26 = ssub.s32 %s20, 2
    %s27 = sadd.s32 %s20, 1
    %s28 = ssub.s32 %s20, %s27
    %p29 = scmp.eq.s32.totalorder %s28, 0
    %s31 = sadd.s32 %s30, 1
    %s32 = scalar_select %p29, %s30, %s31
    %p35 = pneg %p29
    %p36 = scmp.eq.s32.totalorder %s20, 1
    %p37 = por %p35, %p36
    %p38 = scmp.ne.s32.totalorder %s30, %s33
    %p39 = scmp.eq.s32.totalorder %s20, 0
    %p40 = por %p38, %p39
    %p41 = scmp.ne.s32.totalorder %s30, %s33
    %p42 = scmp.eq.s32.totalorder %s25, 1
    %p43 = por %p41, %p42
    %p44 = scmp.ne.s32.totalorder %s33, %s34
    %p45 = scmp.eq.s32.totalorder %s25, 0
    %p46 = por %p44, %p45
    %p47 = scmp.ne.s32.totalorder %s33, %s34
    %p48 = scmp.eq.s32.totalorder %s26, 1
    %p49 = por %p47, %p48
    %p51 = scmp.ne.s32.totalorder %s34, %s50
    %p52 = scmp.eq.s32.totalorder %s26, 0
    %p53 = por %p51, %p52
    %s55 = sadd.s32 %s54, 1
    %p58 = scmp.eq.s32.totalorder %s20, 1
    %p59 = scmp.ne.s32.totalorder %s54, %s56
    %p60 = scmp.eq.s32.totalorder %s20, 0
    %p61 = por %p59, %p60
    %p62 = scmp.ne.s32.totalorder %s54, %s56
    %p63 = scmp.eq.s32.totalorder %s25, 1
    %p64 = por %p62, %p63
    %p65 = scmp.ne.s32.totalorder %s56, %s57
    %p66 = scmp.eq.s32.totalorder %s25, 0
    %p67 = por %p65, %p66
    %p68 = scmp.ne.s32.totalorder %s56, %s57
    %p69 = scmp.eq.s32.totalorder %s26, 1
    %p70 = por %p68, %p69
    %p72 = scmp.ne.s32.totalorder %s57, %s71
    %p73 = scmp.eq.s32.totalorder %s26, 0
    %p74 = por %p72, %p73
    %s76 = sadd.s32 %s75, 1
    %p79 = scmp.eq.s32.totalorder %s20, 1
    %p80 = scmp.ne.s32.totalorder %s75, %s77
    %p81 = scmp.eq.s32.totalorder %s20, 0
    %p82 = por %p80, %p81
    %p83 = scmp.ne.s32.totalorder %s75, %s77
    %p84 = scmp.eq.s32.totalorder %s25, 1
    %p85 = por %p83, %p84
    %p86 = scmp.ne.s32.totalorder %s77, %s78
    %p87 = scmp.eq.s32.totalorder %s25, 0
    %p88 = por %p86, %p87
    %p89 = scmp.ne.s32.totalorder %s77, %s78
    %p90 = scmp.eq.s32.totalorder %s26, 1
    %p91 = por %p89, %p90
    %p93 = scmp.ne.s32.totalorder %s78, %s92
    %p94 = scmp.eq.s32.totalorder %s26, 0
    %p95 = por %p93, %p94
    %s97 = sadd.s32 %s96, 1
    %p100 = scmp.eq.s32.totalorder %s20, 1
    %p101 = scmp.ne.s32.totalorder %s96, %s98
    %p102 = scmp.eq.s32.totalorder %s20, 0
    %p103 = por %p101, %p102
    %p104 = scmp.ne.s32.totalorder %s96, %s98
    %p105 = scmp.eq.s32.totalorder %s25, 1
    %p106 = por %p104, %p105
    %p107 = scmp.ne.s32.totalorder %s98, %s99
    %p108 = scmp.eq.s32.totalorder %s25, 0
    %p109 = por %p107, %p108
    %p110 = scmp.ne.s32.totalorder %s98, %s99
    %p111 = scmp.eq.s32.totalorder %s26, 1
    %p112 = por %p110, %p111
    %p114 = scmp.ne.s32.totalorder %s99, %s113
    %p115 = scmp.eq.s32.totalorder %s26, 0
    %p116 = por %p114, %p115
    %s118 = sadd.s32 %s117, 1
    %p121 = scmp.eq.s32.totalorder %s20, 1
    %p122 = scmp.ne.s32.totalorder %s117, %s119
    %p123 = scmp.eq.s32.totalorder %s20, 0
    %p124 = por %p122, %p123
    %p125 = scmp.ne.s32.totalorder %s117, %s119
    %p126 = scmp.eq.s32.totalorder %s25, 1
    %p127 = por %p125, %p126
    %p128 = scmp.ne.s32.totalorder %s119, %s120
    %p129 = scmp.eq.s32.totalorder %s25, 0
    %p130 = por %p128, %p129
    %p131 = scmp.ne.s32.totalorder %s119, %s120
    %p132 = scmp.eq.s32.totalorder %s26, 1
    %p133 = por %p131, %p132
    %p135 = scmp.ne.s32.totalorder %s120, %s134
    %p136 = scmp.eq.s32.totalorder %s26, 0
    %p137 = por %p135, %p136
    %s139 = sadd.s32 %s138, 1
    %p142 = scmp.eq.s32.totalorder %s20, 1
    %p143 = scmp.ne.s32.totalorder %s138, %s140
    %p144 = scmp.eq.s32.totalorder %s20, 0
    %p145 = por %p143, %p144
    %p146 = scmp.ne.s32.totalorder %s138, %s140
    %p147 = scmp.eq.s32.totalorder %s25, 1
    %p148 = por %p146, %p147
    %p149 = scmp.ne.s32.totalorder %s140, %s141
    %p150 = scmp.eq.s32.totalorder %s25, 0
    %p151 = por %p149, %p150
    %p152 = scmp.ne.s32.totalorder %s140, %s141
    %p153 = scmp.eq.s32.totalorder %s26, 1
    %p154 = por %p152, %p153
    %p156 = scmp.ne.s32.totalorder %s141, %s155
    %p157 = scmp.eq.s32.totalorder %s26, 0
    %p158 = por %p156, %p157
    %s160 = sadd.s32 %s159, 1
    %p163 = scmp.eq.s32.totalorder %s20, 1
    %p164 = scmp.ne.s32.totalorder %s159, %s161
    %p165 = scmp.eq.s32.totalorder %s20, 0
    %p166 = por %p164, %p165
    %p167 = scmp.ne.s32.totalorder %s159, %s161
    %p168 = scmp.eq.s32.totalorder %s25, 1
    %p169 = por %p167, %p168
    %p170 = scmp.ne.s32.totalorder %s161, %s162
    %p171 = scmp.eq.s32.totalorder %s25, 0
    %p172 = por %p170, %p171
    %p173 = scmp.ne.s32.totalorder %s161, %s162
    %p174 = scmp.eq.s32.totalorder %s26, 1
    %p175 = por %p173, %p174
    %p177 = scmp.ne.s32.totalorder %s162, %s176
    %p178 = scmp.eq.s32.totalorder %s26, 0
    %p179 = por %p177, %p178
    %s181 = sadd.s32 %s180, 1
    %p184 = scmp.eq.s32.totalorder %s20, 1
    %p185 = scmp.ne.s32.totalorder %s180, %s182
    %p186 = scmp.eq.s32.totalorder %s20, 0
    %p187 = por %p185, %p186
    %p188 = scmp.ne.s32.totalorder %s180, %s182
    %p189 = scmp.eq.s32.totalorder %s25, 1
    %p190 = por %p188, %p189
    %p191 = scmp.ne.s32.totalorder %s182, %s183
    %p192 = scmp.eq.s32.totalorder %s25, 0
    %p193 = por %p191, %p192
    %p194 = scmp.ne.s32.totalorder %s182, %s183
    %p195 = scmp.eq.s32.totalorder %s26, 1
    %p196 = por %p194, %p195
    %p198 = scmp.ne.s32.totalorder %s183, %s197
    %p199 = scmp.eq.s32.totalorder %s26, 0
    %p200 = por %p198, %p199
    %s202 = sadd.s32 %s201, 1
    %p205 = scmp.eq.s32.totalorder %s20, 1
    %p206 = scmp.ne.s32.totalorder %s201, %s203
    %p207 = scmp.eq.s32.totalorder %s20, 0
    %p208 = por %p206, %p207
    %p209 = scmp.ne.s32.totalorder %s201, %s203
    %p210 = scmp.eq.s32.totalorder %s25, 1
    %p211 = por %p209, %p210
    %p212 = scmp.ne.s32.totalorder %s203, %s204
    %p213 = scmp.eq.s32.totalorder %s25, 0
    %p214 = por %p212, %p213
    %p215 = scmp.ne.s32.totalorder %s203, %s204
    %p216 = scmp.eq.s32.totalorder %s26, 1
    %p217 = por %p215, %p216
    %p219 = scmp.ne.s32.totalorder %s204, %s218
    %p220 = scmp.eq.s32.totalorder %s26, 0
    %p221 = por %p219, %p220
    %s223 = sadd.s32 %s222, 1
    %p226 = scmp.eq.s32.totalorder %s20, 1
    %p227 = scmp.ne.s32.totalorder %s222, %s224
    %p228 = scmp.eq.s32.totalorder %s20, 0
    %p229 = por %p227, %p228
    %p230 = scmp.ne.s32.totalorder %s222, %s224
    %p231 = scmp.eq.s32.totalorder %s25, 1
    %p232 = por %p230, %p231
    %p233 = scmp.ne.s32.totalorder %s224, %s225
    %p234 = scmp.eq.s32.totalorder %s25, 0
    %p235 = por %p233, %p234
    %p236 = scmp.ne.s32.totalorder %s224, %s225
    %p237 = scmp.eq.s32.totalorder %s26, 1
    %p238 = por %p236, %p237
    %p240 = scmp.ne.s32.totalorder %s225, %s239
    %p241 = scmp.eq.s32.totalorder %s26, 0
    %p242 = por %p240, %p241
    %s244 = sadd.s32 %s243, 1
    %p247 = scmp.eq.s32.totalorder %s20, 1
    %p248 = scmp.ne.s32.totalorder %s243, %s245
    %p249 = scmp.eq.s32.totalorder %s20, 0
    %p250 = por %p248, %p249
    %p251 = scmp.ne.s32.totalorder %s243, %s245
    %p252 = scmp.eq.s32.totalorder %s25, 1
    %p253 = por %p251, %p252
    %p254 = scmp.ne.s32.totalorder %s245, %s246
    %p255 = scmp.eq.s32.totalorder %s25, 0
    %p256 = por %p254, %p255
    %p257 = scmp.ne.s32.totalorder %s245, %s246
    %p258 = scmp.eq.s32.totalorder %s26, 1
    %p259 = por %p257, %p258
    %p261 = scmp.ne.s32.totalorder %s246, %s260
    %p262 = scmp.eq.s32.totalorder %s26, 0
    %p263 = por %p261, %p262
    %s265 = sadd.s32 %s264, 1
    %p268 = scmp.eq.s32.totalorder %s20, 1
    %p269 = scmp.ne.s32.totalorder %s264, %s266
    %p270 = scmp.eq.s32.totalorder %s20, 0
    %p271 = por %p269, %p270
    %p272 = scmp.ne.s32.totalorder %s264, %s266
    %p273 = scmp.eq.s32.totalorder %s25, 1
    %p274 = por %p272, %p273
    %p275 = scmp.ne.s32.totalorder %s266, %s267
    %p276 = scmp.eq.s32.totalorder %s25, 0
    %p277 = por %p275, %p276
    %p278 = scmp.ne.s32.totalorder %s266, %s267
    %p279 = scmp.eq.s32.totalorder %s26, 1
    %p280 = por %p278, %p279
    %p282 = scmp.ne.s32.totalorder %s267, %s281
    %p283 = scmp.eq.s32.totalorder %s26, 0
    %p284 = por %p282, %p283
    %s286 = sadd.s32 %s285, 1
    %p289 = scmp.eq.s32.totalorder %s20, 1
    %p290 = scmp.ne.s32.totalorder %s285, %s287
    %p291 = scmp.eq.s32.totalorder %s20, 0
    %p292 = por %p290, %p291
    %p293 = scmp.ne.s32.totalorder %s285, %s287
    %p294 = scmp.eq.s32.totalorder %s25, 1
    %p295 = por %p293, %p294
    %p296 = scmp.ne.s32.totalorder %s287, %s288
    %p297 = scmp.eq.s32.totalorder %s25, 0
    %p298 = por %p296, %p297
    %p299 = scmp.ne.s32.totalorder %s287, %s288
    %p300 = scmp.eq.s32.totalorder %s26, 1
    %p301 = por %p299, %p300
    %p303 = scmp.ne.s32.totalorder %s288, %s302
    %p304 = scmp.eq.s32.totalorder %s26, 0
    %p305 = por %p303, %p304
    %s307 = sadd.s32 %s306, 1
    %p310 = scmp.eq.s32.totalorder %s20, 1
    %p311 = scmp.ne.s32.totalorder %s306, %s308
    %p312 = scmp.eq.s32.totalorder %s20, 0
    %p313 = por %p311, %p312
    %p314 = scmp.ne.s32.totalorder %s306, %s308
    %p315 = scmp.eq.s32.totalorder %s25, 1
    %p316 = por %p314, %p315
    %p317 = scmp.ne.s32.totalorder %s308, %s309
    %p318 = scmp.eq.s32.totalorder %s25, 0
    %p319 = por %p317, %p318
    %p320 = scmp.ne.s32.totalorder %s308, %s309
    %p321 = scmp.eq.s32.totalorder %s26, 1
    %p322 = por %p320, %p321
    %p324 = scmp.ne.s32.totalorder %s309, %s323
    %p325 = scmp.eq.s32.totalorder %s26, 0
    %p326 = por %p324, %p325
    %s327 = ssub.s32 %s20, %s27
    %p328 = scmp.eq.s32.totalorder %s327, 0
    %s330 = sadd.s32 %s329, 1
    %s331 = scalar_select %p328, %s329, %s330
    %p334 = pneg %p328
    %p335 = scmp.eq.s32.totalorder %s20, 1
    %p336 = por %p334, %p335
    %p337 = scmp.ne.s32.totalorder %s329, %s332
    %p338 = scmp.eq.s32.totalorder %s20, 0
    %p339 = por %p337, %p338
    %p340 = scmp.ne.s32.totalorder %s329, %s332
    %p341 = scmp.eq.s32.totalorder %s25, 1
    %p342 = por %p340, %p341
    %p343 = scmp.ne.s32.totalorder %s332, %s333
    %p344 = scmp.eq.s32.totalorder %s25, 0
    %p345 = por %p343, %p344
    %p346 = scmp.ne.s32.totalorder %s332, %s333
    %p347 = scmp.eq.s32.totalorder %s26, 1
    %p348 = por %p346, %p347
    %p350 = scmp.ne.s32.totalorder %s333, %s349
    %p351 = scmp.eq.s32.totalorder %s26, 0
    %p352 = por %p350, %p351
    %p353 = scmp.le.s32.totalorder 1, %s20
    %p354 = scmp.lt.s32.totalorder %s20, 3
    %p355 = pnand %p353, %p354
    %p356 = pneg %p355
    // Predicated region
    $region9: #{efficientnetv2_multilevel_forward.1} parent=5 // pred_check
      _
    $region10: #{efficientnetv2_multilevel_forward.1} parent=5 // pred_check_branch
      %358 = sbr.rel (%p355) target = $region12
    $region11: #{efficientnetv2_multilevel_forward.1} parent=5 // pred_region
      %s359 = ssub.s32 %s20, 1
      // Predicated region
      $region13: #{efficientnetv2_multilevel_forward.1} parent=11 // pred_check
        %p360 = pneg %p67
      $region14: #{efficientnetv2_multilevel_forward.1} parent=11 // pred_check_branch
        %362 = sbr.rel (%p360) target = $region16
      $region15: #{efficientnetv2_multilevel_forward.1} parent=11 // pred_region
        _
      $region16: #{efficientnetv2_multilevel_forward.1} parent=11 // pred_fallthru
        _
      // Predicated region
      $region17: #{efficientnetv2_multilevel_forward.1} parent=11 // pred_check
        %p363 = pneg %p88
      $region18: #{efficientnetv2_multilevel_forward.1} parent=11 // pred_check_branch
        %365 = sbr.rel (%p363) target = $region20
      $region19: #{efficientnetv2_multilevel_forward.1} parent=11 // pred_region
        _
      $region20: #{efficientnetv2_multilevel_forward.1} parent=11 // pred_fallthru
        _
      // Predicated region
      $region21: #{efficientnetv2_multilevel_forward.1} parent=11 // pred_check
        %p366 = pneg %p109
      $region22: #{efficientnetv2_multilevel_forward.1} parent=11 // pred_check_branch
        %368 = sbr.rel (%p366) target = $region24
      $region23: #{efficientnetv2_multilevel_forward.1} parent=11 // pred_region
        _
      $region24: #{efficientnetv2_multilevel_forward.1} parent=11 // pred_fallthru
        _
      // Predicated region
      $region25: #{efficientnetv2_multilevel_forward.1} parent=11 // pred_check
        %p369 = pneg %p130
      $region26: #{efficientnetv2_multilevel_forward.1} parent=11 // pred_check_branch
        %371 = sbr.rel (%p369) target = $region28
      $region27: #{efficientnetv2_multilevel_forward.1} parent=11 // pred_region
        _
      $region28: #{efficientnetv2_multilevel_forward.1} parent=11 // pred_fallthru
        _
      // Predicated region
      $region29: #{efficientnetv2_multilevel_forward.1} parent=11 // pred_check
        %p372 = pneg %p151
      $region30: #{efficientnetv2_multilevel_forward.1} parent=11 // pred_check_branch
        %374 = sbr.rel (%p372) target = $region32
      $region31: #{efficientnetv2_multilevel_forward.1} parent=11 // pred_region
        _
      $region32: #{efficientnetv2_multilevel_forward.1} parent=11 // pred_fallthru
        _
      // Predicated region
      $region33: #{efficientnetv2_multilevel_forward.1} parent=11 // pred_check
        %p375 = pneg %p172
      $region34: #{efficientnetv2_multilevel_forward.1} parent=11 // pred_check_branch
        %377 = sbr.rel (%p375) target = $region36
      $region35: #{efficientnetv2_multilevel_forward.1} parent=11 // pred_region
        _
      $region36: #{efficientnetv2_multilevel_forward.1} parent=11 // pred_fallthru
        _
      // Predicated region
      $region37: #{efficientnetv2_multilevel_forward.1} parent=11 // pred_check
        %p378 = pneg %p193
      $region38: #{efficientnetv2_multilevel_forward.1} parent=11 // pred_check_branch
        %380 = sbr.rel (%p378) target = $region40
      $region39: #{efficientnetv2_multilevel_forward.1} parent=11 // pred_region
        _
      $region40: #{efficientnetv2_multilevel_forward.1} parent=11 // pred_fallthru
        _
      // Predicated region
      $region41: #{efficientnetv2_multilevel_forward.1} parent=11 // pred_check
        %p381 = pneg %p214
      $region42: #{efficientnetv2_multilevel_forward.1} parent=11 // pred_check_branch
        %383 = sbr.rel (%p381) target = $region44
      $region43: #{efficientnetv2_multilevel_forward.1} parent=11 // pred_region
        _
      $region44: #{efficientnetv2_multilevel_forward.1} parent=11 // pred_fallthru
        _
      // Predicated region
      $region45: #{efficientnetv2_multilevel_forward.1} parent=11 // pred_check
        %p384 = pneg %p235
      $region46: #{efficientnetv2_multilevel_forward.1} parent=11 // pred_check_branch
        %386 = sbr.rel (%p384) target = $region48
      $region47: #{efficientnetv2_multilevel_forward.1} parent=11 // pred_region
        _
      $region48: #{efficientnetv2_multilevel_forward.1} parent=11 // pred_fallthru
        _
      // Predicated region
      $region49: #{efficientnetv2_multilevel_forward.1} parent=11 // pred_check
        %p387 = pneg %p256
      $region50: #{efficientnetv2_multilevel_forward.1} parent=11 // pred_check_branch
        %389 = sbr.rel (%p387) target = $region52
      $region51: #{efficientnetv2_multilevel_forward.1} parent=11 // pred_region
        _
      $region52: #{efficientnetv2_multilevel_forward.1} parent=11 // pred_fallthru
        _
      // Predicated region
      $region53: #{efficientnetv2_multilevel_forward.1} parent=11 // pred_check
        %p390 = pneg %p277
      $region54: #{efficientnetv2_multilevel_forward.1} parent=11 // pred_check_branch
        %392 = sbr.rel (%p390) target = $region56
      $region55: #{efficientnetv2_multilevel_forward.1} parent=11 // pred_region
        _
      $region56: #{efficientnetv2_multilevel_forward.1} parent=11 // pred_fallthru
        _
      // Predicated region
      $region57: #{efficientnetv2_multilevel_forward.1} parent=11 // pred_check
        %p393 = pneg %p298
      $region58: #{efficientnetv2_multilevel_forward.1} parent=11 // pred_check_branch
        %395 = sbr.rel (%p393) target = $region60
      $region59: #{efficientnetv2_multilevel_forward.1} parent=11 // pred_region
        _
      $region60: #{efficientnetv2_multilevel_forward.1} parent=11 // pred_fallthru
        _
      // Predicated region
      $region61: #{efficientnetv2_multilevel_forward.1} parent=11 // pred_check
        %p396 = pneg %p319
      $region62: #{efficientnetv2_multilevel_forward.1} parent=11 // pred_check_branch
        %398 = sbr.rel (%p396) target = $region64
      $region63: #{efficientnetv2_multilevel_forward.1} parent=11 // pred_region
        _
      $region64: #{efficientnetv2_multilevel_forward.1} parent=11 // pred_fallthru
        _
    $region12: #{efficientnetv2_multilevel_forward.1} parent=5 // pred_fallthru
      _
    %p399 = scmp.lt.s32.totalorder %s20, 2
    // Predicated region
    $region65: #{efficientnetv2_multilevel_forward.1} parent=5 // pred_check
      %p400 = pneg %p399
    $region66: #{efficientnetv2_multilevel_forward.1} parent=5 // pred_check_branch
      %402 = sbr.rel (%p400) target = $region68
    $region67: #{efficientnetv2_multilevel_forward.1} parent=5 // pred_region
      // Predicated region
      $region69: #{efficientnetv2_multilevel_forward.1} parent=67 // pred_check
        %p403 = pneg %p40
      $region70: #{efficientnetv2_multilevel_forward.1} parent=67 // pred_check_branch
        %405 = sbr.rel (%p403) target = $region72
      $region71: #{efficientnetv2_multilevel_forward.1} parent=67 // pred_region
        %p406 = scmp.lt.s32.totalorder %s20, 1
        %s407 = scalar_select %p406, %s20, 1
        %s408 = smul.addr %s407, 41
        %s409 = smul.addr %s408, 8
        %s410 = scalar_lea.vmem %s0, %s409
      $region72: #{efficientnetv2_multilevel_forward.1} parent=67 // pred_fallthru
        _
    $region68: #{efficientnetv2_multilevel_forward.1} parent=5 // pred_fallthru
      _
    %p411 = scmp.le.s32.totalorder 1, %s20
    %p412 = scmp.lt.s32.totalorder %s20, 3
    %p413 = pnand %p411, %p412
    %p414 = pneg %p413
    // Predicated region
    $region73: #{efficientnetv2_multilevel_forward.1} parent=5 // pred_check
      _
    $region74: #{efficientnetv2_multilevel_forward.1} parent=5 // pred_check_branch
      %416 = sbr.rel (%p413) target = $region76
    $region75: #{efficientnetv2_multilevel_forward.1} parent=5 // pred_region
      %s417 = ssub.s32 %s20, 1
      %p418 = scmp.lt.s32.totalorder %s25, 1
      %s419 = scalar_select %p418, %s25, 1
      %s420 = smul.addr %s419, 41
      %s421 = smul.addr %s420, 8
      %s422 = scalar_lea.vmem %s0, %s421
      %p423 = pneg %p46
      %p424 = pneg %p43
      %p425 = pneg %p67
      %p426 = pneg %p64
      %p427 = pneg %p88
      %p428 = pneg %p85
      %p429 = pneg %p109
      %p430 = pneg %p106
      %p431 = pneg %p130
      %p432 = pneg %p127
      %p433 = pneg %p151
      %p434 = pneg %p148
      %p435 = pneg %p172
      %p436 = pneg %p169
      %p437 = pneg %p193
      %p438 = pneg %p190
      %p439 = pneg %p214
      %p440 = pneg %p211
      %p441 = pneg %p235
      %p442 = pneg %p232
      %p443 = pneg %p256
      %p444 = pneg %p253
      %p445 = pneg %p277
      %p446 = pneg %p274
      %p447 = pneg %p298
      %p448 = pneg %p295
      %p449 = pneg %p319
      %p450 = pneg %p316
      %p451 = pneg %p345
      %p452 = pneg %p342
      %p453 = scmp.lt.s32.totalorder %s25, 1
      %s454 = scalar_select %p453, %s25, 1
      %s455 = smul.addr %s454, 8
      %s456 = scalar_lea.vmem %s14, %s455
      %p457 = scmp.lt.s32.totalorder %s25, 1
      %s458 = scalar_select %p457, %s25, 1
      %s459 = smul.addr %s458, 41
      %s460 = smul.addr %s459, 8
      %s461 = scalar_lea.vmem %s0, %s460
      %p462 = scmp.lt.s32.totalorder %s25, 1
      %s463 = scalar_select %p462, %s25, 1
      %s464 = smul.addr %s463, 8
      %s465 = scalar_lea.vmem %s14, %s464
      %v467 = vld [vmem:[%s461] sm:$0xff]
      %v468 = vld [vmem:[%s461 + $0x8] sm:$0xff]
      %v469 = vld [vmem:[%s461 + $0x10] sm:$0xff]
      %v470 = vld [vmem:[%s461 + $0x18] sm:$0xff]
      %v471 = vld [vmem:[%s461 + $0x20] sm:$0xff]
      %v472 = vld [vmem:[%s461 + $0x28] sm:$0xff]
      %v473 = vld [vmem:[%s461 + $0x30] sm:$0xff]
      %v474 = vld [vmem:[%s461 + $0x38] sm:$0xff]
      %v475 = vld [vmem:[%s461 + $0x40] sm:$0xff]
      %v476 = vld [vmem:[%s461 + $0x48] sm:$0xff]
      %v477 = vld [vmem:[%s461 + $0x50] sm:$0xff]
      %v478 = vld [vmem:[%s461 + $0x58] sm:$0xff]
      %v479 = vld [vmem:[%s461 + $0x60] sm:$0xff]
      %v480 = vld [vmem:[%s461 + $0x68] sm:$0xff]
      %v481 = vld [vmem:[%s461 + $0x70] sm:$0xff]
      %v482 = vld [vmem:[%s461 + $0x78] sm:$0xff]
      %v483 = vld [vmem:[%s461 + $0x80] sm:$0xff]
      %v484 = vld [vmem:[%s461 + $0x88] sm:$0xff]
      %v485 = vld [vmem:[%s461 + $0x90] sm:$0xff]
      %v486 = vld [vmem:[%s461 + $0x98] sm:$0xff]
      %v487 = vld [vmem:[%s461 + $0xa0] sm:$0xff]
      %v488 = vld [vmem:[%s461 + $0xa8] sm:$0xff]
      %v489 = vld [vmem:[%s461 + $0xb0] sm:$0xff]
      %v490 = vld [vmem:[%s461 + $0xb8] sm:$0xff]
      %v491 = vld [vmem:[%s461 + $0xc0] sm:$0xff]
      %v492 = vld [vmem:[%s461 + $0xc8] sm:$0xff]
      %v493 = vld [vmem:[%s461 + $0xd0] sm:$0xff]
      %v494 = vld [vmem:[%s461 + $0xd8] sm:$0xff]
      %v495 = vld [vmem:[%s461 + $0xe0] sm:$0xff]
      %v496 = vld [vmem:[%s461 + $0xe8] sm:$0xff]
      %v497 = vld [vmem:[%s461 + $0xf0] sm:$0xff]
      %v498 = vld [vmem:[%s461 + $0xf8] sm:$0xff]
      %v499 = vld [vmem:[%s461 + $0x100] sm:$0xff]
      %v500 = vld [vmem:[%s461 + $0x108] sm:$0xff]
      %v501 = vld [vmem:[%s461 + $0x110] sm:$0xff]
      %v502 = vld [vmem:[%s461 + $0x118] sm:$0x3f]
      %v503 = vpack.c.bf16 %v468, %v467
      %v504 = vpack.c.bf16 %v470, %v469
      %v505 = vpack.c.bf16 %v472, %v471
      %v506 = vpack.c.bf16 %v474, %v473
      %v507 = vpack.c.bf16 %v476, %v475
      %v508 = vpack.c.bf16 %v478, %v477
      %v509 = vpack.c.bf16 %v480, %v479
      %v510 = vpack.c.bf16 %v482, %v481
      %v511 = vpack.c.bf16 %v484, %v483
      %v512 = vpack.c.bf16 %v486, %v485
      %v513 = vpack.c.bf16 %v488, %v487
      %v514 = vpack.c.bf16 %v490, %v489
      %v515 = vpack.c.bf16 %v492, %v491
      %v516 = vpack.c.bf16 %v494, %v493
      %v517 = vpack.c.bf16 %v496, %v495
      %v518 = vpack.c.bf16 %v498, %v497
      %v519 = vpack.c.bf16 %v500, %v499
      %v520 = vpack.c.bf16 %v502, %v501
      %v521 = vld [vmem:[%s461 + $0x1] sm:$0xff]
      %v522 = vld [vmem:[%s461 + $0x9] sm:$0xff]
      %v523 = vld [vmem:[%s461 + $0x11] sm:$0xff]
      %v524 = vld [vmem:[%s461 + $0x19] sm:$0xff]
      %v525 = vld [vmem:[%s461 + $0x21] sm:$0xff]
      %v526 = vld [vmem:[%s461 + $0x29] sm:$0xff]
      %v527 = vld [vmem:[%s461 + $0x31] sm:$0xff]
      %v528 = vld [vmem:[%s461 + $0x39] sm:$0xff]
      %v529 = vld [vmem:[%s461 + $0x41] sm:$0xff]
      %v530 = vld [vmem:[%s461 + $0x49] sm:$0xff]
      %v531 = vld [vmem:[%s461 + $0x51] sm:$0xff]
      %v532 = vld [vmem:[%s461 + $0x59] sm:$0xff]
      %v533 = vld [vmem:[%s461 + $0x61] sm:$0xff]
      %v534 = vld [vmem:[%s461 + $0x69] sm:$0xff]
      %v535 = vld [vmem:[%s461 + $0x71] sm:$0xff]
      %v536 = vld [vmem:[%s461 + $0x79] sm:$0xff]
      %v537 = vld [vmem:[%s461 + $0x81] sm:$0xff]
      %v538 = vld [vmem:[%s461 + $0x89] sm:$0xff]
      %v539 = vld [vmem:[%s461 + $0x91] sm:$0xff]
      %v540 = vld [vmem:[%s461 + $0x99] sm:$0xff]
      %v541 = vld [vmem:[%s461 + $0xa1] sm:$0xff]
      %v542 = vld [vmem:[%s461 + $0xa9] sm:$0xff]
      %v543 = vld [vmem:[%s461 + $0xb1] sm:$0xff]
      %v544 = vld [vmem:[%s461 + $0xb9] sm:$0xff]
      %v545 = vld [vmem:[%s461 + $0xc1] sm:$0xff]
      %v546 = vld [vmem:[%s461 + $0xc9] sm:$0xff]
      %v547 = vld [vmem:[%s461 + $0xd1] sm:$0xff]
      %v548 = vld [vmem:[%s461 + $0xd9] sm:$0xff]
      %v549 = vld [vmem:[%s461 + $0xe1] sm:$0xff]
      %v550 = vld [vmem:[%s461 + $0xe9] sm:$0xff]
      %v551 = vld [vmem:[%s461 + $0xf1] sm:$0xff]
      %v552 = vld [vmem:[%s461 + $0xf9] sm:$0xff]
      %v553 = vld [vmem:[%s461 + $0x101] sm:$0xff]
      %v554 = vld [vmem:[%s461 + $0x109] sm:$0xff]
      %v555 = vld [vmem:[%s461 + $0x111] sm:$0xff]
      %v556 = vld [vmem:[%s461 + $0x119] sm:$0x3f]
      %v557 = vpack.c.bf16 %v522, %v521
      %v558 = vpack.c.bf16 %v524, %v523
      %v559 = vpack.c.bf16 %v526, %v525
      %v560 = vpack.c.bf16 %v528, %v527
      %v561 = vpack.c.bf16 %v530, %v529
      %v562 = vpack.c.bf16 %v532, %v531
      %v563 = vpack.c.bf16 %v534, %v533
      %v564 = vpack.c.bf16 %v536, %v535
      %v565 = vpack.c.bf16 %v538, %v537
      %v566 = vpack.c.bf16 %v540, %v539
      %v567 = vpack.c.bf16 %v542, %v541
      %v568 = vpack.c.bf16 %v544, %v543
      %v569 = vpack.c.bf16 %v546, %v545
      %v570 = vpack.c.bf16 %v548, %v547
      %v571 = vpack.c.bf16 %v550, %v549
      %v572 = vpack.c.bf16 %v552, %v551
      %v573 = vpack.c.bf16 %v554, %v553
      %v574 = vpack.c.bf16 %v556, %v555
      %v575 = vld [vmem:[%s461 + $0x2] sm:$0xff]
      %v576 = vld [vmem:[%s461 + $0xa] sm:$0xff]
      %v577 = vld [vmem:[%s461 + $0x12] sm:$0xff]
      %v578 = vld [vmem:[%s461 + $0x1a] sm:$0xff]
      %v579 = vld [vmem:[%s461 + $0x22] sm:$0xff]
      %v580 = vld [vmem:[%s461 + $0x2a] sm:$0xff]
      %v581 = vld [vmem:[%s461 + $0x32] sm:$0xff]
      %v582 = vld [vmem:[%s461 + $0x3a] sm:$0xff]
      %v583 = vld [vmem:[%s461 + $0x42] sm:$0xff]
      %v584 = vld [vmem:[%s461 + $0x4a] sm:$0xff]
      %v585 = vld [vmem:[%s461 + $0x52] sm:$0xff]
      %v586 = vld [vmem:[%s461 + $0x5a] sm:$0xff]
      %v587 = vld [vmem:[%s461 + $0x62] sm:$0xff]
      %v588 = vld [vmem:[%s461 + $0x6a] sm:$0xff]
      %v589 = vld [vmem:[%s461 + $0x72] sm:$0xff]
      %v590 = vld [vmem:[%s461 + $0x7a] sm:$0xff]
      %v591 = vld [vmem:[%s461 + $0x82] sm:$0xff]
      %v592 = vld [vmem:[%s461 + $0x8a] sm:$0xff]
      %v593 = vld [vmem:[%s461 + $0x92] sm:$0xff]
      %v594 = vld [vmem:[%s461 + $0x9a] sm:$0xff]
      %v595 = vld [vmem:[%s461 + $0xa2] sm:$0xff]
      %v596 = vld [vmem:[%s461 + $0xaa] sm:$0xff]
      %v597 = vld [vmem:[%s461 + $0xb2] sm:$0xff]
      %v598 = vld [vmem:[%s461 + $0xba] sm:$0xff]
      %v599 = vld [vmem:[%s461 + $0xc2] sm:$0xff]
      %v600 = vld [vmem:[%s461 + $0xca] sm:$0xff]
      %v601 = vld [vmem:[%s461 + $0xd2] sm:$0xff]
      %v602 = vld [vmem:[%s461 + $0xda] sm:$0xff]
      %v603 = vld [vmem:[%s461 + $0xe2] sm:$0xff]
      %v604 = vld [vmem:[%s461 + $0xea] sm:$0xff]
      %v605 = vld [vmem:[%s461 + $0xf2] sm:$0xff]
      %v606 = vld [vmem:[%s461 + $0xfa] sm:$0xff]
      %v607 = vld [vmem:[%s461 + $0x102] sm:$0xff]
      %v608 = vld [vmem:[%s461 + $0x10a] sm:$0xff]
      %v609 = vld [vmem:[%s461 + $0x112] sm:$0xff]
      %v610 = vld [vmem:[%s461 + $0x11a] sm:$0x3f]
      %v611 = vpack.c.bf16 %v576, %v575
      %v612 = vpack.c.bf16 %v578, %v577
      %v613 = vpack.c.bf16 %v580, %v579
      %v614 = vpack.c.bf16 %v582, %v581
      %v615 = vpack.c.bf16 %v584, %v583
      %v616 = vpack.c.bf16 %v586, %v585
      %v617 = vpack.c.bf16 %v588, %v587
      %v618 = vpack.c.bf16 %v590, %v589
      %v619 = vpack.c.bf16 %v592, %v591
      %v620 = vpack.c.bf16 %v594, %v593
      %v621 = vpack.c.bf16 %v596, %v595
      %v622 = vpack.c.bf16 %v598, %v597
      %v623 = vpack.c.bf16 %v600, %v599
      %v624 = vpack.c.bf16 %v602, %v601
      %v625 = vpack.c.bf16 %v604, %v603
      %v626 = vpack.c.bf16 %v606, %v605
      %v627 = vpack.c.bf16 %v608, %v607
      %v628 = vpack.c.bf16 %v610, %v609
      %v629 = vld [vmem:[%s461 + $0x11a] sm:$0xff]
      %v630 = vld [vmem:[%s461 + $0x122] sm:$0xff]
      %v631 = vld [vmem:[%s461 + $0x12a] sm:$0x3f]
      %v632 = vpack.c.bf16 %v629, %v609
      %v633 = vpack.c.bf16 %v631, %v630
      %v634 = vld [vmem:[%s461 + $0x13] sm:$0xff]
      %v635 = vld [vmem:[%s461 + $0x1b] sm:$0xff]
      %v636 = vld [vmem:[%s461 + $0x23] sm:$0xff]
      %v637 = vld [vmem:[%s461 + $0x2b] sm:$0xff]
      %v638 = vld [vmem:[%s461 + $0x33] sm:$0xff]
      %v639 = vld [vmem:[%s461 + $0x3b] sm:$0xff]
      %v640 = vld [vmem:[%s461 + $0x43] sm:$0xff]
      %v641 = vld [vmem:[%s461 + $0x4b] sm:$0xff]
      %v642 = vld [vmem:[%s461 + $0x53] sm:$0xff]
      %v643 = vld [vmem:[%s461 + $0x5b] sm:$0xff]
      %v644 = vld [vmem:[%s461 + $0x63] sm:$0xff]
      %v645 = vld [vmem:[%s461 + $0x6b] sm:$0xff]
      %v646 = vld [vmem:[%s461 + $0x73] sm:$0xff]
      %v647 = vld [vmem:[%s461 + $0x7b] sm:$0xff]
      %v648 = vld [vmem:[%s461 + $0x83] sm:$0xff]
      %v649 = vld [vmem:[%s461 + $0x8b] sm:$0xff]
      %v650 = vld [vmem:[%s461 + $0x93] sm:$0xff]
      %v651 = vld [vmem:[%s461 + $0x9b] sm:$0xff]
      %v652 = vld [vmem:[%s461 + $0xa3] sm:$0xff]
      %v653 = vld [vmem:[%s461 + $0xab] sm:$0xff]
      %v654 = vld [vmem:[%s461 + $0xb3] sm:$0xff]
      %v655 = vld [vmem:[%s461 + $0xbb] sm:$0xff]
      %v656 = vld [vmem:[%s461 + $0xc3] sm:$0xff]
      %v657 = vld [vmem:[%s461 + $0xcb] sm:$0xff]
      %v658 = vld [vmem:[%s461 + $0xd3] sm:$0xff]
      %v659 = vld [vmem:[%s461 + $0xdb] sm:$0xff]
      %v660 = vld [vmem:[%s461 + $0xe3] sm:$0xff]
      %v661 = vld [vmem:[%s461 + $0xeb] sm:$0xff]
      %v662 = vld [vmem:[%s461 + $0xf3] sm:$0xff]
      %v663 = vld [vmem:[%s461 + $0xfb] sm:$0xff]
      %v664 = vld [vmem:[%s461 + $0x103] sm:$0xff]
      %v665 = vld [vmem:[%s461 + $0x10b] sm:$0xff]
      %v666 = vld [vmem:[%s461 + $0x113] sm:$0xff]
      %v667 = vld [vmem:[%s461 + $0x11b] sm:$0xff]
      %v668 = vld [vmem:[%s461 + $0x123] sm:$0xff]
      %v669 = vld [vmem:[%s461 + $0x12b] sm:$0x3f]
      %v670 = vpack.c.bf16 %v635, %v634
      %v671 = vpack.c.bf16 %v637, %v636
      %v672 = vpack.c.bf16 %v639, %v638
      %v673 = vpack.c.bf16 %v641, %v640
      %v674 = vpack.c.bf16 %v643, %v642
      %v675 = vpack.c.bf16 %v645, %v644
      %v676 = vpack.c.bf16 %v647, %v646
      %v677 = vpack.c.bf16 %v649, %v648
      %v678 = vpack.c.bf16 %v651, %v650
      %v679 = vpack.c.bf16 %v653, %v652
      %v680 = vpack.c.bf16 %v655, %v654
      %v681 = vpack.c.bf16 %v657, %v656
      %v682 = vpack.c.bf16 %v659, %v658
      %v683 = vpack.c.bf16 %v661, %v660
      %v684 = vpack.c.bf16 %v663, %v662
      %v685 = vpack.c.bf16 %v665, %v664
      %v686 = vpack.c.bf16 %v667, %v666
      %v687 = vpack.c.bf16 %v669, %v668
      %v688 = vld [vmem:[%s461 + $0x14] sm:$0xff]
      %v689 = vld [vmem:[%s461 + $0x1c] sm:$0xff]
      %v690 = vld [vmem:[%s461 + $0x24] sm:$0xff]
      %v691 = vld [vmem:[%s461 + $0x2c] sm:$0xff]
      %v692 = vld [vmem:[%s461 + $0x34] sm:$0xff]
      %v693 = vld [vmem:[%s461 + $0x3c] sm:$0xff]
      %v694 = vld [vmem:[%s461 + $0x44] sm:$0xff]
      %v695 = vld [vmem:[%s461 + $0x4c] sm:$0xff]
      %v696 = vld [vmem:[%s461 + $0x54] sm:$0xff]
      %v697 = vld [vmem:[%s461 + $0x5c] sm:$0xff]
      %v698 = vld [vmem:[%s461 + $0x64] sm:$0xff]
      %v699 = vld [vmem:[%s461 + $0x6c] sm:$0xff]
      %v700 = vld [vmem:[%s461 + $0x74] sm:$0xff]
      %v701 = vld [vmem:[%s461 + $0x7c] sm:$0xff]
      %v702 = vld [vmem:[%s461 + $0x84] sm:$0xff]
      %v703 = vld [vmem:[%s461 + $0x8c] sm:$0xff]
      %v704 = vld [vmem:[%s461 + $0x94] sm:$0xff]
      %v705 = vld [vmem:[%s461 + $0x9c] sm:$0xff]
      %v706 = vld [vmem:[%s461 + $0xa4] sm:$0xff]
      %v707 = vld [vmem:[%s461 + $0xac] sm:$0xff]
      %v708 = vld [vmem:[%s461 + $0xb4] sm:$0xff]
      %v709 = vld [vmem:[%s461 + $0xbc] sm:$0xff]
      %v710 = vld [vmem:[%s461 + $0xc4] sm:$0xff]
      %v711 = vld [vmem:[%s461 + $0xcc] sm:$0xff]
      %v712 = vld [vmem:[%s461 + $0xd4] sm:$0xff]
      %v713 = vld [vmem:[%s461 + $0xdc] sm:$0xff]
      %v714 = vld [vmem:[%s461 + $0xe4] sm:$0xff]
      %v715 = vld [vmem:[%s461 + $0xec] sm:$0xff]
      %v716 = vld [vmem:[%s461 + $0xf4] sm:$0xff]
      %v717 = vld [vmem:[%s461 + $0xfc] sm:$0xff]
      %v718 = vld [vmem:[%s461 + $0x104] sm:$0xff]
      %v719 = vld [vmem:[%s461 + $0x10c] sm:$0xff]
      %v720 = vld [vmem:[%s461 + $0x114] sm:$0xff]
      %v721 = vld [vmem:[%s461 + $0x11c] sm:$0xff]
      %v722 = vld [vmem:[%s461 + $0x124] sm:$0xff]
      %v723 = vld [vmem:[%s461 + $0x12c] sm:$0x3f]
      %v724 = vpack.c.bf16 %v689, %v688
      %v725 = vpack.c.bf16 %v691, %v690
      %v726 = vpack.c.bf16 %v693, %v692
      %v727 = vpack.c.bf16 %v695, %v694
      %v728 = vpack.c.bf16 %v697, %v696
      %v729 = vpack.c.bf16 %v699, %v698
      %v730 = vpack.c.bf16 %v701, %v700
      %v731 = vpack.c.bf16 %v703, %v702
      %v732 = vpack.c.bf16 %v705, %v704
      %v733 = vpack.c.bf16 %v707, %v706
      %v734 = vpack.c.bf16 %v709, %v708
      %v735 = vpack.c.bf16 %v711, %v710
      %v736 = vpack.c.bf16 %v713, %v712
      %v737 = vpack.c.bf16 %v715, %v714
      %v738 = vpack.c.bf16 %v717, %v716
      %v739 = vpack.c.bf16 %v719, %v718
      %v740 = vpack.c.bf16 %v721, %v720
      %v741 = vpack.c.bf16 %v723, %v722
      %v742 = vld [vmem:[%s461 + $0x12c] sm:$0xff]
      %v743 = vld [vmem:[%s461 + $0x134] sm:$0xff]
      %v744 = vld [vmem:[%s461 + $0x13c] sm:$0x3f]
      %v745 = vpack.c.bf16 %v742, %v722
      %v746 = vpack.c.bf16 %v744, %v743
      %v747 = vld [vmem:[%s461 + $0x25] sm:$0xff]
      %v748 = vld [vmem:[%s461 + $0x2d] sm:$0xff]
      %v749 = vld [vmem:[%s461 + $0x35] sm:$0xff]
      %v750 = vld [vmem:[%s461 + $0x3d] sm:$0xff]
      %v751 = vld [vmem:[%s461 + $0x45] sm:$0xff]
      %v752 = vld [vmem:[%s461 + $0x4d] sm:$0xff]
      %v753 = vld [vmem:[%s461 + $0x55] sm:$0xff]
      %v754 = vld [vmem:[%s461 + $0x5d] sm:$0xff]
      %v755 = vld [vmem:[%s461 + $0x65] sm:$0xff]
      %v756 = vld [vmem:[%s461 + $0x6d] sm:$0xff]
      %v757 = vld [vmem:[%s461 + $0x75] sm:$0xff]
      %v758 = vld [vmem:[%s461 + $0x7d] sm:$0xff]
      %v759 = vld [vmem:[%s461 + $0x85] sm:$0xff]
      %v760 = vld [vmem:[%s461 + $0x8d] sm:$0xff]
      %v761 = vld [vmem:[%s461 + $0x95] sm:$0xff]
      %v762 = vld [vmem:[%s461 + $0x9d] sm:$0xff]
      %v763 = vld [vmem:[%s461 + $0xa5] sm:$0xff]
      %v764 = vld [vmem:[%s461 + $0xad] sm:$0xff]
      %v765 = vld [vmem:[%s461 + $0xb5] sm:$0xff]
      %v766 = vld [vmem:[%s461 + $0xbd] sm:$0xff]
      %v767 = vld [vmem:[%s461 + $0xc5] sm:$0xff]
      %v768 = vld [vmem:[%s461 + $0xcd] sm:$0xff]
      %v769 = vld [vmem:[%s461 + $0xd5] sm:$0xff]
      %v770 = vld [vmem:[%s461 + $0xdd] sm:$0xff]
      %v771 = vld [vmem:[%s461 + $0xe5] sm:$0xff]
      %v772 = vld [vmem:[%s461 + $0xed] sm:$0xff]
      %v773 = vld [vmem:[%s461 + $0xf5] sm:$0xff]
      %v774 = vld [vmem:[%s461 + $0xfd] sm:$0xff]
      %v775 = vld [vmem:[%s461 + $0x105] sm:$0xff]
      %v776 = vld [vmem:[%s461 + $0x10d] sm:$0xff]
      %v777 = vld [vmem:[%s461 + $0x115] sm:$0xff]
      %v778 = vld [vmem:[%s461 + $0x11d] sm:$0xff]
      %v779 = vld [vmem:[%s461 + $0x125] sm:$0xff]
      %v780 = vld [vmem:[%s461 + $0x12d] sm:$0xff]
      %v781 = vld [vmem:[%s461 + $0x135] sm:$0xff]
      %v782 = vld [vmem:[%s461 + $0x13d] sm:$0x3f]
      %v783 = vpack.c.bf16 %v748, %v747
      %v784 = vpack.c.bf16 %v750, %v749
      %v785 = vpack.c.bf16 %v752, %v751
      %v786 = vpack.c.bf16 %v754, %v753
      %v787 = vpack.c.bf16 %v756, %v755
      %v788 = vpack.c.bf16 %v758, %v757
      %v789 = vpack.c.bf16 %v760, %v759
      %v790 = vpack.c.bf16 %v762, %v761
      %v791 = vpack.c.bf16 %v764, %v763
      %v792 = vpack.c.bf16 %v766, %v765
      %v793 = vpack.c.bf16 %v768, %v767
      %v794 = vpack.c.bf16 %v770, %v769
      %v795 = vpack.c.bf16 %v772, %v771
      %v796 = vpack.c.bf16 %v774, %v773
      %v797 = vpack.c.bf16 %v776, %v775
      %v798 = vpack.c.bf16 %v778, %v777
      %v799 = vpack.c.bf16 %v780, %v779
      %v800 = vpack.c.bf16 %v782, %v781
      %v801 = vld [vmem:[%s461 + $0x26] sm:$0xff]
      %v802 = vld [vmem:[%s461 + $0x2e] sm:$0xff]
      %v803 = vld [vmem:[%s461 + $0x36] sm:$0xff]
      %v804 = vld [vmem:[%s461 + $0x3e] sm:$0xff]
      %v805 = vld [vmem:[%s461 + $0x46] sm:$0xff]
      %v806 = vld [vmem:[%s461 + $0x4e] sm:$0xff]
      %v807 = vld [vmem:[%s461 + $0x56] sm:$0xff]
      %v808 = vld [vmem:[%s461 + $0x5e] sm:$0xff]
      %v809 = vld [vmem:[%s461 + $0x66] sm:$0xff]
      %v810 = vld [vmem:[%s461 + $0x6e] sm:$0xff]
      %v811 = vld [vmem:[%s461 + $0x76] sm:$0xff]
      %v812 = vld [vmem:[%s461 + $0x7e] sm:$0xff]
      %v813 = vld [vmem:[%s461 + $0x86] sm:$0xff]
      %v814 = vld [vmem:[%s461 + $0x8e] sm:$0xff]
      %v815 = vld [vmem:[%s461 + $0x96] sm:$0xff]
      %v816 = vld [vmem:[%s461 + $0x9e] sm:$0xff]
      %v817 = vld [vmem:[%s461 + $0xa6] sm:$0xff]
      %v818 = vld [vmem:[%s461 + $0xae] sm:$0xff]
      %v819 = vld [vmem:[%s461 + $0xb6] sm:$0xff]
      %v820 = vld [vmem:[%s461 + $0xbe] sm:$0xff]
      %v821 = vld [vmem:[%s461 + $0xc6] sm:$0xff]
      %v822 = vld [vmem:[%s461 + $0xce] sm:$0xff]
      %v823 = vld [vmem:[%s461 + $0xd6] sm:$0xff]
      %v824 = vld [vmem:[%s461 + $0xde] sm:$0xff]
      %v825 = vld [vmem:[%s461 + $0xe6] sm:$0xff]
      %v826 = vld [vmem:[%s461 + $0xee] sm:$0xff]
      %v827 = vld [vmem:[%s461 + $0xf6] sm:$0xff]
      %v828 = vld [vmem:[%s461 + $0xfe] sm:$0xff]
      %v829 = vld [vmem:[%s461 + $0x106] sm:$0xff]
      %v830 = vld [vmem:[%s461 + $0x10e] sm:$0xff]
      %v831 = vld [vmem:[%s461 + $0x116] sm:$0xff]
      %v832 = vld [vmem:[%s461 + $0x11e] sm:$0xff]
      %v833 = vld [vmem:[%s461 + $0x126] sm:$0xff]
      %v834 = vld [vmem:[%s461 + $0x12e] sm:$0xff]
      %v835 = vld [vmem:[%s461 + $0x136] sm:$0xff]
      %v836 = vld [vmem:[%s461 + $0x13e] sm:$0x3f]
      %v837 = vpack.c.bf16 %v802, %v801
      %v838 = vpack.c.bf16 %v804, %v803
      %v839 = vpack.c.bf16 %v806, %v805
      %v840 = vpack.c.bf16 %v808, %v807
      %v841 = vpack.c.bf16 %v810, %v809
      %v842 = vpack.c.bf16 %v812, %v811
      %v843 = vpack.c.bf16 %v814, %v813
      %v844 = vpack.c.bf16 %v816, %v815
      %v845 = vpack.c.bf16 %v818, %v817
      %v846 = vpack.c.bf16 %v820, %v819
      %v847 = vpack.c.bf16 %v822, %v821
      %v848 = vpack.c.bf16 %v824, %v823
      %v849 = vpack.c.bf16 %v826, %v825
      %v850 = vpack.c.bf16 %v828, %v827
      %v851 = vpack.c.bf16 %v830, %v829
      %v852 = vpack.c.bf16 %v832, %v831
      %v853 = vpack.c.bf16 %v834, %v833
      %v854 = vpack.c.bf16 %v836, %v835
      %v855 = vld [vmem:[%s1] sm:$0xf]
      %v856 = vld [vmem:[%s1 + $0x4] sm:$0xf]
      %v857 = vld [vmem:[%s1 + $0x8] sm:$0xf]
      %v858 = vld [vmem:[%s1 + $0xc] sm:$0xf]
      %v859 = vld [vmem:[%s1 + $0x10] sm:$0xf]
      %v860 = vld [vmem:[%s1 + $0x14] sm:$0xf]
      %v861 = vld [vmem:[%s1 + $0x18] sm:$0xf]
      %v862 = vld [vmem:[%s1 + $0x1c] sm:$0xf]
      %v863 = vld [vmem:[%s1 + $0x20] sm:$0xf]
      %v864 = vld [vmem:[%s1 + $0x24] sm:$0xf]
      %v865 = vld [vmem:[%s1 + $0x28] sm:$0xf]
      %v866 = vld [vmem:[%s1 + $0x2c] sm:$0xf]
      %v867 = vld [vmem:[%s1 + $0x30] sm:$0xf]
      %v868 = vld [vmem:[%s1 + $0x34] sm:$0xf]
      %v869 = vld [vmem:[%s1 + $0x38] sm:$0xf]
      %v870 = vld [vmem:[%s1 + $0x3c] sm:$0xf]
      %v871 = vld [vmem:[%s1 + $0x40] sm:$0xf]
      %v872 = vld [vmem:[%s1 + $0x44] sm:$0xf]
      %v873 = vld [vmem:[%s1 + $0x48] sm:$0xf]
      %v874 = vld [vmem:[%s1 + $0x4c] sm:$0xf]
      %v875 = vld [vmem:[%s1 + $0x50] sm:$0xf]
      %v876 = vld [vmem:[%s1 + $0x54] sm:$0xf]
      %v877 = vld [vmem:[%s1 + $0x58] sm:$0xf]
      %v878 = vld [vmem:[%s1 + $0x5c] sm:$0xf]
      %v879 = vld [vmem:[%s1 + $0x60] sm:$0xf]
      %v880 = vld [vmem:[%s1 + $0x64] sm:$0xf]
      %v881 = vld [vmem:[%s1 + $0x68] sm:$0xf]
      %v882 = vld [vmem:[%s1 + $0x6c] sm:$0xf]
      %v883 = vld [vmem:[%s1 + $0x70] sm:$0xf]
      %v884 = vld [vmem:[%s1 + $0x74] sm:$0xf]
      %v885 = vld [vmem:[%s1 + $0x78] sm:$0xf]
      %v886 = vld [vmem:[%s1 + $0x7c] sm:$0xf]
      %v887 = vld [vmem:[%s1 + $0x80] sm:$0xf]
      %v888 = vld [vmem:[%s1 + $0x84] sm:$0xf]
      %v889 = vld [vmem:[%s1 + $0x88] sm:$0xf]
      %v890 = vld [vmem:[%s1 + $0x8c] sm:$0xf]
      %v891 = vld [vmem:[%s1 + $0x90] sm:$0xf]
      %v892 = vld [vmem:[%s1 + $0x94] sm:$0xf]
      %v893 = vld [vmem:[%s1 + $0x98] sm:$0xf]
      %v894 = vld [vmem:[%s1 + $0x9c] sm:$0xf]
      %v895 = vld [vmem:[%s1 + $0xa0] sm:$0xf]
      %v896 = vld [vmem:[%s1 + $0xa4] sm:$0xf]
      %v897 = vld [vmem:[%s1 + $0xa8] sm:$0xf]
      %v898 = vld [vmem:[%s1 + $0xac] sm:$0xf]
      %v899 = vld [vmem:[%s1 + $0xb0] sm:$0xf]
      %v900 = vld [vmem:[%s1 + $0xb4] sm:$0xf]
      %v901 = vld [vmem:[%s1 + $0xb8] sm:$0xf]
      %v902 = vld [vmem:[%s1 + $0xbc] sm:$0xf]
      %v903 = vld [vmem:[%s1 + $0xc0] sm:$0xf]
      %v904 = vld [vmem:[%s1 + $0xc4] sm:$0xf]
      %v905 = vld [vmem:[%s1 + $0xc8] sm:$0xf]
      %v906 = vld [vmem:[%s1 + $0xcc] sm:$0xf]
      %v907 = vld [vmem:[%s1 + $0xd0] sm:$0xf]
      %v908 = vld [vmem:[%s1 + $0xd4] sm:$0xf]
      %v909 = vld [vmem:[%s1 + $0xd8] sm:$0xf]
      %v910 = vld [vmem:[%s1 + $0xdc] sm:$0xf]
      %v911 = vld [vmem:[%s1 + $0xe0] sm:$0xf]
      %v912 = vld [vmem:[%s1 + $0xe4] sm:$0xf]
      %v913 = vld [vmem:[%s1 + $0xe8] sm:$0xf]
      %v914 = vld [vmem:[%s1 + $0xec] sm:$0xf]
      %v915 = vld [vmem:[%s1 + $0xf0] sm:$0xf]
      %v916 = vld [vmem:[%s1 + $0xf4] sm:$0xf]
      %v917 = vld [vmem:[%s1 + $0xf8] sm:$0xf]
      %v918 = vld [vmem:[%s1 + $0xfc] sm:$0xf]
      %v919 = vld [vmem:[%s1 + $0x100] sm:$0xf]
      %v920 = vld [vmem:[%s1 + $0x104] sm:$0xf]
      %v921 = vld [vmem:[%s1 + $0x108] sm:$0xf]
      %v922 = vld [vmem:[%s1 + $0x10c] sm:$0xf]
      %v923 = vld [vmem:[%s1 + $0x110] sm:$0xf]
      %v924 = vld [vmem:[%s1 + $0x114] sm:$0xf]
      %v925 = vld [vmem:[%s1 + $0x118] sm:$0xf]
      %v926 = vld [vmem:[%s1 + $0x11c] sm:$0xf]
      %v927 = vld [vmem:[%s1 + $0x120] sm:$0xf]
      %v928 = vld [vmem:[%s1 + $0x124] sm:$0xf]
      %v929 = vld [vmem:[%s1 + $0x128] sm:$0xf]
      %v930 = vld [vmem:[%s1 + $0x12c] sm:$0xf]
      %v931 = vld [vmem:[%s1 + $0x130] sm:$0xf]
      %v932 = vld [vmem:[%s1 + $0x134] sm:$0xf]
      %v933 = vld [vmem:[%s1 + $0x138] sm:$0xf]
      %v934 = vld [vmem:[%s1 + $0x13c] sm:$0xf]
      %v935 = vld [vmem:[%s1 + $0x140] sm:$0xf]
      %v936 = vld [vmem:[%s1 + $0x144] sm:$0xf]
      %v937 = vld [vmem:[%s1 + $0x148] sm:$0xf]
      %v938 = vld [vmem:[%s1 + $0x14c] sm:$0xf]
      %v939 = vld [vmem:[%s1 + $0x150] sm:$0xf]
      %v940 = vld [vmem:[%s1 + $0x154] sm:$0xf]
      %v941 = vld [vmem:[%s1 + $0x158] sm:$0xf]
      %v942 = vld [vmem:[%s1 + $0x15c] sm:$0xf]
      %v943 = vld [vmem:[%s1 + $0x160] sm:$0xf]
      %v944 = vld [vmem:[%s1 + $0x164] sm:$0xf]
      %v945 = vld [vmem:[%s1 + $0x168] sm:$0xf]
      %v946 = vld [vmem:[%s1 + $0x16c] sm:$0xf]
      %v947 = vld [vmem:[%s1 + $0x170] sm:$0xf]
      %v948 = vld [vmem:[%s1 + $0x174] sm:$0xf]
      %v949 = vld [vmem:[%s1 + $0x178] sm:$0xf]
      %v950 = vld [vmem:[%s1 + $0x17c] sm:$0xf]
      %v951 = vld [vmem:[%s1 + $0x180] sm:$0xf]
      %v952 = vld [vmem:[%s1 + $0x184] sm:$0xf]
      %v953 = vld [vmem:[%s1 + $0x188] sm:$0xf]
      %v954 = vld [vmem:[%s1 + $0x18c] sm:$0xf]
      %v955 = vld [vmem:[%s1 + $0x190] sm:$0xf]
      %v956 = vld [vmem:[%s1 + $0x194] sm:$0xf]
      %v957 = vld [vmem:[%s1 + $0x198] sm:$0xf]
      %v958 = vld [vmem:[%s1 + $0x19c] sm:$0xf]
      %v959 = vld [vmem:[%s1 + $0x1a0] sm:$0xf]
      %v960 = vld [vmem:[%s1 + $0x1a4] sm:$0xf]
      %v961 = vld [vmem:[%s1 + $0x1a8] sm:$0xf]
      %v962 = vld [vmem:[%s1 + $0x1ac] sm:$0xf]
      %v963 = vld [vmem:[%s1 + $0x1b0] sm:$0xf]
      %v964 = vld [vmem:[%s1 + $0x1b4] sm:$0xf]
      %v965 = vld [vmem:[%s1 + $0x1b8] sm:$0xf]
      %v966 = vld [vmem:[%s1 + $0x1bc] sm:$0xf]
      %v967 = vld [vmem:[%s1 + $0x1c0] sm:$0xf]
      %v968 = vld [vmem:[%s1 + $0x1c4] sm:$0xf]
      %v969 = vld [vmem:[%s1 + $0x1c8] sm:$0xf]
      %v970 = vld [vmem:[%s1 + $0x1cc] sm:$0xf]
      %v971 = vld [vmem:[%s1 + $0x1d0] sm:$0xf]
      %v972 = vld [vmem:[%s1 + $0x1d4] sm:$0xf]
      %v973 = vld [vmem:[%s1 + $0x1d8] sm:$0xf]
      %v974 = vld [vmem:[%s1 + $0x1dc] sm:$0xf]
      %v975 = vld [vmem:[%s1 + $0x1e0] sm:$0xf]
      %v976 = vld [vmem:[%s1 + $0x1e4] sm:$0xf]
      %v977 = vld [vmem:[%s1 + $0x1e8] sm:$0xf]
      %v978 = vld [vmem:[%s1 + $0x1ec] sm:$0xf]
      %v979 = vld [vmem:[%s1 + $0x1f0] sm:$0xf]
      %v980 = vld [vmem:[%s1 + $0x1f4] sm:$0xf]
      %v981 = vld [vmem:[%s1 + $0x1f8] sm:$0xf]
      %v982 = vld [vmem:[%s1 + $0x1fc] sm:$0xf]
      %v983 = vld [vmem:[%s1 + $0x200] sm:$0xf]
      %v984 = vld [vmem:[%s1 + $0x204] sm:$0xf]
      %v985 = vld [vmem:[%s1 + $0x208] sm:$0xf]
      %v986 = vld [vmem:[%s1 + $0x20c] sm:$0xf]
      %v987 = vld [vmem:[%s1 + $0x210] sm:$0xf]
      %v988 = vld [vmem:[%s1 + $0x214] sm:$0xf]
      %v989 = vld [vmem:[%s1 + $0x218] sm:$0xf]
      %v990 = vld [vmem:[%s1 + $0x21c] sm:$0xf]
      %v991 = vld [vmem:[%s1 + $0x220] sm:$0xf]
      %v992 = vld [vmem:[%s1 + $0x224] sm:$0xf]
      %v993 = vld [vmem:[%s1 + $0x228] sm:$0xf]
      %v994 = vld [vmem:[%s1 + $0x22c] sm:$0xf]
      %v995 = vld [vmem:[%s1 + $0x230] sm:$0xf]
      %v996 = vld [vmem:[%s1 + $0x234] sm:$0xf]
      %v997 = vld [vmem:[%s1 + $0x238] sm:$0xf]
      %v998 = vld [vmem:[%s1 + $0x23c] sm:$0xf]
      %v999 = vld [vmem:[%s2] sm:$0x1]
      %v1001 = vlaneseq
      %v1002 = vshrl.u32 %v1001, 7
      %v1003 = vsub.s32 0, %v1002
      %v1004 = vrot.slane %v999, %v1003
      %v1150 = vunpack.c.l.b16 %v855
      %v1151 = vunpack.c.l.b16 %v856
      %v1152 = vunpack.c.l.b16 %v857
      %v1153 = vunpack.c.l.b16 %v858
      %v1154 = vunpack.c.l.b16 %v859
      %v1155 = vunpack.c.l.b16 %v860
      %v1156 = vunpack.c.l.b16 %v861
      %v1157 = vunpack.c.l.b16 %v862
      %v1158 = vunpack.c.l.b16 %v863
      %v1159 = vunpack.c.l.b16 %v864
      %v1160 = vunpack.c.l.b16 %v865
      %v1161 = vunpack.c.l.b16 %v866
      %v1162 = vunpack.c.l.b16 %v867
      %v1163 = vunpack.c.l.b16 %v868
      %v1164 = vunpack.c.l.b16 %v869
      %v1165 = vunpack.c.l.b16 %v870
      %v1166 = vunpack.c.l.b16 %v871
      %v1167 = vunpack.c.l.b16 %v872
      %v1168 = vunpack.c.l.b16 %v873
      %v1169 = vunpack.c.l.b16 %v874
      %v1170 = vunpack.c.l.b16 %v875
      %v1171 = vunpack.c.l.b16 %v876
      %v1172 = vunpack.c.l.b16 %v877
      %v1173 = vunpack.c.l.b16 %v878
      %v1174 = vunpack.c.l.b16 %v879
      %v1175 = vunpack.c.l.b16 %v880
      %v1176 = vunpack.c.l.b16 %v881
      %v1177 = vunpack.c.l.b16 %v882
      %v1178 = vunpack.c.l.b16 %v883
      %v1179 = vunpack.c.l.b16 %v884
      %v1180 = vunpack.c.l.b16 %v885
      %v1181 = vunpack.c.l.b16 %v886
      %v1182 = vunpack.c.l.b16 %v887
      %v1183 = vunpack.c.l.b16 %v888
      %v1184 = vunpack.c.l.b16 %v889
      %v1185 = vunpack.c.l.b16 %v890
      %v1186 = vunpack.c.l.b16 %v891
      %v1187 = vunpack.c.l.b16 %v892
      %v1188 = vunpack.c.l.b16 %v893
      %v1189 = vunpack.c.l.b16 %v894
      %v1190 = vunpack.c.l.b16 %v895
      %v1191 = vunpack.c.l.b16 %v896
      %v1192 = vunpack.c.l.b16 %v897
      %v1193 = vunpack.c.l.b16 %v898
      %v1194 = vunpack.c.l.b16 %v899
      %v1195 = vunpack.c.l.b16 %v900
      %v1196 = vunpack.c.l.b16 %v901
      %v1197 = vunpack.c.l.b16 %v902
      %v1198 = vunpack.c.l.b16 %v903
      %v1199 = vunpack.c.l.b16 %v904
      %v1200 = vunpack.c.l.b16 %v905
      %v1201 = vunpack.c.l.b16 %v906
      %v1202 = vunpack.c.l.b16 %v907
      %v1203 = vunpack.c.l.b16 %v908
      %v1204 = vunpack.c.l.b16 %v909
      %v1205 = vunpack.c.l.b16 %v910
      %v1206 = vunpack.c.l.b16 %v911
      %v1207 = vunpack.c.l.b16 %v912
      %v1208 = vunpack.c.l.b16 %v913
      %v1209 = vunpack.c.l.b16 %v914
      %v1210 = vunpack.c.l.b16 %v915
      %v1211 = vunpack.c.l.b16 %v916
      %v1212 = vunpack.c.l.b16 %v917
      %v1213 = vunpack.c.l.b16 %v918
      %v1214 = vunpack.c.l.b16 %v919
      %v1215 = vunpack.c.l.b16 %v920
      %v1216 = vunpack.c.l.b16 %v921
      %v1217 = vunpack.c.l.b16 %v922
      %v1218 = vunpack.c.l.b16 %v923
      %v1219 = vunpack.c.l.b16 %v924
      %v1220 = vunpack.c.l.b16 %v925
      %v1221 = vunpack.c.l.b16 %v926
      %v1222 = vunpack.c.l.b16 %v927
      %v1223 = vunpack.c.l.b16 %v928
      %v1224 = vunpack.c.l.b16 %v929
      %v1225 = vunpack.c.l.b16 %v930
      %v1226 = vunpack.c.l.b16 %v931
      %v1227 = vunpack.c.l.b16 %v932
      %v1228 = vunpack.c.l.b16 %v933
      %v1229 = vunpack.c.l.b16 %v934
      %v1230 = vunpack.c.l.b16 %v935
      %v1231 = vunpack.c.l.b16 %v936
      %v1232 = vunpack.c.l.b16 %v937
      %v1233 = vunpack.c.l.b16 %v938
      %v1234 = vunpack.c.l.b16 %v939
      %v1235 = vunpack.c.l.b16 %v940
      %v1236 = vunpack.c.l.b16 %v941
      %v1237 = vunpack.c.l.b16 %v942
      %v1238 = vunpack.c.l.b16 %v943
      %v1239 = vunpack.c.l.b16 %v944
      %v1240 = vunpack.c.l.b16 %v945
      %v1241 = vunpack.c.l.b16 %v946
      %v1242 = vunpack.c.l.b16 %v947
      %v1243 = vunpack.c.l.b16 %v948
      %v1244 = vunpack.c.l.b16 %v949
      %v1245 = vunpack.c.l.b16 %v950
      %v1246 = vunpack.c.l.b16 %v951
      %v1247 = vunpack.c.l.b16 %v952
      %v1248 = vunpack.c.l.b16 %v953
      %v1249 = vunpack.c.l.b16 %v954
      %v1250 = vunpack.c.l.b16 %v955
      %v1251 = vunpack.c.l.b16 %v956
      %v1252 = vunpack.c.l.b16 %v957
      %v1253 = vunpack.c.l.b16 %v958
      %v1254 = vunpack.c.l.b16 %v959
      %v1255 = vunpack.c.l.b16 %v960
      %v1256 = vunpack.c.l.b16 %v961
      %v1257 = vunpack.c.l.b16 %v962
      %v1258 = vunpack.c.l.b16 %v963
      %v1259 = vunpack.c.l.b16 %v964
      %v1260 = vunpack.c.l.b16 %v965
      %v1261 = vunpack.c.l.b16 %v966
      %v1262 = vunpack.c.l.b16 %v967
      %v1263 = vunpack.c.l.b16 %v968
      %v1264 = vunpack.c.l.b16 %v969
      %v1265 = vunpack.c.l.b16 %v970
      %v1266 = vunpack.c.l.b16 %v971
      %v1267 = vunpack.c.l.b16 %v972
      %v1268 = vunpack.c.l.b16 %v973
      %v1269 = vunpack.c.l.b16 %v974
      %v1270 = vunpack.c.l.b16 %v975
      %v1271 = vunpack.c.l.b16 %v976
      %v1272 = vunpack.c.l.b16 %v977
      %v1273 = vunpack.c.l.b16 %v978
      %v1274 = vunpack.c.l.b16 %v979
      %v1275 = vunpack.c.l.b16 %v980
      %v1276 = vunpack.c.l.b16 %v981
      %v1277 = vunpack.c.l.b16 %v982
      %v1278 = vunpack.c.l.b16 %v983
      %v1279 = vunpack.c.l.b16 %v984
      %v1280 = vunpack.c.l.b16 %v985
      %v1281 = vunpack.c.l.b16 %v986
      %v1282 = vunpack.c.l.b16 %v987
      %v1283 = vunpack.c.l.b16 %v988
      %v1284 = vunpack.c.l.b16 %v989
      %v1285 = vunpack.c.l.b16 %v990
      %v1286 = vunpack.c.l.b16 %v991
      %v1287 = vunpack.c.l.b16 %v992
      %v1288 = vunpack.c.l.b16 %v993
      %v1289 = vunpack.c.l.b16 %v994
      %v1290 = vunpack.c.l.b16 %v995
      %v1291 = vunpack.c.l.b16 %v996
      %v1292 = vunpack.c.l.b16 %v997
      %v1293 = vunpack.c.l.b16 %v998
      %v1294 = vpack.c.b16 %v1151, %v1150
      %v1295 = vpack.c.b16 %v1153, %v1152
      %v1296 = vpack.c.b16 %v1155, %v1154
      %v1297 = vpack.c.b16 %v1157, %v1156
      %v1298 = vpack.c.b16 %v1159, %v1158
      %v1299 = vpack.c.b16 %v1161, %v1160
      %v1300 = vpack.c.b16 %v1163, %v1162
      %v1301 = vpack.c.b16 %v1165, %v1164
      %v1302 = vpack.c.b16 %v1167, %v1166
      %v1303 = vpack.c.b16 %v1169, %v1168
      %v1304 = vpack.c.b16 %v1171, %v1170
      %v1305 = vpack.c.b16 %v1173, %v1172
      %v1306 = vpack.c.b16 %v1175, %v1174
      %v1307 = vpack.c.b16 %v1177, %v1176
      %v1308 = vpack.c.b16 %v1179, %v1178
      %v1309 = vpack.c.b16 %v1181, %v1180
      %v1310 = vpack.c.b16 %v1183, %v1182
      %v1311 = vpack.c.b16 %v1185, %v1184
      %v1312 = vpack.c.b16 %v1187, %v1186
      %v1313 = vpack.c.b16 %v1189, %v1188
      %v1314 = vpack.c.b16 %v1191, %v1190
      %v1315 = vpack.c.b16 %v1193, %v1192
      %v1316 = vpack.c.b16 %v1195, %v1194
      %v1317 = vpack.c.b16 %v1197, %v1196
      %v1318 = vpack.c.b16 %v1199, %v1198
      %v1319 = vpack.c.b16 %v1201, %v1200
      %v1320 = vpack.c.b16 %v1203, %v1202
      %v1321 = vpack.c.b16 %v1205, %v1204
      %v1322 = vpack.c.b16 %v1207, %v1206
      %v1323 = vpack.c.b16 %v1209, %v1208
      %v1324 = vpack.c.b16 %v1211, %v1210
      %v1325 = vpack.c.b16 %v1213, %v1212
      %v1326 = vpack.c.b16 %v1215, %v1214
      %v1327 = vpack.c.b16 %v1217, %v1216
      %v1328 = vpack.c.b16 %v1219, %v1218
      %v1329 = vpack.c.b16 %v1221, %v1220
      %v1330 = vpack.c.b16 %v1223, %v1222
      %v1331 = vpack.c.b16 %v1225, %v1224
      %v1332 = vpack.c.b16 %v1227, %v1226
      %v1333 = vpack.c.b16 %v1229, %v1228
      %v1334 = vpack.c.b16 %v1231, %v1230
      %v1335 = vpack.c.b16 %v1233, %v1232
      %v1336 = vpack.c.b16 %v1235, %v1234
      %v1337 = vpack.c.b16 %v1237, %v1236
      %v1338 = vpack.c.b16 %v1239, %v1238
      %v1339 = vpack.c.b16 %v1241, %v1240
      %v1340 = vpack.c.b16 %v1243, %v1242
      %v1341 = vpack.c.b16 %v1245, %v1244
      %v1342 = vpack.c.b16 %v1247, %v1246
      %v1343 = vpack.c.b16 %v1249, %v1248
      %v1344 = vpack.c.b16 %v1251, %v1250
      %v1345 = vpack.c.b16 %v1253, %v1252
      %v1346 = vpack.c.b16 %v1255, %v1254
      %v1347 = vpack.c.b16 %v1257, %v1256
      %v1348 = vpack.c.b16 %v1259, %v1258
      %v1349 = vpack.c.b16 %v1261, %v1260
      %v1350 = vpack.c.b16 %v1263, %v1262
      %v1351 = vpack.c.b16 %v1265, %v1264
      %v1352 = vpack.c.b16 %v1267, %v1266
      %v1353 = vpack.c.b16 %v1269, %v1268
      %v1354 = vpack.c.b16 %v1271, %v1270
      %v1355 = vpack.c.b16 %v1273, %v1272
      %v1356 = vpack.c.b16 %v1275, %v1274
      %v1357 = vpack.c.b16 %v1277, %v1276
      %v1358 = vpack.c.b16 %v1279, %v1278
      %v1359 = vpack.c.b16 %v1281, %v1280
      %v1360 = vpack.c.b16 %v1283, %v1282
      %v1361 = vpack.c.b16 %v1285, %v1284
      %v1362 = vpack.c.b16 %v1287, %v1286
      %v1363 = vpack.c.b16 %v1289, %v1288
      %v1364 = vpack.c.b16 %v1291, %v1290
      %v1365 = vpack.c.b16 %v1293, %v1292
      %1438 = vmatprep.subr.bf16.mxu0 0
      %1439 = vmatpush1.bf16.msra.mxu0 %v1294
      %1440 = vmatprep.subr.bf16.mxu0 0
      %1441 = vmatpush1.bf16.msra.mxu0 %v1295
      %1442 = vmatprep.subr.bf16.mxu0 0
      %1443 = vmatpush1.bf16.msra.mxu0 %v1296
      %1444 = vmatprep.subr.bf16.mxu0 0
      %1445 = vmatpush1.bf16.msra.mxu0 %v1297
      %1446 = vmatprep.subr.bf16.mxu0 0
      %1447 = vmatpush1.bf16.msra.mxu0 %v1298
      %1448 = vmatprep.subr.bf16.mxu0 0
      %1449 = vmatpush1.bf16.msra.mxu0 %v1299
      %1450 = vmatprep.subr.bf16.mxu0 0
      %1451 = vmatpush1.bf16.msra.mxu0 %v1300
      %1452 = vmatprep.subr.bf16.mxu0 0
      %1453 = vmatpush1.bf16.msra.mxu0 %v1301
      %1454 = vmatprep.subr.bf16.mxu0 0
      %1455 = vmatpush1.bf16.msra.mxu0 %v1302
      %1456 = vmatprep.subr.bf16.mxu0 0
      %1457 = vmatpush1.bf16.msra.mxu0 %v1303
      %1458 = vmatprep.subr.bf16.mxu0 0
      %1459 = vmatpush1.bf16.msra.mxu0 %v1304
      %1460 = vmatprep.subr.bf16.mxu0 0
      %1461 = vmatpush1.bf16.msra.mxu0 %v1305
      %1462 = vmatprep.subr.bf16.mxu0 0
      %1463 = vmatpush1.bf16.msra.mxu0 %v1306
      %1464 = vmatprep.subr.bf16.mxu0 0
      %1465 = vmatpush1.bf16.msra.mxu0 %v1307
      %1466 = vmatprep.subr.bf16.mxu0 0
      %1467 = vmatpush1.bf16.msra.mxu0 %v1308
      %1468 = vmatprep.subr.bf16.mxu0 0
      %1469 = vmatpush1.bf16.msra.mxu0 %v1309
      %1470 = vmatprep.mubr.bf16.mxu0 %v557
      %1471 = vmatmul.mubr.bf16.gmra.mrb[0].mxu0 %v503
      %v1472 = vpop.f32.mrb[0].mxu0
      %v1473 = vadd.f32 %v1004, %v1472
      %v1474 = vpop.f32.mrb[0].mxu0
      %v1475 = vpop.f32.mrb[0].mxu0
      %v1476 = vadd.f32 %v1004, %v1475
      %v1477 = vpop.f32.mrb[0].mxu0
      %1478 = vmatprep.mubr.bf16.mxu0 %v558
      %1479 = vmatmul.mubr.bf16.gmra.mrb[0].mxu0 %v504
      %v1480 = vpop.f32.mrb[0].mxu0
      %v1481 = vadd.f32 %v1004, %v1480
      %v1482 = vpop.f32.mrb[0].mxu0
      %v1483 = vpop.f32.mrb[0].mxu0
      %v1484 = vadd.f32 %v1004, %v1483
      %v1485 = vpop.f32.mrb[0].mxu0
      %1486 = vmatprep.mubr.bf16.mxu0 %v559
      %1487 = vmatmul.mubr.bf16.gmra.mrb[0].mxu0 %v505
      %v1488 = vpop.f32.mrb[0].mxu0
      %v1489 = vadd.f32 %v1004, %v1488
      %v1490 = vpop.f32.mrb[0].mxu0
      %v1491 = vpop.f32.mrb[0].mxu0
      %v1492 = vadd.f32 %v1004, %v1491
      %v1493 = vpop.f32.mrb[0].mxu0
      %1494 = vmatprep.mubr.bf16.mxu0 %v560
      %1495 = vmatmul.mubr.bf16.gmra.mrb[0].mxu0 %v506
      %v1496 = vpop.f32.mrb[0].mxu0
      %v1497 = vadd.f32 %v1004, %v1496
      %v1498 = vpop.f32.mrb[0].mxu0
      %v1499 = vpop.f32.mrb[0].mxu0
      %v1500 = vadd.f32 %v1004, %v1499
      %v1501 = vpop.f32.mrb[0].mxu0
      %1502 = vmatprep.mubr.bf16.mxu0 %v561
      %1503 = vmatmul.mubr.bf16.gmra.mrb[0].mxu0 %v507
      %v1504 = vpop.f32.mrb[0].mxu0
      %v1505 = vadd.f32 %v1004, %v1504
      %v1506 = vpop.f32.mrb[0].mxu0
      %v1507 = vpop.f32.mrb[0].mxu0
      %v1508 = vadd.f32 %v1004, %v1507
      %v1509 = vpop.f32.mrb[0].mxu0
      %1510 = vmatprep.mubr.bf16.mxu0 %v562
      %1511 = vmatmul.mubr.bf16.gmra.mrb[0].mxu0 %v508
      %v1512 = vpop.f32.mrb[0].mxu0
      %v1513 = vadd.f32 %v1004, %v1512
      %v1514 = vpop.f32.mrb[0].mxu0
      %v1515 = vpop.f32.mrb[0].mxu0
      %v1516 = vadd.f32 %v1004, %v1515
      %v1517 = vpop.f32.mrb[0].mxu0
      %1518 = vmatprep.mubr.bf16.mxu0 %v563
      %1519 = vmatmul.mubr.bf16.gmra.mrb[0].mxu0 %v509
      %v1520 = vpop.f32.mrb[0].mxu0
      %v1521 = vadd.f32 %v1004, %v1520
      %v1522 = vpop.f32.mrb[0].mxu0
      %v1523 = vpop.f32.mrb[0].mxu0
      %v1524 = vadd.f32 %v1004, %v1523
      %v1525 = vpop.f32.mrb[0].mxu0
      %1526 = vmatprep.mubr.bf16.mxu0 %v564
      %1527 = vmatmul.mubr.bf16.gmra.mrb[0].mxu0 %v510
      %v1528 = vpop.f32.mrb[0].mxu0
      %v1529 = vadd.f32 %v1004, %v1528
      %v1530 = vpop.f32.mrb[0].mxu0
      %v1531 = vpop.f32.mrb[0].mxu0
      %v1532 = vadd.f32 %v1004, %v1531
      %v1533 = vpop.f32.mrb[0].mxu0
      %1534 = vmatprep.mubr.bf16.mxu0 %v565
      %1535 = vmatmul.mubr.bf16.gmra.mrb[0].mxu0 %v511
      %v1536 = vpop.f32.mrb[0].mxu0
      %v1537 = vadd.f32 %v1004, %v1536
      %v1538 = vpop.f32.mrb[0].mxu0
      %v1539 = vpop.f32.mrb[0].mxu0
      %v1540 = vadd.f32 %v1004, %v1539
      %v1541 = vpop.f32.mrb[0].mxu0
      %1542 = vmatprep.mubr.bf16.mxu0 %v566
      %1543 = vmatmul.mubr.bf16.gmra.mrb[0].mxu0 %v512
      %v1544 = vpop.f32.mrb[0].mxu0
      %v1545 = vadd.f32 %v1004, %v1544
      %v1546 = vpop.f32.mrb[0].mxu0
      %v1547 = vpop.f32.mrb[0].mxu0
      %v1548 = vadd.f32 %v1004, %v1547
      %v1549 = vpop.f32.mrb[0].mxu0
      %1550 = vmatprep.mubr.bf16.mxu0 %v567
      %1551 = vmatmul.mubr.bf16.gmra.mrb[0].mxu0 %v513
      %v1552 = vpop.f32.mrb[0].mxu0
      %v1553 = vadd.f32 %v1004, %v1552
      %v1554 = vpop.f32.mrb[0].mxu0
      %v1555 = vpop.f32.mrb[0].mxu0
      %v1556 = vadd.f32 %v1004, %v1555
      %v1557 = vpop.f32.mrb[0].mxu0
      %1558 = vmatprep.mubr.bf16.mxu0 %v568
      %1559 = vmatmul.mubr.bf16.gmra.mrb[0].mxu0 %v514
      %v1560 = vpop.f32.mrb[0].mxu0
      %v1561 = vadd.f32 %v1004, %v1560
      %v1562 = vpop.f32.mrb[0].mxu0
      %v1563 = vpop.f32.mrb[0].mxu0
      %v1564 = vadd.f32 %v1004, %v1563
      %v1565 = vpop.f32.mrb[0].mxu0
      %1566 = vmatprep.mubr.bf16.mxu0 %v569
      %1567 = vmatmul.mubr.bf16.gmra.mrb[0].mxu0 %v515
      %v1568 = vpop.f32.mrb[0].mxu0
      %v1569 = vadd.f32 %v1004, %v1568
      %v1570 = vpop.f32.mrb[0].mxu0
      %v1571 = vpop.f32.mrb[0].mxu0
      %v1572 = vadd.f32 %v1004, %v1571
      %v1573 = vpop.f32.mrb[0].mxu0
      %1574 = vmatprep.mubr.bf16.mxu0 %v570
      %1575 = vmatmul.mubr.bf16.gmra.mrb[0].mxu0 %v516
      %v1576 = vpop.f32.mrb[0].mxu0
      %v1577 = vadd.f32 %v1004, %v1576
      %v1578 = vpop.f32.mrb[0].mxu0
      %v1579 = vpop.f32.mrb[0].mxu0
      %v1580 = vadd.f32 %v1004, %v1579
      %v1581 = vpop.f32.mrb[0].mxu0
      %1582 = vmatprep.mubr.bf16.mxu0 %v571
      %1583 = vmatmul.mubr.bf16.gmra.mrb[0].mxu0 %v517
      %v1584 = vpop.f32.mrb[0].mxu0
      %v1585 = vadd.f32 %v1004, %v1584
      %v1586 = vpop.f32.mrb[0].mxu0
      %v1587 = vpop.f32.mrb[0].mxu0
      %v1588 = vadd.f32 %v1004, %v1587
      %v1589 = vpop.f32.mrb[0].mxu0
      %1590 = vmatprep.mubr.bf16.mxu0 %v572
      %1591 = vmatmul.mubr.bf16.gmra.mrb[0].mxu0 %v518
      %v1592 = vpop.f32.mrb[0].mxu0
      %v1593 = vadd.f32 %v1004, %v1592
      %v1594 = vpop.f32.mrb[0].mxu0
      %v1595 = vpop.f32.mrb[0].mxu0
      %v1596 = vadd.f32 %v1004, %v1595
      %v1597 = vpop.f32.mrb[0].mxu0
      %1598 = vmatprep.mubr.bf16.mxu0 %v573
      %1599 = vmatmul.mubr.bf16.gmra.mrb[0].mxu0 %v519
      %v1600 = vpop.f32.mrb[0].mxu0
      %v1601 = vadd.f32 %v1004, %v1600
      %v1602 = vpop.f32.mrb[0].mxu0
      %v1603 = vpop.f32.mrb[0].mxu0
      %v1604 = vadd.f32 %v1004, %v1603
      %v1605 = vpop.f32.mrb[0].mxu0
      %1606 = vmatprep.mubr.bf16.mxu0 %v574
      %1607 = vmatmul.mubr.bf16.gmra.mrb[0].mxu0 %v520
      %v1608 = vpop.f32.mrb[0].mxu0
      %v1609 = vadd.f32 %v1004, %v1608
      %v1610 = vpop.f32.mrb[0].mxu0
      %v1611 = vpop.f32.mrb[0].mxu0
      %v1612 = vadd.f32 %v1004, %v1611
      %v1613 = vpop.f32.mrb[0].mxu0
      %1614 = vdwg.mxu0
      %1615 = vmatprep.subr.bf16.mxu0 0
      %1616 = vmatpush1.bf16.msra.mxu0 %v1310
      %1617 = vmatprep.subr.bf16.mxu0 0
      %1618 = vmatpush1.bf16.msra.mxu0 %v1311
      %1619 = vmatprep.subr.bf16.mxu0 0
      %1620 = vmatpush1.bf16.msra.mxu0 %v1312
      %1621 = vmatprep.subr.bf16.mxu0 0
      %1622 = vmatpush1.bf16.msra.mxu0 %v1313
      %1623 = vmatprep.subr.bf16.mxu0 0
      %1624 = vmatpush1.bf16.msra.mxu0 %v1314
      %1625 = vmatprep.subr.bf16.mxu0 0
      %1626 = vmatpush1.bf16.msra.mxu0 %v1315
      %1627 = vmatprep.subr.bf16.mxu0 0
      %1628 = vmatpush1.bf16.msra.mxu0 %v1316
      %1629 = vmatprep.subr.bf16.mxu0 0
      %1630 = vmatpush1.bf16.msra.mxu0 %v1317
      %1631 = vmatprep.subr.bf16.mxu0 0
      %1632 = vmatpush1.bf16.msra.mxu0 %v1318
      %1633 = vmatprep.subr.bf16.mxu0 0
      %1634 = vmatpush1.bf16.msra.mxu0 %v1319
      %1635 = vmatprep.subr.bf16.mxu0 0
      %1636 = vmatpush1.bf16.msra.mxu0 %v1320
      %1637 = vmatprep.subr.bf16.mxu0 0
      %1638 = vmatpush1.bf16.msra.mxu0 %v1321
      %1639 = vmatprep.subr.bf16.mxu0 0
      %1640 = vmatpush1.bf16.msra.mxu0 %v1322
      %1641 = vmatprep.subr.bf16.mxu0 0
      %1642 = vmatpush1.bf16.msra.mxu0 %v1323
      %1643 = vmatprep.subr.bf16.mxu0 0
      %1644 = vmatpush1.bf16.msra.mxu0 %v1324
      %1645 = vmatprep.subr.bf16.mxu0 0
      %1646 = vmatpush1.bf16.msra.mxu0 %v1325
      %1647 = vmatprep.mubr.bf16.mxu0 %v612
      %1648 = vmatmul.mubr.bf16.gmra.mrb[0].mxu0 %v611
      %v1649 = vpop.f32.mrb[0].mxu0
      %v1650 = vadd.f32 %v1473, %v1649
      %v1651 = vpop.f32.mrb[0].mxu0
      %v1652 = vpop.f32.mrb[0].mxu0
      %v1653 = vadd.f32 %v1476, %v1652
      %v1654 = vpop.f32.mrb[0].mxu0
      %1655 = vmatprep.mubr.bf16.mxu0 %v613
      %1656 = vmatmul.mubr.bf16.gmra.mrb[0].mxu0 %v612
      %v1657 = vpop.f32.mrb[0].mxu0
      %v1658 = vadd.f32 %v1481, %v1657
      %v1659 = vpop.f32.mrb[0].mxu0
      %v1660 = vpop.f32.mrb[0].mxu0
      %v1661 = vadd.f32 %v1484, %v1660
      %v1662 = vpop.f32.mrb[0].mxu0
      %1663 = vmatprep.mubr.bf16.mxu0 %v614
      %1664 = vmatmul.mubr.bf16.gmra.mrb[0].mxu0 %v613
      %v1665 = vpop.f32.mrb[0].mxu0
      %v1666 = vadd.f32 %v1489, %v1665
      %v1667 = vpop.f32.mrb[0].mxu0
      %v1668 = vpop.f32.mrb[0].mxu0
      %v1669 = vadd.f32 %v1492, %v1668
      %v1670 = vpop.f32.mrb[0].mxu0
      %1671 = vmatprep.mubr.bf16.mxu0 %v615
      %1672 = vmatmul.mubr.bf16.gmra.mrb[0].mxu0 %v614
      %v1673 = vpop.f32.mrb[0].mxu0
      %v1674 = vadd.f32 %v1497, %v1673
      %v1675 = vpop.f32.mrb[0].mxu0
      %v1676 = vpop.f32.mrb[0].mxu0
      %v1677 = vadd.f32 %v1500, %v1676
      %v1678 = vpop.f32.mrb[0].mxu0
      %1679 = vmatprep.mubr.bf16.mxu0 %v616
      %1680 = vmatmul.mubr.bf16.gmra.mrb[0].mxu0 %v615
      %v1681 = vpop.f32.mrb[0].mxu0
      %v1682 = vadd.f32 %v1505, %v1681
      %v1683 = vpop.f32.mrb[0].mxu0
      %v1684 = vpop.f32.mrb[0].mxu0
      %v1685 = vadd.f32 %v1508, %v1684
      %v1686 = vpop.f32.mrb[0].mxu0
      %1687 = vmatprep.mubr.bf16.mxu0 %v617
      %1688 = vmatmul.mubr.bf16.gmra.mrb[0].mxu0 %v616
      %v1689 = vpop.f32.mrb[0].mxu0
      %v1690 = vadd.f32 %v1513, %v1689
      %v1691 = vpop.f32.mrb[0].mxu0
      %v1692 = vpop.f32.mrb[0].mxu0
      %v1693 = vadd.f32 %v1516, %v1692
      %v1694 = vpop.f32.mrb[0].mxu0
      %1695 = vmatprep.mubr.bf16.mxu0 %v618
      %1696 = vmatmul.mubr.bf16.gmra.mrb[0].mxu0 %v617
      %v1697 = vpop.f32.mrb[0].mxu0
      %v1698 = vadd.f32 %v1521, %v1697
      %v1699 = vpop.f32.mrb[0].mxu0
      %v1700 = vpop.f32.mrb[0].mxu0
      %v1701 = vadd.f32 %v1524, %v1700
      %v1702 = vpop.f32.mrb[0].mxu0
      %1703 = vmatprep.mubr.bf16.mxu0 %v619
      %1704 = vmatmul.mubr.bf16.gmra.mrb[0].mxu0 %v618
      %v1705 = vpop.f32.mrb[0].mxu0
      %v1706 = vadd.f32 %v1529, %v1705
      %v1707 = vpop.f32.mrb[0].mxu0
      %v1708 = vpop.f32.mrb[0].mxu0
      %v1709 = vadd.f32 %v1532, %v1708
      %v1710 = vpop.f32.mrb[0].mxu0
      %1711 = vmatprep.mubr.bf16.mxu0 %v620
      %1712 = vmatmul.mubr.bf16.gmra.mrb[0].mxu0 %v619
      %v1713 = vpop.f32.mrb[0].mxu0
      %v1714 = vadd.f32 %v1537, %v1713
      %v1715 = vpop.f32.mrb[0].mxu0
      %v1716 = vpop.f32.mrb[0].mxu0
      %v1717 = vadd.f32 %v1540, %v1716
      %v1718 = vpop.f32.mrb[0].mxu0
      %1719 = vmatprep.mubr.bf16.mxu0 %v621
      %1720 = vmatmul.mubr.bf16.gmra.mrb[0].mxu0 %v620
      %v1721 = vpop.f32.mrb[0].mxu0
      %v1722 = vadd.f32 %v1545, %v1721
      %v1723 = vpop.f32.mrb[0].mxu0
      %v1724 = vpop.f32.mrb[0].mxu0
      %v1725 = vadd.f32 %v1548, %v1724
      %v1726 = vpop.f32.mrb[0].mxu0
      %1727 = vmatprep.mubr.bf16.mxu0 %v622
      %1728 = vmatmul.mubr.bf16.gmra.mrb[0].mxu0 %v621
      %v1729 = vpop.f32.mrb[0].mxu0
      %v1730 = vadd.f32 %v1553, %v1729
      %v1731 = vpop.f32.mrb[0].mxu0
      %v1732 = vpop.f32.mrb[0].mxu0
      %v1733 = vadd.f32 %v1556, %v1732
      %v1734 = vpop.f32.mrb[0].mxu0
      %1735 = vmatprep.mubr.bf16.mxu0 %v623
      %1736 = vmatmul.mubr.bf16.gmra.mrb[0].mxu0 %v622
      %v1737 = vpop.f32.mrb[0].mxu0
      %v1738 = vadd.f32 %v1561, %v1737
      %v1739 = vpop.f32.mrb[0].mxu0
      %v1740 = vpop.f32.mrb[0].mxu0
      %v1741 = vadd.f32 %v1564, %v1740
      %v1742 = vpop.f32.mrb[0].mxu0
      %1743 = vmatprep.mubr.bf16.mxu0 %v624
      %1744 = vmatmul.mubr.bf16.gmra.mrb[0].mxu0 %v623
      %v1745 = vpop.f32.mrb[0].mxu0
      %v1746 = vadd.f32 %v1569, %v1745
      %v1747 = vpop.f32.mrb[0].mxu0
      %v1748 = vpop.f32.mrb[0].mxu0
      %v1749 = vadd.f32 %v1572, %v1748
      %v1750 = vpop.f32.mrb[0].mxu0
      %1751 = vmatprep.mubr.bf16.mxu0 %v625
      %1752 = vmatmul.mubr.bf16.gmra.mrb[0].mxu0 %v624
      %v1753 = vpop.f32.mrb[0].mxu0
      %v1754 = vadd.f32 %v1577, %v1753
      %v1755 = vpop.f32.mrb[0].mxu0
      %v1756 = vpop.f32.mrb[0].mxu0
      %v1757 = vadd.f32 %v1580, %v1756
      %v1758 = vpop.f32.mrb[0].mxu0
      %1759 = vmatprep.mubr.bf16.mxu0 %v626
      %1760 = vmatmul.mubr.bf16.gmra.mrb[0].mxu0 %v625
      %v1761 = vpop.f32.mrb[0].mxu0
      %v1762 = vadd.f32 %v1585, %v1761
      %v1763 = vpop.f32.mrb[0].mxu0
      %v1764 = vpop.f32.mrb[0].mxu0
      %v1765 = vadd.f32 %v1588, %v1764
      %v1766 = vpop.f32.mrb[0].mxu0
      %1767 = vmatprep.mubr.bf16.mxu0 %v627
      %1768 = vmatmul.mubr.bf16.gmra.mrb[0].mxu0 %v626
      %v1769 = vpop.f32.mrb[0].mxu0
      %v1770 = vadd.f32 %v1593, %v1769
      %v1771 = vpop.f32.mrb[0].mxu0
      %v1772 = vpop.f32.mrb[0].mxu0
      %v1773 = vadd.f32 %v1596, %v1772
      %v1774 = vpop.f32.mrb[0].mxu0
      %1775 = vmatprep.mubr.bf16.mxu0 %v632
      %1776 = vmatmul.mubr.bf16.gmra.mrb[0].mxu0 %v627
      %v1777 = vpop.f32.mrb[0].mxu0
      %v1778 = vadd.f32 %v1601, %v1777
      %v1779 = vpop.f32.mrb[0].mxu0
      %v1780 = vpop.f32.mrb[0].mxu0
      %v1781 = vadd.f32 %v1604, %v1780
      %v1782 = vpop.f32.mrb[0].mxu0
      %1783 = vmatprep.mubr.bf16.mxu0 %v633
      %1784 = vmatmul.mubr.bf16.gmra.mrb[0].mxu0 %v628
      %v1785 = vpop.f32.mrb[0].mxu0
      %v1786 = vadd.f32 %v1609, %v1785
      %v1787 = vpop.f32.mrb[0].mxu0
      %v1788 = vpop.f32.mrb[0].mxu0
      %v1789 = vadd.f32 %v1612, %v1788
      %v1790 = vpop.f32.mrb[0].mxu0
      %1791 = vdwg.mxu0
      %1792 = vmatprep.subr.bf16.mxu0 0
      %1793 = vmatpush1.bf16.msra.mxu0 %v1326
      %1794 = vmatprep.subr.bf16.mxu0 0
      %1795 = vmatpush1.bf16.msra.mxu0 %v1327
      %1796 = vmatprep.subr.bf16.mxu0 0
      %1797 = vmatpush1.bf16.msra.mxu0 %v1328
      %1798 = vmatprep.subr.bf16.mxu0 0
      %1799 = vmatpush1.bf16.msra.mxu0 %v1329
      %1800 = vmatprep.subr.bf16.mxu0 0
      %1801 = vmatpush1.bf16.msra.mxu0 %v1330
      %1802 = vmatprep.subr.bf16.mxu0 0
      %1803 = vmatpush1.bf16.msra.mxu0 %v1331
      %1804 = vmatprep.subr.bf16.mxu0 0
      %1805 = vmatpush1.bf16.msra.mxu0 %v1332
      %1806 = vmatprep.subr.bf16.mxu0 0
      %1807 = vmatpush1.bf16.msra.mxu0 %v1333
      %1808 = vmatprep.subr.bf16.mxu0 0
      %1809 = vmatpush1.bf16.msra.mxu0 %v1334
      %1810 = vmatprep.subr.bf16.mxu0 0
      %1811 = vmatpush1.bf16.msra.mxu0 %v1335
      %1812 = vmatprep.subr.bf16.mxu0 0
      %1813 = vmatpush1.bf16.msra.mxu0 %v1336
      %1814 = vmatprep.subr.bf16.mxu0 0
      %1815 = vmatpush1.bf16.msra.mxu0 %v1337
      %1816 = vmatprep.subr.bf16.mxu0 0
      %1817 = vmatpush1.bf16.msra.mxu0 %v1338
      %1818 = vmatprep.subr.bf16.mxu0 0
      %1819 = vmatpush1.bf16.msra.mxu0 %v1339
      %1820 = vmatprep.subr.bf16.mxu0 0
      %1821 = vmatpush1.bf16.msra.mxu0 %v1340
      %1822 = vmatprep.subr.bf16.mxu0 0
      %1823 = vmatpush1.bf16.msra.mxu0 %v1341
      %1824 = vmatprep.mubr.bf16.mxu0 %v724
      %1825 = vmatmul.mubr.bf16.gmra.mrb[0].mxu0 %v670
      %v1826 = vpop.f32.mrb[0].mxu0
      %v1827 = vadd.f32 %v1650, %v1826
      %v1828 = vpop.f32.mrb[0].mxu0
      %v1829 = vpop.f32.mrb[0].mxu0
      %v1830 = vadd.f32 %v1653, %v1829
      %v1831 = vpop.f32.mrb[0].mxu0
      %1832 = vmatprep.mubr.bf16.mxu0 %v725
      %1833 = vmatmul.mubr.bf16.gmra.mrb[0].mxu0 %v671
      %v1834 = vpop.f32.mrb[0].mxu0
      %v1835 = vadd.f32 %v1658, %v1834
      %v1836 = vpop.f32.mrb[0].mxu0
      %v1837 = vpop.f32.mrb[0].mxu0
      %v1838 = vadd.f32 %v1661, %v1837
      %v1839 = vpop.f32.mrb[0].mxu0
      %1840 = vmatprep.mubr.bf16.mxu0 %v726
      %1841 = vmatmul.mubr.bf16.gmra.mrb[0].mxu0 %v672
      %v1842 = vpop.f32.mrb[0].mxu0
      %v1843 = vadd.f32 %v1666, %v1842
      %v1844 = vpop.f32.mrb[0].mxu0
      %v1845 = vpop.f32.mrb[0].mxu0
      %v1846 = vadd.f32 %v1669, %v1845
      %v1847 = vpop.f32.mrb[0].mxu0
      %1848 = vmatprep.mubr.bf16.mxu0 %v727
      %1849 = vmatmul.mubr.bf16.gmra.mrb[0].mxu0 %v673
      %v1850 = vpop.f32.mrb[0].mxu0
      %v1851 = vadd.f32 %v1674, %v1850
      %v1852 = vpop.f32.mrb[0].mxu0
      %v1853 = vpop.f32.mrb[0].mxu0
      %v1854 = vadd.f32 %v1677, %v1853
      %v1855 = vpop.f32.mrb[0].mxu0
      %1856 = vmatprep.mubr.bf16.mxu0 %v728
      %1857 = vmatmul.mubr.bf16.gmra.mrb[0].mxu0 %v674
      %v1858 = vpop.f32.mrb[0].mxu0
      %v1859 = vadd.f32 %v1682, %v1858
      %v1860 = vpop.f32.mrb[0].mxu0
      %v1861 = vpop.f32.mrb[0].mxu0
      %v1862 = vadd.f32 %v1685, %v1861
      %v1863 = vpop.f32.mrb[0].mxu0
      %1864 = vmatprep.mubr.bf16.mxu0 %v729
      %1865 = vmatmul.mubr.bf16.gmra.mrb[0].mxu0 %v675
      %v1866 = vpop.f32.mrb[0].mxu0
      %v1867 = vadd.f32 %v1690, %v1866
      %v1868 = vpop.f32.mrb[0].mxu0
      %v1869 = vpop.f32.mrb[0].mxu0
      %v1870 = vadd.f32 %v1693, %v1869
      %v1871 = vpop.f32.mrb[0].mxu0
      %1872 = vmatprep.mubr.bf16.mxu0 %v730
      %1873 = vmatmul.mubr.bf16.gmra.mrb[0].mxu0 %v676
      %v1874 = vpop.f32.mrb[0].mxu0
      %v1875 = vadd.f32 %v1698, %v1874
      %v1876 = vpop.f32.mrb[0].mxu0
      %v1877 = vpop.f32.mrb[0].mxu0
      %v1878 = vadd.f32 %v1701, %v1877
      %v1879 = vpop.f32.mrb[0].mxu0
      %1880 = vmatprep.mubr.bf16.mxu0 %v731
      %1881 = vmatmul.mubr.bf16.gmra.mrb[0].mxu0 %v677
      %v1882 = vpop.f32.mrb[0].mxu0
      %v1883 = vadd.f32 %v1706, %v1882
      %v1884 = vpop.f32.mrb[0].mxu0
      %v1885 = vpop.f32.mrb[0].mxu0
      %v1886 = vadd.f32 %v1709, %v1885
      %v1887 = vpop.f32.mrb[0].mxu0
      %1888 = vmatprep.mubr.bf16.mxu0 %v732
      %1889 = vmatmul.mubr.bf16.gmra.mrb[0].mxu0 %v678
      %v1890 = vpop.f32.mrb[0].mxu0
      %v1891 = vadd.f32 %v1714, %v1890
      %v1892 = vpop.f32.mrb[0].mxu0
      %v1893 = vpop.f32.mrb[0].mxu0
      %v1894 = vadd.f32 %v1717, %v1893
      %v1895 = vpop.f32.mrb[0].mxu0
      %1896 = vmatprep.mubr.bf16.mxu0 %v733
      %1897 = vmatmul.mubr.bf16.gmra.mrb[0].mxu0 %v679
      %v1898 = vpop.f32.mrb[0].mxu0
      %v1899 = vadd.f32 %v1722, %v1898
      %v1900 = vpop.f32.mrb[0].mxu0
      %v1901 = vpop.f32.mrb[0].mxu0
      %v1902 = vadd.f32 %v1725, %v1901
      %v1903 = vpop.f32.mrb[0].mxu0
      %1904 = vmatprep.mubr.bf16.mxu0 %v734
      %1905 = vmatmul.mubr.bf16.gmra.mrb[0].mxu0 %v680
      %v1906 = vpop.f32.mrb[0].mxu0
      %v1907 = vadd.f32 %v1730, %v1906
      %v1908 = vpop.f32.mrb[0].mxu0
      %v1909 = vpop.f32.mrb[0].mxu0
      %v1910 = vadd.f32 %v1733, %v1909
      %v1911 = vpop.f32.mrb[0].mxu0
      %1912 = vmatprep.mubr.bf16.mxu0 %v735
      %1913 = vmatmul.mubr.bf16.gmra.mrb[0].mxu0 %v681
      %v1914 = vpop.f32.mrb[0].mxu0
      %v1915 = vadd.f32 %v1738, %v1914
      %v1916 = vpop.f32.mrb[0].mxu0
      %v1917 = vpop.f32.mrb[0].mxu0
      %v1918 = vadd.f32 %v1741, %v1917
      %v1919 = vpop.f32.mrb[0].mxu0
      %1920 = vmatprep.mubr.bf16.mxu0 %v736
      %1921 = vmatmul.mubr.bf16.gmra.mrb[0].mxu0 %v682
      %v1922 = vpop.f32.mrb[0].mxu0
      %v1923 = vadd.f32 %v1746, %v1922
      %v1924 = vpop.f32.mrb[0].mxu0
      %v1925 = vpop.f32.mrb[0].mxu0
      %v1926 = vadd.f32 %v1749, %v1925
      %v1927 = vpop.f32.mrb[0].mxu0
      %1928 = vmatprep.mubr.bf16.mxu0 %v737
      %1929 = vmatmul.mubr.bf16.gmra.mrb[0].mxu0 %v683
      %v1930 = vpop.f32.mrb[0].mxu0
      %v1931 = vadd.f32 %v1754, %v1930
      %v1932 = vpop.f32.mrb[0].mxu0
      %v1933 = vpop.f32.mrb[0].mxu0
      %v1934 = vadd.f32 %v1757, %v1933
      %v1935 = vpop.f32.mrb[0].mxu0
      %1936 = vmatprep.mubr.bf16.mxu0 %v738
      %1937 = vmatmul.mubr.bf16.gmra.mrb[0].mxu0 %v684
      %v1938 = vpop.f32.mrb[0].mxu0
      %v1939 = vadd.f32 %v1762, %v1938
      %v1940 = vpop.f32.mrb[0].mxu0
      %v1941 = vpop.f32.mrb[0].mxu0
      %v1942 = vadd.f32 %v1765, %v1941
      %v1943 = vpop.f32.mrb[0].mxu0
      %1944 = vmatprep.mubr.bf16.mxu0 %v739
      %1945 = vmatmul.mubr.bf16.gmra.mrb[0].mxu0 %v685
      %v1946 = vpop.f32.mrb[0].mxu0
      %v1947 = vadd.f32 %v1770, %v1946
      %v1948 = vpop.f32.mrb[0].mxu0
      %v1949 = vpop.f32.mrb[0].mxu0
      %v1950 = vadd.f32 %v1773, %v1949
      %v1951 = vpop.f32.mrb[0].mxu0
      %1952 = vmatprep.mubr.bf16.mxu0 %v740
      %1953 = vmatmul.mubr.bf16.gmra.mrb[0].mxu0 %v686
      %v1954 = vpop.f32.mrb[0].mxu0
      %v1955 = vadd.f32 %v1778, %v1954
      %v1956 = vpop.f32.mrb[0].mxu0
      %v1957 = vpop.f32.mrb[0].mxu0
      %v1958 = vadd.f32 %v1781, %v1957
      %v1959 = vpop.f32.mrb[0].mxu0
      %1960 = vmatprep.mubr.bf16.mxu0 %v741
      %1961 = vmatmul.mubr.bf16.gmra.mrb[0].mxu0 %v687
      %v1962 = vpop.f32.mrb[0].mxu0
      %v1963 = vadd.f32 %v1786, %v1962
      %v1964 = vpop.f32.mrb[0].mxu0
      %v1965 = vpop.f32.mrb[0].mxu0
      %v1966 = vadd.f32 %v1789, %v1965
      %v1967 = vpop.f32.mrb[0].mxu0
      %1968 = vdwg.mxu0
      %1969 = vmatprep.subr.bf16.mxu0 0
      %1970 = vmatpush1.bf16.msra.mxu0 %v1342
      %1971 = vmatprep.subr.bf16.mxu0 0
      %1972 = vmatpush1.bf16.msra.mxu0 %v1343
      %1973 = vmatprep.subr.bf16.mxu0 0
      %1974 = vmatpush1.bf16.msra.mxu0 %v1344
      %1975 = vmatprep.subr.bf16.mxu0 0
      %1976 = vmatpush1.bf16.msra.mxu0 %v1345
      %1977 = vmatprep.subr.bf16.mxu0 0
      %1978 = vmatpush1.bf16.msra.mxu0 %v1346
      %1979 = vmatprep.subr.bf16.mxu0 0
      %1980 = vmatpush1.bf16.msra.mxu0 %v1347
      %1981 = vmatprep.subr.bf16.mxu0 0
      %1982 = vmatpush1.bf16.msra.mxu0 %v1348
      %1983 = vmatprep.subr.bf16.mxu0 0
      %1984 = vmatpush1.bf16.msra.mxu0 %v1349
      %1985 = vmatprep.subr.bf16.mxu0 0
      %1986 = vmatpush1.bf16.msra.mxu0 %v1350
      %1987 = vmatprep.subr.bf16.mxu0 0
      %1988 = vmatpush1.bf16.msra.mxu0 %v1351
      %1989 = vmatprep.subr.bf16.mxu0 0
      %1990 = vmatpush1.bf16.msra.mxu0 %v1352
      %1991 = vmatprep.subr.bf16.mxu0 0
      %1992 = vmatpush1.bf16.msra.mxu0 %v1353
      %1993 = vmatprep.subr.bf16.mxu0 0
      %1994 = vmatpush1.bf16.msra.mxu0 %v1354
      %1995 = vmatprep.subr.bf16.mxu0 0
      %1996 = vmatpush1.bf16.msra.mxu0 %v1355
      %1997 = vmatprep.subr.bf16.mxu0 0
      %1998 = vmatpush1.bf16.msra.mxu0 %v1356
      %1999 = vmatprep.subr.bf16.mxu0 0
      %2000 = vmatpush1.bf16.msra.mxu0 %v1357
      %2001 = vmatprep.mubr.bf16.mxu0 %v783
      %2002 = vmatmul.mubr.bf16.gmra.mrb[0].mxu0 %v725
      %v2003 = vpop.f32.mrb[0].mxu0
      %v2004 = vadd.f32 %v1827, %v2003
      %v2005 = vpop.f32.mrb[0].mxu0
      %v2006 = vpop.f32.mrb[0].mxu0
      %v2007 = vadd.f32 %v1830, %v2006
      %v2008 = vpop.f32.mrb[0].mxu0
      %2009 = vmatprep.mubr.bf16.mxu0 %v784
      %2010 = vmatmul.mubr.bf16.gmra.mrb[0].mxu0 %v726
      %v2011 = vpop.f32.mrb[0].mxu0
      %v2012 = vadd.f32 %v1835, %v2011
      %v2013 = vpop.f32.mrb[0].mxu0
      %v2014 = vpop.f32.mrb[0].mxu0
      %v2015 = vadd.f32 %v1838, %v2014
      %v2016 = vpop.f32.mrb[0].mxu0
      %2017 = vmatprep.mubr.bf16.mxu0 %v785
      %2018 = vmatmul.mubr.bf16.gmra.mrb[0].mxu0 %v727
      %v2019 = vpop.f32.mrb[0].mxu0
      %v2020 = vadd.f32 %v1843, %v2019
      %v2021 = vpop.f32.mrb[0].mxu0
      %v2022 = vpop.f32.mrb[0].mxu0
      %v2023 = vadd.f32 %v1846, %v2022
      %v2024 = vpop.f32.mrb[0].mxu0
      %2025 = vmatprep.mubr.bf16.mxu0 %v786
      %2026 = vmatmul.mubr.bf16.gmra.mrb[0].mxu0 %v728
      %v2027 = vpop.f32.mrb[0].mxu0
      %v2028 = vadd.f32 %v1851, %v2027
      %v2029 = vpop.f32.mrb[0].mxu0
      %v2030 = vpop.f32.mrb[0].mxu0
      %v2031 = vadd.f32 %v1854, %v2030
      %v2032 = vpop.f32.mrb[0].mxu0
      %2033 = vmatprep.mubr.bf16.mxu0 %v787
      %2034 = vmatmul.mubr.bf16.gmra.mrb[0].mxu0 %v729
      %v2035 = vpop.f32.mrb[0].mxu0
      %v2036 = vadd.f32 %v1859, %v2035
      %v2037 = vpop.f32.mrb[0].mxu0
      %v2038 = vpop.f32.mrb[0].mxu0
      %v2039 = vadd.f32 %v1862, %v2038
      %v2040 = vpop.f32.mrb[0].mxu0
      %2041 = vmatprep.mubr.bf16.mxu0 %v788
      %2042 = vmatmul.mubr.bf16.gmra.mrb[0].mxu0 %v730
      %v2043 = vpop.f32.mrb[0].mxu0
      %v2044 = vadd.f32 %v1867, %v2043
      %v2045 = vpop.f32.mrb[0].mxu0
      %v2046 = vpop.f32.mrb[0].mxu0
      %v2047 = vadd.f32 %v1870, %v2046
      %v2048 = vpop.f32.mrb[0].mxu0
      %2049 = vmatprep.mubr.bf16.mxu0 %v789
      %2050 = vmatmul.mubr.bf16.gmra.mrb[0].mxu0 %v731
      %v2051 = vpop.f32.mrb[0].mxu0
      %v2052 = vadd.f32 %v1875, %v2051
      %v2053 = vpop.f32.mrb[0].mxu0
      %v2054 = vpop.f32.mrb[0].mxu0
      %v2055 = vadd.f32 %v1878, %v2054
      %v2056 = vpop.f32.mrb[0].mxu0
      %2057 = vmatprep.mubr.bf16.mxu0 %v790
      %2058 = vmatmul.mubr.bf16.gmra.mrb[0].mxu0 %v732
      %v2059 = vpop.f32.mrb[0].mxu0
      %v2060 = vadd.f32 %v1883, %v2059
      %v2061 = vpop.f32.mrb[0].mxu0
      %v2062 = vpop.f32.mrb[0].mxu0
      %v2063 = vadd.f32 %v1886, %v2062
      %v2064 = vpop.f32.mrb[0].mxu0
      %2065 = vmatprep.mubr.bf16.mxu0 %v791
      %2066 = vmatmul.mubr.bf16.gmra.mrb[0].mxu0 %v733
      %v2067 = vpop.f32.mrb[0].mxu0
      %v2068 = vadd.f32 %v1891, %v2067
      %v2069 = vpop.f32.mrb[0].mxu0
      %v2070 = vpop.f32.mrb[0].mxu0
      %v2071 = vadd.f32 %v1894, %v2070
      %v2072 = vpop.f32.mrb[0].mxu0
      %2073 = vmatprep.mubr.bf16.mxu0 %v792
      %2074 = vmatmul.mubr.bf16.gmra.mrb[0].mxu0 %v734
      %v2075 = vpop.f32.mrb[0].mxu0
      %v2076 = vadd.f32 %v1899, %v2075
      %v2077 = vpop.f32.mrb[0].mxu0
      %v2078 = vpop.f32.mrb[0].mxu0
      %v2079 = vadd.f32 %v1902, %v2078
      %v2080 = vpop.f32.mrb[0].mxu0
      %2081 = vmatprep.mubr.bf16.mxu0 %v793
      %2082 = vmatmul.mubr.bf16.gmra.mrb[0].mxu0 %v735
      %v2083 = vpop.f32.mrb[0].mxu0
      %v2084 = vadd.f32 %v1907, %v2083
      %v2085 = vpop.f32.mrb[0].mxu0
      %v2086 = vpop.f32.mrb[0].mxu0
      %v2087 = vadd.f32 %v1910, %v2086
      %v2088 = vpop.f32.mrb[0].mxu0
      %2089 = vmatprep.mubr.bf16.mxu0 %v794
      %2090 = vmatmul.mubr.bf16.gmra.mrb[0].mxu0 %v736
      %v2091 = vpop.f32.mrb[0].mxu0
      %v2092 = vadd.f32 %v1915, %v2091
      %v2093 = vpop.f32.mrb[0].mxu0
      %v2094 = vpop.f32.mrb[0].mxu0
      %v2095 = vadd.f32 %v1918, %v2094
      %v2096 = vpop.f32.mrb[0].mxu0
      %2097 = vmatprep.mubr.bf16.mxu0 %v795
      %2098 = vmatmul.mubr.bf16.gmra.mrb[0].mxu0 %v737
      %v2099 = vpop.f32.mrb[0].mxu0
      %v2100 = vadd.f32 %v1923, %v2099
      %v2101 = vpop.f32.mrb[0].mxu0
      %v2102 = vpop.f32.mrb[0].mxu0
      %v2103 = vadd.f32 %v1926, %v2102
      %v2104 = vpop.f32.mrb[0].mxu0
      %2105 = vmatprep.mubr.bf16.mxu0 %v796
      %2106 = vmatmul.mubr.bf16.gmra.mrb[0].mxu0 %v738
      %v2107 = vpop.f32.mrb[0].mxu0
      %v2108 = vadd.f32 %v1931, %v2107
      %v2109 = vpop.f32.mrb[0].mxu0
      %v2110 = vpop.f32.mrb[0].mxu0
      %v2111 = vadd.f32 %v1934, %v2110
      %v2112 = vpop.f32.mrb[0].mxu0
      %2113 = vmatprep.mubr.bf16.mxu0 %v797
      %2114 = vmatmul.mubr.bf16.gmra.mrb[0].mxu0 %v739
      %v2115 = vpop.f32.mrb[0].mxu0
      %v2116 = vadd.f32 %v1939, %v2115
      %v2117 = vpop.f32.mrb[0].mxu0
      %v2118 = vpop.f32.mrb[0].mxu0
      %v2119 = vadd.f32 %v1942, %v2118
      %v2120 = vpop.f32.mrb[0].mxu0
      %2121 = vmatprep.mubr.bf16.mxu0 %v798
      %2122 = vmatmul.mubr.bf16.gmra.mrb[0].mxu0 %v740
      %v2123 = vpop.f32.mrb[0].mxu0
      %v2124 = vadd.f32 %v1947, %v2123
      %v2125 = vpop.f32.mrb[0].mxu0
      %v2126 = vpop.f32.mrb[0].mxu0
      %v2127 = vadd.f32 %v1950, %v2126
      %v2128 = vpop.f32.mrb[0].mxu0
      %2129 = vmatprep.mubr.bf16.mxu0 %v799
      %2130 = vmatmul.mubr.bf16.gmra.mrb[0].mxu0 %v745
      %v2131 = vpop.f32.mrb[0].mxu0
      %v2132 = vadd.f32 %v1955, %v2131
      %v2133 = vpop.f32.mrb[0].mxu0
      %v2134 = vpop.f32.mrb[0].mxu0
      %v2135 = vadd.f32 %v1958, %v2134
      %v2136 = vpop.f32.mrb[0].mxu0
      %2137 = vmatprep.mubr.bf16.mxu0 %v800
      %2138 = vmatmul.mubr.bf16.gmra.mrb[0].mxu0 %v746
      %v2139 = vpop.f32.mrb[0].mxu0
      %v2140 = vadd.f32 %v1963, %v2139
      %v2141 = vpop.f32.mrb[0].mxu0
      %v2142 = vpop.f32.mrb[0].mxu0
      %v2143 = vadd.f32 %v1966, %v2142
      %v2144 = vpop.f32.mrb[0].mxu0
      %2145 = vdwg.mxu0
      %2146 = vmatprep.subr.bf16.mxu0 0
      %2147 = vmatpush1.bf16.msra.mxu0 %v1358
      %2148 = vmatprep.subr.bf16.mxu0 0
      %2149 = vmatpush1.bf16.msra.mxu0 %v1359
      %2150 = vmatprep.subr.bf16.mxu0 0
      %2151 = vmatpush1.bf16.msra.mxu0 %v1360
      %2152 = vmatprep.subr.bf16.mxu0 0
      %2153 = vmatpush1.bf16.msra.mxu0 %v1361
      %2154 = vmatprep.subr.bf16.mxu0 0
      %2155 = vmatpush1.bf16.msra.mxu0 %v1362
      %2156 = vmatprep.subr.bf16.mxu0 0
      %2157 = vmatpush1.bf16.msra.mxu0 %v1363
      %2158 = vmatprep.subr.bf16.mxu0 0
      %2159 = vmatpush1.bf16.msra.mxu0 %v1364
      %2160 = vmatprep.subr.bf16.mxu0 0
      %2161 = vmatpush1.bf16.msra.mxu0 %v1365
      %2162 = vmatprep.subr.bf16.mxu0 0
      %2163 = vmatpush1.bf16.msra.mxu0 0
      %2164 = vmatprep.subr.bf16.mxu0 0
      %2165 = vmatpush1.bf16.msra.mxu0 0
      %2166 = vmatprep.subr.bf16.mxu0 0
      %2167 = vmatpush1.bf16.msra.mxu0 0
      %2168 = vmatprep.subr.bf16.mxu0 0
      %2169 = vmatpush1.bf16.msra.mxu0 0
      %2170 = vmatprep.subr.bf16.mxu0 0
      %2171 = vmatpush1.bf16.msra.mxu0 0
      %2172 = vmatprep.subr.bf16.mxu0 0
      %2173 = vmatpush1.bf16.msra.mxu0 0
      %2174 = vmatprep.subr.bf16.mxu0 0
      %2175 = vmatpush1.bf16.msra.mxu0 0
      %2176 = vmatprep.subr.bf16.mxu0 0
      %2177 = vmatpush1.bf16.msra.mxu0 0
      %2178 = vmatprep.mubr.bf16.mxu0 0
      %2179 = vmatmul.mubr.bf16.gmra.mrb[0].mxu0 %v837
      %v2180 = vpop.f32.mrb[0].mxu0
      %v2181 = vadd.f32 %v2004, %v2180
      %v2182 = vpop.f32.mrb[0].mxu0
      %v2183 = vpop.f32.mrb[0].mxu0
      %v2184 = vadd.f32 %v2007, %v2183
      %v2185 = vpop.f32.mrb[0].mxu0
      %2186 = vmatprep.mubr.bf16.mxu0 0
      %2187 = vmatmul.mubr.bf16.gmra.mrb[0].mxu0 %v838
      %v2188 = vpop.f32.mrb[0].mxu0
      %v2189 = vadd.f32 %v2012, %v2188
      %v2190 = vpop.f32.mrb[0].mxu0
      %v2191 = vpop.f32.mrb[0].mxu0
      %v2192 = vadd.f32 %v2015, %v2191
      %v2193 = vpop.f32.mrb[0].mxu0
      %2194 = vmatprep.mubr.bf16.mxu0 0
      %2195 = vmatmul.mubr.bf16.gmra.mrb[0].mxu0 %v839
      %v2196 = vpop.f32.mrb[0].mxu0
      %v2197 = vadd.f32 %v2020, %v2196
      %v2198 = vpop.f32.mrb[0].mxu0
      %v2199 = vpop.f32.mrb[0].mxu0
      %v2200 = vadd.f32 %v2023, %v2199
      %v2201 = vpop.f32.mrb[0].mxu0
      %2202 = vmatprep.mubr.bf16.mxu0 0
      %2203 = vmatmul.mubr.bf16.gmra.mrb[0].mxu0 %v840
      %v2204 = vpop.f32.mrb[0].mxu0
      %v2205 = vadd.f32 %v2028, %v2204
      %v2206 = vpop.f32.mrb[0].mxu0
      %v2207 = vpop.f32.mrb[0].mxu0
      %v2208 = vadd.f32 %v2031, %v2207
      %v2209 = vpop.f32.mrb[0].mxu0
      %2210 = vmatprep.mubr.bf16.mxu0 0
      %2211 = vmatmul.mubr.bf16.gmra.mrb[0].mxu0 %v841
      %v2212 = vpop.f32.mrb[0].mxu0
      %v2213 = vadd.f32 %v2036, %v2212
      %v2214 = vpop.f32.mrb[0].mxu0
      %v2215 = vpop.f32.mrb[0].mxu0
      %v2216 = vadd.f32 %v2039, %v2215
      %v2217 = vpop.f32.mrb[0].mxu0
      %2218 = vmatprep.mubr.bf16.mxu0 0
      %2219 = vmatmul.mubr.bf16.gmra.mrb[0].mxu0 %v842
      %v2220 = vpop.f32.mrb[0].mxu0
      %v2221 = vadd.f32 %v2044, %v2220
      %v2222 = vpop.f32.mrb[0].mxu0
      %v2223 = vpop.f32.mrb[0].mxu0
      %v2224 = vadd.f32 %v2047, %v2223
      %v2225 = vpop.f32.mrb[0].mxu0
      %2226 = vmatprep.mubr.bf16.mxu0 0
      %2227 = vmatmul.mubr.bf16.gmra.mrb[0].mxu0 %v843
      %v2228 = vpop.f32.mrb[0].mxu0
      %v2229 = vadd.f32 %v2052, %v2228
      %v2230 = vpop.f32.mrb[0].mxu0
      %v2231 = vpop.f32.mrb[0].mxu0
      %v2232 = vadd.f32 %v2055, %v2231
      %v2233 = vpop.f32.mrb[0].mxu0
      %2234 = vmatprep.mubr.bf16.mxu0 0
      %2235 = vmatmul.mubr.bf16.gmra.mrb[0].mxu0 %v844
      %v2236 = vpop.f32.mrb[0].mxu0
      %v2237 = vadd.f32 %v2060, %v2236
      %v2238 = vpop.f32.mrb[0].mxu0
      %v2239 = vpop.f32.mrb[0].mxu0
      %v2240 = vadd.f32 %v2063, %v2239
      %v2241 = vpop.f32.mrb[0].mxu0
      %2242 = vmatprep.mubr.bf16.mxu0 0
      %2243 = vmatmul.mubr.bf16.gmra.mrb[0].mxu0 %v845
      %v2244 = vpop.f32.mrb[0].mxu0
      %v2245 = vadd.f32 %v2068, %v2244
      %v2246 = vpop.f32.mrb[0].mxu0
      %v2247 = vpop.f32.mrb[0].mxu0
      %v2248 = vadd.f32 %v2071, %v2247
      %v2249 = vpop.f32.mrb[0].mxu0
      %2250 = vmatprep.mubr.bf16.mxu0 0
      %2251 = vmatmul.mubr.bf16.gmra.mrb[0].mxu0 %v846
      %v2252 = vpop.f32.mrb[0].mxu0
      %v2253 = vadd.f32 %v2076, %v2252
      %v2254 = vpop.f32.mrb[0].mxu0
      %v2255 = vpop.f32.mrb[0].mxu0
      %v2256 = vadd.f32 %v2079, %v2255
      %v2257 = vpop.f32.mrb[0].mxu0
      %2258 = vmatprep.mubr.bf16.mxu0 0
      %2259 = vmatmul.mubr.bf16.gmra.mrb[0].mxu0 %v847
      %v2260 = vpop.f32.mrb[0].mxu0
      %v2261 = vadd.f32 %v2084, %v2260
      %v2262 = vpop.f32.mrb[0].mxu0
      %v2263 = vpop.f32.mrb[0].mxu0
      %v2264 = vadd.f32 %v2087, %v2263
      %v2265 = vpop.f32.mrb[0].mxu0
      %2266 = vmatprep.mubr.bf16.mxu0 0
      %2267 = vmatmul.mubr.bf16.gmra.mrb[0].mxu0 %v848
      %v2268 = vpop.f32.mrb[0].mxu0
      %v2269 = vadd.f32 %v2092, %v2268
      %v2270 = vpop.f32.mrb[0].mxu0
      %v2271 = vpop.f32.mrb[0].mxu0
      %v2272 = vadd.f32 %v2095, %v2271
      %v2273 = vpop.f32.mrb[0].mxu0
      %2274 = vmatprep.mubr.bf16.mxu0 0
      %2275 = vmatmul.mubr.bf16.gmra.mrb[0].mxu0 %v849
      %v2276 = vpop.f32.mrb[0].mxu0
      %v2277 = vadd.f32 %v2100, %v2276
      %v2278 = vpop.f32.mrb[0].mxu0
      %v2279 = vpop.f32.mrb[0].mxu0
      %v2280 = vadd.f32 %v2103, %v2279
      %v2281 = vpop.f32.mrb[0].mxu0
      %2282 = vmatprep.mubr.bf16.mxu0 0
      %2283 = vmatmul.mubr.bf16.gmra.mrb[0].mxu0 %v850
      %v2284 = vpop.f32.mrb[0].mxu0
      %v2285 = vadd.f32 %v2108, %v2284
      %v2286 = vpop.f32.mrb[0].mxu0
      %v2287 = vpop.f32.mrb[0].mxu0
      %v2288 = vadd.f32 %v2111, %v2287
      %v2289 = vpop.f32.mrb[0].mxu0
      %2290 = vmatprep.mubr.bf16.mxu0 0
      %2291 = vmatmul.mubr.bf16.gmra.mrb[0].mxu0 %v851
      %v2292 = vpop.f32.mrb[0].mxu0
      %v2293 = vadd.f32 %v2116, %v2292
      %v2294 = vpop.f32.mrb[0].mxu0
      %v2295 = vpop.f32.mrb[0].mxu0
      %v2296 = vadd.f32 %v2119, %v2295
      %v2297 = vpop.f32.mrb[0].mxu0
      %2298 = vmatprep.mubr.bf16.mxu0 0
      %2299 = vmatmul.mubr.bf16.gmra.mrb[0].mxu0 %v852
      %v2300 = vpop.f32.mrb[0].mxu0
      %v2301 = vadd.f32 %v2124, %v2300
      %v2302 = vpop.f32.mrb[0].mxu0
      %v2303 = vpop.f32.mrb[0].mxu0
      %v2304 = vadd.f32 %v2127, %v2303
      %v2305 = vpop.f32.mrb[0].mxu0
      %2306 = vmatprep.mubr.bf16.mxu0 0
      %2307 = vmatmul.mubr.bf16.gmra.mrb[0].mxu0 %v853
      %v2308 = vpop.f32.mrb[0].mxu0
      %v2309 = vadd.f32 %v2132, %v2308
      %v2310 = vpop.f32.mrb[0].mxu0
      %v2311 = vpop.f32.mrb[0].mxu0
      %v2312 = vadd.f32 %v2135, %v2311
      %v2313 = vpop.f32.mrb[0].mxu0
      %2314 = vmatprep.mubr.bf16.mxu0 0
      %2315 = vmatmul.mubr.bf16.gmra.mrb[0].mxu0 %v854
      %v2316 = vpop.f32.mrb[0].mxu0
      %v2317 = vadd.f32 %v2140, %v2316
      %v2318 = vpop.f32.mrb[0].mxu0
      %v2319 = vpop.f32.mrb[0].mxu0
      %v2320 = vadd.f32 %v2143, %v2319
      %v2321 = vpop.f32.mrb[0].mxu0
      %2322 = vdwg.mxu0
      %v2323 = vxor.u32 %v2181, 2147483648
      %v2324 = vxor.u32 %v2184, 2147483648
      %v2325 = vxor.u32 %v2189, 2147483648
      %v2326 = vxor.u32 %v2192, 2147483648
      %v2327 = vxor.u32 %v2197, 2147483648
      %v2328 = vxor.u32 %v2200, 2147483648
      %v2329 = vxor.u32 %v2205, 2147483648
      %v2330 = vxor.u32 %v2208, 2147483648
      %v2331 = vxor.u32 %v2213, 2147483648
      %v2332 = vxor.u32 %v2216, 2147483648
      %v2333 = vxor.u32 %v2221, 2147483648
      %v2334 = vxor.u32 %v2224, 2147483648
      %v2335 = vxor.u32 %v2229, 2147483648
      %v2336 = vxor.u32 %v2232, 2147483648
      %v2337 = vxor.u32 %v2237, 2147483648
      %v2338 = vxor.u32 %v2240, 2147483648
      %v2339 = vxor.u32 %v2245, 2147483648
      %v2340 = vxor.u32 %v2248, 2147483648
      %v2341 = vxor.u32 %v2253, 2147483648
      %v2342 = vxor.u32 %v2256, 2147483648
      %v2343 = vxor.u32 %v2261, 2147483648
      %v2344 = vxor.u32 %v2264, 2147483648
      %v2345 = vxor.u32 %v2269, 2147483648
      %v2346 = vxor.u32 %v2272, 2147483648
      %v2347 = vxor.u32 %v2277, 2147483648
      %v2348 = vxor.u32 %v2280, 2147483648
      %v2349 = vxor.u32 %v2285, 2147483648
      %v2350 = vxor.u32 %v2288, 2147483648
      %v2351 = vxor.u32 %v2293, 2147483648
      %v2352 = vxor.u32 %v2296, 2147483648
      %v2353 = vxor.u32 %v2301, 2147483648
      %v2354 = vxor.u32 %v2304, 2147483648
      %v2355 = vxor.u32 %v2309, 2147483648
      %v2356 = vxor.u32 %v2312, 2147483648
      %v2357 = vxor.u32 %v2317, 2147483648
      %v2358 = vxor.u32 %v2320, 2147483648
      %v2359 = vmul.f32 %v2323, 1.442695
      %v2360 = vpow.pop %v2359
      %v2361 = vmul.f32 %v2324, 1.442695
      %v2362 = vpow.pop %v2361
      %v2363 = vmul.f32 %v2325, 1.442695
      %v2364 = vpow.pop %v2363
      %v2365 = vmul.f32 %v2326, 1.442695
      %v2366 = vpow.pop %v2365
      %v2367 = vmul.f32 %v2327, 1.442695
      %v2368 = vpow.pop %v2367
      %v2369 = vmul.f32 %v2328, 1.442695
      %v2370 = vpow.pop %v2369
      %v2371 = vmul.f32 %v2329, 1.442695
      %v2372 = vpow.pop %v2371
      %v2373 = vmul.f32 %v2330, 1.442695
      %v2374 = vpow.pop %v2373
      %v2375 = vmul.f32 %v2331, 1.442695
      %v2376 = vpow.pop %v2375
      %v2377 = vmul.f32 %v2332, 1.442695
      %v2378 = vpow.pop %v2377
      %v2379 = vmul.f32 %v2333, 1.442695
      %v2380 = vpow.pop %v2379
      %v2381 = vmul.f32 %v2334, 1.442695
      %v2382 = vpow.pop %v2381
      %v2383 = vmul.f32 %v2335, 1.442695
      %v2384 = vpow.pop %v2383
      %v2385 = vmul.f32 %v2336, 1.442695
      %v2386 = vpow.pop %v2385
      %v2387 = vmul.f32 %v2337, 1.442695
      %v2388 = vpow.pop %v2387
      %v2389 = vmul.f32 %v2338, 1.442695
      %v2390 = vpow.pop %v2389
      %v2391 = vmul.f32 %v2339, 1.442695
      %v2392 = vpow.pop %v2391
      %v2393 = vmul.f32 %v2340, 1.442695
      %v2394 = vpow.pop %v2393
      %v2395 = vmul.f32 %v2341, 1.442695
      %v2396 = vpow.pop %v2395
      %v2397 = vmul.f32 %v2342, 1.442695
      %v2398 = vpow.pop %v2397
      %v2399 = vmul.f32 %v2343, 1.442695
      %v2400 = vpow.pop %v2399
      %v2401 = vmul.f32 %v2344, 1.442695
      %v2402 = vpow.pop %v2401
      %v2403 = vmul.f32 %v2345, 1.442695
      %v2404 = vpow.pop %v2403
      %v2405 = vmul.f32 %v2346, 1.442695
      %v2406 = vpow.pop %v2405
      %v2407 = vmul.f32 %v2347, 1.442695
      %v2408 = vpow.pop %v2407
      %v2409 = vmul.f32 %v2348, 1.442695
      %v2410 = vpow.pop %v2409
      %v2411 = vmul.f32 %v2349, 1.442695
      %v2412 = vpow.pop %v2411
      %v2413 = vmul.f32 %v2350, 1.442695
      %v2414 = vpow.pop %v2413
      %v2415 = vmul.f32 %v2351, 1.442695
      %v2416 = vpow.pop %v2415
      %v2417 = vmul.f32 %v2352, 1.442695
      %v2418 = vpow.pop %v2417
      %v2419 = vmul.f32 %v2353, 1.442695
      %v2420 = vpow.pop %v2419
      %v2421 = vmul.f32 %v2354, 1.442695
      %v2422 = vpow.pop %v2421
      %v2423 = vmul.f32 %v2355, 1.442695
      %v2424 = vpow.pop %v2423
      %v2425 = vmul.f32 %v2356, 1.442695
      %v2426 = vpow.pop %v2425
      %v2427 = vmul.f32 %v2357, 1.442695
      %v2428 = vpow.pop %v2427
      %v2429 = vmul.f32 %v2358, 1.442695
      %v2430 = vpow.pop %v2429
      %v2431 = vadd.f32 %v2360, 1.0
      %v2432 = vadd.f32 %v2362, 1.0
      %v2433 = vadd.f32 %v2364, 1.0
      %v2434 = vadd.f32 %v2366, 1.0
      %v2435 = vadd.f32 %v2368, 1.0
      %v2436 = vadd.f32 %v2370, 1.0
      %v2437 = vadd.f32 %v2372, 1.0
      %v2438 = vadd.f32 %v2374, 1.0
      %v2439 = vadd.f32 %v2376, 1.0
      %v2440 = vadd.f32 %v2378, 1.0
      %v2441 = vadd.f32 %v2380, 1.0
      %v2442 = vadd.f32 %v2382, 1.0
      %v2443 = vadd.f32 %v2384, 1.0
      %v2444 = vadd.f32 %v2386, 1.0
      %v2445 = vadd.f32 %v2388, 1.0
      %v2446 = vadd.f32 %v2390, 1.0
      %v2447 = vadd.f32 %v2392, 1.0
      %v2448 = vadd.f32 %v2394, 1.0
      %v2449 = vadd.f32 %v2396, 1.0
      %v2450 = vadd.f32 %v2398, 1.0
      %v2451 = vadd.f32 %v2400, 1.0
      %v2452 = vadd.f32 %v2402, 1.0
      %v2453 = vadd.f32 %v2404, 1.0
      %v2454 = vadd.f32 %v2406, 1.0
      %v2455 = vadd.f32 %v2408, 1.0
      %v2456 = vadd.f32 %v2410, 1.0
      %v2457 = vadd.f32 %v2412, 1.0
      %v2458 = vadd.f32 %v2414, 1.0
      %v2459 = vadd.f32 %v2416, 1.0
      %v2460 = vadd.f32 %v2418, 1.0
      %v2461 = vadd.f32 %v2420, 1.0
      %v2462 = vadd.f32 %v2422, 1.0
      %v2463 = vadd.f32 %v2424, 1.0
      %v2464 = vadd.f32 %v2426, 1.0
      %v2465 = vadd.f32 %v2428, 1.0
      %v2466 = vadd.f32 %v2430, 1.0
      %v2467 = vrcp.pop %v2431
      %v2468 = vmul.f32 1.0, %v2467
      %v2469 = vrcp.pop %v2432
      %v2470 = vmul.f32 1.0, %v2469
      %v2471 = vrcp.pop %v2433
      %v2472 = vmul.f32 1.0, %v2471
      %v2473 = vrcp.pop %v2434
      %v2474 = vmul.f32 1.0, %v2473
      %v2475 = vrcp.pop %v2435
      %v2476 = vmul.f32 1.0, %v2475
      %v2477 = vrcp.pop %v2436
      %v2478 = vmul.f32 1.0, %v2477
      %v2479 = vrcp.pop %v2437
      %v2480 = vmul.f32 1.0, %v2479
      %v2481 = vrcp.pop %v2438
      %v2482 = vmul.f32 1.0, %v2481
      %v2483 = vrcp.pop %v2439
      %v2484 = vmul.f32 1.0, %v2483
      %v2485 = vrcp.pop %v2440
      %v2486 = vmul.f32 1.0, %v2485
      %v2487 = vrcp.pop %v2441
      %v2488 = vmul.f32 1.0, %v2487
      %v2489 = vrcp.pop %v2442
      %v2490 = vmul.f32 1.0, %v2489
      %v2491 = vrcp.pop %v2443
      %v2492 = vmul.f32 1.0, %v2491
      %v2493 = vrcp.pop %v2444
      %v2494 = vmul.f32 1.0, %v2493
      %v2495 = vrcp.pop %v2445
      %v2496 = vmul.f32 1.0, %v2495
      %v2497 = vrcp.pop %v2446
      %v2498 = vmul.f32 1.0, %v2497
      %v2499 = vrcp.pop %v2447
      %v2500 = vmul.f32 1.0, %v2499
      %v2501 = vrcp.pop %v2448
      %v2502 = vmul.f32 1.0, %v2501
      %v2503 = vrcp.pop %v2449
      %v2504 = vmul.f32 1.0, %v2503
      %v2505 = vrcp.pop %v2450
      %v2506 = vmul.f32 1.0, %v2505
      %v2507 = vrcp.pop %v2451
      %v2508 = vmul.f32 1.0, %v2507
      %v2509 = vrcp.pop %v2452
      %v2510 = vmul.f32 1.0, %v2509
      %v2511 = vrcp.pop %v2453
      %v2512 = vmul.f32 1.0, %v2511
      %v2513 = vrcp.pop %v2454
      %v2514 = vmul.f32 1.0, %v2513
      %v2515 = vrcp.pop %v2455
      %v2516 = vmul.f32 1.0, %v2515
      %v2517 = vrcp.pop %v2456
      %v2518 = vmul.f32 1.0, %v2517
      %v2519 = vrcp.pop %v2457
      %v2520 = vmul.f32 1.0, %v2519
      %v2521 = vrcp.pop %v2458
      %v2522 = vmul.f32 1.0, %v2521
      %v2523 = vrcp.pop %v2459
      %v2524 = vmul.f32 1.0, %v2523
      %v2525 = vrcp.pop %v2460
      %v2526 = vmul.f32 1.0, %v2525
      %v2527 = vrcp.pop %v2461
      %v2528 = vmul.f32 1.0, %v2527
      %v2529 = vrcp.pop %v2462
      %v2530 = vmul.f32 1.0, %v2529
      %v2531 = vrcp.pop %v2463
      %v2532 = vmul.f32 1.0, %v2531
      %v2533 = vrcp.pop %v2464
      %v2534 = vmul.f32 1.0, %v2533
      %v2535 = vrcp.pop %v2465
      %v2536 = vmul.f32 1.0, %v2535
      %v2537 = vrcp.pop %v2466
      %v2538 = vmul.f32 1.0, %v2537
      %v2539 = vmul.f32 %v2181, %v2468
      %v2540 = vmul.f32 %v2184, %v2470
      %v2541 = vmul.f32 %v2189, %v2472
      %v2542 = vmul.f32 %v2192, %v2474
      %v2543 = vmul.f32 %v2197, %v2476
      %v2544 = vmul.f32 %v2200, %v2478
      %v2545 = vmul.f32 %v2205, %v2480
      %v2546 = vmul.f32 %v2208, %v2482
      %v2547 = vmul.f32 %v2213, %v2484
      %v2548 = vmul.f32 %v2216, %v2486
      %v2549 = vmul.f32 %v2221, %v2488
      %v2550 = vmul.f32 %v2224, %v2490
      %v2551 = vmul.f32 %v2229, %v2492
      %v2552 = vmul.f32 %v2232, %v2494
      %v2553 = vmul.f32 %v2237, %v2496
      %v2554 = vmul.f32 %v2240, %v2498
      %v2555 = vmul.f32 %v2245, %v2500
      %v2556 = vmul.f32 %v2248, %v2502
      %v2557 = vmul.f32 %v2253, %v2504
      %v2558 = vmul.f32 %v2256, %v2506
      %v2559 = vmul.f32 %v2261, %v2508
      %v2560 = vmul.f32 %v2264, %v2510
      %v2561 = vmul.f32 %v2269, %v2512
      %v2562 = vmul.f32 %v2272, %v2514
      %v2563 = vmul.f32 %v2277, %v2516
      %v2564 = vmul.f32 %v2280, %v2518
      %v2565 = vmul.f32 %v2285, %v2520
      %v2566 = vmul.f32 %v2288, %v2522
      %v2567 = vmul.f32 %v2293, %v2524
      %v2568 = vmul.f32 %v2296, %v2526
      %v2569 = vmul.f32 %v2301, %v2528
      %v2570 = vmul.f32 %v2304, %v2530
      %v2571 = vmul.f32 %v2309, %v2532
      %v2572 = vmul.f32 %v2312, %v2534
      %v2573 = vmul.f32 %v2317, %v2536
      %v2574 = vmul.f32 %v2320, %v2538
      %v2575 = vld [vmem:[%s3] sm:$0xff]
      %v2576 = vld [vmem:[%s3 + $0x8] sm:$0xff]
      %v2577 = vld [vmem:[%s3 + $0x10] sm:$0xff]
      %v2578 = vld [vmem:[%s3 + $0x18] sm:$0xff]
      %v2579 = vld [vmem:[%s3 + $0x20] sm:$0xff]
      %v2580 = vld [vmem:[%s3 + $0x28] sm:$0xff]
      %v2581 = vld [vmem:[%s3 + $0x30] sm:$0xff]
      %v2582 = vld [vmem:[%s3 + $0x38] sm:$0xff]
      %v2583 = vld [vmem:[%s3 + $0x40] sm:$0xff]
      %v2584 = vld [vmem:[%s3 + $0x48] sm:$0xff]
      %v2585 = vld [vmem:[%s3 + $0x50] sm:$0xff]
      %v2586 = vld [vmem:[%s3 + $0x58] sm:$0xff]
      %v2587 = vld [vmem:[%s3 + $0x60] sm:$0xff]
      %v2588 = vld [vmem:[%s3 + $0x68] sm:$0xff]
      %v2589 = vld [vmem:[%s3 + $0x70] sm:$0xff]
      %v2590 = vld [vmem:[%s3 + $0x78] sm:$0xff]
      %v2591 = vld [vmem:[%s3 + $0x80] sm:$0xff]
      %v2592 = vld [vmem:[%s3 + $0x88] sm:$0xff]
      %v2593 = vld [vmem:[%s3 + $0x90] sm:$0xff]
      %v2594 = vld [vmem:[%s3 + $0x98] sm:$0xff]
      %v2595 = vld [vmem:[%s3 + $0xa0] sm:$0xff]
      %v2596 = vld [vmem:[%s3 + $0xa8] sm:$0xff]
      %v2597 = vld [vmem:[%s3 + $0xb0] sm:$0xff]
      %v2598 = vld [vmem:[%s3 + $0xb8] sm:$0xff]
      %v2599 = vld [vmem:[%s3 + $0xc0] sm:$0xff]
      %v2600 = vld [vmem:[%s3 + $0xc8] sm:$0xff]
      %v2601 = vld [vmem:[%s3 + $0xd0] sm:$0xff]
      %v2602 = vld [vmem:[%s3 + $0xd8] sm:$0xff]
      %v2603 = vld [vmem:[%s3 + $0xe0] sm:$0xff]
      %v2604 = vld [vmem:[%s3 + $0xe8] sm:$0xff]
      %v2605 = vld [vmem:[%s3 + $0xf0] sm:$0xff]
      %v2606 = vld [vmem:[%s3 + $0xf8] sm:$0xff]
      %v2607 = vld [vmem:[%s3 + $0x100] sm:$0xff]
      %v2608 = vld [vmem:[%s3 + $0x108] sm:$0xff]
      %v2609 = vld [vmem:[%s3 + $0x110] sm:$0xff]
      %v2610 = vld [vmem:[%s3 + $0x118] sm:$0xff]
      %v2611 = vld [vmem:[%s3 + $0x120] sm:$0xf]
      %v2612 = vld [vmem:[%s3 + $0x128] sm:$0xf]
      %v2613 = vld [vmem:[%s3 + $0x130] sm:$0xf]
      %vm2614 = vcmask 244736
      %v2616 = vsel %vm2614, %v2577, 0
      %v2619 = vsel %vm2614, %v2580, 0
      %v2622 = vsel %vm2614, %v2583, 0
      %v2625 = vsel %vm2614, %v2586, 0
      %v2628 = vsel %vm2614, %v2589, 0
      %v2631 = vsel %vm2614, %v2592, 0
      %v2634 = vsel %vm2614, %v2595, 0
      %v2637 = vsel %vm2614, %v2598, 0
      %v2640 = vsel %vm2614, %v2601, 0
      %v2643 = vsel %vm2614, %v2604, 0
      %v2646 = vsel %vm2614, %v2607, 0
      %v2649 = vsel %vm2614, %v2610, 0
      %v2652 = vsel %vm2614, %v2613, 0
      %vm2654 = vcmask 1045504
      %v2656 = vsel %vm2654, %v2574, 0
      %2658 = vmatprep.subr.mxu0 0.0
      %2659 = vmatpush1.msra.mxu0 %v2539
      %2660 = vmatprep.subr.mxu0 0.0
      %2661 = vmatpush1.msra.mxu0 %v2540
      %2662 = vmatprep.subr.mxu0 0.0
      %2663 = vmatpush1.msra.mxu0 %v2541
      %2664 = vmatprep.subr.mxu0 0.0
      %2665 = vmatpush1.msra.mxu0 %v2542
      %2666 = vmatprep.subr.mxu0 0.0
      %2667 = vmatpush1.msra.mxu0 %v2543
      %2668 = vmatprep.subr.mxu0 0.0
      %2669 = vmatpush1.msra.mxu0 %v2544
      %2670 = vmatprep.subr.mxu0 0.0
      %2671 = vmatpush1.msra.mxu0 %v2545
      %2672 = vmatprep.subr.mxu0 0.0
      %2673 = vmatpush1.msra.mxu0 %v2546
      %2674 = vmatprep.subr.mxu0 0.0
      %2675 = vmatpush1.msra.mxu0 %v2547
      %2676 = vmatprep.subr.mxu0 0.0
      %2677 = vmatpush1.msra.mxu0 %v2548
      %2678 = vmatprep.subr.mxu0 0.0
      %2679 = vmatpush1.msra.mxu0 %v2549
      %2680 = vmatprep.subr.mxu0 0.0
      %2681 = vmatpush1.msra.mxu0 %v2550
      %2682 = vmatprep.subr.mxu0 0.0
      %2683 = vmatpush1.msra.mxu0 %v2551
      %2684 = vmatprep.subr.mxu0 0.0
      %2685 = vmatpush1.msra.mxu0 %v2552
      %2686 = vmatprep.subr.mxu0 0.0
      %2687 = vmatpush1.msra.mxu0 %v2553
      %2688 = vmatprep.subr.mxu0 0.0
      %2689 = vmatpush1.msra.mxu0 %v2554
      %2690 = vmatprep.subr.mxu0 0.0
      %2691 = vmatpush1.msra.mxu0 %v2555
      %2692 = vmatprep.subr.mxu0 0.0
      %2693 = vmatpush1.msra.mxu0 %v2556
      %2694 = vmatprep.subr.mxu0 0.0
      %2695 = vmatpush1.msra.mxu0 %v2557
      %2696 = vmatprep.subr.mxu0 0.0
      %2697 = vmatpush1.msra.mxu0 %v2558
      %2698 = vmatprep.subr.mxu0 0.0
      %2699 = vmatpush1.msra.mxu0 %v2559
      %2700 = vmatprep.subr.mxu0 0.0
      %2701 = vmatpush1.msra.mxu0 %v2560
      %2702 = vmatprep.subr.mxu0 0.0
      %2703 = vmatpush1.msra.mxu0 %v2561
      %2704 = vmatprep.subr.mxu0 0.0
      %2705 = vmatpush1.msra.mxu0 %v2562
      %2706 = vmatprep.subr.mxu0 0.0
      %2707 = vmatpush1.msra.mxu0 %v2563
      %2708 = vmatprep.subr.mxu0 0.0
      %2709 = vmatpush1.msra.mxu0 %v2564
      %2710 = vmatprep.subr.mxu0 0.0
      %2711 = vmatpush1.msra.mxu0 %v2565
      %2712 = vmatprep.subr.mxu0 0.0
      %2713 = vmatpush1.msra.mxu0 %v2566
      %2714 = vmatprep.subr.mxu0 0.0
      %2715 = vmatpush1.msra.mxu0 %v2567
      %2716 = vmatprep.subr.mxu0 0.0
      %2717 = vmatpush1.msra.mxu0 %v2568
      %2718 = vmatprep.subr.mxu0 0.0
      %2719 = vmatpush1.msra.mxu0 %v2569
      %2720 = vmatprep.subr.mxu0 0.0
      %2721 = vmatpush1.msra.mxu0 %v2570
      %2722 = vmatprep.mubr.f32.mxu0 %v2576
      %2723 = vmatmul.mubr.f32.gmra.mrb[0].mxu0 %v2575
      %v2724 = vpop.f32.mrb[0].mxu0
      %v2725 = vadd.f32 0.0, %v2724
      %v2726 = vpop.f32.mrb[0].mxu0
      %2727 = vmatprep.mubr.f32.mxu0 %v2579
      %2728 = vmatmul.mubr.f32.gmra.mrb[0].mxu0 %v2578
      %v2729 = vpop.f32.mrb[0].mxu0
      %v2730 = vadd.f32 0.0, %v2729
      %v2731 = vpop.f32.mrb[0].mxu0
      %2732 = vmatprep.mubr.f32.mxu0 %v2582
      %2733 = vmatmul.mubr.f32.gmra.mrb[0].mxu0 %v2581
      %v2734 = vpop.f32.mrb[0].mxu0
      %v2735 = vadd.f32 0.0, %v2734
      %v2736 = vpop.f32.mrb[0].mxu0
      %2737 = vmatprep.mubr.f32.mxu0 %v2585
      %2738 = vmatmul.mubr.f32.gmra.mrb[0].mxu0 %v2584
      %v2739 = vpop.f32.mrb[0].mxu0
      %v2740 = vadd.f32 0.0, %v2739
      %v2741 = vpop.f32.mrb[0].mxu0
      %2742 = vmatprep.mubr.f32.mxu0 %v2588
      %2743 = vmatmul.mubr.f32.gmra.mrb[0].mxu0 %v2587
      %v2744 = vpop.f32.mrb[0].mxu0
      %v2745 = vadd.f32 0.0, %v2744
      %v2746 = vpop.f32.mrb[0].mxu0
      %2747 = vmatprep.mubr.f32.mxu0 %v2591
      %2748 = vmatmul.mubr.f32.gmra.mrb[0].mxu0 %v2590
      %v2749 = vpop.f32.mrb[0].mxu0
      %v2750 = vadd.f32 0.0, %v2749
      %v2751 = vpop.f32.mrb[0].mxu0
      %2752 = vmatprep.mubr.f32.mxu0 %v2594
      %2753 = vmatmul.mubr.f32.gmra.mrb[0].mxu0 %v2593
      %v2754 = vpop.f32.mrb[0].mxu0
      %v2755 = vadd.f32 0.0, %v2754
      %v2756 = vpop.f32.mrb[0].mxu0
      %2757 = vmatprep.mubr.f32.mxu0 %v2597
      %2758 = vmatmul.mubr.f32.gmra.mrb[0].mxu0 %v2596
      %v2759 = vpop.f32.mrb[0].mxu0
      %v2760 = vadd.f32 0.0, %v2759
      %v2761 = vpop.f32.mrb[0].mxu0
      %2762 = vmatprep.mubr.f32.mxu0 %v2600
      %2763 = vmatmul.mubr.f32.gmra.mrb[0].mxu0 %v2599
      %v2764 = vpop.f32.mrb[0].mxu0
      %v2765 = vadd.f32 0.0, %v2764
      %v2766 = vpop.f32.mrb[0].mxu0
      %2767 = vmatprep.mubr.f32.mxu0 %v2603
      %2768 = vmatmul.mubr.f32.gmra.mrb[0].mxu0 %v2602
      %v2769 = vpop.f32.mrb[0].mxu0
      %v2770 = vadd.f32 0.0, %v2769
      %v2771 = vpop.f32.mrb[0].mxu0
      %2772 = vmatprep.mubr.f32.mxu0 %v2606
      %2773 = vmatmul.mubr.f32.gmra.mrb[0].mxu0 %v2605
      %v2774 = vpop.f32.mrb[0].mxu0
      %v2775 = vadd.f32 0.0, %v2774
      %v2776 = vpop.f32.mrb[0].mxu0
      %2777 = vmatprep.mubr.f32.mxu0 %v2609
      %2778 = vmatmul.mubr.f32.gmra.mrb[0].mxu0 %v2608
      %v2779 = vpop.f32.mrb[0].mxu0
      %v2780 = vadd.f32 0.0, %v2779
      %v2781 = vpop.f32.mrb[0].mxu0
      %2782 = vmatprep.mubr.f32.mxu0 %v2612
      %2783 = vmatmul.mubr.f32.gmra.mrb[0].mxu0 %v2611
      %v2784 = vpop.f32.mrb[0].mxu0
      %v2785 = vadd.f32 0.0, %v2784
      %v2786 = vpop.f32.mrb[0].mxu0
      %2787 = vdwg.mxu0
      %2788 = vmatprep.subr.mxu0 0.0
      %2789 = vmatpush1.msra.mxu0 %v2571
      %2790 = vmatprep.subr.mxu0 0.0
      %2791 = vmatpush1.msra.mxu0 %v2572
      %2792 = vmatprep.subr.mxu0 0.0
      %2793 = vmatpush1.msra.mxu0 %v2573
      %2794 = vmatprep.subr.mxu0 0.0
      %2795 = vmatpush1.msra.mxu0 %v2656
      %2796 = vmatprep.subr.mxu0 0.0
      %2797 = vmatpush1.msra.mxu0 0.0
      %2798 = vmatprep.subr.mxu0 0.0
      %2799 = vmatpush1.msra.mxu0 0.0
      %2800 = vmatprep.subr.mxu0 0.0
      %2801 = vmatpush1.msra.mxu0 0.0
      %2802 = vmatprep.subr.mxu0 0.0
      %2803 = vmatpush1.msra.mxu0 0.0
      %2804 = vmatprep.subr.mxu0 0.0
      %2805 = vmatpush1.msra.mxu0 0.0
      %2806 = vmatprep.subr.mxu0 0.0
      %2807 = vmatpush1.msra.mxu0 0.0
      %2808 = vmatprep.subr.mxu0 0.0
      %2809 = vmatpush1.msra.mxu0 0.0
      %2810 = vmatprep.subr.mxu0 0.0
      %2811 = vmatpush1.msra.mxu0 0.0
      %2812 = vmatprep.subr.mxu0 0.0
      %2813 = vmatpush1.msra.mxu0 0.0
      %2814 = vmatprep.subr.mxu0 0.0
      %2815 = vmatpush1.msra.mxu0 0.0
      %2816 = vmatprep.subr.mxu0 0.0
      %2817 = vmatpush1.msra.mxu0 0.0
      %2818 = vmatprep.subr.mxu0 0.0
      %2819 = vmatpush1.msra.mxu0 0.0
      %2820 = vmatprep.subr.mxu0 0.0
      %2821 = vmatpush1.msra.mxu0 0.0
      %2822 = vmatprep.subr.mxu0 0.0
      %2823 = vmatpush1.msra.mxu0 0.0
      %2824 = vmatprep.subr.mxu0 0.0
      %2825 = vmatpush1.msra.mxu0 0.0
      %2826 = vmatprep.subr.mxu0 0.0
      %2827 = vmatpush1.msra.mxu0 0.0
      %2828 = vmatprep.subr.mxu0 0.0
      %2829 = vmatpush1.msra.mxu0 0.0
      %2830 = vmatprep.subr.mxu0 0.0
      %2831 = vmatpush1.msra.mxu0 0.0
      %2832 = vmatprep.subr.mxu0 0.0
      %2833 = vmatpush1.msra.mxu0 0.0
      %2834 = vmatprep.subr.mxu0 0.0
      %2835 = vmatpush1.msra.mxu0 0.0
      %2836 = vmatprep.subr.mxu0 0.0
      %2837 = vmatpush1.msra.mxu0 0.0
      %2838 = vmatprep.subr.mxu0 0.0
      %2839 = vmatpush1.msra.mxu0 0.0
      %2840 = vmatprep.subr.mxu0 0.0
      %2841 = vmatpush1.msra.mxu0 0.0
      %2842 = vmatprep.subr.mxu0 0.0
      %2843 = vmatpush1.msra.mxu0 0.0
      %2844 = vmatprep.subr.mxu0 0.0
      %2845 = vmatpush1.msra.mxu0 0.0
      %2846 = vmatprep.subr.mxu0 0.0
      %2847 = vmatpush1.msra.mxu0 0.0
      %2848 = vmatprep.subr.mxu0 0.0
      %2849 = vmatpush1.msra.mxu0 0.0
      %2850 = vmatprep.subr.mxu0 0.0
      %2851 = vmatpush1.msra.mxu0 0.0
      %2852 = vmatprep.mubr.f32.mxu0 0.0
      %2853 = vmatmul.mubr.f32.gmra.mrb[0].mxu0 %v2616
      %v2854 = vpop.f32.mrb[0].mxu0
      %v2855 = vadd.f32 %v2725, %v2854
      %v2856 = vpop.f32.mrb[0].mxu0
      %2857 = vmatprep.mubr.f32.mxu0 0.0
      %2858 = vmatmul.mubr.f32.gmra.mrb[0].mxu0 %v2619
      %v2859 = vpop.f32.mrb[0].mxu0
      %v2860 = vadd.f32 %v2730, %v2859
      %v2861 = vpop.f32.mrb[0].mxu0
      %2862 = vmatprep.mubr.f32.mxu0 0.0
      %2863 = vmatmul.mubr.f32.gmra.mrb[0].mxu0 %v2622
      %v2864 = vpop.f32.mrb[0].mxu0
      %v2865 = vadd.f32 %v2735, %v2864
      %v2866 = vpop.f32.mrb[0].mxu0
      %2867 = vmatprep.mubr.f32.mxu0 0.0
      %2868 = vmatmul.mubr.f32.gmra.mrb[0].mxu0 %v2625
      %v2869 = vpop.f32.mrb[0].mxu0
      %v2870 = vadd.f32 %v2740, %v2869
      %v2871 = vpop.f32.mrb[0].mxu0
      %2872 = vmatprep.mubr.f32.mxu0 0.0
      %2873 = vmatmul.mubr.f32.gmra.mrb[0].mxu0 %v2628
      %v2874 = vpop.f32.mrb[0].mxu0
      %v2875 = vadd.f32 %v2745, %v2874
      %v2876 = vpop.f32.mrb[0].mxu0
      %2877 = vmatprep.mubr.f32.mxu0 0.0
      %2878 = vmatmul.mubr.f32.gmra.mrb[0].mxu0 %v2631
      %v2879 = vpop.f32.mrb[0].mxu0
      %v2880 = vadd.f32 %v2750, %v2879
      %v2881 = vpop.f32.mrb[0].mxu0
      %2882 = vmatprep.mubr.f32.mxu0 0.0
      %2883 = vmatmul.mubr.f32.gmra.mrb[0].mxu0 %v2634
      %v2884 = vpop.f32.mrb[0].mxu0
      %v2885 = vadd.f32 %v2755, %v2884
      %v2886 = vpop.f32.mrb[0].mxu0
      %2887 = vmatprep.mubr.f32.mxu0 0.0
      %2888 = vmatmul.mubr.f32.gmra.mrb[0].mxu0 %v2637
      %v2889 = vpop.f32.mrb[0].mxu0
      %v2890 = vadd.f32 %v2760, %v2889
      %v2891 = vpop.f32.mrb[0].mxu0
      %2892 = vmatprep.mubr.f32.mxu0 0.0
      %2893 = vmatmul.mubr.f32.gmra.mrb[0].mxu0 %v2640
      %v2894 = vpop.f32.mrb[0].mxu0
      %v2895 = vadd.f32 %v2765, %v2894
      %v2896 = vpop.f32.mrb[0].mxu0
      %2897 = vmatprep.mubr.f32.mxu0 0.0
      %2898 = vmatmul.mubr.f32.gmra.mrb[0].mxu0 %v2643
      %v2899 = vpop.f32.mrb[0].mxu0
      %v2900 = vadd.f32 %v2770, %v2899
      %v2901 = vpop.f32.mrb[0].mxu0
      %2902 = vmatprep.mubr.f32.mxu0 0.0
      %2903 = vmatmul.mubr.f32.gmra.mrb[0].mxu0 %v2646
      %v2904 = vpop.f32.mrb[0].mxu0
      %v2905 = vadd.f32 %v2775, %v2904
      %v2906 = vpop.f32.mrb[0].mxu0
      %2907 = vmatprep.mubr.f32.mxu0 0.0
      %2908 = vmatmul.mubr.f32.gmra.mrb[0].mxu0 %v2649
      %v2909 = vpop.f32.mrb[0].mxu0
      %v2910 = vadd.f32 %v2780, %v2909
      %v2911 = vpop.f32.mrb[0].mxu0
      %2912 = vmatprep.mubr.f32.mxu0 0.0
      %2913 = vmatmul.mubr.f32.gmra.mrb[0].mxu0 %v2652
      %v2914 = vpop.f32.mrb[0].mxu0
      %v2915 = vadd.f32 %v2785, %v2914
      %v2916 = vpop.f32.mrb[0].mxu0
      %2917 = vdwg.mxu0
      %2918 = vst [vmem:[#allocation2] sm:$0xff] %v2855
      %2919 = vst [vmem:[#allocation2 + $0x8] sm:$0xff] %v2860
      %2920 = vst [vmem:[#allocation2 + $0x10] sm:$0xff] %v2865
      %2921 = vst [vmem:[#allocation2 + $0x18] sm:$0xff] %v2870
      %2922 = vst [vmem:[#allocation2 + $0x20] sm:$0xff] %v2875
      %2923 = vst [vmem:[#allocation2 + $0x28] sm:$0xff] %v2880
      %2924 = vst [vmem:[#allocation2 + $0x30] sm:$0xff] %v2885
      %2925 = vst [vmem:[#allocation2 + $0x38] sm:$0xff] %v2890
      %2926 = vst [vmem:[#allocation2 + $0x40] sm:$0xff] %v2895
      %2927 = vst [vmem:[#allocation2 + $0x48] sm:$0xff] %v2900
      %2928 = vst [vmem:[#allocation2 + $0x50] sm:$0xff] %v2905
      %2929 = vst [vmem:[#allocation2 + $0x58] sm:$0xff] %v2910
      %2930 = vst [vmem:[#allocation2 + $0x60] sm:$0xf] %v2915
      %v2931 = vld [vmem:[#allocation2] sm:$0xff]
      %v2932 = vld [vmem:[#allocation2 + $0x8] sm:$0xff]
      %v2933 = vld [vmem:[#allocation2 + $0x10] sm:$0xff]
      %v2934 = vld [vmem:[#allocation2 + $0x18] sm:$0xff]
      %v2935 = vld [vmem:[#allocation2 + $0x20] sm:$0xff]
      %v2936 = vld [vmem:[#allocation2 + $0x28] sm:$0xff]
      %v2937 = vld [vmem:[#allocation2 + $0x30] sm:$0xff]
      %v2938 = vld [vmem:[#allocation2 + $0x38] sm:$0xff]
      %v2939 = vld [vmem:[#allocation2 + $0x40] sm:$0xff]
      %v2940 = vld [vmem:[#allocation2 + $0x48] sm:$0x3f]
      %v2941 = vpack.c.bf16 %v2932, %v2931
      %v2942 = vpack.c.bf16 %v2934, %v2933
      %v2943 = vpack.c.bf16 %v2936, %v2935
      %v2944 = vpack.c.bf16 %v2938, %v2937
      %v2945 = vpack.c.bf16 %v2940, %v2939
      %v2946 = vld [vmem:[#allocation2 + $0x1] sm:$0xff]
      %v2947 = vld [vmem:[#allocation2 + $0x9] sm:$0xff]
      %v2948 = vld [vmem:[#allocation2 + $0x11] sm:$0xff]
      %v2949 = vld [vmem:[#allocation2 + $0x19] sm:$0xff]
      %v2950 = vld [vmem:[#allocation2 + $0x21] sm:$0xff]
      %v2951 = vld [vmem:[#allocation2 + $0x29] sm:$0xff]
      %v2952 = vld [vmem:[#allocation2 + $0x31] sm:$0xff]
      %v2953 = vld [vmem:[#allocation2 + $0x39] sm:$0xff]
      %v2954 = vld [vmem:[#allocation2 + $0x41] sm:$0xff]
      %v2955 = vld [vmem:[#allocation2 + $0x49] sm:$0x3f]
      %v2956 = vpack.c.bf16 %v2947, %v2946
      %v2957 = vpack.c.bf16 %v2949, %v2948
      %v2958 = vpack.c.bf16 %v2951, %v2950
      %v2959 = vpack.c.bf16 %v2953, %v2952
      %v2960 = vpack.c.bf16 %v2955, %v2954
      %v2961 = vld [vmem:[#allocation2 + $0x2] sm:$0xff]
      %v2962 = vld [vmem:[#allocation2 + $0xa] sm:$0xff]
      %v2963 = vld [vmem:[#allocation2 + $0x12] sm:$0xff]
      %v2964 = vld [vmem:[#allocation2 + $0x1a] sm:$0xff]
      %v2965 = vld [vmem:[#allocation2 + $0x22] sm:$0xff]
      %v2966 = vld [vmem:[#allocation2 + $0x2a] sm:$0xff]
      %v2967 = vld [vmem:[#allocation2 + $0x32] sm:$0xff]
      %v2968 = vld [vmem:[#allocation2 + $0x3a] sm:$0xff]
      %v2969 = vld [vmem:[#allocation2 + $0x42] sm:$0xff]
      %v2970 = vld [vmem:[#allocation2 + $0x4a] sm:$0x3f]
      %v2971 = vpack.c.bf16 %v2962, %v2961
      %v2972 = vpack.c.bf16 %v2964, %v2963
      %v2973 = vpack.c.bf16 %v2966, %v2965
      %v2974 = vpack.c.bf16 %v2968, %v2967
      %v2975 = vpack.c.bf16 %v2970, %v2969
      %v2976 = vld [vmem:[#allocation2 + $0x4a] sm:$0xff]
      %v2977 = vld [vmem:[#allocation2 + $0x52] sm:$0x3f]
      %v2978 = vpack.c.bf16 %v2963, %v2962
      %v2979 = vpack.c.bf16 %v2965, %v2964
      %v2980 = vpack.c.bf16 %v2967, %v2966
      %v2981 = vpack.c.bf16 %v2969, %v2968
      %v2982 = vpack.c.bf16 %v2977, %v2976
      %v2983 = vld [vmem:[#allocation2 + $0xb] sm:$0xff]
      %v2984 = vld [vmem:[#allocation2 + $0x13] sm:$0xff]
      %v2985 = vld [vmem:[#allocation2 + $0x1b] sm:$0xff]
      %v2986 = vld [vmem:[#allocation2 + $0x23] sm:$0xff]
      %v2987 = vld [vmem:[#allocation2 + $0x2b] sm:$0xff]
      %v2988 = vld [vmem:[#allocation2 + $0x33] sm:$0xff]
      %v2989 = vld [vmem:[#allocation2 + $0x3b] sm:$0xff]
      %v2990 = vld [vmem:[#allocation2 + $0x43] sm:$0xff]
      %v2991 = vld [vmem:[#allocation2 + $0x4b] sm:$0xff]
      %v2992 = vld [vmem:[#allocation2 + $0x53] sm:$0x3f]
      %v2993 = vpack.c.bf16 %v2984, %v2983
      %v2994 = vpack.c.bf16 %v2986, %v2985
      %v2995 = vpack.c.bf16 %v2988, %v2987
      %v2996 = vpack.c.bf16 %v2990, %v2989
      %v2997 = vpack.c.bf16 %v2992, %v2991
      %v2998 = vld [vmem:[#allocation2 + $0xc] sm:$0xff]
      %v2999 = vld [vmem:[#allocation2 + $0x14] sm:$0xff]
      %v3000 = vld [vmem:[#allocation2 + $0x1c] sm:$0xff]
      %v3001 = vld [vmem:[#allocation2 + $0x24] sm:$0xff]
      %v3002 = vld [vmem:[#allocation2 + $0x2c] sm:$0xff]
      %v3003 = vld [vmem:[#allocation2 + $0x34] sm:$0xff]
      %v3004 = vld [vmem:[#allocation2 + $0x3c] sm:$0xff]
      %v3005 = vld [vmem:[#allocation2 + $0x44] sm:$0xff]
      %v3006 = vld [vmem:[#allocation2 + $0x4c] sm:$0xff]
      %v3007 = vld [vmem:[#allocation2 + $0x54] sm:$0x3f]
      %v3008 = vpack.c.bf16 %v2999, %v2998
      %v3009 = vpack.c.bf16 %v3001, %v3000
      %v3010 = vpack.c.bf16 %v3003, %v3002
      %v3011 = vpack.c.bf16 %v3005, %v3004
      %v3012 = vpack.c.bf16 %v3007, %v3006
      %v3013 = vld [vmem:[#allocation2 + $0x54] sm:$0xff]
      %v3014 = vld [vmem:[#allocation2 + $0x5c] sm:$0x3f]
      %v3015 = vpack.c.bf16 %v3000, %v2999
      %v3016 = vpack.c.bf16 %v3002, %v3001
      %v3017 = vpack.c.bf16 %v3004, %v3003
      %v3018 = vpack.c.bf16 %v3006, %v3005
      %v3019 = vpack.c.bf16 %v3014, %v3013
      %v3020 = vld [vmem:[#allocation2 + $0x15] sm:$0xff]
      %v3021 = vld [vmem:[#allocation2 + $0x1d] sm:$0xff]
      %v3022 = vld [vmem:[#allocation2 + $0x25] sm:$0xff]
      %v3023 = vld [vmem:[#allocation2 + $0x2d] sm:$0xff]
      %v3024 = vld [vmem:[#allocation2 + $0x35] sm:$0xff]
      %v3025 = vld [vmem:[#allocation2 + $0x3d] sm:$0xff]
      %v3026 = vld [vmem:[#allocation2 + $0x45] sm:$0xff]
      %v3027 = vld [vmem:[#allocation2 + $0x4d] sm:$0xff]
      %v3028 = vld [vmem:[#allocation2 + $0x55] sm:$0xff]
      %v3029 = vld [vmem:[#allocation2 + $0x5d] sm:$0x3f]
      %v3030 = vpack.c.bf16 %v3021, %v3020
      %v3031 = vpack.c.bf16 %v3023, %v3022
      %v3032 = vpack.c.bf16 %v3025, %v3024
      %v3033 = vpack.c.bf16 %v3027, %v3026
      %v3034 = vpack.c.bf16 %v3029, %v3028
      %v3035 = vld [vmem:[#allocation2 + $0x16] sm:$0xff]
      %v3036 = vld [vmem:[#allocation2 + $0x1e] sm:$0xff]
      %v3037 = vld [vmem:[#allocation2 + $0x26] sm:$0xff]
      %v3038 = vld [vmem:[#allocation2 + $0x2e] sm:$0xff]
      %v3039 = vld [vmem:[#allocation2 + $0x36] sm:$0xff]
      %v3040 = vld [vmem:[#allocation2 + $0x3e] sm:$0xff]
      %v3041 = vld [vmem:[#allocation2 + $0x46] sm:$0xff]
      %v3042 = vld [vmem:[#allocation2 + $0x4e] sm:$0xff]
      %v3043 = vld [vmem:[#allocation2 + $0x56] sm:$0xff]
      %v3044 = vld [vmem:[#allocation2 + $0x5e] sm:$0x3f]
      %v3045 = vpack.c.bf16 %v3036, %v3035
      %v3046 = vpack.c.bf16 %v3038, %v3037
      %v3047 = vpack.c.bf16 %v3040, %v3039
      %v3048 = vpack.c.bf16 %v3042, %v3041
      %v3049 = vpack.c.bf16 %v3044, %v3043
      %s3050 = scalar_lea.vmem %s1, 576
      %v3051 = vld [vmem:[%s3050] sm:$0xf]
      %v3052 = vld [vmem:[%s3050 + $0x4] sm:$0xf]
      %v3053 = vld [vmem:[%s3050 + $0x8] sm:$0xf]
      %v3054 = vld [vmem:[%s3050 + $0xc] sm:$0xf]
      %v3055 = vld [vmem:[%s3050 + $0x10] sm:$0xf]
      %v3056 = vld [vmem:[%s3050 + $0x14] sm:$0xf]
      %v3057 = vld [vmem:[%s3050 + $0x18] sm:$0xf]
      %v3058 = vld [vmem:[%s3050 + $0x1c] sm:$0xf]
      %v3059 = vld [vmem:[%s3050 + $0x20] sm:$0xf]
      %v3060 = vld [vmem:[%s3050 + $0x24] sm:$0xf]
      %v3061 = vld [vmem:[%s3050 + $0x28] sm:$0xf]
      %v3062 = vld [vmem:[%s3050 + $0x2c] sm:$0xf]
      %v3063 = vld [vmem:[%s3050 + $0x30] sm:$0xf]
      %v3064 = vld [vmem:[%s3050 + $0x34] sm:$0xf]
      %v3065 = vld [vmem:[%s3050 + $0x38] sm:$0xf]
      %v3066 = vld [vmem:[%s3050 + $0x3c] sm:$0xf]
      %v3067 = vld [vmem:[%s3050 + $0x40] sm:$0xf]
      %v3068 = vld [vmem:[%s3050 + $0x44] sm:$0xf]
      %v3069 = vld [vmem:[%s3050 + $0x48] sm:$0xf]
      %v3070 = vld [vmem:[%s3050 + $0x4c] sm:$0xf]
      %v3071 = vld [vmem:[%s3050 + $0x50] sm:$0xf]
      %v3072 = vld [vmem:[%s3050 + $0x54] sm:$0xf]
      %v3073 = vld [vmem:[%s3050 + $0x58] sm:$0xf]
      %v3074 = vld [vmem:[%s3050 + $0x5c] sm:$0xf]
      %v3075 = vld [vmem:[%s3050 + $0x60] sm:$0xf]
      %v3076 = vld [vmem:[%s3050 + $0x64] sm:$0xf]
      %v3077 = vld [vmem:[%s3050 + $0x68] sm:$0xf]
      %v3078 = vld [vmem:[%s3050 + $0x6c] sm:$0xf]
      %v3079 = vld [vmem:[%s3050 + $0x70] sm:$0xf]
      %v3080 = vld [vmem:[%s3050 + $0x74] sm:$0xf]
      %v3081 = vld [vmem:[%s3050 + $0x78] sm:$0xf]
      %v3082 = vld [vmem:[%s3050 + $0x7c] sm:$0xf]
      %v3083 = vld [vmem:[%s3050 + $0x80] sm:$0xf]
      %v3084 = vld [vmem:[%s3050 + $0x84] sm:$0xf]
      %v3085 = vld [vmem:[%s3050 + $0x88] sm:$0xf]
      %v3086 = vld [vmem:[%s3050 + $0x8c] sm:$0xf]
      %v3087 = vld [vmem:[%s3050 + $0x90] sm:$0xf]
      %v3088 = vld [vmem:[%s3050 + $0x94] sm:$0xf]
      %v3089 = vld [vmem:[%s3050 + $0x98] sm:$0xf]
      %v3090 = vld [vmem:[%s3050 + $0x9c] sm:$0xf]
      %v3091 = vld [vmem:[%s3050 + $0xa0] sm:$0xf]
      %v3092 = vld [vmem:[%s3050 + $0xa4] sm:$0xf]
      %v3093 = vld [vmem:[%s3050 + $0xa8] sm:$0xf]
      %v3094 = vld [vmem:[%s3050 + $0xac] sm:$0xf]
      %v3095 = vld [vmem:[%s3050 + $0xb0] sm:$0xf]
      %v3096 = vld [vmem:[%s3050 + $0xb4] sm:$0xf]
      %v3097 = vld [vmem:[%s3050 + $0xb8] sm:$0xf]
      %v3098 = vld [vmem:[%s3050 + $0xbc] sm:$0xf]
      %v3099 = vld [vmem:[%s3050 + $0xc0] sm:$0xf]
      %v3100 = vld [vmem:[%s3050 + $0xc4] sm:$0xf]
      %v3101 = vld [vmem:[%s3050 + $0xc8] sm:$0xf]
      %v3102 = vld [vmem:[%s3050 + $0xcc] sm:$0xf]
      %v3103 = vld [vmem:[%s3050 + $0xd0] sm:$0xf]
      %v3104 = vld [vmem:[%s3050 + $0xd4] sm:$0xf]
      %v3105 = vld [vmem:[%s3050 + $0xd8] sm:$0xf]
      %v3106 = vld [vmem:[%s3050 + $0xdc] sm:$0xf]
      %v3107 = vld [vmem:[%s3050 + $0xe0] sm:$0xf]
      %v3108 = vld [vmem:[%s3050 + $0xe4] sm:$0xf]
      %v3109 = vld [vmem:[%s3050 + $0xe8] sm:$0xf]
      %v3110 = vld [vmem:[%s3050 + $0xec] sm:$0xf]
      %v3111 = vld [vmem:[%s3050 + $0xf0] sm:$0xf]
      %v3112 = vld [vmem:[%s3050 + $0xf4] sm:$0xf]
      %v3113 = vld [vmem:[%s3050 + $0xf8] sm:$0xf]
      %v3114 = vld [vmem:[%s3050 + $0xfc] sm:$0xf]
      %v3115 = vld [vmem:[%s3050 + $0x100] sm:$0xf]
      %v3116 = vld [vmem:[%s3050 + $0x104] sm:$0xf]
      %v3117 = vld [vmem:[%s3050 + $0x108] sm:$0xf]
      %v3118 = vld [vmem:[%s3050 + $0x10c] sm:$0xf]
      %v3119 = vld [vmem:[%s3050 + $0x110] sm:$0xf]
      %v3120 = vld [vmem:[%s3050 + $0x114] sm:$0xf]
      %v3121 = vld [vmem:[%s3050 + $0x118] sm:$0xf]
      %v3122 = vld [vmem:[%s3050 + $0x11c] sm:$0xf]
      %v3123 = vld [vmem:[%s3050 + $0x120] sm:$0xf]
      %v3124 = vld [vmem:[%s3050 + $0x124] sm:$0xf]
      %v3125 = vld [vmem:[%s3050 + $0x128] sm:$0xf]
      %v3126 = vld [vmem:[%s3050 + $0x12c] sm:$0xf]
      %v3127 = vld [vmem:[%s3050 + $0x130] sm:$0xf]
      %v3128 = vld [vmem:[%s3050 + $0x134] sm:$0xf]
      %v3129 = vld [vmem:[%s3050 + $0x138] sm:$0xf]
      %v3130 = vld [vmem:[%s3050 + $0x13c] sm:$0xf]
      %v3131 = vld [vmem:[%s3050 + $0x140] sm:$0xf]
      %v3132 = vld [vmem:[%s3050 + $0x144] sm:$0xf]
      %v3133 = vld [vmem:[%s3050 + $0x148] sm:$0xf]
      %v3134 = vld [vmem:[%s3050 + $0x14c] sm:$0xf]
      %v3135 = vld [vmem:[%s3050 + $0x150] sm:$0xf]
      %v3136 = vld [vmem:[%s3050 + $0x154] sm:$0xf]
      %v3137 = vld [vmem:[%s3050 + $0x158] sm:$0xf]
      %v3138 = vld [vmem:[%s3050 + $0x15c] sm:$0xf]
      %v3139 = vld [vmem:[%s3050 + $0x160] sm:$0xf]
      %v3140 = vld [vmem:[%s3050 + $0x164] sm:$0xf]
      %v3141 = vld [vmem:[%s3050 + $0x168] sm:$0xf]
      %v3142 = vld [vmem:[%s3050 + $0x16c] sm:$0xf]
      %v3143 = vld [vmem:[%s3050 + $0x170] sm:$0xf]
      %v3144 = vld [vmem:[%s3050 + $0x174] sm:$0xf]
      %v3145 = vld [vmem:[%s3050 + $0x178] sm:$0xf]
      %v3146 = vld [vmem:[%s3050 + $0x17c] sm:$0xf]
      %v3147 = vld [vmem:[%s3050 + $0x180] sm:$0xf]
      %v3148 = vld [vmem:[%s3050 + $0x184] sm:$0xf]
      %v3149 = vld [vmem:[%s3050 + $0x188] sm:$0xf]
      %v3150 = vld [vmem:[%s3050 + $0x18c] sm:$0xf]
      %v3151 = vld [vmem:[%s3050 + $0x190] sm:$0xf]
      %v3152 = vld [vmem:[%s3050 + $0x194] sm:$0xf]
      %v3153 = vld [vmem:[%s3050 + $0x198] sm:$0xf]
      %v3154 = vld [vmem:[%s3050 + $0x19c] sm:$0xf]
      %v3155 = vld [vmem:[%s3050 + $0x1a0] sm:$0xf]
      %v3156 = vld [vmem:[%s3050 + $0x1a4] sm:$0xf]
      %v3157 = vld [vmem:[%s3050 + $0x1a8] sm:$0xf]
      %v3158 = vld [vmem:[%s3050 + $0x1ac] sm:$0xf]
      %v3159 = vld [vmem:[%s3050 + $0x1b0] sm:$0xf]
      %v3160 = vld [vmem:[%s3050 + $0x1b4] sm:$0xf]
      %v3161 = vld [vmem:[%s3050 + $0x1b8] sm:$0xf]
      %v3162 = vld [vmem:[%s3050 + $0x1bc] sm:$0xf]
      %v3163 = vld [vmem:[%s3050 + $0x1c0] sm:$0xf]
      %v3164 = vld [vmem:[%s3050 + $0x1c4] sm:$0xf]
      %v3165 = vld [vmem:[%s3050 + $0x1c8] sm:$0xf]
      %v3166 = vld [vmem:[%s3050 + $0x1cc] sm:$0xf]
      %v3167 = vld [vmem:[%s3050 + $0x1d0] sm:$0xf]
      %v3168 = vld [vmem:[%s3050 + $0x1d4] sm:$0xf]
      %v3169 = vld [vmem:[%s3050 + $0x1d8] sm:$0xf]
      %v3170 = vld [vmem:[%s3050 + $0x1dc] sm:$0xf]
      %v3171 = vld [vmem:[%s3050 + $0x1e0] sm:$0xf]
      %v3172 = vld [vmem:[%s3050 + $0x1e4] sm:$0xf]
      %v3173 = vld [vmem:[%s3050 + $0x1e8] sm:$0xf]
      %v3174 = vld [vmem:[%s3050 + $0x1ec] sm:$0xf]
      %v3175 = vld [vmem:[%s3050 + $0x1f0] sm:$0xf]
      %v3176 = vld [vmem:[%s3050 + $0x1f4] sm:$0xf]
      %v3177 = vld [vmem:[%s3050 + $0x1f8] sm:$0xf]
      %v3178 = vld [vmem:[%s3050 + $0x1fc] sm:$0xf]
      %v3179 = vld [vmem:[%s3050 + $0x200] sm:$0xf]
      %v3180 = vld [vmem:[%s3050 + $0x204] sm:$0xf]
      %v3181 = vld [vmem:[%s3050 + $0x208] sm:$0xf]
      %v3182 = vld [vmem:[%s3050 + $0x20c] sm:$0xf]
      %v3183 = vld [vmem:[%s3050 + $0x210] sm:$0xf]
      %v3184 = vld [vmem:[%s3050 + $0x214] sm:$0xf]
      %v3185 = vld [vmem:[%s3050 + $0x218] sm:$0xf]
      %v3186 = vld [vmem:[%s3050 + $0x21c] sm:$0xf]
      %v3187 = vld [vmem:[%s3050 + $0x220] sm:$0xf]
      %v3188 = vld [vmem:[%s3050 + $0x224] sm:$0xf]
      %v3189 = vld [vmem:[%s3050 + $0x228] sm:$0xf]
      %v3190 = vld [vmem:[%s3050 + $0x22c] sm:$0xf]
      %v3191 = vld [vmem:[%s3050 + $0x230] sm:$0xf]
      %v3192 = vld [vmem:[%s3050 + $0x234] sm:$0xf]
      %v3193 = vld [vmem:[%s3050 + $0x238] sm:$0xf]
      %v3194 = vld [vmem:[%s3050 + $0x23c] sm:$0xf]
      %s3195 = scalar_lea.vmem %s2, 1
      %v3196 = vld [vmem:[%s3195] sm:$0x1]
      %v3198 = vlaneseq
      %v3199 = vshrl.u32 %v3198, 7
      %v3200 = vsub.s32 0, %v3199
      %v3201 = vrot.slane %v3196, %v3200
      %v3347 = vunpack.c.l.b16 %v3051
      %v3348 = vunpack.c.l.b16 %v3052
      %v3349 = vunpack.c.l.b16 %v3053
      %v3350 = vunpack.c.l.b16 %v3054
      %v3351 = vunpack.c.l.b16 %v3055
      %v3352 = vunpack.c.l.b16 %v3056
      %v3353 = vunpack.c.l.b16 %v3057
      %v3354 = vunpack.c.l.b16 %v3058
      %v3355 = vunpack.c.l.b16 %v3059
      %v3356 = vunpack.c.l.b16 %v3060
      %v3357 = vunpack.c.l.b16 %v3061
      %v3358 = vunpack.c.l.b16 %v3062
      %v3359 = vunpack.c.l.b16 %v3063
      %v3360 = vunpack.c.l.b16 %v3064
      %v3361 = vunpack.c.l.b16 %v3065
      %v3362 = vunpack.c.l.b16 %v3066
      %v3363 = vunpack.c.l.b16 %v3067
      %v3364 = vunpack.c.l.b16 %v3068
      %v3365 = vunpack.c.l.b16 %v3069
      %v3366 = vunpack.c.l.b16 %v3070
      %v3367 = vunpack.c.l.b16 %v3071
      %v3368 = vunpack.c.l.b16 %v3072
      %v3369 = vunpack.c.l.b16 %v3073
      %v3370 = vunpack.c.l.b16 %v3074
      %v3371 = vunpack.c.l.b16 %v3075
      %v3372 = vunpack.c.l.b16 %v3076
      %v3373 = vunpack.c.l.b16 %v3077
      %v3374 = vunpack.c.l.b16 %v3078
      %v3375 = vunpack.c.l.b16 %v3079
      %v3376 = vunpack.c.l.b16 %v3080
      %v3377 = vunpack.c.l.b16 %v3081
      %v3378 = vunpack.c.l.b16 %v3082
      %v3379 = vunpack.c.l.b16 %v3083
      %v3380 = vunpack.c.l.b16 %v3084
      %v3381 = vunpack.c.l.b16 %v3085
      %v3382 = vunpack.c.l.b16 %v3086
      %v3383 = vunpack.c.l.b16 %v3087
      %v3384 = vunpack.c.l.b16 %v3088
      %v3385 = vunpack.c.l.b16 %v3089
      %v3386 = vunpack.c.l.b16 %v3090
      %v3387 = vunpack.c.l.b16 %v3091
      %v3388 = vunpack.c.l.b16 %v3092
      %v3389 = vunpack.c.l.b16 %v3093
      %v3390 = vunpack.c.l.b16 %v3094
      %v3391 = vunpack.c.l.b16 %v3095
      %v3392 = vunpack.c.l.b16 %v3096
      %v3393 = vunpack.c.l.b16 %v3097
      %v3394 = vunpack.c.l.b16 %v3098
      %v3395 = vunpack.c.l.b16 %v3099
      %v3396 = vunpack.c.l.b16 %v3100
      %v3397 = vunpack.c.l.b16 %v3101
      %v3398 = vunpack.c.l.b16 %v3102
      %v3399 = vunpack.c.l.b16 %v3103
      %v3400 = vunpack.c.l.b16 %v3104
      %v3401 = vunpack.c.l.b16 %v3105
      %v3402 = vunpack.c.l.b16 %v3106
      %v3403 = vunpack.c.l.b16 %v3107
      %v3404 = vunpack.c.l.b16 %v3108
      %v3405 = vunpack.c.l.b16 %v3109
      %v3406 = vunpack.c.l.b16 %v3110
      %v3407 = vunpack.c.l.b16 %v3111
      %v3408 = vunpack.c.l.b16 %v3112
      %v3409 = vunpack.c.l.b16 %v3113
      %v3410 = vunpack.c.l.b16 %v3114
      %v3411 = vunpack.c.l.b16 %v3115
      %v3412 = vunpack.c.l.b16 %v3116
      %v3413 = vunpack.c.l.b16 %v3117
      %v3414 = vunpack.c.l.b16 %v3118
      %v3415 = vunpack.c.l.b16 %v3119
      %v3416 = vunpack.c.l.b16 %v3120
      %v3417 = vunpack.c.l.b16 %v3121
      %v3418 = vunpack.c.l.b16 %v3122
      %v3419 = vunpack.c.l.b16 %v3123
      %v3420 = vunpack.c.l.b16 %v3124
      %v3421 = vunpack.c.l.b16 %v3125
      %v3422 = vunpack.c.l.b16 %v3126
      %v3423 = vunpack.c.l.b16 %v3127
      %v3424 = vunpack.c.l.b16 %v3128
      %v3425 = vunpack.c.l.b16 %v3129
      %v3426 = vunpack.c.l.b16 %v3130
      %v3427 = vunpack.c.l.b16 %v3131
      %v3428 = vunpack.c.l.b16 %v3132
      %v3429 = vunpack.c.l.b16 %v3133
      %v3430 = vunpack.c.l.b16 %v3134
      %v3431 = vunpack.c.l.b16 %v3135
      %v3432 = vunpack.c.l.b16 %v3136
      %v3433 = vunpack.c.l.b16 %v3137
      %v3434 = vunpack.c.l.b16 %v3138
      %v3435 = vunpack.c.l.b16 %v3139
      %v3436 = vunpack.c.l.b16 %v3140
      %v3437 = vunpack.c.l.b16 %v3141
      %v3438 = vunpack.c.l.b16 %v3142
      %v3439 = vunpack.c.l.b16 %v3143
      %v3440 = vunpack.c.l.b16 %v3144
      %v3441 = vunpack.c.l.b16 %v3145
      %v3442 = vunpack.c.l.b16 %v3146
      %v3443 = vunpack.c.l.b16 %v3147
      %v3444 = vunpack.c.l.b16 %v3148
      %v3445 = vunpack.c.l.b16 %v3149
      %v3446 = vunpack.c.l.b16 %v3150
      %v3447 = vunpack.c.l.b16 %v3151
      %v3448 = vunpack.c.l.b16 %v3152
      %v3449 = vunpack.c.l.b16 %v3153
      %v3450 = vunpack.c.l.b16 %v3154
      %v3451 = vunpack.c.l.b16 %v3155
      %v3452 = vunpack.c.l.b16 %v3156
      %v3453 = vunpack.c.l.b16 %v3157
      %v3454 = vunpack.c.l.b16 %v3158
      %v3455 = vunpack.c.l.b16 %v3159
      %v3456 = vunpack.c.l.b16 %v3160
      %v3457 = vunpack.c.l.b16 %v3161
      %v3458 = vunpack.c.l.b16 %v3162
      %v3459 = vunpack.c.l.b16 %v3163
      %v3460 = vunpack.c.l.b16 %v3164
      %v3461 = vunpack.c.l.b16 %v3165
      %v3462 = vunpack.c.l.b16 %v3166
      %v3463 = vunpack.c.l.b16 %v3167
      %v3464 = vunpack.c.l.b16 %v3168
      %v3465 = vunpack.c.l.b16 %v3169
      %v3466 = vunpack.c.l.b16 %v3170
      %v3467 = vunpack.c.l.b16 %v3171
      %v3468 = vunpack.c.l.b16 %v3172
      %v3469 = vunpack.c.l.b16 %v3173
      %v3470 = vunpack.c.l.b16 %v3174
      %v3471 = vunpack.c.l.b16 %v3175
      %v3472 = vunpack.c.l.b16 %v3176
      %v3473 = vunpack.c.l.b16 %v3177
      %v3474 = vunpack.c.l.b16 %v3178
      %v3475 = vunpack.c.l.b16 %v3179
      %v3476 = vunpack.c.l.b16 %v3180
      %v3477 = vunpack.c.l.b16 %v3181
      %v3478 = vunpack.c.l.b16 %v3182
      %v3479 = vunpack.c.l.b16 %v3183
      %v3480 = vunpack.c.l.b16 %v3184
      %v3481 = vunpack.c.l.b16 %v3185
      %v3482 = vunpack.c.l.b16 %v3186
      %v3483 = vunpack.c.l.b16 %v3187
      %v3484 = vunpack.c.l.b16 %v3188
      %v3485 = vunpack.c.l.b16 %v3189
      %v3486 = vunpack.c.l.b16 %v3190
      %v3487 = vunpack.c.l.b16 %v3191
      %v3488 = vunpack.c.l.b16 %v3192
      %v3489 = vunpack.c.l.b16 %v3193
      %v3490 = vunpack.c.l.b16 %v3194
      %v3491 = vpack.c.b16 %v3348, %v3347
      %v3492 = vpack.c.b16 %v3350, %v3349
      %v3493 = vpack.c.b16 %v3352, %v3351
      %v3494 = vpack.c.b16 %v3354, %v3353
      %v3495 = vpack.c.b16 %v3356, %v3355
      %v3496 = vpack.c.b16 %v3358, %v3357
      %v3497 = vpack.c.b16 %v3360, %v3359
      %v3498 = vpack.c.b16 %v3362, %v3361
      %v3499 = vpack.c.b16 %v3364, %v3363
      %v3500 = vpack.c.b16 %v3366, %v3365
      %v3501 = vpack.c.b16 %v3368, %v3367
      %v3502 = vpack.c.b16 %v3370, %v3369
      %v3503 = vpack.c.b16 %v3372, %v3371
      %v3504 = vpack.c.b16 %v3374, %v3373
      %v3505 = vpack.c.b16 %v3376, %v3375
      %v3506 = vpack.c.b16 %v3378, %v3377
      %v3507 = vpack.c.b16 %v3380, %v3379
      %v3508 = vpack.c.b16 %v3382, %v3381
      %v3509 = vpack.c.b16 %v3384, %v3383
      %v3510 = vpack.c.b16 %v3386, %v3385
      %v3511 = vpack.c.b16 %v3388, %v3387
      %v3512 = vpack.c.b16 %v3390, %v3389
      %v3513 = vpack.c.b16 %v3392, %v3391
      %v3514 = vpack.c.b16 %v3394, %v3393
      %v3515 = vpack.c.b16 %v3396, %v3395
      %v3516 = vpack.c.b16 %v3398, %v3397
      %v3517 = vpack.c.b16 %v3400, %v3399
      %v3518 = vpack.c.b16 %v3402, %v3401
      %v3519 = vpack.c.b16 %v3404, %v3403
      %v3520 = vpack.c.b16 %v3406, %v3405
      %v3521 = vpack.c.b16 %v3408, %v3407
      %v3522 = vpack.c.b16 %v3410, %v3409
      %v3523 = vpack.c.b16 %v3412, %v3411
      %v3524 = vpack.c.b16 %v3414, %v3413
      %v3525 = vpack.c.b16 %v3416, %v3415
      %v3526 = vpack.c.b16 %v3418, %v3417
      %v3527 = vpack.c.b16 %v3420, %v3419
      %v3528 = vpack.c.b16 %v3422, %v3421
      %v3529 = vpack.c.b16 %v3424, %v3423
      %v3530 = vpack.c.b16 %v3426, %v3425
      %v3531 = vpack.c.b16 %v3428, %v3427
      %v3532 = vpack.c.b16 %v3430, %v3429
      %v3533 = vpack.c.b16 %v3432, %v3431
      %v3534 = vpack.c.b16 %v3434, %v3433
      %v3535 = vpack.c.b16 %v3436, %v3435
      %v3536 = vpack.c.b16 %v3438, %v3437
      %v3537 = vpack.c.b16 %v3440, %v3439
      %v3538 = vpack.c.b16 %v3442, %v3441
      %v3539 = vpack.c.b16 %v3444, %v3443
      %v3540 = vpack.c.b16 %v3446, %v3445
      %v3541 = vpack.c.b16 %v3448, %v3447
      %v3542 = vpack.c.b16 %v3450, %v3449
      %v3543 = vpack.c.b16 %v3452, %v3451
      %v3544 = vpack.c.b16 %v3454, %v3453
      %v3545 = vpack.c.b16 %v3456, %v3455
      %v3546 = vpack.c.b16 %v3458, %v3457
      %v3547 = vpack.c.b16 %v3460, %v3459
      %v3548 = vpack.c.b16 %v3462, %v3461
      %v3549 = vpack.c.b16 %v3464, %v3463
      %v3550 = vpack.c.b16 %v3466, %v3465
      %v3551 = vpack.c.b16 %v3468, %v3467
      %v3552 = vpack.c.b16 %v3470, %v3469
      %v3553 = vpack.c.b16 %v3472, %v3471
      %v3554 = vpack.c.b16 %v3474, %v3473
      %v3555 = vpack.c.b16 %v3476, %v3475
      %v3556 = vpack.c.b16 %v3478, %v3477
      %v3557 = vpack.c.b16 %v3480, %v3479
      %v3558 = vpack.c.b16 %v3482, %v3481
      %v3559 = vpack.c.b16 %v3484, %v3483
      %v3560 = vpack.c.b16 %v3486, %v3485
      %v3561 = vpack.c.b16 %v3488, %v3487
      %v3562 = vpack.c.b16 %v3490, %v3489
      %3635 = vmatprep.subr.bf16.mxu0 0
      %3636 = vmatpush1.bf16.msra.mxu0 %v3491
      %3637 = vmatprep.subr.bf16.mxu0 0
      %3638 = vmatpush1.bf16.msra.mxu0 %v3492
      %3639 = vmatprep.subr.bf16.mxu0 0
      %3640 = vmatpush1.bf16.msra.mxu0 %v3493
      %3641 = vmatprep.subr.bf16.mxu0 0
      %3642 = vmatpush1.bf16.msra.mxu0 %v3494
      %3643 = vmatprep.subr.bf16.mxu0 0
      %3644 = vmatpush1.bf16.msra.mxu0 %v3495
      %3645 = vmatprep.subr.bf16.mxu0 0
      %3646 = vmatpush1.bf16.msra.mxu0 %v3496
      %3647 = vmatprep.subr.bf16.mxu0 0
      %3648 = vmatpush1.bf16.msra.mxu0 %v3497
      %3649 = vmatprep.subr.bf16.mxu0 0
      %3650 = vmatpush1.bf16.msra.mxu0 %v3498
      %3651 = vmatprep.subr.bf16.mxu0 0
      %3652 = vmatpush1.bf16.msra.mxu0 %v3499
      %3653 = vmatprep.subr.bf16.mxu0 0
      %3654 = vmatpush1.bf16.msra.mxu0 %v3500
      %3655 = vmatprep.subr.bf16.mxu0 0
      %3656 = vmatpush1.bf16.msra.mxu0 %v3501
      %3657 = vmatprep.subr.bf16.mxu0 0
      %3658 = vmatpush1.bf16.msra.mxu0 %v3502
      %3659 = vmatprep.subr.bf16.mxu0 0
      %3660 = vmatpush1.bf16.msra.mxu0 %v3503
      %3661 = vmatprep.subr.bf16.mxu0 0
      %3662 = vmatpush1.bf16.msra.mxu0 %v3504
      %3663 = vmatprep.subr.bf16.mxu0 0
      %3664 = vmatpush1.bf16.msra.mxu0 %v3505
      %3665 = vmatprep.subr.bf16.mxu0 0
      %3666 = vmatpush1.bf16.msra.mxu0 %v3506
      %3667 = vmatprep.mubr.bf16.mxu0 %v2956
      %3668 = vmatmul.mubr.bf16.gmra.mrb[0].mxu0 %v2941
      %v3669 = vpop.f32.mrb[0].mxu0
      %v3670 = vadd.f32 %v3201, %v3669
      %v3671 = vpop.f32.mrb[0].mxu0
      %v3672 = vpop.f32.mrb[0].mxu0
      %v3673 = vadd.f32 %v3201, %v3672
      %v3674 = vpop.f32.mrb[0].mxu0
      %3675 = vmatprep.mubr.bf16.mxu0 %v2957
      %3676 = vmatmul.mubr.bf16.gmra.mrb[0].mxu0 %v2942
      %v3677 = vpop.f32.mrb[0].mxu0
      %v3678 = vadd.f32 %v3201, %v3677
      %v3679 = vpop.f32.mrb[0].mxu0
      %v3680 = vpop.f32.mrb[0].mxu0
      %v3681 = vadd.f32 %v3201, %v3680
      %v3682 = vpop.f32.mrb[0].mxu0
      %3683 = vmatprep.mubr.bf16.mxu0 %v2958
      %3684 = vmatmul.mubr.bf16.gmra.mrb[0].mxu0 %v2943
      %v3685 = vpop.f32.mrb[0].mxu0
      %v3686 = vadd.f32 %v3201, %v3685
      %v3687 = vpop.f32.mrb[0].mxu0
      %v3688 = vpop.f32.mrb[0].mxu0
      %v3689 = vadd.f32 %v3201, %v3688
      %v3690 = vpop.f32.mrb[0].mxu0
      %3691 = vmatprep.mubr.bf16.mxu0 %v2959
      %3692 = vmatmul.mubr.bf16.gmra.mrb[0].mxu0 %v2944
      %v3693 = vpop.f32.mrb[0].mxu0
      %v3694 = vadd.f32 %v3201, %v3693
      %v3695 = vpop.f32.mrb[0].mxu0
      %v3696 = vpop.f32.mrb[0].mxu0
      %v3697 = vadd.f32 %v3201, %v3696
      %v3698 = vpop.f32.mrb[0].mxu0
      %3699 = vmatprep.mubr.bf16.mxu0 %v2960
      %3700 = vmatmul.mubr.bf16.gmra.mrb[0].mxu0 %v2945
      %v3701 = vpop.f32.mrb[0].mxu0
      %v3702 = vadd.f32 %v3201, %v3701
      %v3703 = vpop.f32.mrb[0].mxu0
      %v3704 = vpop.f32.mrb[0].mxu0
      %v3705 = vadd.f32 %v3201, %v3704
      %v3706 = vpop.f32.mrb[0].mxu0
      %3707 = vdwg.mxu0
      %3708 = vmatprep.subr.bf16.mxu0 0
      %3709 = vmatpush1.bf16.msra.mxu0 %v3507
      %3710 = vmatprep.subr.bf16.mxu0 0
      %3711 = vmatpush1.bf16.msra.mxu0 %v3508
      %3712 = vmatprep.subr.bf16.mxu0 0
      %3713 = vmatpush1.bf16.msra.mxu0 %v3509
      %3714 = vmatprep.subr.bf16.mxu0 0
      %3715 = vmatpush1.bf16.msra.mxu0 %v3510
      %3716 = vmatprep.subr.bf16.mxu0 0
      %3717 = vmatpush1.bf16.msra.mxu0 %v3511
      %3718 = vmatprep.subr.bf16.mxu0 0
      %3719 = vmatpush1.bf16.msra.mxu0 %v3512
      %3720 = vmatprep.subr.bf16.mxu0 0
      %3721 = vmatpush1.bf16.msra.mxu0 %v3513
      %3722 = vmatprep.subr.bf16.mxu0 0
      %3723 = vmatpush1.bf16.msra.mxu0 %v3514
      %3724 = vmatprep.subr.bf16.mxu0 0
      %3725 = vmatpush1.bf16.msra.mxu0 %v3515
      %3726 = vmatprep.subr.bf16.mxu0 0
      %3727 = vmatpush1.bf16.msra.mxu0 %v3516
      %3728 = vmatprep.subr.bf16.mxu0 0
      %3729 = vmatpush1.bf16.msra.mxu0 %v3517
      %3730 = vmatprep.subr.bf16.mxu0 0
      %3731 = vmatpush1.bf16.msra.mxu0 %v3518
      %3732 = vmatprep.subr.bf16.mxu0 0
      %3733 = vmatpush1.bf16.msra.mxu0 %v3519
      %3734 = vmatprep.subr.bf16.mxu0 0
      %3735 = vmatpush1.bf16.msra.mxu0 %v3520
      %3736 = vmatprep.subr.bf16.mxu0 0
      %3737 = vmatpush1.bf16.msra.mxu0 %v3521
      %3738 = vmatprep.subr.bf16.mxu0 0
      %3739 = vmatpush1.bf16.msra.mxu0 %v3522
      %3740 = vmatprep.mubr.bf16.mxu0 %v2978
      %3741 = vmatmul.mubr.bf16.gmra.mrb[0].mxu0 %v2971
      %v3742 = vpop.f32.mrb[0].mxu0
      %v3743 = vadd.f32 %v3670, %v3742
      %v3744 = vpop.f32.mrb[0].mxu0
      %v3745 = vpop.f32.mrb[0].mxu0
      %v3746 = vadd.f32 %v3673, %v3745
      %v3747 = vpop.f32.mrb[0].mxu0
      %3748 = vmatprep.mubr.bf16.mxu0 %v2979
      %3749 = vmatmul.mubr.bf16.gmra.mrb[0].mxu0 %v2972
      %v3750 = vpop.f32.mrb[0].mxu0
      %v3751 = vadd.f32 %v3678, %v3750
      %v3752 = vpop.f32.mrb[0].mxu0
      %v3753 = vpop.f32.mrb[0].mxu0
      %v3754 = vadd.f32 %v3681, %v3753
      %v3755 = vpop.f32.mrb[0].mxu0
      %3756 = vmatprep.mubr.bf16.mxu0 %v2980
      %3757 = vmatmul.mubr.bf16.gmra.mrb[0].mxu0 %v2973
      %v3758 = vpop.f32.mrb[0].mxu0
      %v3759 = vadd.f32 %v3686, %v3758
      %v3760 = vpop.f32.mrb[0].mxu0
      %v3761 = vpop.f32.mrb[0].mxu0
      %v3762 = vadd.f32 %v3689, %v3761
      %v3763 = vpop.f32.mrb[0].mxu0
      %3764 = vmatprep.mubr.bf16.mxu0 %v2981
      %3765 = vmatmul.mubr.bf16.gmra.mrb[0].mxu0 %v2974
      %v3766 = vpop.f32.mrb[0].mxu0
      %v3767 = vadd.f32 %v3694, %v3766
      %v3768 = vpop.f32.mrb[0].mxu0
      %v3769 = vpop.f32.mrb[0].mxu0
      %v3770 = vadd.f32 %v3697, %v3769
      %v3771 = vpop.f32.mrb[0].mxu0
      %3772 = vmatprep.mubr.bf16.mxu0 %v2982
      %3773 = vmatmul.mubr.bf16.gmra.mrb[0].mxu0 %v2975
      %v3774 = vpop.f32.mrb[0].mxu0
      %v3775 = vadd.f32 %v3702, %v3774
      %v3776 = vpop.f32.mrb[0].mxu0
      %v3777 = vpop.f32.mrb[0].mxu0
      %v3778 = vadd.f32 %v3705, %v3777
      %v3779 = vpop.f32.mrb[0].mxu0
      %3780 = vdwg.mxu0
      %3781 = vmatprep.subr.bf16.mxu0 0
      %3782 = vmatpush1.bf16.msra.mxu0 %v3523
      %3783 = vmatprep.subr.bf16.mxu0 0
      %3784 = vmatpush1.bf16.msra.mxu0 %v3524
      %3785 = vmatprep.subr.bf16.mxu0 0
      %3786 = vmatpush1.bf16.msra.mxu0 %v3525
      %3787 = vmatprep.subr.bf16.mxu0 0
      %3788 = vmatpush1.bf16.msra.mxu0 %v3526
      %3789 = vmatprep.subr.bf16.mxu0 0
      %3790 = vmatpush1.bf16.msra.mxu0 %v3527
      %3791 = vmatprep.subr.bf16.mxu0 0
      %3792 = vmatpush1.bf16.msra.mxu0 %v3528
      %3793 = vmatprep.subr.bf16.mxu0 0
      %3794 = vmatpush1.bf16.msra.mxu0 %v3529
      %3795 = vmatprep.subr.bf16.mxu0 0
      %3796 = vmatpush1.bf16.msra.mxu0 %v3530
      %3797 = vmatprep.subr.bf16.mxu0 0
      %3798 = vmatpush1.bf16.msra.mxu0 %v3531
      %3799 = vmatprep.subr.bf16.mxu0 0
      %3800 = vmatpush1.bf16.msra.mxu0 %v3532
      %3801 = vmatprep.subr.bf16.mxu0 0
      %3802 = vmatpush1.bf16.msra.mxu0 %v3533
      %3803 = vmatprep.subr.bf16.mxu0 0
      %3804 = vmatpush1.bf16.msra.mxu0 %v3534
      %3805 = vmatprep.subr.bf16.mxu0 0
      %3806 = vmatpush1.bf16.msra.mxu0 %v3535
      %3807 = vmatprep.subr.bf16.mxu0 0
      %3808 = vmatpush1.bf16.msra.mxu0 %v3536
      %3809 = vmatprep.subr.bf16.mxu0 0
      %3810 = vmatpush1.bf16.msra.mxu0 %v3537
      %3811 = vmatprep.subr.bf16.mxu0 0
      %3812 = vmatpush1.bf16.msra.mxu0 %v3538
      %3813 = vmatprep.mubr.bf16.mxu0 %v3008
      %3814 = vmatmul.mubr.bf16.gmra.mrb[0].mxu0 %v2993
      %v3815 = vpop.f32.mrb[0].mxu0
      %v3816 = vadd.f32 %v3743, %v3815
      %v3817 = vpop.f32.mrb[0].mxu0
      %v3818 = vpop.f32.mrb[0].mxu0
      %v3819 = vadd.f32 %v3746, %v3818
      %v3820 = vpop.f32.mrb[0].mxu0
      %3821 = vmatprep.mubr.bf16.mxu0 %v3009
      %3822 = vmatmul.mubr.bf16.gmra.mrb[0].mxu0 %v2994
      %v3823 = vpop.f32.mrb[0].mxu0
      %v3824 = vadd.f32 %v3751, %v3823
      %v3825 = vpop.f32.mrb[0].mxu0
      %v3826 = vpop.f32.mrb[0].mxu0
      %v3827 = vadd.f32 %v3754, %v3826
      %v3828 = vpop.f32.mrb[0].mxu0
      %3829 = vmatprep.mubr.bf16.mxu0 %v3010
      %3830 = vmatmul.mubr.bf16.gmra.mrb[0].mxu0 %v2995
      %v3831 = vpop.f32.mrb[0].mxu0
      %v3832 = vadd.f32 %v3759, %v3831
      %v3833 = vpop.f32.mrb[0].mxu0
      %v3834 = vpop.f32.mrb[0].mxu0
      %v3835 = vadd.f32 %v3762, %v3834
      %v3836 = vpop.f32.mrb[0].mxu0
      %3837 = vmatprep.mubr.bf16.mxu0 %v3011
      %3838 = vmatmul.mubr.bf16.gmra.mrb[0].mxu0 %v2996
      %v3839 = vpop.f32.mrb[0].mxu0
      %v3840 = vadd.f32 %v3767, %v3839
      %v3841 = vpop.f32.mrb[0].mxu0
      %v3842 = vpop.f32.mrb[0].mxu0
      %v3843 = vadd.f32 %v3770, %v3842
      %v3844 = vpop.f32.mrb[0].mxu0
      %3845 = vmatprep.mubr.bf16.mxu0 %v3012
      %3846 = vmatmul.mubr.bf16.gmra.mrb[0].mxu0 %v2997
      %v3847 = vpop.f32.mrb[0].mxu0
      %v3848 = vadd.f32 %v3775, %v3847
      %v3849 = vpop.f32.mrb[0].mxu0
      %v3850 = vpop.f32.mrb[0].mxu0
      %v3851 = vadd.f32 %v3778, %v3850
      %v3852 = vpop.f32.mrb[0].mxu0
      %3853 = vdwg.mxu0
      %3854 = vmatprep.subr.bf16.mxu0 0
      %3855 = vmatpush1.bf16.msra.mxu0 %v3539
      %3856 = vmatprep.subr.bf16.mxu0 0
      %3857 = vmatpush1.bf16.msra.mxu0 %v3540
      %3858 = vmatprep.subr.bf16.mxu0 0
      %3859 = vmatpush1.bf16.msra.mxu0 %v3541
      %3860 = vmatprep.subr.bf16.mxu0 0
      %3861 = vmatpush1.bf16.msra.mxu0 %v3542
      %3862 = vmatprep.subr.bf16.mxu0 0
      %3863 = vmatpush1.bf16.msra.mxu0 %v3543
      %3864 = vmatprep.subr.bf16.mxu0 0
      %3865 = vmatpush1.bf16.msra.mxu0 %v3544
      %3866 = vmatprep.subr.bf16.mxu0 0
      %3867 = vmatpush1.bf16.msra.mxu0 %v3545
      %3868 = vmatprep.subr.bf16.mxu0 0
      %3869 = vmatpush1.bf16.msra.mxu0 %v3546
      %3870 = vmatprep.subr.bf16.mxu0 0
      %3871 = vmatpush1.bf16.msra.mxu0 %v3547
      %3872 = vmatprep.subr.bf16.mxu0 0
      %3873 = vmatpush1.bf16.msra.mxu0 %v3548
      %3874 = vmatprep.subr.bf16.mxu0 0
      %3875 = vmatpush1.bf16.msra.mxu0 %v3549
      %3876 = vmatprep.subr.bf16.mxu0 0
      %3877 = vmatpush1.bf16.msra.mxu0 %v3550
      %3878 = vmatprep.subr.bf16.mxu0 0
      %3879 = vmatpush1.bf16.msra.mxu0 %v3551
      %3880 = vmatprep.subr.bf16.mxu0 0
      %3881 = vmatpush1.bf16.msra.mxu0 %v3552
      %3882 = vmatprep.subr.bf16.mxu0 0
      %3883 = vmatpush1.bf16.msra.mxu0 %v3553
      %3884 = vmatprep.subr.bf16.mxu0 0
      %3885 = vmatpush1.bf16.msra.mxu0 %v3554
      %3886 = vmatprep.mubr.bf16.mxu0 %v3030
      %3887 = vmatmul.mubr.bf16.gmra.mrb[0].mxu0 %v3015
      %v3888 = vpop.f32.mrb[0].mxu0
      %v3889 = vadd.f32 %v3816, %v3888
      %v3890 = vpop.f32.mrb[0].mxu0
      %v3891 = vpop.f32.mrb[0].mxu0
      %v3892 = vadd.f32 %v3819, %v3891
      %v3893 = vpop.f32.mrb[0].mxu0
      %3894 = vmatprep.mubr.bf16.mxu0 %v3031
      %3895 = vmatmul.mubr.bf16.gmra.mrb[0].mxu0 %v3016
      %v3896 = vpop.f32.mrb[0].mxu0
      %v3897 = vadd.f32 %v3824, %v3896
      %v3898 = vpop.f32.mrb[0].mxu0
      %v3899 = vpop.f32.mrb[0].mxu0
      %v3900 = vadd.f32 %v3827, %v3899
      %v3901 = vpop.f32.mrb[0].mxu0
      %3902 = vmatprep.mubr.bf16.mxu0 %v3032
      %3903 = vmatmul.mubr.bf16.gmra.mrb[0].mxu0 %v3017
      %v3904 = vpop.f32.mrb[0].mxu0
      %v3905 = vadd.f32 %v3832, %v3904
      %v3906 = vpop.f32.mrb[0].mxu0
      %v3907 = vpop.f32.mrb[0].mxu0
      %v3908 = vadd.f32 %v3835, %v3907
      %v3909 = vpop.f32.mrb[0].mxu0
      %3910 = vmatprep.mubr.bf16.mxu0 %v3033
      %3911 = vmatmul.mubr.bf16.gmra.mrb[0].mxu0 %v3018
      %v3912 = vpop.f32.mrb[0].mxu0
      %v3913 = vadd.f32 %v3840, %v3912
      %v3914 = vpop.f32.mrb[0].mxu0
      %v3915 = vpop.f32.mrb[0].mxu0
      %v3916 = vadd.f32 %v3843, %v3915
      %v3917 = vpop.f32.mrb[0].mxu0
      %3918 = vmatprep.mubr.bf16.mxu0 %v3034
      %3919 = vmatmul.mubr.bf16.gmra.mrb[0].mxu0 %v3019
      %v3920 = vpop.f32.mrb[0].mxu0
      %v3921 = vadd.f32 %v3848, %v3920
      %v3922 = vpop.f32.mrb[0].mxu0
      %v3923 = vpop.f32.mrb[0].mxu0
      %v3924 = vadd.f32 %v3851, %v3923
      %v3925 = vpop.f32.mrb[0].mxu0
      %3926 = vdwg.mxu0
      %3927 = vmatprep.subr.bf16.mxu0 0
      %3928 = vmatpush1.bf16.msra.mxu0 %v3555
      %3929 = vmatprep.subr.bf16.mxu0 0
      %3930 = vmatpush1.bf16.msra.mxu0 %v3556
      %3931 = vmatprep.subr.bf16.mxu0 0
      %3932 = vmatpush1.bf16.msra.mxu0 %v3557
      %3933 = vmatprep.subr.bf16.mxu0 0
      %3934 = vmatpush1.bf16.msra.mxu0 %v3558
      %3935 = vmatprep.subr.bf16.mxu0 0
      %3936 = vmatpush1.bf16.msra.mxu0 %v3559
      %3937 = vmatprep.subr.bf16.mxu0 0
      %3938 = vmatpush1.bf16.msra.mxu0 %v3560
      %3939 = vmatprep.subr.bf16.mxu0 0
      %3940 = vmatpush1.bf16.msra.mxu0 %v3561
      %3941 = vmatprep.subr.bf16.mxu0 0
      %3942 = vmatpush1.bf16.msra.mxu0 %v3562
      %3943 = vmatprep.subr.bf16.mxu0 0
      %3944 = vmatpush1.bf16.msra.mxu0 0
      %3945 = vmatprep.subr.bf16.mxu0 0
      %3946 = vmatpush1.bf16.msra.mxu0 0
      %3947 = vmatprep.subr.bf16.mxu0 0
      %3948 = vmatpush1.bf16.msra.mxu0 0
      %3949 = vmatprep.subr.bf16.mxu0 0
      %3950 = vmatpush1.bf16.msra.mxu0 0
      %3951 = vmatprep.subr.bf16.mxu0 0
      %3952 = vmatpush1.bf16.msra.mxu0 0
      %3953 = vmatprep.subr.bf16.mxu0 0
      %3954 = vmatpush1.bf16.msra.mxu0 0
      %3955 = vmatprep.subr.bf16.mxu0 0
      %3956 = vmatpush1.bf16.msra.mxu0 0
      %3957 = vmatprep.subr.bf16.mxu0 0
      %3958 = vmatpush1.bf16.msra.mxu0 0
      %3959 = vmatprep.mubr.bf16.mxu0 0
      %3960 = vmatmul.mubr.bf16.gmra.mrb[0].mxu0 %v3045
      %v3961 = vpop.f32.mrb[0].mxu0
      %v3962 = vadd.f32 %v3889, %v3961
      %v3963 = vpop.f32.mrb[0].mxu0
      %v3964 = vpop.f32.mrb[0].mxu0
      %v3965 = vadd.f32 %v3892, %v3964
      %v3966 = vpop.f32.mrb[0].mxu0
      %3967 = vmatprep.mubr.bf16.mxu0 0
      %3968 = vmatmul.mubr.bf16.gmra.mrb[0].mxu0 %v3046
      %v3969 = vpop.f32.mrb[0].mxu0
      %v3970 = vadd.f32 %v3897, %v3969
      %v3971 = vpop.f32.mrb[0].mxu0
      %v3972 = vpop.f32.mrb[0].mxu0
      %v3973 = vadd.f32 %v3900, %v3972
      %v3974 = vpop.f32.mrb[0].mxu0
      %3975 = vmatprep.mubr.bf16.mxu0 0
      %3976 = vmatmul.mubr.bf16.gmra.mrb[0].mxu0 %v3047
      %v3977 = vpop.f32.mrb[0].mxu0
      %v3978 = vadd.f32 %v3905, %v3977
      %v3979 = vpop.f32.mrb[0].mxu0
      %v3980 = vpop.f32.mrb[0].mxu0
      %v3981 = vadd.f32 %v3908, %v3980
      %v3982 = vpop.f32.mrb[0].mxu0
      %3983 = vmatprep.mubr.bf16.mxu0 0
      %3984 = vmatmul.mubr.bf16.gmra.mrb[0].mxu0 %v3048
      %v3985 = vpop.f32.mrb[0].mxu0
      %v3986 = vadd.f32 %v3913, %v3985
      %v3987 = vpop.f32.mrb[0].mxu0
      %v3988 = vpop.f32.mrb[0].mxu0
      %v3989 = vadd.f32 %v3916, %v3988
      %v3990 = vpop.f32.mrb[0].mxu0
      %3991 = vmatprep.mubr.bf16.mxu0 0
      %3992 = vmatmul.mubr.bf16.gmra.mrb[0].mxu0 %v3049
      %v3993 = vpop.f32.mrb[0].mxu0
      %v3994 = vadd.f32 %v3921, %v3993
      %v3995 = vpop.f32.mrb[0].mxu0
      %v3996 = vpop.f32.mrb[0].mxu0
      %v3997 = vadd.f32 %v3924, %v3996
      %v3998 = vpop.f32.mrb[0].mxu0
      %3999 = vdwg.mxu0
      %v4000 = vxor.u32 %v3962, 2147483648
      %v4001 = vxor.u32 %v3965, 2147483648
      %v4002 = vxor.u32 %v3970, 2147483648
      %v4003 = vxor.u32 %v3973, 2147483648
      %v4004 = vxor.u32 %v3978, 2147483648
      %v4005 = vxor.u32 %v3981, 2147483648
      %v4006 = vxor.u32 %v3986, 2147483648
      %v4007 = vxor.u32 %v3989, 2147483648
      %v4008 = vxor.u32 %v3994, 2147483648
      %v4009 = vxor.u32 %v3997, 2147483648
      %v4010 = vmul.f32 %v4000, 1.442695
      %v4011 = vpow.pop %v4010
      %v4012 = vmul.f32 %v4001, 1.442695
      %v4013 = vpow.pop %v4012
      %v4014 = vmul.f32 %v4002, 1.442695
      %v4015 = vpow.pop %v4014
      %v4016 = vmul.f32 %v4003, 1.442695
      %v4017 = vpow.pop %v4016
      %v4018 = vmul.f32 %v4004, 1.442695
      %v4019 = vpow.pop %v4018
      %v4020 = vmul.f32 %v4005, 1.442695
      %v4021 = vpow.pop %v4020
      %v4022 = vmul.f32 %v4006, 1.442695
      %v4023 = vpow.pop %v4022
      %v4024 = vmul.f32 %v4007, 1.442695
      %v4025 = vpow.pop %v4024
      %v4026 = vmul.f32 %v4008, 1.442695
      %v4027 = vpow.pop %v4026
      %v4028 = vmul.f32 %v4009, 1.442695
      %v4029 = vpow.pop %v4028
      %v4030 = vadd.f32 %v4011, 1.0
      %v4031 = vadd.f32 %v4013, 1.0
      %v4032 = vadd.f32 %v4015, 1.0
      %v4033 = vadd.f32 %v4017, 1.0
      %v4034 = vadd.f32 %v4019, 1.0
      %v4035 = vadd.f32 %v4021, 1.0
      %v4036 = vadd.f32 %v4023, 1.0
      %v4037 = vadd.f32 %v4025, 1.0
      %v4038 = vadd.f32 %v4027, 1.0
      %v4039 = vadd.f32 %v4029, 1.0
      %v4040 = vrcp.pop %v4030
      %v4041 = vmul.f32 1.0, %v4040
      %v4042 = vrcp.pop %v4031
      %v4043 = vmul.f32 1.0, %v4042
      %v4044 = vrcp.pop %v4032
      %v4045 = vmul.f32 1.0, %v4044
      %v4046 = vrcp.pop %v4033
      %v4047 = vmul.f32 1.0, %v4046
      %v4048 = vrcp.pop %v4034
      %v4049 = vmul.f32 1.0, %v4048
      %v4050 = vrcp.pop %v4035
      %v4051 = vmul.f32 1.0, %v4050
      %v4052 = vrcp.pop %v4036
      %v4053 = vmul.f32 1.0, %v4052
      %v4054 = vrcp.pop %v4037
      %v4055 = vmul.f32 1.0, %v4054
      %v4056 = vrcp.pop %v4038
      %v4057 = vmul.f32 1.0, %v4056
      %v4058 = vrcp.pop %v4039
      %v4059 = vmul.f32 1.0, %v4058
      %v4060 = vmul.f32 %v3962, %v4041
      %v4061 = vmul.f32 %v3965, %v4043
      %v4062 = vmul.f32 %v3970, %v4045
      %v4063 = vmul.f32 %v3973, %v4047
      %v4064 = vmul.f32 %v3978, %v4049
      %v4065 = vmul.f32 %v3981, %v4051
      %v4066 = vmul.f32 %v3986, %v4053
      %v4067 = vmul.f32 %v3989, %v4055
      %v4068 = vmul.f32 %v3994, %v4057
      %v4069 = vmul.f32 %v3997, %v4059
      %v4070 = vld [vmem:[%s4] sm:$0xff]
      %v4071 = vld [vmem:[%s4 + $0x8] sm:$0xff]
      %v4072 = vld [vmem:[%s4 + $0x10] sm:$0xff]
      %v4073 = vld [vmem:[%s4 + $0x18] sm:$0xff]
      %v4074 = vld [vmem:[%s4 + $0x20] sm:$0xff]
      %v4075 = vld [vmem:[%s4 + $0x28] sm:$0xff]
      %v4076 = vld [vmem:[%s4 + $0x30] sm:$0xff]
      %v4077 = vld [vmem:[%s4 + $0x38] sm:$0xff]
      %v4078 = vld [vmem:[%s4 + $0x40] sm:$0xff]
      %v4079 = vld [vmem:[%s4 + $0x48] sm:$0xff]
      %v4080 = vld [vmem:[%s4 + $0x50] sm:$0xff]
      %v4081 = vld [vmem:[%s4 + $0x58] sm:$0xff]
      %v4082 = vld [vmem:[%s4 + $0x60] sm:$0xf]
      %vm4083 = vcmask 637952
      %v4085 = vsel %vm4083, %v4070, 0
      %v4088 = vsel %vm4083, %v4071, 0
      %v4091 = vsel %vm4083, %v4072, 0
      %v4094 = vsel %vm4083, %v4073, 0
      %v4097 = vsel %vm4083, %v4074, 0
      %v4100 = vsel %vm4083, %v4075, 0
      %v4103 = vsel %vm4083, %v4076, 0
      %v4106 = vsel %vm4083, %v4077, 0
      %v4109 = vsel %vm4083, %v4078, 0
      %v4112 = vsel %vm4083, %v4079, 0
      %v4115 = vsel %vm4083, %v4080, 0
      %v4118 = vsel %vm4083, %v4081, 0
      %v4121 = vsel %vm4083, %v4082, 0
      %v4124 = vsel %vm2654, %v4069, 0
      %4126 = vmatprep.subr.mxu0 0.0
      %4127 = vmatpush1.msra.mxu0 %v4060
      %4128 = vmatprep.subr.mxu0 0.0
      %4129 = vmatpush1.msra.mxu0 %v4061
      %4130 = vmatprep.subr.mxu0 0.0
      %4131 = vmatpush1.msra.mxu0 %v4062
      %4132 = vmatprep.subr.mxu0 0.0
      %4133 = vmatpush1.msra.mxu0 %v4063
      %4134 = vmatprep.subr.mxu0 0.0
      %4135 = vmatpush1.msra.mxu0 %v4064
      %4136 = vmatprep.subr.mxu0 0.0
      %4137 = vmatpush1.msra.mxu0 %v4065
      %4138 = vmatprep.subr.mxu0 0.0
      %4139 = vmatpush1.msra.mxu0 %v4066
      %4140 = vmatprep.subr.mxu0 0.0
      %4141 = vmatpush1.msra.mxu0 %v4067
      %4142 = vmatprep.subr.mxu0 0.0
      %4143 = vmatpush1.msra.mxu0 %v4068
      %4144 = vmatprep.subr.mxu0 0.0
      %4145 = vmatpush1.msra.mxu0 %v4124
      %4146 = vmatprep.subr.mxu0 0.0
      %4147 = vmatpush1.msra.mxu0 0.0
      %4148 = vmatprep.subr.mxu0 0.0
      %4149 = vmatpush1.msra.mxu0 0.0
      %4150 = vmatprep.subr.mxu0 0.0
      %4151 = vmatpush1.msra.mxu0 0.0
      %4152 = vmatprep.subr.mxu0 0.0
      %4153 = vmatpush1.msra.mxu0 0.0
      %4154 = vmatprep.subr.mxu0 0.0
      %4155 = vmatpush1.msra.mxu0 0.0
      %4156 = vmatprep.subr.mxu0 0.0
      %4157 = vmatpush1.msra.mxu0 0.0
      %4158 = vmatprep.subr.mxu0 0.0
      %4159 = vmatpush1.msra.mxu0 0.0
      %4160 = vmatprep.subr.mxu0 0.0
      %4161 = vmatpush1.msra.mxu0 0.0
      %4162 = vmatprep.subr.mxu0 0.0
      %4163 = vmatpush1.msra.mxu0 0.0
      %4164 = vmatprep.subr.mxu0 0.0
      %4165 = vmatpush1.msra.mxu0 0.0
      %4166 = vmatprep.subr.mxu0 0.0
      %4167 = vmatpush1.msra.mxu0 0.0
      %4168 = vmatprep.subr.mxu0 0.0
      %4169 = vmatpush1.msra.mxu0 0.0
      %4170 = vmatprep.subr.mxu0 0.0
      %4171 = vmatpush1.msra.mxu0 0.0
      %4172 = vmatprep.subr.mxu0 0.0
      %4173 = vmatpush1.msra.mxu0 0.0
      %4174 = vmatprep.subr.mxu0 0.0
      %4175 = vmatpush1.msra.mxu0 0.0
      %4176 = vmatprep.subr.mxu0 0.0
      %4177 = vmatpush1.msra.mxu0 0.0
      %4178 = vmatprep.subr.mxu0 0.0
      %4179 = vmatpush1.msra.mxu0 0.0
      %4180 = vmatprep.subr.mxu0 0.0
      %4181 = vmatpush1.msra.mxu0 0.0
      %4182 = vmatprep.subr.mxu0 0.0
      %4183 = vmatpush1.msra.mxu0 0.0
      %4184 = vmatprep.subr.mxu0 0.0
      %4185 = vmatpush1.msra.mxu0 0.0
      %4186 = vmatprep.subr.mxu0 0.0
      %4187 = vmatpush1.msra.mxu0 0.0
      %4188 = vmatprep.subr.mxu0 0.0
      %4189 = vmatpush1.msra.mxu0 0.0
      %4190 = vmatprep.mubr.f32.mxu0 0.0
      %4191 = vmatmul.mubr.f32.gmra.mrb[0].mxu0 %v4085
      %v4192 = vpop.f32.mrb[0].mxu0
      %v4193 = vadd.f32 0.0, %v4192
      %v4194 = vpop.f32.mrb[0].mxu0
      %4195 = vmatprep.mubr.f32.mxu0 0.0
      %4196 = vmatmul.mubr.f32.gmra.mrb[0].mxu0 %v4088
      %v4197 = vpop.f32.mrb[0].mxu0
      %v4198 = vadd.f32 0.0, %v4197
      %v4199 = vpop.f32.mrb[0].mxu0
      %4200 = vmatprep.mubr.f32.mxu0 0.0
      %4201 = vmatmul.mubr.f32.gmra.mrb[0].mxu0 %v4091
      %v4202 = vpop.f32.mrb[0].mxu0
      %v4203 = vadd.f32 0.0, %v4202
      %v4204 = vpop.f32.mrb[0].mxu0
      %4205 = vmatprep.mubr.f32.mxu0 0.0
      %4206 = vmatmul.mubr.f32.gmra.mrb[0].mxu0 %v4094
      %v4207 = vpop.f32.mrb[0].mxu0
      %v4208 = vadd.f32 0.0, %v4207
      %v4209 = vpop.f32.mrb[0].mxu0
      %4210 = vmatprep.mubr.f32.mxu0 0.0
      %4211 = vmatmul.mubr.f32.gmra.mrb[0].mxu0 %v4097
      %v4212 = vpop.f32.mrb[0].mxu0
      %v4213 = vadd.f32 0.0, %v4212
      %v4214 = vpop.f32.mrb[0].mxu0
      %4215 = vmatprep.mubr.f32.mxu0 0.0
      %4216 = vmatmul.mubr.f32.gmra.mrb[0].mxu0 %v4100
      %v4217 = vpop.f32.mrb[0].mxu0
      %v4218 = vadd.f32 0.0, %v4217
      %v4219 = vpop.f32.mrb[0].mxu0
      %4220 = vmatprep.mubr.f32.mxu0 0.0
      %4221 = vmatmul.mubr.f32.gmra.mrb[0].mxu0 %v4103
      %v4222 = vpop.f32.mrb[0].mxu0
      %v4223 = vadd.f32 0.0, %v4222
      %v4224 = vpop.f32.mrb[0].mxu0
      %4225 = vmatprep.mubr.f32.mxu0 0.0
      %4226 = vmatmul.mubr.f32.gmra.mrb[0].mxu0 %v4106
      %v4227 = vpop.f32.mrb[0].mxu0
      %v4228 = vadd.f32 0.0, %v4227
      %v4229 = vpop.f32.mrb[0].mxu0
      %4230 = vmatprep.mubr.f32.mxu0 0.0
      %4231 = vmatmul.mubr.f32.gmra.mrb[0].mxu0 %v4109
      %v4232 = vpop.f32.mrb[0].mxu0
      %v4233 = vadd.f32 0.0, %v4232
      %v4234 = vpop.f32.mrb[0].mxu0
      %4235 = vmatprep.mubr.f32.mxu0 0.0
      %4236 = vmatmul.mubr.f32.gmra.mrb[0].mxu0 %v4112
      %v4237 = vpop.f32.mrb[0].mxu0
      %v4238 = vadd.f32 0.0, %v4237
      %v4239 = vpop.f32.mrb[0].mxu0
      %4240 = vmatprep.mubr.f32.mxu0 0.0
      %4241 = vmatmul.mubr.f32.gmra.mrb[0].mxu0 %v4115
      %v4242 = vpop.f32.mrb[0].mxu0
      %v4243 = vadd.f32 0.0, %v4242
      %v4244 = vpop.f32.mrb[0].mxu0
      %4245 = vmatprep.mubr.f32.mxu0 0.0
      %4246 = vmatmul.mubr.f32.gmra.mrb[0].mxu0 %v4118
      %v4247 = vpop.f32.mrb[0].mxu0
      %v4248 = vadd.f32 0.0, %v4247
      %v4249 = vpop.f32.mrb[0].mxu0
      %4250 = vmatprep.mubr.f32.mxu0 0.0
      %4251 = vmatmul.mubr.f32.gmra.mrb[0].mxu0 %v4121
      %v4252 = vpop.f32.mrb[0].mxu0
      %v4253 = vadd.f32 0.0, %v4252
      %v4254 = vpop.f32.mrb[0].mxu0
      %4255 = vdwg.mxu0
      %4256 = vst [vmem:[#allocation3] sm:$0xff] %v4193
      %4257 = vst [vmem:[#allocation3 + $0x8] sm:$0xff] %v4198
      %4258 = vst [vmem:[#allocation3 + $0x10] sm:$0xff] %v4203
      %4259 = vst [vmem:[#allocation3 + $0x18] sm:$0xff] %v4208
      %4260 = vst [vmem:[#allocation3 + $0x20] sm:$0xff] %v4213
      %4261 = vst [vmem:[#allocation3 + $0x28] sm:$0xff] %v4218
      %4262 = vst [vmem:[#allocation3 + $0x30] sm:$0xff] %v4223
      %4263 = vst [vmem:[#allocation3 + $0x38] sm:$0xff] %v4228
      %4264 = vst [vmem:[#allocation3 + $0x40] sm:$0xff] %v4233
      %4265 = vst [vmem:[#allocation3 + $0x48] sm:$0xff] %v4238
      %4266 = vst [vmem:[#allocation3 + $0x50] sm:$0xff] %v4243
      %4267 = vst [vmem:[#allocation3 + $0x58] sm:$0xff] %v4248
      %4268 = vst [vmem:[#allocation3 + $0x60] sm:$0xf] %v4253
      %v4269 = vld [vmem:[#allocation3] sm:$0xff]
      %v4270 = vld [vmem:[#allocation3 + $0x8] sm:$0xff]
      %v4271 = vld [vmem:[#allocation3 + $0x10] sm:$0xff]
      %v4272 = vld [vmem:[#allocation3 + $0x18] sm:$0xff]
      %v4273 = vld [vmem:[#allocation3 + $0x20] sm:$0xff]
      %v4274 = vld [vmem:[#allocation3 + $0x28] sm:$0xff]
      %v4275 = vld [vmem:[#allocation3 + $0x30] sm:$0xff]
      %v4276 = vld [vmem:[#allocation3 + $0x38] sm:$0xff]
      %v4277 = vld [vmem:[#allocation3 + $0x40] sm:$0xff]
      %v4278 = vld [vmem:[#allocation3 + $0x48] sm:$0x3f]
      %v4279 = vpack.c.bf16 %v4270, %v4269
      %v4280 = vpack.c.bf16 %v4272, %v4271
      %v4281 = vpack.c.bf16 %v4274, %v4273
      %v4282 = vpack.c.bf16 %v4276, %v4275
      %v4283 = vpack.c.bf16 %v4278, %v4277
      %v4284 = vld [vmem:[#allocation3 + $0x1] sm:$0xff]
      %v4285 = vld [vmem:[#allocation3 + $0x9] sm:$0xff]
      %v4286 = vld [vmem:[#allocation3 + $0x11] sm:$0xff]
      %v4287 = vld [vmem:[#allocation3 + $0x19] sm:$0xff]
      %v4288 = vld [vmem:[#allocation3 + $0x21] sm:$0xff]
      %v4289 = vld [vmem:[#allocation3 + $0x29] sm:$0xff]
      %v4290 = vld [vmem:[#allocation3 + $0x31] sm:$0xff]
      %v4291 = vld [vmem:[#allocation3 + $0x39] sm:$0xff]
      %v4292 = vld [vmem:[#allocation3 + $0x41] sm:$0xff]
      %v4293 = vld [vmem:[#allocation3 + $0x49] sm:$0x3f]
      %v4294 = vpack.c.bf16 %v4285, %v4284
      %v4295 = vpack.c.bf16 %v4287, %v4286
      %v4296 = vpack.c.bf16 %v4289, %v4288
      %v4297 = vpack.c.bf16 %v4291, %v4290
      %v4298 = vpack.c.bf16 %v4293, %v4292
      %v4299 = vld [vmem:[#allocation3 + $0x2] sm:$0xff]
      %v4300 = vld [vmem:[#allocation3 + $0xa] sm:$0xff]
      %v4301 = vld [vmem:[#allocation3 + $0x12] sm:$0xff]
      %v4302 = vld [vmem:[#allocation3 + $0x1a] sm:$0xff]
      %v4303 = vld [vmem:[#allocation3 + $0x22] sm:$0xff]
      %v4304 = vld [vmem:[#allocation3 + $0x2a] sm:$0xff]
      %v4305 = vld [vmem:[#allocation3 + $0x32] sm:$0xff]
      %v4306 = vld [vmem:[#allocation3 + $0x3a] sm:$0xff]
      %v4307 = vld [vmem:[#allocation3 + $0x42] sm:$0xff]
      %v4308 = vld [vmem:[#allocation3 + $0x4a] sm:$0x3f]
      %v4309 = vpack.c.bf16 %v4300, %v4299
      %v4310 = vpack.c.bf16 %v4302, %v4301
      %v4311 = vpack.c.bf16 %v4304, %v4303
      %v4312 = vpack.c.bf16 %v4306, %v4305
      %v4313 = vpack.c.bf16 %v4308, %v4307
      %v4314 = vld [vmem:[#allocation3 + $0x4a] sm:$0xff]
      %v4315 = vld [vmem:[#allocation3 + $0x52] sm:$0x3f]
      %v4316 = vpack.c.bf16 %v4301, %v4300
      %v4317 = vpack.c.bf16 %v4303, %v4302
      %v4318 = vpack.c.bf16 %v4305, %v4304
      %v4319 = vpack.c.bf16 %v4307, %v4306
      %v4320 = vpack.c.bf16 %v4315, %v4314
      %v4321 = vld [vmem:[#allocation3 + $0xb] sm:$0xff]
      %v4322 = vld [vmem:[#allocation3 + $0x13] sm:$0xff]
      %v4323 = vld [vmem:[#allocation3 + $0x1b] sm:$0xff]
      %v4324 = vld [vmem:[#allocation3 + $0x23] sm:$0xff]
      %v4325 = vld [vmem:[#allocation3 + $0x2b] sm:$0xff]
      %v4326 = vld [vmem:[#allocation3 + $0x33] sm:$0xff]
      %v4327 = vld [vmem:[#allocation3 + $0x3b] sm:$0xff]
      %v4328 = vld [vmem:[#allocation3 + $0x43] sm:$0xff]
      %v4329 = vld [vmem:[#allocation3 + $0x4b] sm:$0xff]
      %v4330 = vld [vmem:[#allocation3 + $0x53] sm:$0x3f]
      %v4331 = vpack.c.bf16 %v4322, %v4321
      %v4332 = vpack.c.bf16 %v4324, %v4323
      %v4333 = vpack.c.bf16 %v4326, %v4325
      %v4334 = vpack.c.bf16 %v4328, %v4327
      %v4335 = vpack.c.bf16 %v4330, %v4329
      %v4336 = vld [vmem:[#allocation3 + $0xc] sm:$0xff]
      %v4337 = vld [vmem:[#allocation3 + $0x14] sm:$0xff]
      %v4338 = vld [vmem:[#allocation3 + $0x1c] sm:$0xff]
      %v4339 = vld [vmem:[#allocation3 + $0x24] sm:$0xff]
      %v4340 = vld [vmem:[#allocation3 + $0x2c] sm:$0xff]
      %v4341 = vld [vmem:[#allocation3 + $0x34] sm:$0xff]
      %v4342 = vld [vmem:[#allocation3 + $0x3c] sm:$0xff]
      %v4343 = vld [vmem:[#allocation3 + $0x44] sm:$0xff]
      %v4344 = vld [vmem:[#allocation3 + $0x4c] sm:$0xff]
      %v4345 = vld [vmem:[#allocation3 + $0x54] sm:$0x3f]
      %v4346 = vpack.c.bf16 %v4337, %v4336
      %v4347 = vpack.c.bf16 %v4339, %v4338
      %v4348 = vpack.c.bf16 %v4341, %v4340
      %v4349 = vpack.c.bf16 %v4343, %v4342
      %v4350 = vpack.c.bf16 %v4345, %v4344
      %v4351 = vld [vmem:[#allocation3 + $0x54] sm:$0xff]
      %v4352 = vld [vmem:[#allocation3 + $0x5c] sm:$0x3f]
      %v4353 = vpack.c.bf16 %v4338, %v4337
      %v4354 = vpack.c.bf16 %v4340, %v4339
      %v4355 = vpack.c.bf16 %v4342, %v4341
      %v4356 = vpack.c.bf16 %v4344, %v4343
      %v4357 = vpack.c.bf16 %v4352, %v4351
      %v4358 = vld [vmem:[#allocation3 + $0x15] sm:$0xff]
      %v4359 = vld [vmem:[#allocation3 + $0x1d] sm:$0xff]
      %v4360 = vld [vmem:[#allocation3 + $0x25] sm:$0xff]
      %v4361 = vld [vmem:[#allocation3 + $0x2d] sm:$0xff]
      %v4362 = vld [vmem:[#allocation3 + $0x35] sm:$0xff]
      %v4363 = vld [vmem:[#allocation3 + $0x3d] sm:$0xff]
      %v4364 = vld [vmem:[#allocation3 + $0x45] sm:$0xff]
      %v4365 = vld [vmem:[#allocation3 + $0x4d] sm:$0xff]
      %v4366 = vld [vmem:[#allocation3 + $0x55] sm:$0xff]
      %v4367 = vld [vmem:[#allocation3 + $0x5d] sm:$0x3f]
      %v4368 = vpack.c.bf16 %v4359, %v4358
      %v4369 = vpack.c.bf16 %v4361, %v4360
      %v4370 = vpack.c.bf16 %v4363, %v4362
      %v4371 = vpack.c.bf16 %v4365, %v4364
      %v4372 = vpack.c.bf16 %v4367, %v4366
      %v4373 = vld [vmem:[#allocation3 + $0x16] sm:$0xff]
      %v4374 = vld [vmem:[#allocation3 + $0x1e] sm:$0xff]
      %v4375 = vld [vmem:[#allocation3 + $0x26] sm:$0xff]
      %v4376 = vld [vmem:[#allocation3 + $0x2e] sm:$0xff]
      %v4377 = vld [vmem:[#allocation3 + $0x36] sm:$0xff]
      %v4378 = vld [vmem:[#allocation3 + $0x3e] sm:$0xff]
      %v4379 = vld [vmem:[#allocation3 + $0x46] sm:$0xff]
      %v4380 = vld [vmem:[#allocation3 + $0x4e] sm:$0xff]
      %v4381 = vld [vmem:[#allocation3 + $0x56] sm:$0xff]
      %v4382 = vld [vmem:[#allocation3 + $0x5e] sm:$0x3f]
      %v4383 = vpack.c.bf16 %v4374, %v4373
      %v4384 = vpack.c.bf16 %v4376, %v4375
      %v4385 = vpack.c.bf16 %v4378, %v4377
      %v4386 = vpack.c.bf16 %v4380, %v4379
      %v4387 = vpack.c.bf16 %v4382, %v4381
      %s4388 = scalar_lea.vmem %s1, 1152
      %v4389 = vld [vmem:[%s4388] sm:$0xf]
      %v4390 = vld [vmem:[%s4388 + $0x4] sm:$0xf]
      %v4391 = vld [vmem:[%s4388 + $0x8] sm:$0xf]
      %v4392 = vld [vmem:[%s4388 + $0xc] sm:$0xf]
      %v4393 = vld [vmem:[%s4388 + $0x10] sm:$0xf]
      %v4394 = vld [vmem:[%s4388 + $0x14] sm:$0xf]
      %v4395 = vld [vmem:[%s4388 + $0x18] sm:$0xf]
      %v4396 = vld [vmem:[%s4388 + $0x1c] sm:$0xf]
      %v4397 = vld [vmem:[%s4388 + $0x20] sm:$0xf]
      %v4398 = vld [vmem:[%s4388 + $0x24] sm:$0xf]
      %v4399 = vld [vmem:[%s4388 + $0x28] sm:$0xf]
      %v4400 = vld [vmem:[%s4388 + $0x2c] sm:$0xf]
      %v4401 = vld [vmem:[%s4388 + $0x30] sm:$0xf]
      %v4402 = vld [vmem:[%s4388 + $0x34] sm:$0xf]
      %v4403 = vld [vmem:[%s4388 + $0x38] sm:$0xf]
      %v4404 = vld [vmem:[%s4388 + $0x3c] sm:$0xf]
      %v4405 = vld [vmem:[%s4388 + $0x40] sm:$0xf]
      %v4406 = vld [vmem:[%s4388 + $0x44] sm:$0xf]
      %v4407 = vld [vmem:[%s4388 + $0x48] sm:$0xf]
      %v4408 = vld [vmem:[%s4388 + $0x4c] sm:$0xf]
      %v4409 = vld [vmem:[%s4388 + $0x50] sm:$0xf]
      %v4410 = vld [vmem:[%s4388 + $0x54] sm:$0xf]
      %v4411 = vld [vmem:[%s4388 + $0x58] sm:$0xf]
      %v4412 = vld [vmem:[%s4388 + $0x5c] sm:$0xf]
      %v4413 = vld [vmem:[%s4388 + $0x60] sm:$0xf]
      %v4414 = vld [vmem:[%s4388 + $0x64] sm:$0xf]
      %v4415 = vld [vmem:[%s4388 + $0x68] sm:$0xf]
      %v4416 = vld [vmem:[%s4388 + $0x6c] sm:$0xf]
      %v4417 = vld [vmem:[%s4388 + $0x70] sm:$0xf]
      %v4418 = vld [vmem:[%s4388 + $0x74] sm:$0xf]
      %v4419 = vld [vmem:[%s4388 + $0x78] sm:$0xf]
      %v4420 = vld [vmem:[%s4388 + $0x7c] sm:$0xf]
      %v4421 = vld [vmem:[%s4388 + $0x80] sm:$0xf]
      %v4422 = vld [vmem:[%s4388 + $0x84] sm:$0xf]
      %v4423 = vld [vmem:[%s4388 + $0x88] sm:$0xf]
      %v4424 = vld [vmem:[%s4388 + $0x8c] sm:$0xf]
      %v4425 = vld [vmem:[%s4388 + $0x90] sm:$0xf]
      %v4426 = vld [vmem:[%s4388 + $0x94] sm:$0xf]
      %v4427 = vld [vmem:[%s4388 + $0x98] sm:$0xf]
      %v4428 = vld [vmem:[%s4388 + $0x9c] sm:$0xf]
      %v4429 = vld [vmem:[%s4388 + $0xa0] sm:$0xf]
      %v4430 = vld [vmem:[%s4388 + $0xa4] sm:$0xf]
      %v4431 = vld [vmem:[%s4388 + $0xa8] sm:$0xf]
      %v4432 = vld [vmem:[%s4388 + $0xac] sm:$0xf]
      %v4433 = vld [vmem:[%s4388 + $0xb0] sm:$0xf]
      %v4434 = vld [vmem:[%s4388 + $0xb4] sm:$0xf]
      %v4435 = vld [vmem:[%s4388 + $0xb8] sm:$0xf]
      %v4436 = vld [vmem:[%s4388 + $0xbc] sm:$0xf]
      %v4437 = vld [vmem:[%s4388 + $0xc0] sm:$0xf]
      %v4438 = vld [vmem:[%s4388 + $0xc4] sm:$0xf]
      %v4439 = vld [vmem:[%s4388 + $0xc8] sm:$0xf]
      %v4440 = vld [vmem:[%s4388 + $0xcc] sm:$0xf]
      %v4441 = vld [vmem:[%s4388 + $0xd0] sm:$0xf]
      %v4442 = vld [vmem:[%s4388 + $0xd4] sm:$0xf]
      %v4443 = vld [vmem:[%s4388 + $0xd8] sm:$0xf]
      %v4444 = vld [vmem:[%s4388 + $0xdc] sm:$0xf]
      %v4445 = vld [vmem:[%s4388 + $0xe0] sm:$0xf]
      %v4446 = vld [vmem:[%s4388 + $0xe4] sm:$0xf]
      %v4447 = vld [vmem:[%s4388 + $0xe8] sm:$0xf]
      %v4448 = vld [vmem:[%s4388 + $0xec] sm:$0xf]
      %v4449 = vld [vmem:[%s4388 + $0xf0] sm:$0xf]
      %v4450 = vld [vmem:[%s4388 + $0xf4] sm:$0xf]
      %v4451 = vld [vmem:[%s4388 + $0xf8] sm:$0xf]
      %v4452 = vld [vmem:[%s4388 + $0xfc] sm:$0xf]
      %v4453 = vld [vmem:[%s4388 + $0x100] sm:$0xf]
      %v4454 = vld [vmem:[%s4388 + $0x104] sm:$0xf]
      %v4455 = vld [vmem:[%s4388 + $0x108] sm:$0xf]
      %v4456 = vld [vmem:[%s4388 + $0x10c] sm:$0xf]
      %v4457 = vld [vmem:[%s4388 + $0x110] sm:$0xf]
      %v4458 = vld [vmem:[%s4388 + $0x114] sm:$0xf]
      %v4459 = vld [vmem:[%s4388 + $0x118] sm:$0xf]
      %v4460 = vld [vmem:[%s4388 + $0x11c] sm:$0xf]
      %v4461 = vld [vmem:[%s4388 + $0x120] sm:$0xf]
      %v4462 = vld [vmem:[%s4388 + $0x124] sm:$0xf]
      %v4463 = vld [vmem:[%s4388 + $0x128] sm:$0xf]
      %v4464 = vld [vmem:[%s4388 + $0x12c] sm:$0xf]
      %v4465 = vld [vmem:[%s4388 + $0x130] sm:$0xf]
      %v4466 = vld [vmem:[%s4388 + $0x134] sm:$0xf]
      %v4467 = vld [vmem:[%s4388 + $0x138] sm:$0xf]
      %v4468 = vld [vmem:[%s4388 + $0x13c] sm:$0xf]
      %v4469 = vld [vmem:[%s4388 + $0x140] sm:$0xf]
      %v4470 = vld [vmem:[%s4388 + $0x144] sm:$0xf]
      %v4471 = vld [vmem:[%s4388 + $0x148] sm:$0xf]
      %v4472 = vld [vmem:[%s4388 + $0x14c] sm:$0xf]
      %v4473 = vld [vmem:[%s4388 + $0x150] sm:$0xf]
      %v4474 = vld [vmem:[%s4388 + $0x154] sm:$0xf]
      %v4475 = vld [vmem:[%s4388 + $0x158] sm:$0xf]
      %v4476 = vld [vmem:[%s4388 + $0x15c] sm:$0xf]
      %v4477 = vld [vmem:[%s4388 + $0x160] sm:$0xf]
      %v4478 = vld [vmem:[%s4388 + $0x164] sm:$0xf]
      %v4479 = vld [vmem:[%s4388 + $0x168] sm:$0xf]
      %v4480 = vld [vmem:[%s4388 + $0x16c] sm:$0xf]
      %v4481 = vld [vmem:[%s4388 + $0x170] sm:$0xf]
      %v4482 = vld [vmem:[%s4388 + $0x174] sm:$0xf]
      %v4483 = vld [vmem:[%s4388 + $0x178] sm:$0xf]
      %v4484 = vld [vmem:[%s4388 + $0x17c] sm:$0xf]
      %v4485 = vld [vmem:[%s4388 + $0x180] sm:$0xf]
      %v4486 = vld [vmem:[%s4388 + $0x184] sm:$0xf]
      %v4487 = vld [vmem:[%s4388 + $0x188] sm:$0xf]
      %v4488 = vld [vmem:[%s4388 + $0x18c] sm:$0xf]
      %v4489 = vld [vmem:[%s4388 + $0x190] sm:$0xf]
      %v4490 = vld [vmem:[%s4388 + $0x194] sm:$0xf]
      %v4491 = vld [vmem:[%s4388 + $0x198] sm:$0xf]
      %v4492 = vld [vmem:[%s4388 + $0x19c] sm:$0xf]
      %v4493 = vld [vmem:[%s4388 + $0x1a0] sm:$0xf]
      %v4494 = vld [vmem:[%s4388 + $0x1a4] sm:$0xf]
      %v4495 = vld [vmem:[%s4388 + $0x1a8] sm:$0xf]
      %v4496 = vld [vmem:[%s4388 + $0x1ac] sm:$0xf]
      %v4497 = vld [vmem:[%s4388 + $0x1b0] sm:$0xf]
      %v4498 = vld [vmem:[%s4388 + $0x1b4] sm:$0xf]
      %v4499 = vld [vmem:[%s4388 + $0x1b8] sm:$0xf]
      %v4500 = vld [vmem:[%s4388 + $0x1bc] sm:$0xf]
      %v4501 = vld [vmem:[%s4388 + $0x1c0] sm:$0xf]
      %v4502 = vld [vmem:[%s4388 + $0x1c4] sm:$0xf]
      %v4503 = vld [vmem:[%s4388 + $0x1c8] sm:$0xf]
      %v4504 = vld [vmem:[%s4388 + $0x1cc] sm:$0xf]
      %v4505 = vld [vmem:[%s4388 + $0x1d0] sm:$0xf]
      %v4506 = vld [vmem:[%s4388 + $0x1d4] sm:$0xf]
      %v4507 = vld [vmem:[%s4388 + $0x1d8] sm:$0xf]
      %v4508 = vld [vmem:[%s4388 + $0x1dc] sm:$0xf]
      %v4509 = vld [vmem:[%s4388 + $0x1e0] sm:$0xf]
      %v4510 = vld [vmem:[%s4388 + $0x1e4] sm:$0xf]
      %v4511 = vld [vmem:[%s4388 + $0x1e8] sm:$0xf]
      %v4512 = vld [vmem:[%s4388 + $0x1ec] sm:$0xf]
      %v4513 = vld [vmem:[%s4388 + $0x1f0] sm:$0xf]
      %v4514 = vld [vmem:[%s4388 + $0x1f4] sm:$0xf]
      %v4515 = vld [vmem:[%s4388 + $0x1f8] sm:$0xf]
      %v4516 = vld [vmem:[%s4388 + $0x1fc] sm:$0xf]
      %v4517 = vld [vmem:[%s4388 + $0x200] sm:$0xf]
      %v4518 = vld [vmem:[%s4388 + $0x204] sm:$0xf]
      %v4519 = vld [vmem:[%s4388 + $0x208] sm:$0xf]
      %v4520 = vld [vmem:[%s4388 + $0x20c] sm:$0xf]
      %v4521 = vld [vmem:[%s4388 + $0x210] sm:$0xf]
      %v4522 = vld [vmem:[%s4388 + $0x214] sm:$0xf]
      %v4523 = vld [vmem:[%s4388 + $0x218] sm:$0xf]
      %v4524 = vld [vmem:[%s4388 + $0x21c] sm:$0xf]
      %v4525 = vld [vmem:[%s4388 + $0x220] sm:$0xf]
      %v4526 = vld [vmem:[%s4388 + $0x224] sm:$0xf]
      %v4527 = vld [vmem:[%s4388 + $0x228] sm:$0xf]
      %v4528 = vld [vmem:[%s4388 + $0x22c] sm:$0xf]
      %v4529 = vld [vmem:[%s4388 + $0x230] sm:$0xf]
      %v4530 = vld [vmem:[%s4388 + $0x234] sm:$0xf]
      %v4531 = vld [vmem:[%s4388 + $0x238] sm:$0xf]
      %v4532 = vld [vmem:[%s4388 + $0x23c] sm:$0xf]
      %s4533 = scalar_lea.vmem %s2, 2
      %v4534 = vld [vmem:[%s4533] sm:$0x1]
      %v4536 = vlaneseq
      %v4537 = vshrl.u32 %v4536, 7
      %v4538 = vsub.s32 0, %v4537
      %v4539 = vrot.slane %v4534, %v4538
      %v4685 = vunpack.c.l.b16 %v4389
      %v4686 = vunpack.c.l.b16 %v4390
      %v4687 = vunpack.c.l.b16 %v4391
      %v4688 = vunpack.c.l.b16 %v4392
      %v4689 = vunpack.c.l.b16 %v4393
      %v4690 = vunpack.c.l.b16 %v4394
      %v4691 = vunpack.c.l.b16 %v4395
      %v4692 = vunpack.c.l.b16 %v4396
      %v4693 = vunpack.c.l.b16 %v4397
      %v4694 = vunpack.c.l.b16 %v4398
      %v4695 = vunpack.c.l.b16 %v4399
      %v4696 = vunpack.c.l.b16 %v4400
      %v4697 = vunpack.c.l.b16 %v4401
      %v4698 = vunpack.c.l.b16 %v4402
      %v4699 = vunpack.c.l.b16 %v4403
      %v4700 = vunpack.c.l.b16 %v4404
      %v4701 = vunpack.c.l.b16 %v4405
      %v4702 = vunpack.c.l.b16 %v4406
      %v4703 = vunpack.c.l.b16 %v4407
      %v4704 = vunpack.c.l.b16 %v4408
      %v4705 = vunpack.c.l.b16 %v4409
      %v4706 = vunpack.c.l.b16 %v4410
      %v4707 = vunpack.c.l.b16 %v4411
      %v4708 = vunpack.c.l.b16 %v4412
      %v4709 = vunpack.c.l.b16 %v4413
      %v4710 = vunpack.c.l.b16 %v4414
      %v4711 = vunpack.c.l.b16 %v4415
      %v4712 = vunpack.c.l.b16 %v4416
      %v4713 = vunpack.c.l.b16 %v4417
      %v4714 = vunpack.c.l.b16 %v4418
      %v4715 = vunpack.c.l.b16 %v4419
      %v4716 = vunpack.c.l.b16 %v4420
      %v4717 = vunpack.c.l.b16 %v4421
      %v4718 = vunpack.c.l.b16 %v4422
      %v4719 = vunpack.c.l.b16 %v4423
      %v4720 = vunpack.c.l.b16 %v4424
      %v4721 = vunpack.c.l.b16 %v4425
      %v4722 = vunpack.c.l.b16 %v4426
      %v4723 = vunpack.c.l.b16 %v4427
      %v4724 = vunpack.c.l.b16 %v4428
      %v4725 = vunpack.c.l.b16 %v4429
      %v4726 = vunpack.c.l.b16 %v4430
      %v4727 = vunpack.c.l.b16 %v4431
      %v4728 = vunpack.c.l.b16 %v4432
      %v4729 = vunpack.c.l.b16 %v4433
      %v4730 = vunpack.c.l.b16 %v4434
      %v4731 = vunpack.c.l.b16 %v4435
      %v4732 = vunpack.c.l.b16 %v4436
      %v4733 = vunpack.c.l.b16 %v4437
      %v4734 = vunpack.c.l.b16 %v4438
      %v4735 = vunpack.c.l.b16 %v4439
      %v4736 = vunpack.c.l.b16 %v4440
      %v4737 = vunpack.c.l.b16 %v4441
      %v4738 = vunpack.c.l.b16 %v4442
      %v4739 = vunpack.c.l.b16 %v4443
      %v4740 = vunpack.c.l.b16 %v4444
      %v4741 = vunpack.c.l.b16 %v4445
      %v4742 = vunpack.c.l.b16 %v4446
      %v4743 = vunpack.c.l.b16 %v4447
      %v4744 = vunpack.c.l.b16 %v4448
      %v4745 = vunpack.c.l.b16 %v4449
      %v4746 = vunpack.c.l.b16 %v4450
      %v4747 = vunpack.c.l.b16 %v4451
      %v4748 = vunpack.c.l.b16 %v4452
      %v4749 = vunpack.c.l.b16 %v4453
      %v4750 = vunpack.c.l.b16 %v4454
      %v4751 = vunpack.c.l.b16 %v4455
      %v4752 = vunpack.c.l.b16 %v4456
      %v4753 = vunpack.c.l.b16 %v4457
      %v4754 = vunpack.c.l.b16 %v4458
      %v4755 = vunpack.c.l.b16 %v4459
      %v4756 = vunpack.c.l.b16 %v4460
      %v4757 = vunpack.c.l.b16 %v4461
      %v4758 = vunpack.c.l.b16 %v4462
      %v4759 = vunpack.c.l.b16 %v4463
      %v4760 = vunpack.c.l.b16 %v4464
      %v4761 = vunpack.c.l.b16 %v4465
      %v4762 = vunpack.c.l.b16 %v4466
      %v4763 = vunpack.c.l.b16 %v4467
      %v4764 = vunpack.c.l.b16 %v4468
      %v4765 = vunpack.c.l.b16 %v4469
      %v4766 = vunpack.c.l.b16 %v4470
      %v4767 = vunpack.c.l.b16 %v4471
      %v4768 = vunpack.c.l.b16 %v4472
      %v4769 = vunpack.c.l.b16 %v4473
      %v4770 = vunpack.c.l.b16 %v4474
      %v4771 = vunpack.c.l.b16 %v4475
      %v4772 = vunpack.c.l.b16 %v4476
      %v4773 = vunpack.c.l.b16 %v4477
      %v4774 = vunpack.c.l.b16 %v4478
      %v4775 = vunpack.c.l.b16 %v4479
      %v4776 = vunpack.c.l.b16 %v4480
      %v4777 = vunpack.c.l.b16 %v4481
      %v4778 = vunpack.c.l.b16 %v4482
      %v4779 = vunpack.c.l.b16 %v4483
      %v4780 = vunpack.c.l.b16 %v4484
      %v4781 = vunpack.c.l.b16 %v4485
      %v4782 = vunpack.c.l.b16 %v4486
      %v4783 = vunpack.c.l.b16 %v4487
      %v4784 = vunpack.c.l.b16 %v4488
      %v4785 = vunpack.c.l.b16 %v4489
      %v4786 = vunpack.c.l.b16 %v4490
      %v4787 = vunpack.c.l.b16 %v4491
      %v4788 = vunpack.c.l.b16 %v4492
      %v4789 = vunpack.c.l.b16 %v4493
      %v4790 = vunpack.c.l.b16 %v4494
      %v4791 = vunpack.c.l.b16 %v4495
      %v4792 = vunpack.c.l.b16 %v4496
      %v4793 = vunpack.c.l.b16 %v4497
      %v4794 = vunpack.c.l.b16 %v4498
      %v4795 = vunpack.c.l.b16 %v4499
      %v4796 = vunpack.c.l.b16 %v4500
      %v4797 = vunpack.c.l.b16 %v4501
      %v4798 = vunpack.c.l.b16 %v4502
      %v4799 = vunpack.c.l.b16 %v4503
      %v4800 = vunpack.c.l.b16 %v4504
      %v4801 = vunpack.c.l.b16 %v4505
      %v4802 = vunpack.c.l.b16 %v4506
      %v4803 = vunpack.c.l.b16 %v4507
      %v4804 = vunpack.c.l.b16 %v4508
      %v4805 = vunpack.c.l.b16 %v4509
      %v4806 = vunpack.c.l.b16 %v4510
      %v4807 = vunpack.c.l.b16 %v4511
      %v4808 = vunpack.c.l.b16 %v4512
      %v4809 = vunpack.c.l.b16 %v4513
      %v4810 = vunpack.c.l.b16 %v4514
      %v4811 = vunpack.c.l.b16 %v4515
      %v4812 = vunpack.c.l.b16 %v4516
      %v4813 = vunpack.c.l.b16 %v4517
      %v4814 = vunpack.c.l.b16 %v4518
      %v4815 = vunpack.c.l.b16 %v4519
      %v4816 = vunpack.c.l.b16 %v4520
      %v4817 = vunpack.c.l.b16 %v4521
      %v4818 = vunpack.c.l.b16 %v4522
      %v4819 = vunpack.c.l.b16 %v4523
      %v4820 = vunpack.c.l.b16 %v4524
      %v4821 = vunpack.c.l.b16 %v4525
      %v4822 = vunpack.c.l.b16 %v4526
      %v4823 = vunpack.c.l.b16 %v4527
      %v4824 = vunpack.c.l.b16 %v4528
      %v4825 = vunpack.c.l.b16 %v4529
      %v4826 = vunpack.c.l.b16 %v4530
      %v4827 = vunpack.c.l.b16 %v4531
      %v4828 = vunpack.c.l.b16 %v4532
      %v4829 = vpack.c.b16 %v4686, %v4685
      %v4830 = vpack.c.b16 %v4688, %v4687
      %v4831 = vpack.c.b16 %v4690, %v4689
      %v4832 = vpack.c.b16 %v4692, %v4691
      %v4833 = vpack.c.b16 %v4694, %v4693
      %v4834 = vpack.c.b16 %v4696, %v4695
      %v4835 = vpack.c.b16 %v4698, %v4697
      %v4836 = vpack.c.b16 %v4700, %v4699
      %v4837 = vpack.c.b16 %v4702, %v4701
      %v4838 = vpack.c.b16 %v4704, %v4703
      %v4839 = vpack.c.b16 %v4706, %v4705
      %v4840 = vpack.c.b16 %v4708, %v4707
      %v4841 = vpack.c.b16 %v4710, %v4709
      %v4842 = vpack.c.b16 %v4712, %v4711
      %v4843 = vpack.c.b16 %v4714, %v4713
      %v4844 = vpack.c.b16 %v4716, %v4715
      %v4845 = vpack.c.b16 %v4718, %v4717
      %v4846 = vpack.c.b16 %v4720, %v4719
      %v4847 = vpack.c.b16 %v4722, %v4721
      %v4848 = vpack.c.b16 %v4724, %v4723
      %v4849 = vpack.c.b16 %v4726, %v4725
      %v4850 = vpack.c.b16 %v4728, %v4727
      %v4851 = vpack.c.b16 %v4730, %v4729
      %v4852 = vpack.c.b16 %v4732, %v4731
      %v4853 = vpack.c.b16 %v4734, %v4733
      %v4854 = vpack.c.b16 %v4736, %v4735
      %v4855 = vpack.c.b16 %v4738, %v4737
      %v4856 = vpack.c.b16 %v4740, %v4739
      %v4857 = vpack.c.b16 %v4742, %v4741
      %v4858 = vpack.c.b16 %v4744, %v4743
      %v4859 = vpack.c.b16 %v4746, %v4745
      %v4860 = vpack.c.b16 %v4748, %v4747
      %v4861 = vpack.c.b16 %v4750, %v4749
      %v4862 = vpack.c.b16 %v4752, %v4751
      %v4863 = vpack.c.b16 %v4754, %v4753
      %v4864 = vpack.c.b16 %v4756, %v4755
      %v4865 = vpack.c.b16 %v4758, %v4757
      %v4866 = vpack.c.b16 %v4760, %v4759
      %v4867 = vpack.c.b16 %v4762, %v4761
      %v4868 = vpack.c.b16 %v4764, %v4763
      %v4869 = vpack.c.b16 %v4766, %v4765
      %v4870 = vpack.c.b16 %v4768, %v4767
      %v4871 = vpack.c.b16 %v4770, %v4769
      %v4872 = vpack.c.b16 %v4772, %v4771
      %v4873 = vpack.c.b16 %v4774, %v4773
      %v4874 = vpack.c.b16 %v4776, %v4775
      %v4875 = vpack.c.b16 %v4778, %v4777
      %v4876 = vpack.c.b16 %v4780, %v4779
      %v4877 = vpack.c.b16 %v4782, %v4781
      %v4878 = vpack.c.b16 %v4784, %v4783
      %v4879 = vpack.c.b16 %v4786, %v4785
      %v4880 = vpack.c.b16 %v4788, %v4787
      %v4881 = vpack.c.b16 %v4790, %v4789
      %v4882 = vpack.c.b16 %v4792, %v4791
      %v4883 = vpack.c.b16 %v4794, %v4793
      %v4884 = vpack.c.b16 %v4796, %v4795
      %v4885 = vpack.c.b16 %v4798, %v4797
      %v4886 = vpack.c.b16 %v4800, %v4799
      %v4887 = vpack.c.b16 %v4802, %v4801
      %v4888 = vpack.c.b16 %v4804, %v4803
      %v4889 = vpack.c.b16 %v4806, %v4805
      %v4890 = vpack.c.b16 %v4808, %v4807
      %v4891 = vpack.c.b16 %v4810, %v4809
      %v4892 = vpack.c.b16 %v4812, %v4811
      %v4893 = vpack.c.b16 %v4814, %v4813
      %v4894 = vpack.c.b16 %v4816, %v4815
      %v4895 = vpack.c.b16 %v4818, %v4817
      %v4896 = vpack.c.b16 %v4820, %v4819
      %v4897 = vpack.c.b16 %v4822, %v4821
      %v4898 = vpack.c.b16 %v4824, %v4823
      %v4899 = vpack.c.b16 %v4826, %v4825
      %v4900 = vpack.c.b16 %v4828, %v4827
      %4973 = vmatprep.subr.bf16.mxu0 0
      %4974 = vmatpush1.bf16.msra.mxu0 %v4829
      %4975 = vmatprep.subr.bf16.mxu0 0
      %4976 = vmatpush1.bf16.msra.mxu0 %v4830
      %4977 = vmatprep.subr.bf16.mxu0 0
      %4978 = vmatpush1.bf16.msra.mxu0 %v4831
      %4979 = vmatprep.subr.bf16.mxu0 0
      %4980 = vmatpush1.bf16.msra.mxu0 %v4832
      %4981 = vmatprep.subr.bf16.mxu0 0
      %4982 = vmatpush1.bf16.msra.mxu0 %v4833
      %4983 = vmatprep.subr.bf16.mxu0 0
      %4984 = vmatpush1.bf16.msra.mxu0 %v4834
      %4985 = vmatprep.subr.bf16.mxu0 0
      %4986 = vmatpush1.bf16.msra.mxu0 %v4835
      %4987 = vmatprep.subr.bf16.mxu0 0
      %4988 = vmatpush1.bf16.msra.mxu0 %v4836
      %4989 = vmatprep.subr.bf16.mxu0 0
      %4990 = vmatpush1.bf16.msra.mxu0 %v4837
      %4991 = vmatprep.subr.bf16.mxu0 0
      %4992 = vmatpush1.bf16.msra.mxu0 %v4838
      %4993 = vmatprep.subr.bf16.mxu0 0
      %4994 = vmatpush1.bf16.msra.mxu0 %v4839
      %4995 = vmatprep.subr.bf16.mxu0 0
      %4996 = vmatpush1.bf16.msra.mxu0 %v4840
      %4997 = vmatprep.subr.bf16.mxu0 0
      %4998 = vmatpush1.bf16.msra.mxu0 %v4841
      %4999 = vmatprep.subr.bf16.mxu0 0
      %5000 = vmatpush1.bf16.msra.mxu0 %v4842
      %5001 = vmatprep.subr.bf16.mxu0 0
      %5002 = vmatpush1.bf16.msra.mxu0 %v4843
      %5003 = vmatprep.subr.bf16.mxu0 0
      %5004 = vmatpush1.bf16.msra.mxu0 %v4844
      %5005 = vmatprep.mubr.bf16.mxu0 %v4294
      %5006 = vmatmul.mubr.bf16.gmra.mrb[0].mxu0 %v4279
      %v5007 = vpop.f32.mrb[0].mxu0
      %v5008 = vadd.f32 %v4539, %v5007
      %v5009 = vpop.f32.mrb[0].mxu0
      %v5010 = vpop.f32.mrb[0].mxu0
      %v5011 = vadd.f32 %v4539, %v5010
      %v5012 = vpop.f32.mrb[0].mxu0
      %5013 = vmatprep.mubr.bf16.mxu0 %v4295
      %5014 = vmatmul.mubr.bf16.gmra.mrb[0].mxu0 %v4280
      %v5015 = vpop.f32.mrb[0].mxu0
      %v5016 = vadd.f32 %v4539, %v5015
      %v5017 = vpop.f32.mrb[0].mxu0
      %v5018 = vpop.f32.mrb[0].mxu0
      %v5019 = vadd.f32 %v4539, %v5018
      %v5020 = vpop.f32.mrb[0].mxu0
      %5021 = vmatprep.mubr.bf16.mxu0 %v4296
      %5022 = vmatmul.mubr.bf16.gmra.mrb[0].mxu0 %v4281
      %v5023 = vpop.f32.mrb[0].mxu0
      %v5024 = vadd.f32 %v4539, %v5023
      %v5025 = vpop.f32.mrb[0].mxu0
      %v5026 = vpop.f32.mrb[0].mxu0
      %v5027 = vadd.f32 %v4539, %v5026
      %v5028 = vpop.f32.mrb[0].mxu0
      %5029 = vmatprep.mubr.bf16.mxu0 %v4297
      %5030 = vmatmul.mubr.bf16.gmra.mrb[0].mxu0 %v4282
      %v5031 = vpop.f32.mrb[0].mxu0
      %v5032 = vadd.f32 %v4539, %v5031
      %v5033 = vpop.f32.mrb[0].mxu0
      %v5034 = vpop.f32.mrb[0].mxu0
      %v5035 = vadd.f32 %v4539, %v5034
      %v5036 = vpop.f32.mrb[0].mxu0
      %5037 = vmatprep.mubr.bf16.mxu0 %v4298
      %5038 = vmatmul.mubr.bf16.gmra.mrb[0].mxu0 %v4283
      %v5039 = vpop.f32.mrb[0].mxu0
      %v5040 = vadd.f32 %v4539, %v5039
      %v5041 = vpop.f32.mrb[0].mxu0
      %v5042 = vpop.f32.mrb[0].mxu0
      %v5043 = vadd.f32 %v4539, %v5042
      %v5044 = vpop.f32.mrb[0].mxu0
      %5045 = vdwg.mxu0
      %5046 = vmatprep.subr.bf16.mxu0 0
      %5047 = vmatpush1.bf16.msra.mxu0 %v4845
      %5048 = vmatprep.subr.bf16.mxu0 0
      %5049 = vmatpush1.bf16.msra.mxu0 %v4846
      %5050 = vmatprep.subr.bf16.mxu0 0
      %5051 = vmatpush1.bf16.msra.mxu0 %v4847
      %5052 = vmatprep.subr.bf16.mxu0 0
      %5053 = vmatpush1.bf16.msra.mxu0 %v4848
      %5054 = vmatprep.subr.bf16.mxu0 0
      %5055 = vmatpush1.bf16.msra.mxu0 %v4849
      %5056 = vmatprep.subr.bf16.mxu0 0
      %5057 = vmatpush1.bf16.msra.mxu0 %v4850
      %5058 = vmatprep.subr.bf16.mxu0 0
      %5059 = vmatpush1.bf16.msra.mxu0 %v4851
      %5060 = vmatprep.subr.bf16.mxu0 0
      %5061 = vmatpush1.bf16.msra.mxu0 %v4852
      %5062 = vmatprep.subr.bf16.mxu0 0
      %5063 = vmatpush1.bf16.msra.mxu0 %v4853
      %5064 = vmatprep.subr.bf16.mxu0 0
      %5065 = vmatpush1.bf16.msra.mxu0 %v4854
      %5066 = vmatprep.subr.bf16.mxu0 0
      %5067 = vmatpush1.bf16.msra.mxu0 %v4855
      %5068 = vmatprep.subr.bf16.mxu0 0
      %5069 = vmatpush1.bf16.msra.mxu0 %v4856
      %5070 = vmatprep.subr.bf16.mxu0 0
      %5071 = vmatpush1.bf16.msra.mxu0 %v4857
      %5072 = vmatprep.subr.bf16.mxu0 0
      %5073 = vmatpush1.bf16.msra.mxu0 %v4858
      %5074 = vmatprep.subr.bf16.mxu0 0
      %5075 = vmatpush1.bf16.msra.mxu0 %v4859
      %5076 = vmatprep.subr.bf16.mxu0 0
      %5077 = vmatpush1.bf16.msra.mxu0 %v4860
      %5078 = vmatprep.mubr.bf16.mxu0 %v4316
      %5079 = vmatmul.mubr.bf16.gmra.mrb[0].mxu0 %v4309
      %v5080 = vpop.f32.mrb[0].mxu0
      %v5081 = vadd.f32 %v5008, %v5080
      %v5082 = vpop.f32.mrb[0].mxu0
      %v5083 = vpop.f32.mrb[0].mxu0
      %v5084 = vadd.f32 %v5011, %v5083
      %v5085 = vpop.f32.mrb[0].mxu0
      %5086 = vmatprep.mubr.bf16.mxu0 %v4317
      %5087 = vmatmul.mubr.bf16.gmra.mrb[0].mxu0 %v4310
      %v5088 = vpop.f32.mrb[0].mxu0
      %v5089 = vadd.f32 %v5016, %v5088
      %v5090 = vpop.f32.mrb[0].mxu0
      %v5091 = vpop.f32.mrb[0].mxu0
      %v5092 = vadd.f32 %v5019, %v5091
      %v5093 = vpop.f32.mrb[0].mxu0
      %5094 = vmatprep.mubr.bf16.mxu0 %v4318
      %5095 = vmatmul.mubr.bf16.gmra.mrb[0].mxu0 %v4311
      %v5096 = vpop.f32.mrb[0].mxu0
      %v5097 = vadd.f32 %v5024, %v5096
      %v5098 = vpop.f32.mrb[0].mxu0
      %v5099 = vpop.f32.mrb[0].mxu0
      %v5100 = vadd.f32 %v5027, %v5099
      %v5101 = vpop.f32.mrb[0].mxu0
      %5102 = vmatprep.mubr.bf16.mxu0 %v4319
      %5103 = vmatmul.mubr.bf16.gmra.mrb[0].mxu0 %v4312
      %v5104 = vpop.f32.mrb[0].mxu0
      %v5105 = vadd.f32 %v5032, %v5104
      %v5106 = vpop.f32.mrb[0].mxu0
      %v5107 = vpop.f32.mrb[0].mxu0
      %v5108 = vadd.f32 %v5035, %v5107
      %v5109 = vpop.f32.mrb[0].mxu0
      %5110 = vmatprep.mubr.bf16.mxu0 %v4320
      %5111 = vmatmul.mubr.bf16.gmra.mrb[0].mxu0 %v4313
      %v5112 = vpop.f32.mrb[0].mxu0
      %v5113 = vadd.f32 %v5040, %v5112
      %v5114 = vpop.f32.mrb[0].mxu0
      %v5115 = vpop.f32.mrb[0].mxu0
      %v5116 = vadd.f32 %v5043, %v5115
      %v5117 = vpop.f32.mrb[0].mxu0
      %5118 = vdwg.mxu0
      %5119 = vmatprep.subr.bf16.mxu0 0
      %5120 = vmatpush1.bf16.msra.mxu0 %v4861
      %5121 = vmatprep.subr.bf16.mxu0 0
      %5122 = vmatpush1.bf16.msra.mxu0 %v4862
      %5123 = vmatprep.subr.bf16.mxu0 0
      %5124 = vmatpush1.bf16.msra.mxu0 %v4863
      %5125 = vmatprep.subr.bf16.mxu0 0
      %5126 = vmatpush1.bf16.msra.mxu0 %v4864
      %5127 = vmatprep.subr.bf16.mxu0 0
      %5128 = vmatpush1.bf16.msra.mxu0 %v4865
      %5129 = vmatprep.subr.bf16.mxu0 0
      %5130 = vmatpush1.bf16.msra.mxu0 %v4866
      %5131 = vmatprep.subr.bf16.mxu0 0
      %5132 = vmatpush1.bf16.msra.mxu0 %v4867
      %5133 = vmatprep.subr.bf16.mxu0 0
      %5134 = vmatpush1.bf16.msra.mxu0 %v4868
      %5135 = vmatprep.subr.bf16.mxu0 0
      %5136 = vmatpush1.bf16.msra.mxu0 %v4869
      %5137 = vmatprep.subr.bf16.mxu0 0
      %5138 = vmatpush1.bf16.msra.mxu0 %v4870
      %5139 = vmatprep.subr.bf16.mxu0 0
      %5140 = vmatpush1.bf16.msra.mxu0 %v4871
      %5141 = vmatprep.subr.bf16.mxu0 0
      %5142 = vmatpush1.bf16.msra.mxu0 %v4872
      %5143 = vmatprep.subr.bf16.mxu0 0
      %5144 = vmatpush1.bf16.msra.mxu0 %v4873
      %5145 = vmatprep.subr.bf16.mxu0 0
      %5146 = vmatpush1.bf16.msra.mxu0 %v4874
      %5147 = vmatprep.subr.bf16.mxu0 0
      %5148 = vmatpush1.bf16.msra.mxu0 %v4875
      %5149 = vmatprep.subr.bf16.mxu0 0
      %5150 = vmatpush1.bf16.msra.mxu0 %v4876
      %5151 = vmatprep.mubr.bf16.mxu0 %v4346
      %5152 = vmatmul.mubr.bf16.gmra.mrb[0].mxu0 %v4331
      %v5153 = vpop.f32.mrb[0].mxu0
      %v5154 = vadd.f32 %v5081, %v5153
      %v5155 = vpop.f32.mrb[0].mxu0
      %v5156 = vpop.f32.mrb[0].mxu0
      %v5157 = vadd.f32 %v5084, %v5156
      %v5158 = vpop.f32.mrb[0].mxu0
      %5159 = vmatprep.mubr.bf16.mxu0 %v4347
      %5160 = vmatmul.mubr.bf16.gmra.mrb[0].mxu0 %v4332
      %v5161 = vpop.f32.mrb[0].mxu0
      %v5162 = vadd.f32 %v5089, %v5161
      %v5163 = vpop.f32.mrb[0].mxu0
      %v5164 = vpop.f32.mrb[0].mxu0
      %v5165 = vadd.f32 %v5092, %v5164
      %v5166 = vpop.f32.mrb[0].mxu0
      %5167 = vmatprep.mubr.bf16.mxu0 %v4348
      %5168 = vmatmul.mubr.bf16.gmra.mrb[0].mxu0 %v4333
      %v5169 = vpop.f32.mrb[0].mxu0
      %v5170 = vadd.f32 %v5097, %v5169
      %v5171 = vpop.f32.mrb[0].mxu0
      %v5172 = vpop.f32.mrb[0].mxu0
      %v5173 = vadd.f32 %v5100, %v5172
      %v5174 = vpop.f32.mrb[0].mxu0
      %5175 = vmatprep.mubr.bf16.mxu0 %v4349
      %5176 = vmatmul.mubr.bf16.gmra.mrb[0].mxu0 %v4334
      %v5177 = vpop.f32.mrb[0].mxu0
      %v5178 = vadd.f32 %v5105, %v5177
      %v5179 = vpop.f32.mrb[0].mxu0
      %v5180 = vpop.f32.mrb[0].mxu0
      %v5181 = vadd.f32 %v5108, %v5180
      %v5182 = vpop.f32.mrb[0].mxu0
      %5183 = vmatprep.mubr.bf16.mxu0 %v4350
      %5184 = vmatmul.mubr.bf16.gmra.mrb[0].mxu0 %v4335
      %v5185 = vpop.f32.mrb[0].mxu0
      %v5186 = vadd.f32 %v5113, %v5185
      %v5187 = vpop.f32.mrb[0].mxu0
      %v5188 = vpop.f32.mrb[0].mxu0
      %v5189 = vadd.f32 %v5116, %v5188
      %v5190 = vpop.f32.mrb[0].mxu0
      %5191 = vdwg.mxu0
      %5192 = vmatprep.subr.bf16.mxu0 0
      %5193 = vmatpush1.bf16.msra.mxu0 %v4877
      %5194 = vmatprep.subr.bf16.mxu0 0
      %5195 = vmatpush1.bf16.msra.mxu0 %v4878
      %5196 = vmatprep.subr.bf16.mxu0 0
      %5197 = vmatpush1.bf16.msra.mxu0 %v4879
      %5198 = vmatprep.subr.bf16.mxu0 0
      %5199 = vmatpush1.bf16.msra.mxu0 %v4880
      %5200 = vmatprep.subr.bf16.mxu0 0
      %5201 = vmatpush1.bf16.msra.mxu0 %v4881
      %5202 = vmatprep.subr.bf16.mxu0 0
      %5203 = vmatpush1.bf16.msra.mxu0 %v4882
      %5204 = vmatprep.subr.bf16.mxu0 0
      %5205 = vmatpush1.bf16.msra.mxu0 %v4883
      %5206 = vmatprep.subr.bf16.mxu0 0
      %5207 = vmatpush1.bf16.msra.mxu0 %v4884
      %5208 = vmatprep.subr.bf16.mxu0 0
      %5209 = vmatpush1.bf16.msra.mxu0 %v4885
      %5210 = vmatprep.subr.bf16.mxu0 0
      %5211 = vmatpush1.bf16.msra.mxu0 %v4886
      %5212 = vmatprep.subr.bf16.mxu0 0
      %5213 = vmatpush1.bf16.msra.mxu0 %v4887
      %5214 = vmatprep.subr.bf16.mxu0 0
      %5215 = vmatpush1.bf16.msra.mxu0 %v4888
      %5216 = vmatprep.subr.bf16.mxu0 0
      %5217 = vmatpush1.bf16.msra.mxu0 %v4889
      %5218 = vmatprep.subr.bf16.mxu0 0
      %5219 = vmatpush1.bf16.msra.mxu0 %v4890
      %5220 = vmatprep.subr.bf16.mxu0 0
      %5221 = vmatpush1.bf16.msra.mxu0 %v4891
      %5222 = vmatprep.subr.bf16.mxu0 0
      %5223 = vmatpush1.bf16.msra.mxu0 %v4892
      %5224 = vmatprep.mubr.bf16.mxu0 %v4368
      %5225 = vmatmul.mubr.bf16.gmra.mrb[0].mxu0 %v4353
      %v5226 = vpop.f32.mrb[0].mxu0
      %v5227 = vadd.f32 %v5154, %v5226
      %v5228 = vpop.f32.mrb[0].mxu0
      %v5229 = vpop.f32.mrb[0].mxu0
      %v5230 = vadd.f32 %v5157, %v5229
      %v5231 = vpop.f32.mrb[0].mxu0
      %5232 = vmatprep.mubr.bf16.mxu0 %v4369
      %5233 = vmatmul.mubr.bf16.gmra.mrb[0].mxu0 %v4354
      %v5234 = vpop.f32.mrb[0].mxu0
      %v5235 = vadd.f32 %v5162, %v5234
      %v5236 = vpop.f32.mrb[0].mxu0
      %v5237 = vpop.f32.mrb[0].mxu0
      %v5238 = vadd.f32 %v5165, %v5237
      %v5239 = vpop.f32.mrb[0].mxu0
      %5240 = vmatprep.mubr.bf16.mxu0 %v4370
      %5241 = vmatmul.mubr.bf16.gmra.mrb[0].mxu0 %v4355
      %v5242 = vpop.f32.mrb[0].mxu0
      %v5243 = vadd.f32 %v5170, %v5242
      %v5244 = vpop.f32.mrb[0].mxu0
      %v5245 = vpop.f32.mrb[0].mxu0
      %v5246 = vadd.f32 %v5173, %v5245
      %v5247 = vpop.f32.mrb[0].mxu0
      %5248 = vmatprep.mubr.bf16.mxu0 %v4371
      %5249 = vmatmul.mubr.bf16.gmra.mrb[0].mxu0 %v4356
      %v5250 = vpop.f32.mrb[0].mxu0
      %v5251 = vadd.f32 %v5178, %v5250
      %v5252 = vpop.f32.mrb[0].mxu0
      %v5253 = vpop.f32.mrb[0].mxu0
      %v5254 = vadd.f32 %v5181, %v5253
      %v5255 = vpop.f32.mrb[0].mxu0
      %5256 = vmatprep.mubr.bf16.mxu0 %v4372
      %5257 = vmatmul.mubr.bf16.gmra.mrb[0].mxu0 %v4357
      %v5258 = vpop.f32.mrb[0].mxu0
      %v5259 = vadd.f32 %v5186, %v5258
      %v5260 = vpop.f32.mrb[0].mxu0
      %v5261 = vpop.f32.mrb[0].mxu0
      %v5262 = vadd.f32 %v5189, %v5261
      %v5263 = vpop.f32.mrb[0].mxu0
      %5264 = vdwg.mxu0
      %5265 = vmatprep.subr.bf16.mxu0 0
      %5266 = vmatpush1.bf16.msra.mxu0 %v4893
      %5267 = vmatprep.subr.bf16.mxu0 0
      %5268 = vmatpush1.bf16.msra.mxu0 %v4894
      %5269 = vmatprep.subr.bf16.mxu0 0
      %5270 = vmatpush1.bf16.msra.mxu0 %v4895
      %5271 = vmatprep.subr.bf16.mxu0 0
      %5272 = vmatpush1.bf16.msra.mxu0 %v4896
      %5273 = vmatprep.subr.bf16.mxu0 0
      %5274 = vmatpush1.bf16.msra.mxu0 %v4897
      %5275 = vmatprep.subr.bf16.mxu0 0
      %5276 = vmatpush1.bf16.msra.mxu0 %v4898
      %5277 = vmatprep.subr.bf16.mxu0 0
      %5278 = vmatpush1.bf16.msra.mxu0 %v4899
      %5279 = vmatprep.subr.bf16.mxu0 0
      %5280 = vmatpush1.bf16.msra.mxu0 %v4900
      %5281 = vmatprep.subr.bf16.mxu0 0
      %5282 = vmatpush1.bf16.msra.mxu0 0
      %5283 = vmatprep.subr.bf16.mxu0 0
      %5284 = vmatpush1.bf16.msra.mxu0 0
      %5285 = vmatprep.subr.bf16.mxu0 0
      %5286 = vmatpush1.bf16.msra.mxu0 0
      %5287 = vmatprep.subr.bf16.mxu0 0
      %5288 = vmatpush1.bf16.msra.mxu0 0
      %5289 = vmatprep.subr.bf16.mxu0 0
      %5290 = vmatpush1.bf16.msra.mxu0 0
      %5291 = vmatprep.subr.bf16.mxu0 0
      %5292 = vmatpush1.bf16.msra.mxu0 0
      %5293 = vmatprep.subr.bf16.mxu0 0
      %5294 = vmatpush1.bf16.msra.mxu0 0
      %5295 = vmatprep.subr.bf16.mxu0 0
      %5296 = vmatpush1.bf16.msra.mxu0 0
      %5297 = vmatprep.mubr.bf16.mxu0 0
      %5298 = vmatmul.mubr.bf16.gmra.mrb[0].mxu0 %v4383
      %v5299 = vpop.f32.mrb[0].mxu0
      %v5300 = vadd.f32 %v5227, %v5299
      %v5301 = vpop.f32.mrb[0].mxu0
      %v5302 = vpop.f32.mrb[0].mxu0
      %v5303 = vadd.f32 %v5230, %v5302
      %v5304 = vpop.f32.mrb[0].mxu0
      %5305 = vmatprep.mubr.bf16.mxu0 0
      %5306 = vmatmul.mubr.bf16.gmra.mrb[0].mxu0 %v4384
      %v5307 = vpop.f32.mrb[0].mxu0
      %v5308 = vadd.f32 %v5235, %v5307
      %v5309 = vpop.f32.mrb[0].mxu0
      %v5310 = vpop.f32.mrb[0].mxu0
      %v5311 = vadd.f32 %v5238, %v5310
      %v5312 = vpop.f32.mrb[0].mxu0
      %5313 = vmatprep.mubr.bf16.mxu0 0
      %5314 = vmatmul.mubr.bf16.gmra.mrb[0].mxu0 %v4385
      %v5315 = vpop.f32.mrb[0].mxu0
      %v5316 = vadd.f32 %v5243, %v5315
      %v5317 = vpop.f32.mrb[0].mxu0
      %v5318 = vpop.f32.mrb[0].mxu0
      %v5319 = vadd.f32 %v5246, %v5318
      %v5320 = vpop.f32.mrb[0].mxu0
      %5321 = vmatprep.mubr.bf16.mxu0 0
      %5322 = vmatmul.mubr.bf16.gmra.mrb[0].mxu0 %v4386
      %v5323 = vpop.f32.mrb[0].mxu0
      %v5324 = vadd.f32 %v5251, %v5323
      %v5325 = vpop.f32.mrb[0].mxu0
      %v5326 = vpop.f32.mrb[0].mxu0
      %v5327 = vadd.f32 %v5254, %v5326
      %v5328 = vpop.f32.mrb[0].mxu0
      %5329 = vmatprep.mubr.bf16.mxu0 0
      %5330 = vmatmul.mubr.bf16.gmra.mrb[0].mxu0 %v4387
      %v5331 = vpop.f32.mrb[0].mxu0
      %v5332 = vadd.f32 %v5259, %v5331
      %v5333 = vpop.f32.mrb[0].mxu0
      %v5334 = vpop.f32.mrb[0].mxu0
      %v5335 = vadd.f32 %v5262, %v5334
      %v5336 = vpop.f32.mrb[0].mxu0
      %5337 = vdwg.mxu0
      %v5338 = vxor.u32 %v5300, 2147483648
      %v5339 = vxor.u32 %v5303, 2147483648
      %v5340 = vxor.u32 %v5308, 2147483648
      %v5341 = vxor.u32 %v5311, 2147483648
      %v5342 = vxor.u32 %v5316, 2147483648
      %v5343 = vxor.u32 %v5319, 2147483648
      %v5344 = vxor.u32 %v5324, 2147483648
      %v5345 = vxor.u32 %v5327, 2147483648
      %v5346 = vxor.u32 %v5332, 2147483648
      %v5347 = vxor.u32 %v5335, 2147483648
      %v5348 = vmul.f32 %v5338, 1.442695
      %v5349 = vpow.pop %v5348
      %v5350 = vmul.f32 %v5339, 1.442695
      %v5351 = vpow.pop %v5350
      %v5352 = vmul.f32 %v5340, 1.442695
      %v5353 = vpow.pop %v5352
      %v5354 = vmul.f32 %v5341, 1.442695
      %v5355 = vpow.pop %v5354
      %v5356 = vmul.f32 %v5342, 1.442695
      %v5357 = vpow.pop %v5356
      %v5358 = vmul.f32 %v5343, 1.442695
      %v5359 = vpow.pop %v5358
      %v5360 = vmul.f32 %v5344, 1.442695
      %v5361 = vpow.pop %v5360
      %v5362 = vmul.f32 %v5345, 1.442695
      %v5363 = vpow.pop %v5362
      %v5364 = vmul.f32 %v5346, 1.442695
      %v5365 = vpow.pop %v5364
      %v5366 = vmul.f32 %v5347, 1.442695
      %v5367 = vpow.pop %v5366
      %v5368 = vadd.f32 %v5349, 1.0
      %v5369 = vadd.f32 %v5351, 1.0
      %v5370 = vadd.f32 %v5353, 1.0
      %v5371 = vadd.f32 %v5355, 1.0
      %v5372 = vadd.f32 %v5357, 1.0
      %v5373 = vadd.f32 %v5359, 1.0
      %v5374 = vadd.f32 %v5361, 1.0
      %v5375 = vadd.f32 %v5363, 1.0
      %v5376 = vadd.f32 %v5365, 1.0
      %v5377 = vadd.f32 %v5367, 1.0
      %v5378 = vrcp.pop %v5368
      %v5379 = vmul.f32 1.0, %v5378
      %v5380 = vrcp.pop %v5369
      %v5381 = vmul.f32 1.0, %v5380
      %v5382 = vrcp.pop %v5370
      %v5383 = vmul.f32 1.0, %v5382
      %v5384 = vrcp.pop %v5371
      %v5385 = vmul.f32 1.0, %v5384
      %v5386 = vrcp.pop %v5372
      %v5387 = vmul.f32 1.0, %v5386
      %v5388 = vrcp.pop %v5373
      %v5389 = vmul.f32 1.0, %v5388
      %v5390 = vrcp.pop %v5374
      %v5391 = vmul.f32 1.0, %v5390
      %v5392 = vrcp.pop %v5375
      %v5393 = vmul.f32 1.0, %v5392
      %v5394 = vrcp.pop %v5376
      %v5395 = vmul.f32 1.0, %v5394
      %v5396 = vrcp.pop %v5377
      %v5397 = vmul.f32 1.0, %v5396
      %v5398 = vmul.f32 %v5300, %v5379
      %v5399 = vmul.f32 %v5303, %v5381
      %v5400 = vmul.f32 %v5308, %v5383
      %v5401 = vmul.f32 %v5311, %v5385
      %v5402 = vmul.f32 %v5316, %v5387
      %v5403 = vmul.f32 %v5319, %v5389
      %v5404 = vmul.f32 %v5324, %v5391
      %v5405 = vmul.f32 %v5327, %v5393
      %v5406 = vmul.f32 %v5332, %v5395
      %v5407 = vmul.f32 %v5335, %v5397
      %v5408 = vld [vmem:[%s9] sm:$0x1]
      %v5410 = vsel %vm4083, %v5408, 0
      %v5413 = vsel %vm2654, %v5407, 0
      %5415 = vmatprep.subr.mxu0 0.0
      %5416 = vmatpush1.msra.mxu0 %v5398
      %5417 = vmatprep.subr.mxu0 0.0
      %5418 = vmatpush1.msra.mxu0 %v5399
      %5419 = vmatprep.subr.mxu0 0.0
      %5420 = vmatpush1.msra.mxu0 %v5400
      %5421 = vmatprep.subr.mxu0 0.0
      %5422 = vmatpush1.msra.mxu0 %v5401
      %5423 = vmatprep.subr.mxu0 0.0
      %5424 = vmatpush1.msra.mxu0 %v5402
      %5425 = vmatprep.subr.mxu0 0.0
      %5426 = vmatpush1.msra.mxu0 %v5403
      %5427 = vmatprep.subr.mxu0 0.0
      %5428 = vmatpush1.msra.mxu0 %v5404
      %5429 = vmatprep.subr.mxu0 0.0
      %5430 = vmatpush1.msra.mxu0 %v5405
      %5431 = vmatprep.subr.mxu0 0.0
      %5432 = vmatpush1.msra.mxu0 %v5406
      %5433 = vmatprep.subr.mxu0 0.0
      %5434 = vmatpush1.msra.mxu0 %v5413
      %5435 = vmatprep.subr.mxu0 0.0
      %5436 = vmatpush1.msra.mxu0 0.0
      %5437 = vmatprep.subr.mxu0 0.0
      %5438 = vmatpush1.msra.mxu0 0.0
      %5439 = vmatprep.subr.mxu0 0.0
      %5440 = vmatpush1.msra.mxu0 0.0
      %5441 = vmatprep.subr.mxu0 0.0
      %5442 = vmatpush1.msra.mxu0 0.0
      %5443 = vmatprep.subr.mxu0 0.0
      %5444 = vmatpush1.msra.mxu0 0.0
      %5445 = vmatprep.subr.mxu0 0.0
      %5446 = vmatpush1.msra.mxu0 0.0
      %5447 = vmatprep.subr.mxu0 0.0
      %5448 = vmatpush1.msra.mxu0 0.0
      %5449 = vmatprep.subr.mxu0 0.0
      %5450 = vmatpush1.msra.mxu0 0.0
      %5451 = vmatprep.subr.mxu0 0.0
      %5452 = vmatpush1.msra.mxu0 0.0
      %5453 = vmatprep.subr.mxu0 0.0
      %5454 = vmatpush1.msra.mxu0 0.0
      %5455 = vmatprep.subr.mxu0 0.0
      %5456 = vmatpush1.msra.mxu0 0.0
      %5457 = vmatprep.subr.mxu0 0.0
      %5458 = vmatpush1.msra.mxu0 0.0
      %5459 = vmatprep.subr.mxu0 0.0
      %5460 = vmatpush1.msra.mxu0 0.0
      %5461 = vmatprep.subr.mxu0 0.0
      %5462 = vmatpush1.msra.mxu0 0.0
      %5463 = vmatprep.subr.mxu0 0.0
      %5464 = vmatpush1.msra.mxu0 0.0
      %5465 = vmatprep.subr.mxu0 0.0
      %5466 = vmatpush1.msra.mxu0 0.0
      %5467 = vmatprep.subr.mxu0 0.0
      %5468 = vmatpush1.msra.mxu0 0.0
      %5469 = vmatprep.subr.mxu0 0.0
      %5470 = vmatpush1.msra.mxu0 0.0
      %5471 = vmatprep.subr.mxu0 0.0
      %5472 = vmatpush1.msra.mxu0 0.0
      %5473 = vmatprep.subr.mxu0 0.0
      %5474 = vmatpush1.msra.mxu0 0.0
      %5475 = vmatprep.subr.mxu0 0.0
      %5476 = vmatpush1.msra.mxu0 0.0
      %5477 = vmatprep.subr.mxu0 0.0
      %5478 = vmatpush1.msra.mxu0 0.0
      %5479 = vmatprep.mubr.f32.mxu0 0.0
      %5480 = vmatmul.mubr.f32.gmra.mrb[0].mxu0 %v5410
      %v5481 = vpop.f32.mrb[0].mxu0
      %v5482 = vadd.f32 0.0, %v5481
      %v5483 = vpop.f32.mrb[0].mxu0
      %5484 = vdwg.mxu0
      %v5485 = vld [vmem:[%s5] sm:$0xff]
      %v5486 = vld [vmem:[%s5 + $0x8] sm:$0xff]
      %v5487 = vld [vmem:[%s5 + $0x10] sm:$0xff]
      %v5488 = vld [vmem:[%s5 + $0x18] sm:$0xff]
      %v5489 = vld [vmem:[%s5 + $0x20] sm:$0xf]
      %v5491 = vsel %vm4083, %v5485, 0
      %v5494 = vsel %vm4083, %v5486, 0
      %v5497 = vsel %vm4083, %v5487, 0
      %v5500 = vsel %vm4083, %v5488, 0
      %v5503 = vsel %vm4083, %v5489, 0
      %5505 = vmatprep.subr.mxu0 0.0
      %5506 = vmatpush1.msra.mxu0 %v5398
      %5507 = vmatprep.subr.mxu0 0.0
      %5508 = vmatpush1.msra.mxu0 %v5399
      %5509 = vmatprep.subr.mxu0 0.0
      %5510 = vmatpush1.msra.mxu0 %v5400
      %5511 = vmatprep.subr.mxu0 0.0
      %5512 = vmatpush1.msra.mxu0 %v5401
      %5513 = vmatprep.subr.mxu0 0.0
      %5514 = vmatpush1.msra.mxu0 %v5402
      %5515 = vmatprep.subr.mxu0 0.0
      %5516 = vmatpush1.msra.mxu0 %v5403
      %5517 = vmatprep.subr.mxu0 0.0
      %5518 = vmatpush1.msra.mxu0 %v5404
      %5519 = vmatprep.subr.mxu0 0.0
      %5520 = vmatpush1.msra.mxu0 %v5405
      %5521 = vmatprep.subr.mxu0 0.0
      %5522 = vmatpush1.msra.mxu0 %v5406
      %5523 = vmatprep.subr.mxu0 0.0
      %5524 = vmatpush1.msra.mxu0 %v5413
      %5525 = vmatprep.subr.mxu0 0.0
      %5526 = vmatpush1.msra.mxu0 0.0
      %5527 = vmatprep.subr.mxu0 0.0
      %5528 = vmatpush1.msra.mxu0 0.0
      %5529 = vmatprep.subr.mxu0 0.0
      %5530 = vmatpush1.msra.mxu0 0.0
      %5531 = vmatprep.subr.mxu0 0.0
      %5532 = vmatpush1.msra.mxu0 0.0
      %5533 = vmatprep.subr.mxu0 0.0
      %5534 = vmatpush1.msra.mxu0 0.0
      %5535 = vmatprep.subr.mxu0 0.0
      %5536 = vmatpush1.msra.mxu0 0.0
      %5537 = vmatprep.subr.mxu0 0.0
      %5538 = vmatpush1.msra.mxu0 0.0
      %5539 = vmatprep.subr.mxu0 0.0
      %5540 = vmatpush1.msra.mxu0 0.0
      %5541 = vmatprep.subr.mxu0 0.0
      %5542 = vmatpush1.msra.mxu0 0.0
      %5543 = vmatprep.subr.mxu0 0.0
      %5544 = vmatpush1.msra.mxu0 0.0
      %5545 = vmatprep.subr.mxu0 0.0
      %5546 = vmatpush1.msra.mxu0 0.0
      %5547 = vmatprep.subr.mxu0 0.0
      %5548 = vmatpush1.msra.mxu0 0.0
      %5549 = vmatprep.subr.mxu0 0.0
      %5550 = vmatpush1.msra.mxu0 0.0
      %5551 = vmatprep.subr.mxu0 0.0
      %5552 = vmatpush1.msra.mxu0 0.0
      %5553 = vmatprep.subr.mxu0 0.0
      %5554 = vmatpush1.msra.mxu0 0.0
      %5555 = vmatprep.subr.mxu0 0.0
      %5556 = vmatpush1.msra.mxu0 0.0
      %5557 = vmatprep.subr.mxu0 0.0
      %5558 = vmatpush1.msra.mxu0 0.0
      %5559 = vmatprep.subr.mxu0 0.0
      %5560 = vmatpush1.msra.mxu0 0.0
      %5561 = vmatprep.subr.mxu0 0.0
      %5562 = vmatpush1.msra.mxu0 0.0
      %5563 = vmatprep.subr.mxu0 0.0
      %5564 = vmatpush1.msra.mxu0 0.0
      %5565 = vmatprep.subr.mxu0 0.0
      %5566 = vmatpush1.msra.mxu0 0.0
      %5567 = vmatprep.subr.mxu0 0.0
      %5568 = vmatpush1.msra.mxu0 0.0
      %5569 = vmatprep.mubr.f32.mxu0 0.0
      %5570 = vmatmul.mubr.f32.gmra.mrb[0].mxu0 %v5491
      %v5571 = vpop.f32.mrb[0].mxu0
      %v5572 = vadd.f32 0.0, %v5571
      %v5573 = vpop.f32.mrb[0].mxu0
      %5574 = vmatprep.mubr.f32.mxu0 0.0
      %5575 = vmatmul.mubr.f32.gmra.mrb[0].mxu0 %v5494
      %v5576 = vpop.f32.mrb[0].mxu0
      %v5577 = vadd.f32 0.0, %v5576
      %v5578 = vpop.f32.mrb[0].mxu0
      %5579 = vmatprep.mubr.f32.mxu0 0.0
      %5580 = vmatmul.mubr.f32.gmra.mrb[0].mxu0 %v5497
      %v5581 = vpop.f32.mrb[0].mxu0
      %v5582 = vadd.f32 0.0, %v5581
      %v5583 = vpop.f32.mrb[0].mxu0
      %5584 = vmatprep.mubr.f32.mxu0 0.0
      %5585 = vmatmul.mubr.f32.gmra.mrb[0].mxu0 %v5500
      %v5586 = vpop.f32.mrb[0].mxu0
      %v5587 = vadd.f32 0.0, %v5586
      %v5588 = vpop.f32.mrb[0].mxu0
      %5589 = vmatprep.mubr.f32.mxu0 0.0
      %5590 = vmatmul.mubr.f32.gmra.mrb[0].mxu0 %v5503
      %v5591 = vpop.f32.mrb[0].mxu0
      %v5592 = vadd.f32 0.0, %v5591
      %v5593 = vpop.f32.mrb[0].mxu0
      %5594 = vdwg.mxu0
      %5595 = vst [vmem:[#allocation4] sm:$0xff] %v5572
      %5596 = vst [vmem:[#allocation4 + $0x8] sm:$0xff] %v5577
      %5597 = vst [vmem:[#allocation4 + $0x10] sm:$0xff] %v5582
      %5598 = vst [vmem:[#allocation4 + $0x18] sm:$0xff] %v5587
      %5599 = vst [vmem:[#allocation4 + $0x20] sm:$0xf] %v5592
      %v5600 = vld [vmem:[#allocation4] sm:$0xff]
      %v5601 = vld [vmem:[#allocation4 + $0x8] sm:$0xff]
      %v5602 = vld [vmem:[#allocation4 + $0x10] sm:$0x3f]
      %v5603 = vpack.c.bf16 %v5601, %v5600
      %v5604 = vpack.c.bf16 %v5602, %v5602
      %v5605 = vld [vmem:[#allocation4 + $0x1] sm:$0xff]
      %v5606 = vld [vmem:[#allocation4 + $0x9] sm:$0xff]
      %v5607 = vld [vmem:[#allocation4 + $0x11] sm:$0x3f]
      %v5608 = vpack.c.bf16 %v5606, %v5605
      %v5609 = vpack.c.bf16 %v5607, %v5607
      %v5610 = vld [vmem:[#allocation4 + $0x2] sm:$0xff]
      %v5611 = vld [vmem:[#allocation4 + $0xa] sm:$0xff]
      %v5612 = vld [vmem:[#allocation4 + $0x12] sm:$0x3f]
      %v5613 = vpack.c.bf16 %v5611, %v5610
      %v5614 = vpack.c.bf16 %v5612, %v5612
      %v5615 = vld [vmem:[#allocation4 + $0x6] sm:$0xff]
      %v5616 = vld [vmem:[#allocation4 + $0xe] sm:$0xff]
      %v5617 = vld [vmem:[#allocation4 + $0x16] sm:$0x3f]
      %v5618 = vpack.c.bf16 %v5616, %v5615
      %v5619 = vpack.c.bf16 %v5617, %v5617
      %v5620 = vld [vmem:[#allocation4 + $0x7] sm:$0xff]
      %v5621 = vld [vmem:[#allocation4 + $0xf] sm:$0xff]
      %v5622 = vld [vmem:[#allocation4 + $0x17] sm:$0x3f]
      %v5623 = vpack.c.bf16 %v5621, %v5620
      %v5624 = vpack.c.bf16 %v5622, %v5622
      %v5625 = vld [vmem:[#allocation4 + $0x10] sm:$0xff]
      %v5626 = vld [vmem:[#allocation4 + $0x18] sm:$0x3f]
      %v5627 = vpack.c.bf16 %v5625, %v5601
      %v5628 = vpack.c.bf16 %v5626, %v5626
      %v5629 = vld [vmem:[#allocation4 + $0xc] sm:$0xff]
      %v5630 = vld [vmem:[#allocation4 + $0x14] sm:$0xff]
      %v5631 = vld [vmem:[#allocation4 + $0x1c] sm:$0x3f]
      %v5632 = vpack.c.bf16 %v5630, %v5629
      %v5633 = vpack.c.bf16 %v5631, %v5631
      %v5634 = vld [vmem:[#allocation4 + $0xd] sm:$0xff]
      %v5635 = vld [vmem:[#allocation4 + $0x15] sm:$0xff]
      %v5636 = vld [vmem:[#allocation4 + $0x1d] sm:$0x3f]
      %v5637 = vpack.c.bf16 %v5635, %v5634
      %v5638 = vpack.c.bf16 %v5636, %v5636
      %v5639 = vld [vmem:[#allocation4 + $0xe] sm:$0xff]
      %v5640 = vld [vmem:[#allocation4 + $0x16] sm:$0xff]
      %v5641 = vld [vmem:[#allocation4 + $0x1e] sm:$0x3f]
      %v5642 = vpack.c.bf16 %v5640, %v5639
      %v5643 = vpack.c.bf16 %v5641, %v5641
      %s5644 = scalar_lea.vmem %s1, 1728
      %v5645 = vld [vmem:[%s5644] sm:$0xf]
      %v5646 = vld [vmem:[%s5644 + $0x4] sm:$0xf]
      %v5647 = vld [vmem:[%s5644 + $0x8] sm:$0xf]
      %v5648 = vld [vmem:[%s5644 + $0xc] sm:$0xf]
      %v5649 = vld [vmem:[%s5644 + $0x10] sm:$0xf]
      %v5650 = vld [vmem:[%s5644 + $0x14] sm:$0xf]
      %v5651 = vld [vmem:[%s5644 + $0x18] sm:$0xf]
      %v5652 = vld [vmem:[%s5644 + $0x1c] sm:$0xf]
      %v5653 = vld [vmem:[%s5644 + $0x20] sm:$0xf]
      %v5654 = vld [vmem:[%s5644 + $0x24] sm:$0xf]
      %v5655 = vld [vmem:[%s5644 + $0x28] sm:$0xf]
      %v5656 = vld [vmem:[%s5644 + $0x2c] sm:$0xf]
      %v5657 = vld [vmem:[%s5644 + $0x30] sm:$0xf]
      %v5658 = vld [vmem:[%s5644 + $0x34] sm:$0xf]
      %v5659 = vld [vmem:[%s5644 + $0x38] sm:$0xf]
      %v5660 = vld [vmem:[%s5644 + $0x3c] sm:$0xf]
      %v5661 = vld [vmem:[%s5644 + $0x40] sm:$0xf]
      %v5662 = vld [vmem:[%s5644 + $0x44] sm:$0xf]
      %v5663 = vld [vmem:[%s5644 + $0x48] sm:$0xf]
      %v5664 = vld [vmem:[%s5644 + $0x4c] sm:$0xf]
      %v5665 = vld [vmem:[%s5644 + $0x50] sm:$0xf]
      %v5666 = vld [vmem:[%s5644 + $0x54] sm:$0xf]
      %v5667 = vld [vmem:[%s5644 + $0x58] sm:$0xf]
      %v5668 = vld [vmem:[%s5644 + $0x5c] sm:$0xf]
      %v5669 = vld [vmem:[%s5644 + $0x60] sm:$0xf]
      %v5670 = vld [vmem:[%s5644 + $0x64] sm:$0xf]
      %v5671 = vld [vmem:[%s5644 + $0x68] sm:$0xf]
      %v5672 = vld [vmem:[%s5644 + $0x6c] sm:$0xf]
      %v5673 = vld [vmem:[%s5644 + $0x70] sm:$0xf]
      %v5674 = vld [vmem:[%s5644 + $0x74] sm:$0xf]
      %v5675 = vld [vmem:[%s5644 + $0x78] sm:$0xf]
      %v5676 = vld [vmem:[%s5644 + $0x7c] sm:$0xf]
      %v5677 = vld [vmem:[%s5644 + $0x80] sm:$0xf]
      %v5678 = vld [vmem:[%s5644 + $0x84] sm:$0xf]
      %v5679 = vld [vmem:[%s5644 + $0x88] sm:$0xf]
      %v5680 = vld [vmem:[%s5644 + $0x8c] sm:$0xf]
      %v5681 = vld [vmem:[%s5644 + $0x90] sm:$0xf]
      %v5682 = vld [vmem:[%s5644 + $0x94] sm:$0xf]
      %v5683 = vld [vmem:[%s5644 + $0x98] sm:$0xf]
      %v5684 = vld [vmem:[%s5644 + $0x9c] sm:$0xf]
      %v5685 = vld [vmem:[%s5644 + $0xa0] sm:$0xf]
      %v5686 = vld [vmem:[%s5644 + $0xa4] sm:$0xf]
      %v5687 = vld [vmem:[%s5644 + $0xa8] sm:$0xf]
      %v5688 = vld [vmem:[%s5644 + $0xac] sm:$0xf]
      %v5689 = vld [vmem:[%s5644 + $0xb0] sm:$0xf]
      %v5690 = vld [vmem:[%s5644 + $0xb4] sm:$0xf]
      %v5691 = vld [vmem:[%s5644 + $0xb8] sm:$0xf]
      %v5692 = vld [vmem:[%s5644 + $0xbc] sm:$0xf]
      %v5693 = vld [vmem:[%s5644 + $0xc0] sm:$0xf]
      %v5694 = vld [vmem:[%s5644 + $0xc4] sm:$0xf]
      %v5695 = vld [vmem:[%s5644 + $0xc8] sm:$0xf]
      %v5696 = vld [vmem:[%s5644 + $0xcc] sm:$0xf]
      %v5697 = vld [vmem:[%s5644 + $0xd0] sm:$0xf]
      %v5698 = vld [vmem:[%s5644 + $0xd4] sm:$0xf]
      %v5699 = vld [vmem:[%s5644 + $0xd8] sm:$0xf]
      %v5700 = vld [vmem:[%s5644 + $0xdc] sm:$0xf]
      %v5701 = vld [vmem:[%s5644 + $0xe0] sm:$0xf]
      %v5702 = vld [vmem:[%s5644 + $0xe4] sm:$0xf]
      %v5703 = vld [vmem:[%s5644 + $0xe8] sm:$0xf]
      %v5704 = vld [vmem:[%s5644 + $0xec] sm:$0xf]
      %v5705 = vld [vmem:[%s5644 + $0xf0] sm:$0xf]
      %v5706 = vld [vmem:[%s5644 + $0xf4] sm:$0xf]
      %v5707 = vld [vmem:[%s5644 + $0xf8] sm:$0xf]
      %v5708 = vld [vmem:[%s5644 + $0xfc] sm:$0xf]
      %v5709 = vld [vmem:[%s5644 + $0x100] sm:$0xf]
      %v5710 = vld [vmem:[%s5644 + $0x104] sm:$0xf]
      %v5711 = vld [vmem:[%s5644 + $0x108] sm:$0xf]
      %v5712 = vld [vmem:[%s5644 + $0x10c] sm:$0xf]
      %v5713 = vld [vmem:[%s5644 + $0x110] sm:$0xf]
      %v5714 = vld [vmem:[%s5644 + $0x114] sm:$0xf]
      %v5715 = vld [vmem:[%s5644 + $0x118] sm:$0xf]
      %v5716 = vld [vmem:[%s5644 + $0x11c] sm:$0xf]
      %v5717 = vld [vmem:[%s5644 + $0x120] sm:$0xf]
      %v5718 = vld [vmem:[%s5644 + $0x124] sm:$0xf]
      %v5719 = vld [vmem:[%s5644 + $0x128] sm:$0xf]
      %v5720 = vld [vmem:[%s5644 + $0x12c] sm:$0xf]
      %v5721 = vld [vmem:[%s5644 + $0x130] sm:$0xf]
      %v5722 = vld [vmem:[%s5644 + $0x134] sm:$0xf]
      %v5723 = vld [vmem:[%s5644 + $0x138] sm:$0xf]
      %v5724 = vld [vmem:[%s5644 + $0x13c] sm:$0xf]
      %v5725 = vld [vmem:[%s5644 + $0x140] sm:$0xf]
      %v5726 = vld [vmem:[%s5644 + $0x144] sm:$0xf]
      %v5727 = vld [vmem:[%s5644 + $0x148] sm:$0xf]
      %v5728 = vld [vmem:[%s5644 + $0x14c] sm:$0xf]
      %v5729 = vld [vmem:[%s5644 + $0x150] sm:$0xf]
      %v5730 = vld [vmem:[%s5644 + $0x154] sm:$0xf]
      %v5731 = vld [vmem:[%s5644 + $0x158] sm:$0xf]
      %v5732 = vld [vmem:[%s5644 + $0x15c] sm:$0xf]
      %v5733 = vld [vmem:[%s5644 + $0x160] sm:$0xf]
      %v5734 = vld [vmem:[%s5644 + $0x164] sm:$0xf]
      %v5735 = vld [vmem:[%s5644 + $0x168] sm:$0xf]
      %v5736 = vld [vmem:[%s5644 + $0x16c] sm:$0xf]
      %v5737 = vld [vmem:[%s5644 + $0x170] sm:$0xf]
      %v5738 = vld [vmem:[%s5644 + $0x174] sm:$0xf]
      %v5739 = vld [vmem:[%s5644 + $0x178] sm:$0xf]
      %v5740 = vld [vmem:[%s5644 + $0x17c] sm:$0xf]
      %v5741 = vld [vmem:[%s5644 + $0x180] sm:$0xf]
      %v5742 = vld [vmem:[%s5644 + $0x184] sm:$0xf]
      %v5743 = vld [vmem:[%s5644 + $0x188] sm:$0xf]
      %v5744 = vld [vmem:[%s5644 + $0x18c] sm:$0xf]
      %v5745 = vld [vmem:[%s5644 + $0x190] sm:$0xf]
      %v5746 = vld [vmem:[%s5644 + $0x194] sm:$0xf]
      %v5747 = vld [vmem:[%s5644 + $0x198] sm:$0xf]
      %v5748 = vld [vmem:[%s5644 + $0x19c] sm:$0xf]
      %v5749 = vld [vmem:[%s5644 + $0x1a0] sm:$0xf]
      %v5750 = vld [vmem:[%s5644 + $0x1a4] sm:$0xf]
      %v5751 = vld [vmem:[%s5644 + $0x1a8] sm:$0xf]
      %v5752 = vld [vmem:[%s5644 + $0x1ac] sm:$0xf]
      %v5753 = vld [vmem:[%s5644 + $0x1b0] sm:$0xf]
      %v5754 = vld [vmem:[%s5644 + $0x1b4] sm:$0xf]
      %v5755 = vld [vmem:[%s5644 + $0x1b8] sm:$0xf]
      %v5756 = vld [vmem:[%s5644 + $0x1bc] sm:$0xf]
      %v5757 = vld [vmem:[%s5644 + $0x1c0] sm:$0xf]
      %v5758 = vld [vmem:[%s5644 + $0x1c4] sm:$0xf]
      %v5759 = vld [vmem:[%s5644 + $0x1c8] sm:$0xf]
      %v5760 = vld [vmem:[%s5644 + $0x1cc] sm:$0xf]
      %v5761 = vld [vmem:[%s5644 + $0x1d0] sm:$0xf]
      %v5762 = vld [vmem:[%s5644 + $0x1d4] sm:$0xf]
      %v5763 = vld [vmem:[%s5644 + $0x1d8] sm:$0xf]
      %v5764 = vld [vmem:[%s5644 + $0x1dc] sm:$0xf]
      %v5765 = vld [vmem:[%s5644 + $0x1e0] sm:$0xf]
      %v5766 = vld [vmem:[%s5644 + $0x1e4] sm:$0xf]
      %v5767 = vld [vmem:[%s5644 + $0x1e8] sm:$0xf]
      %v5768 = vld [vmem:[%s5644 + $0x1ec] sm:$0xf]
      %v5769 = vld [vmem:[%s5644 + $0x1f0] sm:$0xf]
      %v5770 = vld [vmem:[%s5644 + $0x1f4] sm:$0xf]
      %v5771 = vld [vmem:[%s5644 + $0x1f8] sm:$0xf]
      %v5772 = vld [vmem:[%s5644 + $0x1fc] sm:$0xf]
      %v5773 = vld [vmem:[%s5644 + $0x200] sm:$0xf]
      %v5774 = vld [vmem:[%s5644 + $0x204] sm:$0xf]
      %v5775 = vld [vmem:[%s5644 + $0x208] sm:$0xf]
      %v5776 = vld [vmem:[%s5644 + $0x20c] sm:$0xf]
      %v5777 = vld [vmem:[%s5644 + $0x210] sm:$0xf]
      %v5778 = vld [vmem:[%s5644 + $0x214] sm:$0xf]
      %v5779 = vld [vmem:[%s5644 + $0x218] sm:$0xf]
      %v5780 = vld [vmem:[%s5644 + $0x21c] sm:$0xf]
      %v5781 = vld [vmem:[%s5644 + $0x220] sm:$0xf]
      %v5782 = vld [vmem:[%s5644 + $0x224] sm:$0xf]
      %v5783 = vld [vmem:[%s5644 + $0x228] sm:$0xf]
      %v5784 = vld [vmem:[%s5644 + $0x22c] sm:$0xf]
      %v5785 = vld [vmem:[%s5644 + $0x230] sm:$0xf]
      %v5786 = vld [vmem:[%s5644 + $0x234] sm:$0xf]
      %v5787 = vld [vmem:[%s5644 + $0x238] sm:$0xf]
      %v5788 = vld [vmem:[%s5644 + $0x23c] sm:$0xf]
      %s5789 = scalar_lea.vmem %s2, 3
      %v5790 = vld [vmem:[%s5789] sm:$0x1]
      %v5792 = vlaneseq
      %v5793 = vshrl.u32 %v5792, 7
      %v5794 = vsub.s32 0, %v5793
      %v5795 = vrot.slane %v5790, %v5794
      %v5941 = vunpack.c.l.b16 %v5645
      %v5942 = vunpack.c.l.b16 %v5646
      %v5943 = vunpack.c.l.b16 %v5647
      %v5944 = vunpack.c.l.b16 %v5648
      %v5945 = vunpack.c.l.b16 %v5649
      %v5946 = vunpack.c.l.b16 %v5650
      %v5947 = vunpack.c.l.b16 %v5651
      %v5948 = vunpack.c.l.b16 %v5652
      %v5949 = vunpack.c.l.b16 %v5653
      %v5950 = vunpack.c.l.b16 %v5654
      %v5951 = vunpack.c.l.b16 %v5655
      %v5952 = vunpack.c.l.b16 %v5656
      %v5953 = vunpack.c.l.b16 %v5657
      %v5954 = vunpack.c.l.b16 %v5658
      %v5955 = vunpack.c.l.b16 %v5659
      %v5956 = vunpack.c.l.b16 %v5660
      %v5957 = vunpack.c.l.b16 %v5661
      %v5958 = vunpack.c.l.b16 %v5662
      %v5959 = vunpack.c.l.b16 %v5663
      %v5960 = vunpack.c.l.b16 %v5664
      %v5961 = vunpack.c.l.b16 %v5665
      %v5962 = vunpack.c.l.b16 %v5666
      %v5963 = vunpack.c.l.b16 %v5667
      %v5964 = vunpack.c.l.b16 %v5668
      %v5965 = vunpack.c.l.b16 %v5669
      %v5966 = vunpack.c.l.b16 %v5670
      %v5967 = vunpack.c.l.b16 %v5671
      %v5968 = vunpack.c.l.b16 %v5672
      %v5969 = vunpack.c.l.b16 %v5673
      %v5970 = vunpack.c.l.b16 %v5674
      %v5971 = vunpack.c.l.b16 %v5675
      %v5972 = vunpack.c.l.b16 %v5676
      %v5973 = vunpack.c.l.b16 %v5677
      %v5974 = vunpack.c.l.b16 %v5678
      %v5975 = vunpack.c.l.b16 %v5679
      %v5976 = vunpack.c.l.b16 %v5680
      %v5977 = vunpack.c.l.b16 %v5681
      %v5978 = vunpack.c.l.b16 %v5682
      %v5979 = vunpack.c.l.b16 %v5683
      %v5980 = vunpack.c.l.b16 %v5684
      %v5981 = vunpack.c.l.b16 %v5685
      %v5982 = vunpack.c.l.b16 %v5686
      %v5983 = vunpack.c.l.b16 %v5687
      %v5984 = vunpack.c.l.b16 %v5688
      %v5985 = vunpack.c.l.b16 %v5689
      %v5986 = vunpack.c.l.b16 %v5690
      %v5987 = vunpack.c.l.b16 %v5691
      %v5988 = vunpack.c.l.b16 %v5692
      %v5989 = vunpack.c.l.b16 %v5693
      %v5990 = vunpack.c.l.b16 %v5694
      %v5991 = vunpack.c.l.b16 %v5695
      %v5992 = vunpack.c.l.b16 %v5696
      %v5993 = vunpack.c.l.b16 %v5697
      %v5994 = vunpack.c.l.b16 %v5698
      %v5995 = vunpack.c.l.b16 %v5699
      %v5996 = vunpack.c.l.b16 %v5700
      %v5997 = vunpack.c.l.b16 %v5701
      %v5998 = vunpack.c.l.b16 %v5702
      %v5999 = vunpack.c.l.b16 %v5703
      %v6000 = vunpack.c.l.b16 %v5704
      %v6001 = vunpack.c.l.b16 %v5705
      %v6002 = vunpack.c.l.b16 %v5706
      %v6003 = vunpack.c.l.b16 %v5707
      %v6004 = vunpack.c.l.b16 %v5708
      %v6005 = vunpack.c.l.b16 %v5709
      %v6006 = vunpack.c.l.b16 %v5710
      %v6007 = vunpack.c.l.b16 %v5711
      %v6008 = vunpack.c.l.b16 %v5712
      %v6009 = vunpack.c.l.b16 %v5713
      %v6010 = vunpack.c.l.b16 %v5714
      %v6011 = vunpack.c.l.b16 %v5715
      %v6012 = vunpack.c.l.b16 %v5716
      %v6013 = vunpack.c.l.b16 %v5717
      %v6014 = vunpack.c.l.b16 %v5718
      %v6015 = vunpack.c.l.b16 %v5719
      %v6016 = vunpack.c.l.b16 %v5720
      %v6017 = vunpack.c.l.b16 %v5721
      %v6018 = vunpack.c.l.b16 %v5722
      %v6019 = vunpack.c.l.b16 %v5723
      %v6020 = vunpack.c.l.b16 %v5724
      %v6021 = vunpack.c.l.b16 %v5725
      %v6022 = vunpack.c.l.b16 %v5726
      %v6023 = vunpack.c.l.b16 %v5727
      %v6024 = vunpack.c.l.b16 %v5728
      %v6025 = vunpack.c.l.b16 %v5729
      %v6026 = vunpack.c.l.b16 %v5730
      %v6027 = vunpack.c.l.b16 %v5731
      %v6028 = vunpack.c.l.b16 %v5732
      %v6029 = vunpack.c.l.b16 %v5733
      %v6030 = vunpack.c.l.b16 %v5734
      %v6031 = vunpack.c.l.b16 %v5735
      %v6032 = vunpack.c.l.b16 %v5736
      %v6033 = vunpack.c.l.b16 %v5737
      %v6034 = vunpack.c.l.b16 %v5738
      %v6035 = vunpack.c.l.b16 %v5739
      %v6036 = vunpack.c.l.b16 %v5740
      %v6037 = vunpack.c.l.b16 %v5741
      %v6038 = vunpack.c.l.b16 %v5742
      %v6039 = vunpack.c.l.b16 %v5743
      %v6040 = vunpack.c.l.b16 %v5744
      %v6041 = vunpack.c.l.b16 %v5745
      %v6042 = vunpack.c.l.b16 %v5746
      %v6043 = vunpack.c.l.b16 %v5747
      %v6044 = vunpack.c.l.b16 %v5748
      %v6045 = vunpack.c.l.b16 %v5749
      %v6046 = vunpack.c.l.b16 %v5750
      %v6047 = vunpack.c.l.b16 %v5751
      %v6048 = vunpack.c.l.b16 %v5752
      %v6049 = vunpack.c.l.b16 %v5753
      %v6050 = vunpack.c.l.b16 %v5754
      %v6051 = vunpack.c.l.b16 %v5755
      %v6052 = vunpack.c.l.b16 %v5756
      %v6053 = vunpack.c.l.b16 %v5757
      %v6054 = vunpack.c.l.b16 %v5758
      %v6055 = vunpack.c.l.b16 %v5759
      %v6056 = vunpack.c.l.b16 %v5760
      %v6057 = vunpack.c.l.b16 %v5761
      %v6058 = vunpack.c.l.b16 %v5762
      %v6059 = vunpack.c.l.b16 %v5763
      %v6060 = vunpack.c.l.b16 %v5764
      %v6061 = vunpack.c.l.b16 %v5765
      %v6062 = vunpack.c.l.b16 %v5766
      %v6063 = vunpack.c.l.b16 %v5767
      %v6064 = vunpack.c.l.b16 %v5768
      %v6065 = vunpack.c.l.b16 %v5769
      %v6066 = vunpack.c.l.b16 %v5770
      %v6067 = vunpack.c.l.b16 %v5771
      %v6068 = vunpack.c.l.b16 %v5772
      %v6069 = vunpack.c.l.b16 %v5773
      %v6070 = vunpack.c.l.b16 %v5774
      %v6071 = vunpack.c.l.b16 %v5775
      %v6072 = vunpack.c.l.b16 %v5776
      %v6073 = vunpack.c.l.b16 %v5777
      %v6074 = vunpack.c.l.b16 %v5778
      %v6075 = vunpack.c.l.b16 %v5779
      %v6076 = vunpack.c.l.b16 %v5780
      %v6077 = vunpack.c.l.b16 %v5781
      %v6078 = vunpack.c.l.b16 %v5782
      %v6079 = vunpack.c.l.b16 %v5783
      %v6080 = vunpack.c.l.b16 %v5784
      %v6081 = vunpack.c.l.b16 %v5785
      %v6082 = vunpack.c.l.b16 %v5786
      %v6083 = vunpack.c.l.b16 %v5787
      %v6084 = vunpack.c.l.b16 %v5788
      %v6085 = vpack.c.b16 %v5942, %v5941
      %v6086 = vpack.c.b16 %v5944, %v5943
      %v6087 = vpack.c.b16 %v5946, %v5945
      %v6088 = vpack.c.b16 %v5948, %v5947
      %v6089 = vpack.c.b16 %v5950, %v5949
      %v6090 = vpack.c.b16 %v5952, %v5951
      %v6091 = vpack.c.b16 %v5954, %v5953
      %v6092 = vpack.c.b16 %v5956, %v5955
      %v6093 = vpack.c.b16 %v5958, %v5957
      %v6094 = vpack.c.b16 %v5960, %v5959
      %v6095 = vpack.c.b16 %v5962, %v5961
      %v6096 = vpack.c.b16 %v5964, %v5963
      %v6097 = vpack.c.b16 %v5966, %v5965
      %v6098 = vpack.c.b16 %v5968, %v5967
      %v6099 = vpack.c.b16 %v5970, %v5969
      %v6100 = vpack.c.b16 %v5972, %v5971
      %v6101 = vpack.c.b16 %v5974, %v5973
      %v6102 = vpack.c.b16 %v5976, %v5975
      %v6103 = vpack.c.b16 %v5978, %v5977
      %v6104 = vpack.c.b16 %v5980, %v5979
      %v6105 = vpack.c.b16 %v5982, %v5981
      %v6106 = vpack.c.b16 %v5984, %v5983
      %v6107 = vpack.c.b16 %v5986, %v5985
      %v6108 = vpack.c.b16 %v5988, %v5987
      %v6109 = vpack.c.b16 %v5990, %v5989
      %v6110 = vpack.c.b16 %v5992, %v5991
      %v6111 = vpack.c.b16 %v5994, %v5993
      %v6112 = vpack.c.b16 %v5996, %v5995
      %v6113 = vpack.c.b16 %v5998, %v5997
      %v6114 = vpack.c.b16 %v6000, %v5999
      %v6115 = vpack.c.b16 %v6002, %v6001
      %v6116 = vpack.c.b16 %v6004, %v6003
      %v6117 = vpack.c.b16 %v6006, %v6005
      %v6118 = vpack.c.b16 %v6008, %v6007
      %v6119 = vpack.c.b16 %v6010, %v6009
      %v6120 = vpack.c.b16 %v6012, %v6011
      %v6121 = vpack.c.b16 %v6014, %v6013
      %v6122 = vpack.c.b16 %v6016, %v6015
      %v6123 = vpack.c.b16 %v6018, %v6017
      %v6124 = vpack.c.b16 %v6020, %v6019
      %v6125 = vpack.c.b16 %v6022, %v6021
      %v6126 = vpack.c.b16 %v6024, %v6023
      %v6127 = vpack.c.b16 %v6026, %v6025
      %v6128 = vpack.c.b16 %v6028, %v6027
      %v6129 = vpack.c.b16 %v6030, %v6029
      %v6130 = vpack.c.b16 %v6032, %v6031
      %v6131 = vpack.c.b16 %v6034, %v6033
      %v6132 = vpack.c.b16 %v6036, %v6035
      %v6133 = vpack.c.b16 %v6038, %v6037
      %v6134 = vpack.c.b16 %v6040, %v6039
      %v6135 = vpack.c.b16 %v6042, %v6041
      %v6136 = vpack.c.b16 %v6044, %v6043
      %v6137 = vpack.c.b16 %v6046, %v6045
      %v6138 = vpack.c.b16 %v6048, %v6047
      %v6139 = vpack.c.b16 %v6050, %v6049
      %v6140 = vpack.c.b16 %v6052, %v6051
      %v6141 = vpack.c.b16 %v6054, %v6053
      %v6142 = vpack.c.b16 %v6056, %v6055
      %v6143 = vpack.c.b16 %v6058, %v6057
      %v6144 = vpack.c.b16 %v6060, %v6059
      %v6145 = vpack.c.b16 %v6062, %v6061
      %v6146 = vpack.c.b16 %v6064, %v6063
      %v6147 = vpack.c.b16 %v6066, %v6065
      %v6148 = vpack.c.b16 %v6068, %v6067
      %v6149 = vpack.c.b16 %v6070, %v6069
      %v6150 = vpack.c.b16 %v6072, %v6071
      %v6151 = vpack.c.b16 %v6074, %v6073
      %v6152 = vpack.c.b16 %v6076, %v6075
      %v6153 = vpack.c.b16 %v6078, %v6077
      %v6154 = vpack.c.b16 %v6080, %v6079
      %v6155 = vpack.c.b16 %v6082, %v6081
      %v6156 = vpack.c.b16 %v6084, %v6083
      %6229 = vmatprep.subr.bf16.mxu0 0
      %6230 = vmatpush1.bf16.msra.mxu0 %v6085
      %6231 = vmatprep.subr.bf16.mxu0 0
      %6232 = vmatpush1.bf16.msra.mxu0 %v6086
      %6233 = vmatprep.subr.bf16.mxu0 0
      %6234 = vmatpush1.bf16.msra.mxu0 %v6087
      %6235 = vmatprep.subr.bf16.mxu0 0
      %6236 = vmatpush1.bf16.msra.mxu0 %v6088
      %6237 = vmatprep.subr.bf16.mxu0 0
      %6238 = vmatpush1.bf16.msra.mxu0 %v6089
      %6239 = vmatprep.subr.bf16.mxu0 0
      %6240 = vmatpush1.bf16.msra.mxu0 %v6090
      %6241 = vmatprep.subr.bf16.mxu0 0
      %6242 = vmatpush1.bf16.msra.mxu0 %v6091
      %6243 = vmatprep.subr.bf16.mxu0 0
      %6244 = vmatpush1.bf16.msra.mxu0 %v6092
      %6245 = vmatprep.subr.bf16.mxu0 0
      %6246 = vmatpush1.bf16.msra.mxu0 %v6093
      %6247 = vmatprep.subr.bf16.mxu0 0
      %6248 = vmatpush1.bf16.msra.mxu0 %v6094
      %6249 = vmatprep.subr.bf16.mxu0 0
      %6250 = vmatpush1.bf16.msra.mxu0 %v6095
      %6251 = vmatprep.subr.bf16.mxu0 0
      %6252 = vmatpush1.bf16.msra.mxu0 %v6096
      %6253 = vmatprep.subr.bf16.mxu0 0
      %6254 = vmatpush1.bf16.msra.mxu0 %v6097
      %6255 = vmatprep.subr.bf16.mxu0 0
      %6256 = vmatpush1.bf16.msra.mxu0 %v6098
      %6257 = vmatprep.subr.bf16.mxu0 0
      %6258 = vmatpush1.bf16.msra.mxu0 %v6099
      %6259 = vmatprep.subr.bf16.mxu0 0
      %6260 = vmatpush1.bf16.msra.mxu0 %v6100
      %6261 = vmatprep.mubr.bf16.mxu0 %v5608
      %6262 = vmatmul.mubr.bf16.gmra.mrb[0].mxu0 %v5603
      %v6263 = vpop.f32.mrb[0].mxu0
      %v6264 = vadd.f32 %v5795, %v6263
      %v6265 = vpop.f32.mrb[0].mxu0
      %v6266 = vpop.f32.mrb[0].mxu0
      %v6267 = vadd.f32 %v5795, %v6266
      %v6268 = vpop.f32.mrb[0].mxu0
      %6269 = vmatprep.mubr.bf16.mxu0 %v5609
      %6270 = vmatmul.mubr.bf16.gmra.mrb[0].mxu0 %v5604
      %v6271 = vpop.f32.mrb[0].mxu0
      %v6272 = vadd.f32 %v5795, %v6271
      %v6273 = vpop.f32.mrb[0].mxu0
      %v6274 = vpop.f32.mrb[0].mxu0
      %v6275 = vpop.f32.mrb[0].mxu0
      %6276 = vdwg.mxu0
      %6277 = vmatprep.subr.bf16.mxu0 0
      %6278 = vmatpush1.bf16.msra.mxu0 %v6101
      %6279 = vmatprep.subr.bf16.mxu0 0
      %6280 = vmatpush1.bf16.msra.mxu0 %v6102
      %6281 = vmatprep.subr.bf16.mxu0 0
      %6282 = vmatpush1.bf16.msra.mxu0 %v6103
      %6283 = vmatprep.subr.bf16.mxu0 0
      %6284 = vmatpush1.bf16.msra.mxu0 %v6104
      %6285 = vmatprep.subr.bf16.mxu0 0
      %6286 = vmatpush1.bf16.msra.mxu0 %v6105
      %6287 = vmatprep.subr.bf16.mxu0 0
      %6288 = vmatpush1.bf16.msra.mxu0 %v6106
      %6289 = vmatprep.subr.bf16.mxu0 0
      %6290 = vmatpush1.bf16.msra.mxu0 %v6107
      %6291 = vmatprep.subr.bf16.mxu0 0
      %6292 = vmatpush1.bf16.msra.mxu0 %v6108
      %6293 = vmatprep.subr.bf16.mxu0 0
      %6294 = vmatpush1.bf16.msra.mxu0 %v6109
      %6295 = vmatprep.subr.bf16.mxu0 0
      %6296 = vmatpush1.bf16.msra.mxu0 %v6110
      %6297 = vmatprep.subr.bf16.mxu0 0
      %6298 = vmatpush1.bf16.msra.mxu0 %v6111
      %6299 = vmatprep.subr.bf16.mxu0 0
      %6300 = vmatpush1.bf16.msra.mxu0 %v6112
      %6301 = vmatprep.subr.bf16.mxu0 0
      %6302 = vmatpush1.bf16.msra.mxu0 %v6113
      %6303 = vmatprep.subr.bf16.mxu0 0
      %6304 = vmatpush1.bf16.msra.mxu0 %v6114
      %6305 = vmatprep.subr.bf16.mxu0 0
      %6306 = vmatpush1.bf16.msra.mxu0 %v6115
      %6307 = vmatprep.subr.bf16.mxu0 0
      %6308 = vmatpush1.bf16.msra.mxu0 %v6116
      %6309 = vmatprep.mubr.bf16.mxu0 %v5618
      %6310 = vmatmul.mubr.bf16.gmra.mrb[0].mxu0 %v5613
      %v6311 = vpop.f32.mrb[0].mxu0
      %v6312 = vadd.f32 %v6264, %v6311
      %v6313 = vpop.f32.mrb[0].mxu0
      %v6314 = vpop.f32.mrb[0].mxu0
      %v6315 = vadd.f32 %v6267, %v6314
      %v6316 = vpop.f32.mrb[0].mxu0
      %6317 = vmatprep.mubr.bf16.mxu0 %v5619
      %6318 = vmatmul.mubr.bf16.gmra.mrb[0].mxu0 %v5614
      %v6319 = vpop.f32.mrb[0].mxu0
      %v6320 = vadd.f32 %v6272, %v6319
      %v6321 = vpop.f32.mrb[0].mxu0
      %v6322 = vpop.f32.mrb[0].mxu0
      %v6323 = vpop.f32.mrb[0].mxu0
      %6324 = vdwg.mxu0
      %6325 = vmatprep.subr.bf16.mxu0 0
      %6326 = vmatpush1.bf16.msra.mxu0 %v6117
      %6327 = vmatprep.subr.bf16.mxu0 0
      %6328 = vmatpush1.bf16.msra.mxu0 %v6118
      %6329 = vmatprep.subr.bf16.mxu0 0
      %6330 = vmatpush1.bf16.msra.mxu0 %v6119
      %6331 = vmatprep.subr.bf16.mxu0 0
      %6332 = vmatpush1.bf16.msra.mxu0 %v6120
      %6333 = vmatprep.subr.bf16.mxu0 0
      %6334 = vmatpush1.bf16.msra.mxu0 %v6121
      %6335 = vmatprep.subr.bf16.mxu0 0
      %6336 = vmatpush1.bf16.msra.mxu0 %v6122
      %6337 = vmatprep.subr.bf16.mxu0 0
      %6338 = vmatpush1.bf16.msra.mxu0 %v6123
      %6339 = vmatprep.subr.bf16.mxu0 0
      %6340 = vmatpush1.bf16.msra.mxu0 %v6124
      %6341 = vmatprep.subr.bf16.mxu0 0
      %6342 = vmatpush1.bf16.msra.mxu0 %v6125
      %6343 = vmatprep.subr.bf16.mxu0 0
      %6344 = vmatpush1.bf16.msra.mxu0 %v6126
      %6345 = vmatprep.subr.bf16.mxu0 0
      %6346 = vmatpush1.bf16.msra.mxu0 %v6127
      %6347 = vmatprep.subr.bf16.mxu0 0
      %6348 = vmatpush1.bf16.msra.mxu0 %v6128
      %6349 = vmatprep.subr.bf16.mxu0 0
      %6350 = vmatpush1.bf16.msra.mxu0 %v6129
      %6351 = vmatprep.subr.bf16.mxu0 0
      %6352 = vmatpush1.bf16.msra.mxu0 %v6130
      %6353 = vmatprep.subr.bf16.mxu0 0
      %6354 = vmatpush1.bf16.msra.mxu0 %v6131
      %6355 = vmatprep.subr.bf16.mxu0 0
      %6356 = vmatpush1.bf16.msra.mxu0 %v6132
      %6357 = vmatprep.mubr.bf16.mxu0 %v5627
      %6358 = vmatmul.mubr.bf16.gmra.mrb[0].mxu0 %v5623
      %v6359 = vpop.f32.mrb[0].mxu0
      %v6360 = vadd.f32 %v6312, %v6359
      %v6361 = vpop.f32.mrb[0].mxu0
      %v6362 = vpop.f32.mrb[0].mxu0
      %v6363 = vadd.f32 %v6315, %v6362
      %v6364 = vpop.f32.mrb[0].mxu0
      %6365 = vmatprep.mubr.bf16.mxu0 %v5628
      %6366 = vmatmul.mubr.bf16.gmra.mrb[0].mxu0 %v5624
      %v6367 = vpop.f32.mrb[0].mxu0
      %v6368 = vadd.f32 %v6320, %v6367
      %v6369 = vpop.f32.mrb[0].mxu0
      %v6370 = vpop.f32.mrb[0].mxu0
      %v6371 = vpop.f32.mrb[0].mxu0
      %6372 = vdwg.mxu0
      %6373 = vmatprep.subr.bf16.mxu0 0
      %6374 = vmatpush1.bf16.msra.mxu0 %v6133
      %6375 = vmatprep.subr.bf16.mxu0 0
      %6376 = vmatpush1.bf16.msra.mxu0 %v6134
      %6377 = vmatprep.subr.bf16.mxu0 0
      %6378 = vmatpush1.bf16.msra.mxu0 %v6135
      %6379 = vmatprep.subr.bf16.mxu0 0
      %6380 = vmatpush1.bf16.msra.mxu0 %v6136
      %6381 = vmatprep.subr.bf16.mxu0 0
      %6382 = vmatpush1.bf16.msra.mxu0 %v6137
      %6383 = vmatprep.subr.bf16.mxu0 0
      %6384 = vmatpush1.bf16.msra.mxu0 %v6138
      %6385 = vmatprep.subr.bf16.mxu0 0
      %6386 = vmatpush1.bf16.msra.mxu0 %v6139
      %6387 = vmatprep.subr.bf16.mxu0 0
      %6388 = vmatpush1.bf16.msra.mxu0 %v6140
      %6389 = vmatprep.subr.bf16.mxu0 0
      %6390 = vmatpush1.bf16.msra.mxu0 %v6141
      %6391 = vmatprep.subr.bf16.mxu0 0
      %6392 = vmatpush1.bf16.msra.mxu0 %v6142
      %6393 = vmatprep.subr.bf16.mxu0 0
      %6394 = vmatpush1.bf16.msra.mxu0 %v6143
      %6395 = vmatprep.subr.bf16.mxu0 0
      %6396 = vmatpush1.bf16.msra.mxu0 %v6144
      %6397 = vmatprep.subr.bf16.mxu0 0
      %6398 = vmatpush1.bf16.msra.mxu0 %v6145
      %6399 = vmatprep.subr.bf16.mxu0 0
      %6400 = vmatpush1.bf16.msra.mxu0 %v6146
      %6401 = vmatprep.subr.bf16.mxu0 0
      %6402 = vmatpush1.bf16.msra.mxu0 %v6147
      %6403 = vmatprep.subr.bf16.mxu0 0
      %6404 = vmatpush1.bf16.msra.mxu0 %v6148
      %6405 = vmatprep.mubr.bf16.mxu0 %v5637
      %6406 = vmatmul.mubr.bf16.gmra.mrb[0].mxu0 %v5632
      %v6407 = vpop.f32.mrb[0].mxu0
      %v6408 = vadd.f32 %v6360, %v6407
      %v6409 = vpop.f32.mrb[0].mxu0
      %v6410 = vpop.f32.mrb[0].mxu0
      %v6411 = vadd.f32 %v6363, %v6410
      %v6412 = vpop.f32.mrb[0].mxu0
      %6413 = vmatprep.mubr.bf16.mxu0 %v5638
      %6414 = vmatmul.mubr.bf16.gmra.mrb[0].mxu0 %v5633
      %v6415 = vpop.f32.mrb[0].mxu0
      %v6416 = vadd.f32 %v6368, %v6415
      %v6417 = vpop.f32.mrb[0].mxu0
      %v6418 = vpop.f32.mrb[0].mxu0
      %v6419 = vpop.f32.mrb[0].mxu0
      %6420 = vdwg.mxu0
      %6421 = vmatprep.subr.bf16.mxu0 0
      %6422 = vmatpush1.bf16.msra.mxu0 %v6149
      %6423 = vmatprep.subr.bf16.mxu0 0
      %6424 = vmatpush1.bf16.msra.mxu0 %v6150
      %6425 = vmatprep.subr.bf16.mxu0 0
      %6426 = vmatpush1.bf16.msra.mxu0 %v6151
      %6427 = vmatprep.subr.bf16.mxu0 0
      %6428 = vmatpush1.bf16.msra.mxu0 %v6152
      %6429 = vmatprep.subr.bf16.mxu0 0
      %6430 = vmatpush1.bf16.msra.mxu0 %v6153
      %6431 = vmatprep.subr.bf16.mxu0 0
      %6432 = vmatpush1.bf16.msra.mxu0 %v6154
      %6433 = vmatprep.subr.bf16.mxu0 0
      %6434 = vmatpush1.bf16.msra.mxu0 %v6155
      %6435 = vmatprep.subr.bf16.mxu0 0
      %6436 = vmatpush1.bf16.msra.mxu0 %v6156
      %6437 = vmatprep.subr.bf16.mxu0 0
      %6438 = vmatpush1.bf16.msra.mxu0 0
      %6439 = vmatprep.subr.bf16.mxu0 0
      %6440 = vmatpush1.bf16.msra.mxu0 0
      %6441 = vmatprep.subr.bf16.mxu0 0
      %6442 = vmatpush1.bf16.msra.mxu0 0
      %6443 = vmatprep.subr.bf16.mxu0 0
      %6444 = vmatpush1.bf16.msra.mxu0 0
      %6445 = vmatprep.subr.bf16.mxu0 0
      %6446 = vmatpush1.bf16.msra.mxu0 0
      %6447 = vmatprep.subr.bf16.mxu0 0
      %6448 = vmatpush1.bf16.msra.mxu0 0
      %6449 = vmatprep.subr.bf16.mxu0 0
      %6450 = vmatpush1.bf16.msra.mxu0 0
      %6451 = vmatprep.subr.bf16.mxu0 0
      %6452 = vmatpush1.bf16.msra.mxu0 0
      %6453 = vmatprep.mubr.bf16.mxu0 0
      %6454 = vmatmul.mubr.bf16.gmra.mrb[0].mxu0 %v5642
      %v6455 = vpop.f32.mrb[0].mxu0
      %v6456 = vadd.f32 %v6408, %v6455
      %v6457 = vpop.f32.mrb[0].mxu0
      %v6458 = vpop.f32.mrb[0].mxu0
      %v6459 = vadd.f32 %v6411, %v6458
      %v6460 = vpop.f32.mrb[0].mxu0
      %6461 = vmatprep.mubr.bf16.mxu0 0
      %6462 = vmatmul.mubr.bf16.gmra.mrb[0].mxu0 %v5643
      %v6463 = vpop.f32.mrb[0].mxu0
      %v6464 = vadd.f32 %v6416, %v6463
      %v6465 = vpop.f32.mrb[0].mxu0
      %v6466 = vpop.f32.mrb[0].mxu0
      %v6467 = vpop.f32.mrb[0].mxu0
      %6468 = vdwg.mxu0
      %v6469 = vxor.u32 %v6456, 2147483648
      %v6470 = vxor.u32 %v6459, 2147483648
      %v6471 = vxor.u32 %v6464, 2147483648
      %v6472 = vmul.f32 %v6469, 1.442695
      %v6473 = vpow.pop %v6472
      %v6474 = vmul.f32 %v6470, 1.442695
      %v6475 = vpow.pop %v6474
      %v6476 = vmul.f32 %v6471, 1.442695
      %v6477 = vpow.pop %v6476
      %v6478 = vadd.f32 %v6473, 1.0
      %v6479 = vadd.f32 %v6475, 1.0
      %v6480 = vadd.f32 %v6477, 1.0
      %v6481 = vrcp.pop %v6478
      %v6482 = vmul.f32 1.0, %v6481
      %v6483 = vrcp.pop %v6479
      %v6484 = vmul.f32 1.0, %v6483
      %v6485 = vrcp.pop %v6480
      %v6486 = vmul.f32 1.0, %v6485
      %v6487 = vmul.f32 %v6456, %v6482
      %v6488 = vmul.f32 %v6459, %v6484
      %v6489 = vmul.f32 %v6464, %v6486
      %v6490 = vld [vmem:[%s10] sm:$0x1]
      %vm6491 = vcmask 179200
      %v6493 = vsel %vm6491, %v6490, 0
      %v6496 = vsel %vm2654, %v6489, 0
      %6498 = vmatprep.subr.mxu0 0.0
      %6499 = vmatpush1.msra.mxu0 %v6487
      %6500 = vmatprep.subr.mxu0 0.0
      %6501 = vmatpush1.msra.mxu0 %v6488
      %6502 = vmatprep.subr.mxu0 0.0
      %6503 = vmatpush1.msra.mxu0 %v6496
      %6504 = vmatprep.subr.mxu0 0.0
      %6505 = vmatpush1.msra.mxu0 0.0
      %6506 = vmatprep.subr.mxu0 0.0
      %6507 = vmatpush1.msra.mxu0 0.0
      %6508 = vmatprep.subr.mxu0 0.0
      %6509 = vmatpush1.msra.mxu0 0.0
      %6510 = vmatprep.subr.mxu0 0.0
      %6511 = vmatpush1.msra.mxu0 0.0
      %6512 = vmatprep.subr.mxu0 0.0
      %6513 = vmatpush1.msra.mxu0 0.0
      %6514 = vmatprep.subr.mxu0 0.0
      %6515 = vmatpush1.msra.mxu0 0.0
      %6516 = vmatprep.subr.mxu0 0.0
      %6517 = vmatpush1.msra.mxu0 0.0
      %6518 = vmatprep.subr.mxu0 0.0
      %6519 = vmatpush1.msra.mxu0 0.0
      %6520 = vmatprep.subr.mxu0 0.0
      %6521 = vmatpush1.msra.mxu0 0.0
      %6522 = vmatprep.subr.mxu0 0.0
      %6523 = vmatpush1.msra.mxu0 0.0
      %6524 = vmatprep.subr.mxu0 0.0
      %6525 = vmatpush1.msra.mxu0 0.0
      %6526 = vmatprep.subr.mxu0 0.0
      %6527 = vmatpush1.msra.mxu0 0.0
      %6528 = vmatprep.subr.mxu0 0.0
      %6529 = vmatpush1.msra.mxu0 0.0
      %6530 = vmatprep.subr.mxu0 0.0
      %6531 = vmatpush1.msra.mxu0 0.0
      %6532 = vmatprep.subr.mxu0 0.0
      %6533 = vmatpush1.msra.mxu0 0.0
      %6534 = vmatprep.subr.mxu0 0.0
      %6535 = vmatpush1.msra.mxu0 0.0
      %6536 = vmatprep.subr.mxu0 0.0
      %6537 = vmatpush1.msra.mxu0 0.0
      %6538 = vmatprep.subr.mxu0 0.0
      %6539 = vmatpush1.msra.mxu0 0.0
      %6540 = vmatprep.subr.mxu0 0.0
      %6541 = vmatpush1.msra.mxu0 0.0
      %6542 = vmatprep.subr.mxu0 0.0
      %6543 = vmatpush1.msra.mxu0 0.0
      %6544 = vmatprep.subr.mxu0 0.0
      %6545 = vmatpush1.msra.mxu0 0.0
      %6546 = vmatprep.subr.mxu0 0.0
      %6547 = vmatpush1.msra.mxu0 0.0
      %6548 = vmatprep.subr.mxu0 0.0
      %6549 = vmatpush1.msra.mxu0 0.0
      %6550 = vmatprep.subr.mxu0 0.0
      %6551 = vmatpush1.msra.mxu0 0.0
      %6552 = vmatprep.subr.mxu0 0.0
      %6553 = vmatpush1.msra.mxu0 0.0
      %6554 = vmatprep.subr.mxu0 0.0
      %6555 = vmatpush1.msra.mxu0 0.0
      %6556 = vmatprep.subr.mxu0 0.0
      %6557 = vmatpush1.msra.mxu0 0.0
      %6558 = vmatprep.subr.mxu0 0.0
      %6559 = vmatpush1.msra.mxu0 0.0
      %6560 = vmatprep.subr.mxu0 0.0
      %6561 = vmatpush1.msra.mxu0 0.0
      %6562 = vmatprep.mubr.f32.mxu0 0.0
      %6563 = vmatmul.mubr.f32.gmra.mrb[0].mxu0 %v6493
      %v6564 = vpop.f32.mrb[0].mxu0
      %v6565 = vadd.f32 0.0, %v6564
      %v6566 = vpop.f32.mrb[0].mxu0
      %6567 = vdwg.mxu0
      %v6568 = vld [vmem:[%s6] sm:$0xff]
      %v6569 = vld [vmem:[%s6 + $0x8] sm:$0xff]
      %v6570 = vld [vmem:[%s6 + $0x10] sm:$0xff]
      %v6571 = vld [vmem:[%s6 + $0x18] sm:$0xff]
      %v6572 = vld [vmem:[%s6 + $0x20] sm:$0xf]
      %v6574 = vsel %vm6491, %v6568, 0
      %v6577 = vsel %vm6491, %v6569, 0
      %v6580 = vsel %vm6491, %v6570, 0
      %v6583 = vsel %vm6491, %v6571, 0
      %v6586 = vsel %vm6491, %v6572, 0
      %6588 = vmatprep.subr.mxu0 0.0
      %6589 = vmatpush1.msra.mxu0 %v6487
      %6590 = vmatprep.subr.mxu0 0.0
      %6591 = vmatpush1.msra.mxu0 %v6488
      %6592 = vmatprep.subr.mxu0 0.0
      %6593 = vmatpush1.msra.mxu0 %v6496
      %6594 = vmatprep.subr.mxu0 0.0
      %6595 = vmatpush1.msra.mxu0 0.0
      %6596 = vmatprep.subr.mxu0 0.0
      %6597 = vmatpush1.msra.mxu0 0.0
      %6598 = vmatprep.subr.mxu0 0.0
      %6599 = vmatpush1.msra.mxu0 0.0
      %6600 = vmatprep.subr.mxu0 0.0
      %6601 = vmatpush1.msra.mxu0 0.0
      %6602 = vmatprep.subr.mxu0 0.0
      %6603 = vmatpush1.msra.mxu0 0.0
      %6604 = vmatprep.subr.mxu0 0.0
      %6605 = vmatpush1.msra.mxu0 0.0
      %6606 = vmatprep.subr.mxu0 0.0
      %6607 = vmatpush1.msra.mxu0 0.0
      %6608 = vmatprep.subr.mxu0 0.0
      %6609 = vmatpush1.msra.mxu0 0.0
      %6610 = vmatprep.subr.mxu0 0.0
      %6611 = vmatpush1.msra.mxu0 0.0
      %6612 = vmatprep.subr.mxu0 0.0
      %6613 = vmatpush1.msra.mxu0 0.0
      %6614 = vmatprep.subr.mxu0 0.0
      %6615 = vmatpush1.msra.mxu0 0.0
      %6616 = vmatprep.subr.mxu0 0.0
      %6617 = vmatpush1.msra.mxu0 0.0
      %6618 = vmatprep.subr.mxu0 0.0
      %6619 = vmatpush1.msra.mxu0 0.0
      %6620 = vmatprep.subr.mxu0 0.0
      %6621 = vmatpush1.msra.mxu0 0.0
      %6622 = vmatprep.subr.mxu0 0.0
      %6623 = vmatpush1.msra.mxu0 0.0
      %6624 = vmatprep.subr.mxu0 0.0
      %6625 = vmatpush1.msra.mxu0 0.0
      %6626 = vmatprep.subr.mxu0 0.0
      %6627 = vmatpush1.msra.mxu0 0.0
      %6628 = vmatprep.subr.mxu0 0.0
      %6629 = vmatpush1.msra.mxu0 0.0
      %6630 = vmatprep.subr.mxu0 0.0
      %6631 = vmatpush1.msra.mxu0 0.0
      %6632 = vmatprep.subr.mxu0 0.0
      %6633 = vmatpush1.msra.mxu0 0.0
      %6634 = vmatprep.subr.mxu0 0.0
      %6635 = vmatpush1.msra.mxu0 0.0
      %6636 = vmatprep.subr.mxu0 0.0
      %6637 = vmatpush1.msra.mxu0 0.0
      %6638 = vmatprep.subr.mxu0 0.0
      %6639 = vmatpush1.msra.mxu0 0.0
      %6640 = vmatprep.subr.mxu0 0.0
      %6641 = vmatpush1.msra.mxu0 0.0
      %6642 = vmatprep.subr.mxu0 0.0
      %6643 = vmatpush1.msra.mxu0 0.0
      %6644 = vmatprep.subr.mxu0 0.0
      %6645 = vmatpush1.msra.mxu0 0.0
      %6646 = vmatprep.subr.mxu0 0.0
      %6647 = vmatpush1.msra.mxu0 0.0
      %6648 = vmatprep.subr.mxu0 0.0
      %6649 = vmatpush1.msra.mxu0 0.0
      %6650 = vmatprep.subr.mxu0 0.0
      %6651 = vmatpush1.msra.mxu0 0.0
      %6652 = vmatprep.mubr.f32.mxu0 0.0
      %6653 = vmatmul.mubr.f32.gmra.mrb[0].mxu0 %v6574
      %v6654 = vpop.f32.mrb[0].mxu0
      %v6655 = vadd.f32 0.0, %v6654
      %v6656 = vpop.f32.mrb[0].mxu0
      %6657 = vmatprep.mubr.f32.mxu0 0.0
      %6658 = vmatmul.mubr.f32.gmra.mrb[0].mxu0 %v6577
      %v6659 = vpop.f32.mrb[0].mxu0
      %v6660 = vadd.f32 0.0, %v6659
      %v6661 = vpop.f32.mrb[0].mxu0
      %6662 = vmatprep.mubr.f32.mxu0 0.0
      %6663 = vmatmul.mubr.f32.gmra.mrb[0].mxu0 %v6580
      %v6664 = vpop.f32.mrb[0].mxu0
      %v6665 = vadd.f32 0.0, %v6664
      %v6666 = vpop.f32.mrb[0].mxu0
      %6667 = vmatprep.mubr.f32.mxu0 0.0
      %6668 = vmatmul.mubr.f32.gmra.mrb[0].mxu0 %v6583
      %v6669 = vpop.f32.mrb[0].mxu0
      %v6670 = vadd.f32 0.0, %v6669
      %v6671 = vpop.f32.mrb[0].mxu0
      %6672 = vmatprep.mubr.f32.mxu0 0.0
      %6673 = vmatmul.mubr.f32.gmra.mrb[0].mxu0 %v6586
      %v6674 = vpop.f32.mrb[0].mxu0
      %v6675 = vadd.f32 0.0, %v6674
      %v6676 = vpop.f32.mrb[0].mxu0
      %6677 = vdwg.mxu0
      %6678 = vst [vmem:[#allocation5] sm:$0xff] %v6655
      %6679 = vst [vmem:[#allocation5 + $0x8] sm:$0xff] %v6660
      %6680 = vst [vmem:[#allocation5 + $0x10] sm:$0xff] %v6665
      %6681 = vst [vmem:[#allocation5 + $0x18] sm:$0xff] %v6670
      %6682 = vst [vmem:[#allocation5 + $0x20] sm:$0xf] %v6675
      %v6683 = vld [vmem:[#allocation5] sm:$0xff]
      %v6684 = vld [vmem:[#allocation5 + $0x8] sm:$0xff]
      %v6685 = vld [vmem:[#allocation5 + $0x10] sm:$0x3f]
      %v6686 = vpack.c.bf16 %v6684, %v6683
      %v6687 = vpack.c.bf16 %v6685, %v6685
      %v6688 = vld [vmem:[#allocation5 + $0x1] sm:$0xff]
      %v6689 = vld [vmem:[#allocation5 + $0x9] sm:$0xff]
      %v6690 = vld [vmem:[#allocation5 + $0x11] sm:$0x3f]
      %v6691 = vpack.c.bf16 %v6689, %v6688
      %v6692 = vpack.c.bf16 %v6690, %v6690
      %v6693 = vld [vmem:[#allocation5 + $0x2] sm:$0xff]
      %v6694 = vld [vmem:[#allocation5 + $0xa] sm:$0xff]
      %v6695 = vld [vmem:[#allocation5 + $0x12] sm:$0x3f]
      %v6696 = vpack.c.bf16 %v6694, %v6693
      %v6697 = vpack.c.bf16 %v6695, %v6695
      %v6698 = vld [vmem:[#allocation5 + $0x6] sm:$0xff]
      %v6699 = vld [vmem:[#allocation5 + $0xe] sm:$0xff]
      %v6700 = vld [vmem:[#allocation5 + $0x16] sm:$0x3f]
      %v6701 = vpack.c.bf16 %v6699, %v6698
      %v6702 = vpack.c.bf16 %v6700, %v6700
      %v6703 = vld [vmem:[#allocation5 + $0x7] sm:$0xff]
      %v6704 = vld [vmem:[#allocation5 + $0xf] sm:$0xff]
      %v6705 = vld [vmem:[#allocation5 + $0x17] sm:$0x3f]
      %v6706 = vpack.c.bf16 %v6704, %v6703
      %v6707 = vpack.c.bf16 %v6705, %v6705
      %v6708 = vld [vmem:[#allocation5 + $0x10] sm:$0xff]
      %v6709 = vld [vmem:[#allocation5 + $0x18] sm:$0x3f]
      %v6710 = vpack.c.bf16 %v6708, %v6684
      %v6711 = vpack.c.bf16 %v6709, %v6709
      %v6712 = vld [vmem:[#allocation5 + $0xc] sm:$0xff]
      %v6713 = vld [vmem:[#allocation5 + $0x14] sm:$0xff]
      %v6714 = vld [vmem:[#allocation5 + $0x1c] sm:$0x3f]
      %v6715 = vpack.c.bf16 %v6713, %v6712
      %v6716 = vpack.c.bf16 %v6714, %v6714
      %v6717 = vld [vmem:[#allocation5 + $0xd] sm:$0xff]
      %v6718 = vld [vmem:[#allocation5 + $0x15] sm:$0xff]
      %v6719 = vld [vmem:[#allocation5 + $0x1d] sm:$0x3f]
      %v6720 = vpack.c.bf16 %v6718, %v6717
      %v6721 = vpack.c.bf16 %v6719, %v6719
      %v6722 = vld [vmem:[#allocation5 + $0xe] sm:$0xff]
      %v6723 = vld [vmem:[#allocation5 + $0x16] sm:$0xff]
      %v6724 = vld [vmem:[#allocation5 + $0x1e] sm:$0x3f]
      %v6725 = vpack.c.bf16 %v6723, %v6722
      %v6726 = vpack.c.bf16 %v6724, %v6724
      %s6727 = scalar_lea.vmem %s1, 2304
      %v6728 = vld [vmem:[%s6727] sm:$0xf]
      %v6729 = vld [vmem:[%s6727 + $0x4] sm:$0xf]
      %v6730 = vld [vmem:[%s6727 + $0x8] sm:$0xf]
      %v6731 = vld [vmem:[%s6727 + $0xc] sm:$0xf]
      %v6732 = vld [vmem:[%s6727 + $0x10] sm:$0xf]
      %v6733 = vld [vmem:[%s6727 + $0x14] sm:$0xf]
      %v6734 = vld [vmem:[%s6727 + $0x18] sm:$0xf]
      %v6735 = vld [vmem:[%s6727 + $0x1c] sm:$0xf]
      %v6736 = vld [vmem:[%s6727 + $0x20] sm:$0xf]
      %v6737 = vld [vmem:[%s6727 + $0x24] sm:$0xf]
      %v6738 = vld [vmem:[%s6727 + $0x28] sm:$0xf]
      %v6739 = vld [vmem:[%s6727 + $0x2c] sm:$0xf]
      %v6740 = vld [vmem:[%s6727 + $0x30] sm:$0xf]
      %v6741 = vld [vmem:[%s6727 + $0x34] sm:$0xf]
      %v6742 = vld [vmem:[%s6727 + $0x38] sm:$0xf]
      %v6743 = vld [vmem:[%s6727 + $0x3c] sm:$0xf]
      %v6744 = vld [vmem:[%s6727 + $0x40] sm:$0xf]
      %v6745 = vld [vmem:[%s6727 + $0x44] sm:$0xf]
      %v6746 = vld [vmem:[%s6727 + $0x48] sm:$0xf]
      %v6747 = vld [vmem:[%s6727 + $0x4c] sm:$0xf]
      %v6748 = vld [vmem:[%s6727 + $0x50] sm:$0xf]
      %v6749 = vld [vmem:[%s6727 + $0x54] sm:$0xf]
      %v6750 = vld [vmem:[%s6727 + $0x58] sm:$0xf]
      %v6751 = vld [vmem:[%s6727 + $0x5c] sm:$0xf]
      %v6752 = vld [vmem:[%s6727 + $0x60] sm:$0xf]
      %v6753 = vld [vmem:[%s6727 + $0x64] sm:$0xf]
      %v6754 = vld [vmem:[%s6727 + $0x68] sm:$0xf]
      %v6755 = vld [vmem:[%s6727 + $0x6c] sm:$0xf]
      %v6756 = vld [vmem:[%s6727 + $0x70] sm:$0xf]
      %v6757 = vld [vmem:[%s6727 + $0x74] sm:$0xf]
      %v6758 = vld [vmem:[%s6727 + $0x78] sm:$0xf]
      %v6759 = vld [vmem:[%s6727 + $0x7c] sm:$0xf]
      %v6760 = vld [vmem:[%s6727 + $0x80] sm:$0xf]
      %v6761 = vld [vmem:[%s6727 + $0x84] sm:$0xf]
      %v6762 = vld [vmem:[%s6727 + $0x88] sm:$0xf]
      %v6763 = vld [vmem:[%s6727 + $0x8c] sm:$0xf]
      %v6764 = vld [vmem:[%s6727 + $0x90] sm:$0xf]
      %v6765 = vld [vmem:[%s6727 + $0x94] sm:$0xf]
      %v6766 = vld [vmem:[%s6727 + $0x98] sm:$0xf]
      %v6767 = vld [vmem:[%s6727 + $0x9c] sm:$0xf]
      %v6768 = vld [vmem:[%s6727 + $0xa0] sm:$0xf]
      %v6769 = vld [vmem:[%s6727 + $0xa4] sm:$0xf]
      %v6770 = vld [vmem:[%s6727 + $0xa8] sm:$0xf]
      %v6771 = vld [vmem:[%s6727 + $0xac] sm:$0xf]
      %v6772 = vld [vmem:[%s6727 + $0xb0] sm:$0xf]
      %v6773 = vld [vmem:[%s6727 + $0xb4] sm:$0xf]
      %v6774 = vld [vmem:[%s6727 + $0xb8] sm:$0xf]
      %v6775 = vld [vmem:[%s6727 + $0xbc] sm:$0xf]
      %v6776 = vld [vmem:[%s6727 + $0xc0] sm:$0xf]
      %v6777 = vld [vmem:[%s6727 + $0xc4] sm:$0xf]
      %v6778 = vld [vmem:[%s6727 + $0xc8] sm:$0xf]
      %v6779 = vld [vmem:[%s6727 + $0xcc] sm:$0xf]
      %v6780 = vld [vmem:[%s6727 + $0xd0] sm:$0xf]
      %v6781 = vld [vmem:[%s6727 + $0xd4] sm:$0xf]
      %v6782 = vld [vmem:[%s6727 + $0xd8] sm:$0xf]
      %v6783 = vld [vmem:[%s6727 + $0xdc] sm:$0xf]
      %v6784 = vld [vmem:[%s6727 + $0xe0] sm:$0xf]
      %v6785 = vld [vmem:[%s6727 + $0xe4] sm:$0xf]
      %v6786 = vld [vmem:[%s6727 + $0xe8] sm:$0xf]
      %v6787 = vld [vmem:[%s6727 + $0xec] sm:$0xf]
      %v6788 = vld [vmem:[%s6727 + $0xf0] sm:$0xf]
      %v6789 = vld [vmem:[%s6727 + $0xf4] sm:$0xf]
      %v6790 = vld [vmem:[%s6727 + $0xf8] sm:$0xf]
      %v6791 = vld [vmem:[%s6727 + $0xfc] sm:$0xf]
      %v6792 = vld [vmem:[%s6727 + $0x100] sm:$0xf]
      %v6793 = vld [vmem:[%s6727 + $0x104] sm:$0xf]
      %v6794 = vld [vmem:[%s6727 + $0x108] sm:$0xf]
      %v6795 = vld [vmem:[%s6727 + $0x10c] sm:$0xf]
      %v6796 = vld [vmem:[%s6727 + $0x110] sm:$0xf]
      %v6797 = vld [vmem:[%s6727 + $0x114] sm:$0xf]
      %v6798 = vld [vmem:[%s6727 + $0x118] sm:$0xf]
      %v6799 = vld [vmem:[%s6727 + $0x11c] sm:$0xf]
      %v6800 = vld [vmem:[%s6727 + $0x120] sm:$0xf]
      %v6801 = vld [vmem:[%s6727 + $0x124] sm:$0xf]
      %v6802 = vld [vmem:[%s6727 + $0x128] sm:$0xf]
      %v6803 = vld [vmem:[%s6727 + $0x12c] sm:$0xf]
      %v6804 = vld [vmem:[%s6727 + $0x130] sm:$0xf]
      %v6805 = vld [vmem:[%s6727 + $0x134] sm:$0xf]
      %v6806 = vld [vmem:[%s6727 + $0x138] sm:$0xf]
      %v6807 = vld [vmem:[%s6727 + $0x13c] sm:$0xf]
      %v6808 = vld [vmem:[%s6727 + $0x140] sm:$0xf]
      %v6809 = vld [vmem:[%s6727 + $0x144] sm:$0xf]
      %v6810 = vld [vmem:[%s6727 + $0x148] sm:$0xf]
      %v6811 = vld [vmem:[%s6727 + $0x14c] sm:$0xf]
      %v6812 = vld [vmem:[%s6727 + $0x150] sm:$0xf]
      %v6813 = vld [vmem:[%s6727 + $0x154] sm:$0xf]
      %v6814 = vld [vmem:[%s6727 + $0x158] sm:$0xf]
      %v6815 = vld [vmem:[%s6727 + $0x15c] sm:$0xf]
      %v6816 = vld [vmem:[%s6727 + $0x160] sm:$0xf]
      %v6817 = vld [vmem:[%s6727 + $0x164] sm:$0xf]
      %v6818 = vld [vmem:[%s6727 + $0x168] sm:$0xf]
      %v6819 = vld [vmem:[%s6727 + $0x16c] sm:$0xf]
      %v6820 = vld [vmem:[%s6727 + $0x170] sm:$0xf]
      %v6821 = vld [vmem:[%s6727 + $0x174] sm:$0xf]
      %v6822 = vld [vmem:[%s6727 + $0x178] sm:$0xf]
      %v6823 = vld [vmem:[%s6727 + $0x17c] sm:$0xf]
      %v6824 = vld [vmem:[%s6727 + $0x180] sm:$0xf]
      %v6825 = vld [vmem:[%s6727 + $0x184] sm:$0xf]
      %v6826 = vld [vmem:[%s6727 + $0x188] sm:$0xf]
      %v6827 = vld [vmem:[%s6727 + $0x18c] sm:$0xf]
      %v6828 = vld [vmem:[%s6727 + $0x190] sm:$0xf]
      %v6829 = vld [vmem:[%s6727 + $0x194] sm:$0xf]
      %v6830 = vld [vmem:[%s6727 + $0x198] sm:$0xf]
      %v6831 = vld [vmem:[%s6727 + $0x19c] sm:$0xf]
      %v6832 = vld [vmem:[%s6727 + $0x1a0] sm:$0xf]
      %v6833 = vld [vmem:[%s6727 + $0x1a4] sm:$0xf]
      %v6834 = vld [vmem:[%s6727 + $0x1a8] sm:$0xf]
      %v6835 = vld [vmem:[%s6727 + $0x1ac] sm:$0xf]
      %v6836 = vld [vmem:[%s6727 + $0x1b0] sm:$0xf]
      %v6837 = vld [vmem:[%s6727 + $0x1b4] sm:$0xf]
      %v6838 = vld [vmem:[%s6727 + $0x1b8] sm:$0xf]
      %v6839 = vld [vmem:[%s6727 + $0x1bc] sm:$0xf]
      %v6840 = vld [vmem:[%s6727 + $0x1c0] sm:$0xf]
      %v6841 = vld [vmem:[%s6727 + $0x1c4] sm:$0xf]
      %v6842 = vld [vmem:[%s6727 + $0x1c8] sm:$0xf]
      %v6843 = vld [vmem:[%s6727 + $0x1cc] sm:$0xf]
      %v6844 = vld [vmem:[%s6727 + $0x1d0] sm:$0xf]
      %v6845 = vld [vmem:[%s6727 + $0x1d4] sm:$0xf]
      %v6846 = vld [vmem:[%s6727 + $0x1d8] sm:$0xf]
      %v6847 = vld [vmem:[%s6727 + $0x1dc] sm:$0xf]
      %v6848 = vld [vmem:[%s6727 + $0x1e0] sm:$0xf]
      %v6849 = vld [vmem:[%s6727 + $0x1e4] sm:$0xf]
      %v6850 = vld [vmem:[%s6727 + $0x1e8] sm:$0xf]
      %v6851 = vld [vmem:[%s6727 + $0x1ec] sm:$0xf]
      %v6852 = vld [vmem:[%s6727 + $0x1f0] sm:$0xf]
      %v6853 = vld [vmem:[%s6727 + $0x1f4] sm:$0xf]
      %v6854 = vld [vmem:[%s6727 + $0x1f8] sm:$0xf]
      %v6855 = vld [vmem:[%s6727 + $0x1fc] sm:$0xf]
      %v6856 = vld [vmem:[%s6727 + $0x200] sm:$0xf]
      %v6857 = vld [vmem:[%s6727 + $0x204] sm:$0xf]
      %v6858 = vld [vmem:[%s6727 + $0x208] sm:$0xf]
      %v6859 = vld [vmem:[%s6727 + $0x20c] sm:$0xf]
      %v6860 = vld [vmem:[%s6727 + $0x210] sm:$0xf]
      %v6861 = vld [vmem:[%s6727 + $0x214] sm:$0xf]
      %v6862 = vld [vmem:[%s6727 + $0x218] sm:$0xf]
      %v6863 = vld [vmem:[%s6727 + $0x21c] sm:$0xf]
      %v6864 = vld [vmem:[%s6727 + $0x220] sm:$0xf]
      %v6865 = vld [vmem:[%s6727 + $0x224] sm:$0xf]
      %v6866 = vld [vmem:[%s6727 + $0x228] sm:$0xf]
      %v6867 = vld [vmem:[%s6727 + $0x22c] sm:$0xf]
      %v6868 = vld [vmem:[%s6727 + $0x230] sm:$0xf]
      %v6869 = vld [vmem:[%s6727 + $0x234] sm:$0xf]
      %v6870 = vld [vmem:[%s6727 + $0x238] sm:$0xf]
      %v6871 = vld [vmem:[%s6727 + $0x23c] sm:$0xf]
      %s6872 = scalar_lea.vmem %s2, 4
      %v6873 = vld [vmem:[%s6872] sm:$0x1]
      %v6875 = vlaneseq
      %v6876 = vshrl.u32 %v6875, 7
      %v6877 = vsub.s32 0, %v6876
      %v6878 = vrot.slane %v6873, %v6877
      %v7024 = vunpack.c.l.b16 %v6728
      %v7025 = vunpack.c.l.b16 %v6729
      %v7026 = vunpack.c.l.b16 %v6730
      %v7027 = vunpack.c.l.b16 %v6731
      %v7028 = vunpack.c.l.b16 %v6732
      %v7029 = vunpack.c.l.b16 %v6733
      %v7030 = vunpack.c.l.b16 %v6734
      %v7031 = vunpack.c.l.b16 %v6735
      %v7032 = vunpack.c.l.b16 %v6736
      %v7033 = vunpack.c.l.b16 %v6737
      %v7034 = vunpack.c.l.b16 %v6738
      %v7035 = vunpack.c.l.b16 %v6739
      %v7036 = vunpack.c.l.b16 %v6740
      %v7037 = vunpack.c.l.b16 %v6741
      %v7038 = vunpack.c.l.b16 %v6742
      %v7039 = vunpack.c.l.b16 %v6743
      %v7040 = vunpack.c.l.b16 %v6744
      %v7041 = vunpack.c.l.b16 %v6745
      %v7042 = vunpack.c.l.b16 %v6746
      %v7043 = vunpack.c.l.b16 %v6747
      %v7044 = vunpack.c.l.b16 %v6748
      %v7045 = vunpack.c.l.b16 %v6749
      %v7046 = vunpack.c.l.b16 %v6750
      %v7047 = vunpack.c.l.b16 %v6751
      %v7048 = vunpack.c.l.b16 %v6752
      %v7049 = vunpack.c.l.b16 %v6753
      %v7050 = vunpack.c.l.b16 %v6754
      %v7051 = vunpack.c.l.b16 %v6755
      %v7052 = vunpack.c.l.b16 %v6756
      %v7053 = vunpack.c.l.b16 %v6757
      %v7054 = vunpack.c.l.b16 %v6758
      %v7055 = vunpack.c.l.b16 %v6759
      %v7056 = vunpack.c.l.b16 %v6760
      %v7057 = vunpack.c.l.b16 %v6761
      %v7058 = vunpack.c.l.b16 %v6762
      %v7059 = vunpack.c.l.b16 %v6763
      %v7060 = vunpack.c.l.b16 %v6764
      %v7061 = vunpack.c.l.b16 %v6765
      %v7062 = vunpack.c.l.b16 %v6766
      %v7063 = vunpack.c.l.b16 %v6767
      %v7064 = vunpack.c.l.b16 %v6768
      %v7065 = vunpack.c.l.b16 %v6769
      %v7066 = vunpack.c.l.b16 %v6770
      %v7067 = vunpack.c.l.b16 %v6771
      %v7068 = vunpack.c.l.b16 %v6772
      %v7069 = vunpack.c.l.b16 %v6773
      %v7070 = vunpack.c.l.b16 %v6774
      %v7071 = vunpack.c.l.b16 %v6775
      %v7072 = vunpack.c.l.b16 %v6776
      %v7073 = vunpack.c.l.b16 %v6777
      %v7074 = vunpack.c.l.b16 %v6778
      %v7075 = vunpack.c.l.b16 %v6779
      %v7076 = vunpack.c.l.b16 %v6780
      %v7077 = vunpack.c.l.b16 %v6781
      %v7078 = vunpack.c.l.b16 %v6782
      %v7079 = vunpack.c.l.b16 %v6783
      %v7080 = vunpack.c.l.b16 %v6784
      %v7081 = vunpack.c.l.b16 %v6785
      %v7082 = vunpack.c.l.b16 %v6786
      %v7083 = vunpack.c.l.b16 %v6787
      %v7084 = vunpack.c.l.b16 %v6788
      %v7085 = vunpack.c.l.b16 %v6789
      %v7086 = vunpack.c.l.b16 %v6790
      %v7087 = vunpack.c.l.b16 %v6791
      %v7088 = vunpack.c.l.b16 %v6792
      %v7089 = vunpack.c.l.b16 %v6793
      %v7090 = vunpack.c.l.b16 %v6794
      %v7091 = vunpack.c.l.b16 %v6795
      %v7092 = vunpack.c.l.b16 %v6796
      %v7093 = vunpack.c.l.b16 %v6797
      %v7094 = vunpack.c.l.b16 %v6798
      %v7095 = vunpack.c.l.b16 %v6799
      %v7096 = vunpack.c.l.b16 %v6800
      %v7097 = vunpack.c.l.b16 %v6801
      %v7098 = vunpack.c.l.b16 %v6802
      %v7099 = vunpack.c.l.b16 %v6803
      %v7100 = vunpack.c.l.b16 %v6804
      %v7101 = vunpack.c.l.b16 %v6805
      %v7102 = vunpack.c.l.b16 %v6806
      %v7103 = vunpack.c.l.b16 %v6807
      %v7104 = vunpack.c.l.b16 %v6808
      %v7105 = vunpack.c.l.b16 %v6809
      %v7106 = vunpack.c.l.b16 %v6810
      %v7107 = vunpack.c.l.b16 %v6811
      %v7108 = vunpack.c.l.b16 %v6812
      %v7109 = vunpack.c.l.b16 %v6813
      %v7110 = vunpack.c.l.b16 %v6814
      %v7111 = vunpack.c.l.b16 %v6815
      %v7112 = vunpack.c.l.b16 %v6816
      %v7113 = vunpack.c.l.b16 %v6817
      %v7114 = vunpack.c.l.b16 %v6818
      %v7115 = vunpack.c.l.b16 %v6819
      %v7116 = vunpack.c.l.b16 %v6820
      %v7117 = vunpack.c.l.b16 %v6821
      %v7118 = vunpack.c.l.b16 %v6822
      %v7119 = vunpack.c.l.b16 %v6823
      %v7120 = vunpack.c.l.b16 %v6824
      %v7121 = vunpack.c.l.b16 %v6825
      %v7122 = vunpack.c.l.b16 %v6826
      %v7123 = vunpack.c.l.b16 %v6827
      %v7124 = vunpack.c.l.b16 %v6828
      %v7125 = vunpack.c.l.b16 %v6829
      %v7126 = vunpack.c.l.b16 %v6830
      %v7127 = vunpack.c.l.b16 %v6831
      %v7128 = vunpack.c.l.b16 %v6832
      %v7129 = vunpack.c.l.b16 %v6833
      %v7130 = vunpack.c.l.b16 %v6834
      %v7131 = vunpack.c.l.b16 %v6835
      %v7132 = vunpack.c.l.b16 %v6836
      %v7133 = vunpack.c.l.b16 %v6837
      %v7134 = vunpack.c.l.b16 %v6838
      %v7135 = vunpack.c.l.b16 %v6839
      %v7136 = vunpack.c.l.b16 %v6840
      %v7137 = vunpack.c.l.b16 %v6841
      %v7138 = vunpack.c.l.b16 %v6842
      %v7139 = vunpack.c.l.b16 %v6843
      %v7140 = vunpack.c.l.b16 %v6844
      %v7141 = vunpack.c.l.b16 %v6845
      %v7142 = vunpack.c.l.b16 %v6846
      %v7143 = vunpack.c.l.b16 %v6847
      %v7144 = vunpack.c.l.b16 %v6848
      %v7145 = vunpack.c.l.b16 %v6849
      %v7146 = vunpack.c.l.b16 %v6850
      %v7147 = vunpack.c.l.b16 %v6851
      %v7148 = vunpack.c.l.b16 %v6852
      %v7149 = vunpack.c.l.b16 %v6853
      %v7150 = vunpack.c.l.b16 %v6854
      %v7151 = vunpack.c.l.b16 %v6855
      %v7152 = vunpack.c.l.b16 %v6856
      %v7153 = vunpack.c.l.b16 %v6857
      %v7154 = vunpack.c.l.b16 %v6858
      %v7155 = vunpack.c.l.b16 %v6859
      %v7156 = vunpack.c.l.b16 %v6860
      %v7157 = vunpack.c.l.b16 %v6861
      %v7158 = vunpack.c.l.b16 %v6862
      %v7159 = vunpack.c.l.b16 %v6863
      %v7160 = vunpack.c.l.b16 %v6864
      %v7161 = vunpack.c.l.b16 %v6865
      %v7162 = vunpack.c.l.b16 %v6866
      %v7163 = vunpack.c.l.b16 %v6867
      %v7164 = vunpack.c.l.b16 %v6868
      %v7165 = vunpack.c.l.b16 %v6869
      %v7166 = vunpack.c.l.b16 %v6870
      %v7167 = vunpack.c.l.b16 %v6871
      %v7168 = vpack.c.b16 %v7025, %v7024
      %v7169 = vpack.c.b16 %v7027, %v7026
      %v7170 = vpack.c.b16 %v7029, %v7028
      %v7171 = vpack.c.b16 %v7031, %v7030
      %v7172 = vpack.c.b16 %v7033, %v7032
      %v7173 = vpack.c.b16 %v7035, %v7034
      %v7174 = vpack.c.b16 %v7037, %v7036
      %v7175 = vpack.c.b16 %v7039, %v7038
      %v7176 = vpack.c.b16 %v7041, %v7040
      %v7177 = vpack.c.b16 %v7043, %v7042
      %v7178 = vpack.c.b16 %v7045, %v7044
      %v7179 = vpack.c.b16 %v7047, %v7046
      %v7180 = vpack.c.b16 %v7049, %v7048
      %v7181 = vpack.c.b16 %v7051, %v7050
      %v7182 = vpack.c.b16 %v7053, %v7052
      %v7183 = vpack.c.b16 %v7055, %v7054
      %v7184 = vpack.c.b16 %v7057, %v7056
      %v7185 = vpack.c.b16 %v7059, %v7058
      %v7186 = vpack.c.b16 %v7061, %v7060
      %v7187 = vpack.c.b16 %v7063, %v7062
      %v7188 = vpack.c.b16 %v7065, %v7064
      %v7189 = vpack.c.b16 %v7067, %v7066
      %v7190 = vpack.c.b16 %v7069, %v7068
      %v7191 = vpack.c.b16 %v7071, %v7070
      %v7192 = vpack.c.b16 %v7073, %v7072
      %v7193 = vpack.c.b16 %v7075, %v7074
      %v7194 = vpack.c.b16 %v7077, %v7076
      %v7195 = vpack.c.b16 %v7079, %v7078
      %v7196 = vpack.c.b16 %v7081, %v7080
      %v7197 = vpack.c.b16 %v7083, %v7082
      %v7198 = vpack.c.b16 %v7085, %v7084
      %v7199 = vpack.c.b16 %v7087, %v7086
      %v7200 = vpack.c.b16 %v7089, %v7088
      %v7201 = vpack.c.b16 %v7091, %v7090
      %v7202 = vpack.c.b16 %v7093, %v7092
      %v7203 = vpack.c.b16 %v7095, %v7094
      %v7204 = vpack.c.b16 %v7097, %v7096
      %v7205 = vpack.c.b16 %v7099, %v7098
      %v7206 = vpack.c.b16 %v7101, %v7100
      %v7207 = vpack.c.b16 %v7103, %v7102
      %v7208 = vpack.c.b16 %v7105, %v7104
      %v7209 = vpack.c.b16 %v7107, %v7106
      %v7210 = vpack.c.b16 %v7109, %v7108
      %v7211 = vpack.c.b16 %v7111, %v7110
      %v7212 = vpack.c.b16 %v7113, %v7112
      %v7213 = vpack.c.b16 %v7115, %v7114
      %v7214 = vpack.c.b16 %v7117, %v7116
      %v7215 = vpack.c.b16 %v7119, %v7118
      %v7216 = vpack.c.b16 %v7121, %v7120
      %v7217 = vpack.c.b16 %v7123, %v7122
      %v7218 = vpack.c.b16 %v7125, %v7124
      %v7219 = vpack.c.b16 %v7127, %v7126
      %v7220 = vpack.c.b16 %v7129, %v7128
      %v7221 = vpack.c.b16 %v7131, %v7130
      %v7222 = vpack.c.b16 %v7133, %v7132
      %v7223 = vpack.c.b16 %v7135, %v7134
      %v7224 = vpack.c.b16 %v7137, %v7136
      %v7225 = vpack.c.b16 %v7139, %v7138
      %v7226 = vpack.c.b16 %v7141, %v7140
      %v7227 = vpack.c.b16 %v7143, %v7142
      %v7228 = vpack.c.b16 %v7145, %v7144
      %v7229 = vpack.c.b16 %v7147, %v7146
      %v7230 = vpack.c.b16 %v7149, %v7148
      %v7231 = vpack.c.b16 %v7151, %v7150
      %v7232 = vpack.c.b16 %v7153, %v7152
      %v7233 = vpack.c.b16 %v7155, %v7154
      %v7234 = vpack.c.b16 %v7157, %v7156
      %v7235 = vpack.c.b16 %v7159, %v7158
      %v7236 = vpack.c.b16 %v7161, %v7160
      %v7237 = vpack.c.b16 %v7163, %v7162
      %v7238 = vpack.c.b16 %v7165, %v7164
      %v7239 = vpack.c.b16 %v7167, %v7166
      %7312 = vmatprep.subr.bf16.mxu0 0
      %7313 = vmatpush1.bf16.msra.mxu0 %v7168
      %7314 = vmatprep.subr.bf16.mxu0 0
      %7315 = vmatpush1.bf16.msra.mxu0 %v7169
      %7316 = vmatprep.subr.bf16.mxu0 0
      %7317 = vmatpush1.bf16.msra.mxu0 %v7170
      %7318 = vmatprep.subr.bf16.mxu0 0
      %7319 = vmatpush1.bf16.msra.mxu0 %v7171
      %7320 = vmatprep.subr.bf16.mxu0 0
      %7321 = vmatpush1.bf16.msra.mxu0 %v7172
      %7322 = vmatprep.subr.bf16.mxu0 0
      %7323 = vmatpush1.bf16.msra.mxu0 %v7173
      %7324 = vmatprep.subr.bf16.mxu0 0
      %7325 = vmatpush1.bf16.msra.mxu0 %v7174
      %7326 = vmatprep.subr.bf16.mxu0 0
      %7327 = vmatpush1.bf16.msra.mxu0 %v7175
      %7328 = vmatprep.subr.bf16.mxu0 0
      %7329 = vmatpush1.bf16.msra.mxu0 %v7176
      %7330 = vmatprep.subr.bf16.mxu0 0
      %7331 = vmatpush1.bf16.msra.mxu0 %v7177
      %7332 = vmatprep.subr.bf16.mxu0 0
      %7333 = vmatpush1.bf16.msra.mxu0 %v7178
      %7334 = vmatprep.subr.bf16.mxu0 0
      %7335 = vmatpush1.bf16.msra.mxu0 %v7179
      %7336 = vmatprep.subr.bf16.mxu0 0
      %7337 = vmatpush1.bf16.msra.mxu0 %v7180
      %7338 = vmatprep.subr.bf16.mxu0 0
      %7339 = vmatpush1.bf16.msra.mxu0 %v7181
      %7340 = vmatprep.subr.bf16.mxu0 0
      %7341 = vmatpush1.bf16.msra.mxu0 %v7182
      %7342 = vmatprep.subr.bf16.mxu0 0
      %7343 = vmatpush1.bf16.msra.mxu0 %v7183
      %7344 = vmatprep.mubr.bf16.mxu0 %v6691
      %7345 = vmatmul.mubr.bf16.gmra.mrb[0].mxu0 %v6686
      %v7346 = vpop.f32.mrb[0].mxu0
      %v7347 = vadd.f32 %v6878, %v7346
      %v7348 = vpop.f32.mrb[0].mxu0
      %v7349 = vpop.f32.mrb[0].mxu0
      %v7350 = vadd.f32 %v6878, %v7349
      %v7351 = vpop.f32.mrb[0].mxu0
      %7352 = vmatprep.mubr.bf16.mxu0 %v6692
      %7353 = vmatmul.mubr.bf16.gmra.mrb[0].mxu0 %v6687
      %v7354 = vpop.f32.mrb[0].mxu0
      %v7355 = vadd.f32 %v6878, %v7354
      %v7356 = vpop.f32.mrb[0].mxu0
      %v7357 = vpop.f32.mrb[0].mxu0
      %v7358 = vpop.f32.mrb[0].mxu0
      %7359 = vdwg.mxu0
      %7360 = vmatprep.subr.bf16.mxu0 0
      %7361 = vmatpush1.bf16.msra.mxu0 %v7184
      %7362 = vmatprep.subr.bf16.mxu0 0
      %7363 = vmatpush1.bf16.msra.mxu0 %v7185
      %7364 = vmatprep.subr.bf16.mxu0 0
      %7365 = vmatpush1.bf16.msra.mxu0 %v7186
      %7366 = vmatprep.subr.bf16.mxu0 0
      %7367 = vmatpush1.bf16.msra.mxu0 %v7187
      %7368 = vmatprep.subr.bf16.mxu0 0
      %7369 = vmatpush1.bf16.msra.mxu0 %v7188
      %7370 = vmatprep.subr.bf16.mxu0 0
      %7371 = vmatpush1.bf16.msra.mxu0 %v7189
      %7372 = vmatprep.subr.bf16.mxu0 0
      %7373 = vmatpush1.bf16.msra.mxu0 %v7190
      %7374 = vmatprep.subr.bf16.mxu0 0
      %7375 = vmatpush1.bf16.msra.mxu0 %v7191
      %7376 = vmatprep.subr.bf16.mxu0 0
      %7377 = vmatpush1.bf16.msra.mxu0 %v7192
      %7378 = vmatprep.subr.bf16.mxu0 0
      %7379 = vmatpush1.bf16.msra.mxu0 %v7193
      %7380 = vmatprep.subr.bf16.mxu0 0
      %7381 = vmatpush1.bf16.msra.mxu0 %v7194
      %7382 = vmatprep.subr.bf16.mxu0 0
      %7383 = vmatpush1.bf16.msra.mxu0 %v7195
      %7384 = vmatprep.subr.bf16.mxu0 0
      %7385 = vmatpush1.bf16.msra.mxu0 %v7196
      %7386 = vmatprep.subr.bf16.mxu0 0
      %7387 = vmatpush1.bf16.msra.mxu0 %v7197
      %7388 = vmatprep.subr.bf16.mxu0 0
      %7389 = vmatpush1.bf16.msra.mxu0 %v7198
      %7390 = vmatprep.subr.bf16.mxu0 0
      %7391 = vmatpush1.bf16.msra.mxu0 %v7199
      %7392 = vmatprep.mubr.bf16.mxu0 %v6701
      %7393 = vmatmul.mubr.bf16.gmra.mrb[0].mxu0 %v6696
      %v7394 = vpop.f32.mrb[0].mxu0
      %v7395 = vadd.f32 %v7347, %v7394
      %v7396 = vpop.f32.mrb[0].mxu0
      %v7397 = vpop.f32.mrb[0].mxu0
      %v7398 = vadd.f32 %v7350, %v7397
      %v7399 = vpop.f32.mrb[0].mxu0
      %7400 = vmatprep.mubr.bf16.mxu0 %v6702
      %7401 = vmatmul.mubr.bf16.gmra.mrb[0].mxu0 %v6697
      %v7402 = vpop.f32.mrb[0].mxu0
      %v7403 = vadd.f32 %v7355, %v7402
      %v7404 = vpop.f32.mrb[0].mxu0
      %v7405 = vpop.f32.mrb[0].mxu0
      %v7406 = vpop.f32.mrb[0].mxu0
      %7407 = vdwg.mxu0
      %7408 = vmatprep.subr.bf16.mxu0 0
      %7409 = vmatpush1.bf16.msra.mxu0 %v7200
      %7410 = vmatprep.subr.bf16.mxu0 0
      %7411 = vmatpush1.bf16.msra.mxu0 %v7201
      %7412 = vmatprep.subr.bf16.mxu0 0
      %7413 = vmatpush1.bf16.msra.mxu0 %v7202
      %7414 = vmatprep.subr.bf16.mxu0 0
      %7415 = vmatpush1.bf16.msra.mxu0 %v7203
      %7416 = vmatprep.subr.bf16.mxu0 0
      %7417 = vmatpush1.bf16.msra.mxu0 %v7204
      %7418 = vmatprep.subr.bf16.mxu0 0
      %7419 = vmatpush1.bf16.msra.mxu0 %v7205
      %7420 = vmatprep.subr.bf16.mxu0 0
      %7421 = vmatpush1.bf16.msra.mxu0 %v7206
      %7422 = vmatprep.subr.bf16.mxu0 0
      %7423 = vmatpush1.bf16.msra.mxu0 %v7207
      %7424 = vmatprep.subr.bf16.mxu0 0
      %7425 = vmatpush1.bf16.msra.mxu0 %v7208
      %7426 = vmatprep.subr.bf16.mxu0 0
      %7427 = vmatpush1.bf16.msra.mxu0 %v7209
      %7428 = vmatprep.subr.bf16.mxu0 0
      %7429 = vmatpush1.bf16.msra.mxu0 %v7210
      %7430 = vmatprep.subr.bf16.mxu0 0
      %7431 = vmatpush1.bf16.msra.mxu0 %v7211
      %7432 = vmatprep.subr.bf16.mxu0 0
      %7433 = vmatpush1.bf16.msra.mxu0 %v7212
      %7434 = vmatprep.subr.bf16.mxu0 0
      %7435 = vmatpush1.bf16.msra.mxu0 %v7213
      %7436 = vmatprep.subr.bf16.mxu0 0
      %7437 = vmatpush1.bf16.msra.mxu0 %v7214
      %7438 = vmatprep.subr.bf16.mxu0 0
      %7439 = vmatpush1.bf16.msra.mxu0 %v7215
      %7440 = vmatprep.mubr.bf16.mxu0 %v6710
      %7441 = vmatmul.mubr.bf16.gmra.mrb[0].mxu0 %v6706
      %v7442 = vpop.f32.mrb[0].mxu0
      %v7443 = vadd.f32 %v7395, %v7442
      %v7444 = vpop.f32.mrb[0].mxu0
      %v7445 = vpop.f32.mrb[0].mxu0
      %v7446 = vadd.f32 %v7398, %v7445
      %v7447 = vpop.f32.mrb[0].mxu0
      %7448 = vmatprep.mubr.bf16.mxu0 %v6711
      %7449 = vmatmul.mubr.bf16.gmra.mrb[0].mxu0 %v6707
      %v7450 = vpop.f32.mrb[0].mxu0
      %v7451 = vadd.f32 %v7403, %v7450
      %v7452 = vpop.f32.mrb[0].mxu0
      %v7453 = vpop.f32.mrb[0].mxu0
      %v7454 = vpop.f32.mrb[0].mxu0
      %7455 = vdwg.mxu0
      %7456 = vmatprep.subr.bf16.mxu0 0
      %7457 = vmatpush1.bf16.msra.mxu0 %v7216
      %7458 = vmatprep.subr.bf16.mxu0 0
      %7459 = vmatpush1.bf16.msra.mxu0 %v7217
      %7460 = vmatprep.subr.bf16.mxu0 0
      %7461 = vmatpush1.bf16.msra.mxu0 %v7218
      %7462 = vmatprep.subr.bf16.mxu0 0
      %7463 = vmatpush1.bf16.msra.mxu0 %v7219
      %7464 = vmatprep.subr.bf16.mxu0 0
      %7465 = vmatpush1.bf16.msra.mxu0 %v7220
      %7466 = vmatprep.subr.bf16.mxu0 0
      %7467 = vmatpush1.bf16.msra.mxu0 %v7221
      %7468 = vmatprep.subr.bf16.mxu0 0
      %7469 = vmatpush1.bf16.msra.mxu0 %v7222
      %7470 = vmatprep.subr.bf16.mxu0 0
      %7471 = vmatpush1.bf16.msra.mxu0 %v7223
      %7472 = vmatprep.subr.bf16.mxu0 0
      %7473 = vmatpush1.bf16.msra.mxu0 %v7224
      %7474 = vmatprep.subr.bf16.mxu0 0
      %7475 = vmatpush1.bf16.msra.mxu0 %v7225
      %7476 = vmatprep.subr.bf16.mxu0 0
      %7477 = vmatpush1.bf16.msra.mxu0 %v7226
      %7478 = vmatprep.subr.bf16.mxu0 0
      %7479 = vmatpush1.bf16.msra.mxu0 %v7227
      %7480 = vmatprep.subr.bf16.mxu0 0
      %7481 = vmatpush1.bf16.msra.mxu0 %v7228
      %7482 = vmatprep.subr.bf16.mxu0 0
      %7483 = vmatpush1.bf16.msra.mxu0 %v7229
      %7484 = vmatprep.subr.bf16.mxu0 0
      %7485 = vmatpush1.bf16.msra.mxu0 %v7230
      %7486 = vmatprep.subr.bf16.mxu0 0
      %7487 = vmatpush1.bf16.msra.mxu0 %v7231
      %7488 = vmatprep.mubr.bf16.mxu0 %v6720
      %7489 = vmatmul.mubr.bf16.gmra.mrb[0].mxu0 %v6715
      %v7490 = vpop.f32.mrb[0].mxu0
      %v7491 = vadd.f32 %v7443, %v7490
      %v7492 = vpop.f32.mrb[0].mxu0
      %v7493 = vpop.f32.mrb[0].mxu0
      %v7494 = vadd.f32 %v7446, %v7493
      %v7495 = vpop.f32.mrb[0].mxu0
      %7496 = vmatprep.mubr.bf16.mxu0 %v6721
      %7497 = vmatmul.mubr.bf16.gmra.mrb[0].mxu0 %v6716
      %v7498 = vpop.f32.mrb[0].mxu0
      %v7499 = vadd.f32 %v7451, %v7498
      %v7500 = vpop.f32.mrb[0].mxu0
      %v7501 = vpop.f32.mrb[0].mxu0
      %v7502 = vpop.f32.mrb[0].mxu0
      %7503 = vdwg.mxu0
      %7504 = vmatprep.subr.bf16.mxu0 0
      %7505 = vmatpush1.bf16.msra.mxu0 %v7232
      %7506 = vmatprep.subr.bf16.mxu0 0
      %7507 = vmatpush1.bf16.msra.mxu0 %v7233
      %7508 = vmatprep.subr.bf16.mxu0 0
      %7509 = vmatpush1.bf16.msra.mxu0 %v7234
      %7510 = vmatprep.subr.bf16.mxu0 0
      %7511 = vmatpush1.bf16.msra.mxu0 %v7235
      %7512 = vmatprep.subr.bf16.mxu0 0
      %7513 = vmatpush1.bf16.msra.mxu0 %v7236
      %7514 = vmatprep.subr.bf16.mxu0 0
      %7515 = vmatpush1.bf16.msra.mxu0 %v7237
      %7516 = vmatprep.subr.bf16.mxu0 0
      %7517 = vmatpush1.bf16.msra.mxu0 %v7238
      %7518 = vmatprep.subr.bf16.mxu0 0
      %7519 = vmatpush1.bf16.msra.mxu0 %v7239
      %7520 = vmatprep.subr.bf16.mxu0 0
      %7521 = vmatpush1.bf16.msra.mxu0 0
      %7522 = vmatprep.subr.bf16.mxu0 0
      %7523 = vmatpush1.bf16.msra.mxu0 0
      %7524 = vmatprep.subr.bf16.mxu0 0
      %7525 = vmatpush1.bf16.msra.mxu0 0
      %7526 = vmatprep.subr.bf16.mxu0 0
      %7527 = vmatpush1.bf16.msra.mxu0 0
      %7528 = vmatprep.subr.bf16.mxu0 0
      %7529 = vmatpush1.bf16.msra.mxu0 0
      %7530 = vmatprep.subr.bf16.mxu0 0
      %7531 = vmatpush1.bf16.msra.mxu0 0
      %7532 = vmatprep.subr.bf16.mxu0 0
      %7533 = vmatpush1.bf16.msra.mxu0 0
      %7534 = vmatprep.subr.bf16.mxu0 0
      %7535 = vmatpush1.bf16.msra.mxu0 0
      %7536 = vmatprep.mubr.bf16.mxu0 0
      %7537 = vmatmul.mubr.bf16.gmra.mrb[0].mxu0 %v6725
      %v7538 = vpop.f32.mrb[0].mxu0
      %v7539 = vadd.f32 %v7491, %v7538
      %v7540 = vpop.f32.mrb[0].mxu0
      %v7541 = vpop.f32.mrb[0].mxu0
      %v7542 = vadd.f32 %v7494, %v7541
      %v7543 = vpop.f32.mrb[0].mxu0
      %7544 = vmatprep.mubr.bf16.mxu0 0
      %7545 = vmatmul.mubr.bf16.gmra.mrb[0].mxu0 %v6726
      %v7546 = vpop.f32.mrb[0].mxu0
      %v7547 = vadd.f32 %v7499, %v7546
      %v7548 = vpop.f32.mrb[0].mxu0
      %v7549 = vpop.f32.mrb[0].mxu0
      %v7550 = vpop.f32.mrb[0].mxu0
      %7551 = vdwg.mxu0
      %v7552 = vxor.u32 %v7539, 2147483648
      %v7553 = vxor.u32 %v7542, 2147483648
      %v7554 = vxor.u32 %v7547, 2147483648
      %v7555 = vmul.f32 %v7552, 1.442695
      %v7556 = vpow.pop %v7555
      %v7557 = vmul.f32 %v7553, 1.442695
      %v7558 = vpow.pop %v7557
      %v7559 = vmul.f32 %v7554, 1.442695
      %v7560 = vpow.pop %v7559
      %v7561 = vadd.f32 %v7556, 1.0
      %v7562 = vadd.f32 %v7558, 1.0
      %v7563 = vadd.f32 %v7560, 1.0
      %v7564 = vrcp.pop %v7561
      %v7565 = vmul.f32 1.0, %v7564
      %v7566 = vrcp.pop %v7562
      %v7567 = vmul.f32 1.0, %v7566
      %v7568 = vrcp.pop %v7563
      %v7569 = vmul.f32 1.0, %v7568
      %v7570 = vmul.f32 %v7539, %v7565
      %v7571 = vmul.f32 %v7542, %v7567
      %v7572 = vmul.f32 %v7547, %v7569
      %v7573 = vld [vmem:[%s11] sm:$0x1]
      %v7575 = vsel %vm6491, %v7573, 0
      %v7578 = vsel %vm2654, %v7572, 0
      %7580 = vmatprep.subr.mxu0 0.0
      %7581 = vmatpush1.msra.mxu0 %v7570
      %7582 = vmatprep.subr.mxu0 0.0
      %7583 = vmatpush1.msra.mxu0 %v7571
      %7584 = vmatprep.subr.mxu0 0.0
      %7585 = vmatpush1.msra.mxu0 %v7578
      %7586 = vmatprep.subr.mxu0 0.0
      %7587 = vmatpush1.msra.mxu0 0.0
      %7588 = vmatprep.subr.mxu0 0.0
      %7589 = vmatpush1.msra.mxu0 0.0
      %7590 = vmatprep.subr.mxu0 0.0
      %7591 = vmatpush1.msra.mxu0 0.0
      %7592 = vmatprep.subr.mxu0 0.0
      %7593 = vmatpush1.msra.mxu0 0.0
      %7594 = vmatprep.subr.mxu0 0.0
      %7595 = vmatpush1.msra.mxu0 0.0
      %7596 = vmatprep.subr.mxu0 0.0
      %7597 = vmatpush1.msra.mxu0 0.0
      %7598 = vmatprep.subr.mxu0 0.0
      %7599 = vmatpush1.msra.mxu0 0.0
      %7600 = vmatprep.subr.mxu0 0.0
      %7601 = vmatpush1.msra.mxu0 0.0
      %7602 = vmatprep.subr.mxu0 0.0
      %7603 = vmatpush1.msra.mxu0 0.0
      %7604 = vmatprep.subr.mxu0 0.0
      %7605 = vmatpush1.msra.mxu0 0.0
      %7606 = vmatprep.subr.mxu0 0.0
      %7607 = vmatpush1.msra.mxu0 0.0
      %7608 = vmatprep.subr.mxu0 0.0
      %7609 = vmatpush1.msra.mxu0 0.0
      %7610 = vmatprep.subr.mxu0 0.0
      %7611 = vmatpush1.msra.mxu0 0.0
      %7612 = vmatprep.subr.mxu0 0.0
      %7613 = vmatpush1.msra.mxu0 0.0
      %7614 = vmatprep.subr.mxu0 0.0
      %7615 = vmatpush1.msra.mxu0 0.0
      %7616 = vmatprep.subr.mxu0 0.0
      %7617 = vmatpush1.msra.mxu0 0.0
      %7618 = vmatprep.subr.mxu0 0.0
      %7619 = vmatpush1.msra.mxu0 0.0
      %7620 = vmatprep.subr.mxu0 0.0
      %7621 = vmatpush1.msra.mxu0 0.0
      %7622 = vmatprep.subr.mxu0 0.0
      %7623 = vmatpush1.msra.mxu0 0.0
      %7624 = vmatprep.subr.mxu0 0.0
      %7625 = vmatpush1.msra.mxu0 0.0
      %7626 = vmatprep.subr.mxu0 0.0
      %7627 = vmatpush1.msra.mxu0 0.0
      %7628 = vmatprep.subr.mxu0 0.0
      %7629 = vmatpush1.msra.mxu0 0.0
      %7630 = vmatprep.subr.mxu0 0.0
      %7631 = vmatpush1.msra.mxu0 0.0
      %7632 = vmatprep.subr.mxu0 0.0
      %7633 = vmatpush1.msra.mxu0 0.0
      %7634 = vmatprep.subr.mxu0 0.0
      %7635 = vmatpush1.msra.mxu0 0.0
      %7636 = vmatprep.subr.mxu0 0.0
      %7637 = vmatpush1.msra.mxu0 0.0
      %7638 = vmatprep.subr.mxu0 0.0
      %7639 = vmatpush1.msra.mxu0 0.0
      %7640 = vmatprep.subr.mxu0 0.0
      %7641 = vmatpush1.msra.mxu0 0.0
      %7642 = vmatprep.subr.mxu0 0.0
      %7643 = vmatpush1.msra.mxu0 0.0
      %7644 = vmatprep.mubr.f32.mxu0 0.0
      %7645 = vmatmul.mubr.f32.gmra.mrb[0].mxu0 %v7575
      %v7646 = vpop.f32.mrb[0].mxu0
      %v7647 = vadd.f32 0.0, %v7646
      %v7648 = vpop.f32.mrb[0].mxu0
      %7649 = vdwg.mxu0
      %v7650 = vld [vmem:[%s7] sm:$0xff]
      %v7651 = vld [vmem:[%s7 + $0x8] sm:$0xff]
      %v7653 = vsel %vm6491, %v7650, 0
      %v7656 = vsel %vm6491, %v7651, 0
      %7658 = vmatprep.subr.mxu0 0.0
      %7659 = vmatpush1.msra.mxu0 %v7570
      %7660 = vmatprep.subr.mxu0 0.0
      %7661 = vmatpush1.msra.mxu0 %v7571
      %7662 = vmatprep.subr.mxu0 0.0
      %7663 = vmatpush1.msra.mxu0 %v7578
      %7664 = vmatprep.subr.mxu0 0.0
      %7665 = vmatpush1.msra.mxu0 0.0
      %7666 = vmatprep.subr.mxu0 0.0
      %7667 = vmatpush1.msra.mxu0 0.0
      %7668 = vmatprep.subr.mxu0 0.0
      %7669 = vmatpush1.msra.mxu0 0.0
      %7670 = vmatprep.subr.mxu0 0.0
      %7671 = vmatpush1.msra.mxu0 0.0
      %7672 = vmatprep.subr.mxu0 0.0
      %7673 = vmatpush1.msra.mxu0 0.0
      %7674 = vmatprep.subr.mxu0 0.0
      %7675 = vmatpush1.msra.mxu0 0.0
      %7676 = vmatprep.subr.mxu0 0.0
      %7677 = vmatpush1.msra.mxu0 0.0
      %7678 = vmatprep.subr.mxu0 0.0
      %7679 = vmatpush1.msra.mxu0 0.0
      %7680 = vmatprep.subr.mxu0 0.0
      %7681 = vmatpush1.msra.mxu0 0.0
      %7682 = vmatprep.subr.mxu0 0.0
      %7683 = vmatpush1.msra.mxu0 0.0
      %7684 = vmatprep.subr.mxu0 0.0
      %7685 = vmatpush1.msra.mxu0 0.0
      %7686 = vmatprep.subr.mxu0 0.0
      %7687 = vmatpush1.msra.mxu0 0.0
      %7688 = vmatprep.subr.mxu0 0.0
      %7689 = vmatpush1.msra.mxu0 0.0
      %7690 = vmatprep.subr.mxu0 0.0
      %7691 = vmatpush1.msra.mxu0 0.0
      %7692 = vmatprep.subr.mxu0 0.0
      %7693 = vmatpush1.msra.mxu0 0.0
      %7694 = vmatprep.subr.mxu0 0.0
      %7695 = vmatpush1.msra.mxu0 0.0
      %7696 = vmatprep.subr.mxu0 0.0
      %7697 = vmatpush1.msra.mxu0 0.0
      %7698 = vmatprep.subr.mxu0 0.0
      %7699 = vmatpush1.msra.mxu0 0.0
      %7700 = vmatprep.subr.mxu0 0.0
      %7701 = vmatpush1.msra.mxu0 0.0
      %7702 = vmatprep.subr.mxu0 0.0
      %7703 = vmatpush1.msra.mxu0 0.0
      %7704 = vmatprep.subr.mxu0 0.0
      %7705 = vmatpush1.msra.mxu0 0.0
      %7706 = vmatprep.subr.mxu0 0.0
      %7707 = vmatpush1.msra.mxu0 0.0
      %7708 = vmatprep.subr.mxu0 0.0
      %7709 = vmatpush1.msra.mxu0 0.0
      %7710 = vmatprep.subr.mxu0 0.0
      %7711 = vmatpush1.msra.mxu0 0.0
      %7712 = vmatprep.subr.mxu0 0.0
      %7713 = vmatpush1.msra.mxu0 0.0
      %7714 = vmatprep.subr.mxu0 0.0
      %7715 = vmatpush1.msra.mxu0 0.0
      %7716 = vmatprep.subr.mxu0 0.0
      %7717 = vmatpush1.msra.mxu0 0.0
      %7718 = vmatprep.subr.mxu0 0.0
      %7719 = vmatpush1.msra.mxu0 0.0
      %7720 = vmatprep.subr.mxu0 0.0
      %7721 = vmatpush1.msra.mxu0 0.0
      %7722 = vmatprep.mubr.f32.mxu0 0.0
      %7723 = vmatmul.mubr.f32.gmra.mrb[0].mxu0 %v7653
      %v7724 = vpop.f32.mrb[0].mxu0
      %v7725 = vadd.f32 0.0, %v7724
      %v7726 = vpop.f32.mrb[0].mxu0
      %7727 = vmatprep.mubr.f32.mxu0 0.0
      %7728 = vmatmul.mubr.f32.gmra.mrb[0].mxu0 %v7656
      %v7729 = vpop.f32.mrb[0].mxu0
      %v7730 = vadd.f32 0.0, %v7729
      %v7731 = vpop.f32.mrb[0].mxu0
      %7732 = vdwg.mxu0
      %7733 = vst [vmem:[#allocation6] sm:$0xff] %v7725
      %7734 = vst [vmem:[#allocation6 + $0x8] sm:$0xff] %v7730
      %v7735 = vld [vmem:[#allocation6] sm:$0x3f]
      %v7736 = vpack.c.bf16 %v7735, %v7735
      %v7737 = vld [vmem:[#allocation6 + $0x1] sm:$0x3f]
      %v7738 = vpack.c.bf16 %v7737, %v7737
      %v7739 = vld [vmem:[#allocation6 + $0x2] sm:$0x3f]
      %v7740 = vpack.c.bf16 %v7739, %v7739
      %v7741 = vld [vmem:[#allocation6 + $0x4] sm:$0x3f]
      %v7742 = vpack.c.bf16 %v7741, %v7741
      %v7743 = vld [vmem:[#allocation6 + $0x5] sm:$0x3f]
      %v7744 = vpack.c.bf16 %v7743, %v7743
      %v7745 = vld [vmem:[#allocation6 + $0x6] sm:$0x3f]
      %v7746 = vpack.c.bf16 %v7745, %v7745
      %v7747 = vld [vmem:[#allocation6 + $0x8] sm:$0x3f]
      %v7748 = vpack.c.bf16 %v7747, %v7747
      %v7749 = vld [vmem:[#allocation6 + $0x9] sm:$0x3f]
      %v7750 = vpack.c.bf16 %v7749, %v7749
      %v7751 = vld [vmem:[#allocation6 + $0xa] sm:$0x3f]
      %v7752 = vpack.c.bf16 %v7751, %v7751
      %s7753 = scalar_lea.vmem %s1, 2880
      %v7754 = vld [vmem:[%s7753] sm:$0xf]
      %v7755 = vld [vmem:[%s7753 + $0x4] sm:$0xf]
      %v7756 = vld [vmem:[%s7753 + $0x8] sm:$0xf]
      %v7757 = vld [vmem:[%s7753 + $0xc] sm:$0xf]
      %v7758 = vld [vmem:[%s7753 + $0x10] sm:$0xf]
      %v7759 = vld [vmem:[%s7753 + $0x14] sm:$0xf]
      %v7760 = vld [vmem:[%s7753 + $0x18] sm:$0xf]
      %v7761 = vld [vmem:[%s7753 + $0x1c] sm:$0xf]
      %v7762 = vld [vmem:[%s7753 + $0x20] sm:$0xf]
      %v7763 = vld [vmem:[%s7753 + $0x24] sm:$0xf]
      %v7764 = vld [vmem:[%s7753 + $0x28] sm:$0xf]
      %v7765 = vld [vmem:[%s7753 + $0x2c] sm:$0xf]
      %v7766 = vld [vmem:[%s7753 + $0x30] sm:$0xf]
      %v7767 = vld [vmem:[%s7753 + $0x34] sm:$0xf]
      %v7768 = vld [vmem:[%s7753 + $0x38] sm:$0xf]
      %v7769 = vld [vmem:[%s7753 + $0x3c] sm:$0xf]
      %v7770 = vld [vmem:[%s7753 + $0x40] sm:$0xf]
      %v7771 = vld [vmem:[%s7753 + $0x44] sm:$0xf]
      %v7772 = vld [vmem:[%s7753 + $0x48] sm:$0xf]
      %v7773 = vld [vmem:[%s7753 + $0x4c] sm:$0xf]
      %v7774 = vld [vmem:[%s7753 + $0x50] sm:$0xf]
      %v7775 = vld [vmem:[%s7753 + $0x54] sm:$0xf]
      %v7776 = vld [vmem:[%s7753 + $0x58] sm:$0xf]
      %v7777 = vld [vmem:[%s7753 + $0x5c] sm:$0xf]
      %v7778 = vld [vmem:[%s7753 + $0x60] sm:$0xf]
      %v7779 = vld [vmem:[%s7753 + $0x64] sm:$0xf]
      %v7780 = vld [vmem:[%s7753 + $0x68] sm:$0xf]
      %v7781 = vld [vmem:[%s7753 + $0x6c] sm:$0xf]
      %v7782 = vld [vmem:[%s7753 + $0x70] sm:$0xf]
      %v7783 = vld [vmem:[%s7753 + $0x74] sm:$0xf]
      %v7784 = vld [vmem:[%s7753 + $0x78] sm:$0xf]
      %v7785 = vld [vmem:[%s7753 + $0x7c] sm:$0xf]
      %v7786 = vld [vmem:[%s7753 + $0x80] sm:$0xf]
      %v7787 = vld [vmem:[%s7753 + $0x84] sm:$0xf]
      %v7788 = vld [vmem:[%s7753 + $0x88] sm:$0xf]
      %v7789 = vld [vmem:[%s7753 + $0x8c] sm:$0xf]
      %v7790 = vld [vmem:[%s7753 + $0x90] sm:$0xf]
      %v7791 = vld [vmem:[%s7753 + $0x94] sm:$0xf]
      %v7792 = vld [vmem:[%s7753 + $0x98] sm:$0xf]
      %v7793 = vld [vmem:[%s7753 + $0x9c] sm:$0xf]
      %v7794 = vld [vmem:[%s7753 + $0xa0] sm:$0xf]
      %v7795 = vld [vmem:[%s7753 + $0xa4] sm:$0xf]
      %v7796 = vld [vmem:[%s7753 + $0xa8] sm:$0xf]
      %v7797 = vld [vmem:[%s7753 + $0xac] sm:$0xf]
      %v7798 = vld [vmem:[%s7753 + $0xb0] sm:$0xf]
      %v7799 = vld [vmem:[%s7753 + $0xb4] sm:$0xf]
      %v7800 = vld [vmem:[%s7753 + $0xb8] sm:$0xf]
      %v7801 = vld [vmem:[%s7753 + $0xbc] sm:$0xf]
      %v7802 = vld [vmem:[%s7753 + $0xc0] sm:$0xf]
      %v7803 = vld [vmem:[%s7753 + $0xc4] sm:$0xf]
      %v7804 = vld [vmem:[%s7753 + $0xc8] sm:$0xf]
      %v7805 = vld [vmem:[%s7753 + $0xcc] sm:$0xf]
      %v7806 = vld [vmem:[%s7753 + $0xd0] sm:$0xf]
      %v7807 = vld [vmem:[%s7753 + $0xd4] sm:$0xf]
      %v7808 = vld [vmem:[%s7753 + $0xd8] sm:$0xf]
      %v7809 = vld [vmem:[%s7753 + $0xdc] sm:$0xf]
      %v7810 = vld [vmem:[%s7753 + $0xe0] sm:$0xf]
      %v7811 = vld [vmem:[%s7753 + $0xe4] sm:$0xf]
      %v7812 = vld [vmem:[%s7753 + $0xe8] sm:$0xf]
      %v7813 = vld [vmem:[%s7753 + $0xec] sm:$0xf]
      %v7814 = vld [vmem:[%s7753 + $0xf0] sm:$0xf]
      %v7815 = vld [vmem:[%s7753 + $0xf4] sm:$0xf]
      %v7816 = vld [vmem:[%s7753 + $0xf8] sm:$0xf]
      %v7817 = vld [vmem:[%s7753 + $0xfc] sm:$0xf]
      %v7818 = vld [vmem:[%s7753 + $0x100] sm:$0xf]
      %v7819 = vld [vmem:[%s7753 + $0x104] sm:$0xf]
      %v7820 = vld [vmem:[%s7753 + $0x108] sm:$0xf]
      %v7821 = vld [vmem:[%s7753 + $0x10c] sm:$0xf]
      %v7822 = vld [vmem:[%s7753 + $0x110] sm:$0xf]
      %v7823 = vld [vmem:[%s7753 + $0x114] sm:$0xf]
      %v7824 = vld [vmem:[%s7753 + $0x118] sm:$0xf]
      %v7825 = vld [vmem:[%s7753 + $0x11c] sm:$0xf]
      %v7826 = vld [vmem:[%s7753 + $0x120] sm:$0xf]
      %v7827 = vld [vmem:[%s7753 + $0x124] sm:$0xf]
      %v7828 = vld [vmem:[%s7753 + $0x128] sm:$0xf]
      %v7829 = vld [vmem:[%s7753 + $0x12c] sm:$0xf]
      %v7830 = vld [vmem:[%s7753 + $0x130] sm:$0xf]
      %v7831 = vld [vmem:[%s7753 + $0x134] sm:$0xf]
      %v7832 = vld [vmem:[%s7753 + $0x138] sm:$0xf]
      %v7833 = vld [vmem:[%s7753 + $0x13c] sm:$0xf]
      %v7834 = vld [vmem:[%s7753 + $0x140] sm:$0xf]
      %v7835 = vld [vmem:[%s7753 + $0x144] sm:$0xf]
      %v7836 = vld [vmem:[%s7753 + $0x148] sm:$0xf]
      %v7837 = vld [vmem:[%s7753 + $0x14c] sm:$0xf]
      %v7838 = vld [vmem:[%s7753 + $0x150] sm:$0xf]
      %v7839 = vld [vmem:[%s7753 + $0x154] sm:$0xf]
      %v7840 = vld [vmem:[%s7753 + $0x158] sm:$0xf]
      %v7841 = vld [vmem:[%s7753 + $0x15c] sm:$0xf]
      %v7842 = vld [vmem:[%s7753 + $0x160] sm:$0xf]
      %v7843 = vld [vmem:[%s7753 + $0x164] sm:$0xf]
      %v7844 = vld [vmem:[%s7753 + $0x168] sm:$0xf]
      %v7845 = vld [vmem:[%s7753 + $0x16c] sm:$0xf]
      %v7846 = vld [vmem:[%s7753 + $0x170] sm:$0xf]
      %v7847 = vld [vmem:[%s7753 + $0x174] sm:$0xf]
      %v7848 = vld [vmem:[%s7753 + $0x178] sm:$0xf]
      %v7849 = vld [vmem:[%s7753 + $0x17c] sm:$0xf]
      %v7850 = vld [vmem:[%s7753 + $0x180] sm:$0xf]
      %v7851 = vld [vmem:[%s7753 + $0x184] sm:$0xf]
      %v7852 = vld [vmem:[%s7753 + $0x188] sm:$0xf]
      %v7853 = vld [vmem:[%s7753 + $0x18c] sm:$0xf]
      %v7854 = vld [vmem:[%s7753 + $0x190] sm:$0xf]
      %v7855 = vld [vmem:[%s7753 + $0x194] sm:$0xf]
      %v7856 = vld [vmem:[%s7753 + $0x198] sm:$0xf]
      %v7857 = vld [vmem:[%s7753 + $0x19c] sm:$0xf]
      %v7858 = vld [vmem:[%s7753 + $0x1a0] sm:$0xf]
      %v7859 = vld [vmem:[%s7753 + $0x1a4] sm:$0xf]
      %v7860 = vld [vmem:[%s7753 + $0x1a8] sm:$0xf]
      %v7861 = vld [vmem:[%s7753 + $0x1ac] sm:$0xf]
      %v7862 = vld [vmem:[%s7753 + $0x1b0] sm:$0xf]
      %v7863 = vld [vmem:[%s7753 + $0x1b4] sm:$0xf]
      %v7864 = vld [vmem:[%s7753 + $0x1b8] sm:$0xf]
      %v7865 = vld [vmem:[%s7753 + $0x1bc] sm:$0xf]
      %v7866 = vld [vmem:[%s7753 + $0x1c0] sm:$0xf]
      %v7867 = vld [vmem:[%s7753 + $0x1c4] sm:$0xf]
      %v7868 = vld [vmem:[%s7753 + $0x1c8] sm:$0xf]
      %v7869 = vld [vmem:[%s7753 + $0x1cc] sm:$0xf]
      %v7870 = vld [vmem:[%s7753 + $0x1d0] sm:$0xf]
      %v7871 = vld [vmem:[%s7753 + $0x1d4] sm:$0xf]
      %v7872 = vld [vmem:[%s7753 + $0x1d8] sm:$0xf]
      %v7873 = vld [vmem:[%s7753 + $0x1dc] sm:$0xf]
      %v7874 = vld [vmem:[%s7753 + $0x1e0] sm:$0xf]
      %v7875 = vld [vmem:[%s7753 + $0x1e4] sm:$0xf]
      %v7876 = vld [vmem:[%s7753 + $0x1e8] sm:$0xf]
      %v7877 = vld [vmem:[%s7753 + $0x1ec] sm:$0xf]
      %v7878 = vld [vmem:[%s7753 + $0x1f0] sm:$0xf]
      %v7879 = vld [vmem:[%s7753 + $0x1f4] sm:$0xf]
      %v7880 = vld [vmem:[%s7753 + $0x1f8] sm:$0xf]
      %v7881 = vld [vmem:[%s7753 + $0x1fc] sm:$0xf]
      %v7882 = vld [vmem:[%s7753 + $0x200] sm:$0xf]
      %v7883 = vld [vmem:[%s7753 + $0x204] sm:$0xf]
      %v7884 = vld [vmem:[%s7753 + $0x208] sm:$0xf]
      %v7885 = vld [vmem:[%s7753 + $0x20c] sm:$0xf]
      %v7886 = vld [vmem:[%s7753 + $0x210] sm:$0xf]
      %v7887 = vld [vmem:[%s7753 + $0x214] sm:$0xf]
      %v7888 = vld [vmem:[%s7753 + $0x218] sm:$0xf]
      %v7889 = vld [vmem:[%s7753 + $0x21c] sm:$0xf]
      %v7890 = vld [vmem:[%s7753 + $0x220] sm:$0xf]
      %v7891 = vld [vmem:[%s7753 + $0x224] sm:$0xf]
      %v7892 = vld [vmem:[%s7753 + $0x228] sm:$0xf]
      %v7893 = vld [vmem:[%s7753 + $0x22c] sm:$0xf]
      %v7894 = vld [vmem:[%s7753 + $0x230] sm:$0xf]
      %v7895 = vld [vmem:[%s7753 + $0x234] sm:$0xf]
      %v7896 = vld [vmem:[%s7753 + $0x238] sm:$0xf]
      %v7897 = vld [vmem:[%s7753 + $0x23c] sm:$0xf]
      %s7898 = scalar_lea.vmem %s2, 5
      %v7899 = vld [vmem:[%s7898] sm:$0x1]
      %v7901 = vlaneseq
      %v7902 = vshrl.u32 %v7901, 7
      %v7903 = vsub.s32 0, %v7902
      %v7904 = vrot.slane %v7899, %v7903
      %v8050 = vunpack.c.l.b16 %v7754
      %v8051 = vunpack.c.l.b16 %v7755
      %v8052 = vunpack.c.l.b16 %v7756
      %v8053 = vunpack.c.l.b16 %v7757
      %v8054 = vunpack.c.l.b16 %v7758
      %v8055 = vunpack.c.l.b16 %v7759
      %v8056 = vunpack.c.l.b16 %v7760
      %v8057 = vunpack.c.l.b16 %v7761
      %v8058 = vunpack.c.l.b16 %v7762
      %v8059 = vunpack.c.l.b16 %v7763
      %v8060 = vunpack.c.l.b16 %v7764
      %v8061 = vunpack.c.l.b16 %v7765
      %v8062 = vunpack.c.l.b16 %v7766
      %v8063 = vunpack.c.l.b16 %v7767
      %v8064 = vunpack.c.l.b16 %v7768
      %v8065 = vunpack.c.l.b16 %v7769
      %v8066 = vunpack.c.l.b16 %v7770
      %v8067 = vunpack.c.l.b16 %v7771
      %v8068 = vunpack.c.l.b16 %v7772
      %v8069 = vunpack.c.l.b16 %v7773
      %v8070 = vunpack.c.l.b16 %v7774
      %v8071 = vunpack.c.l.b16 %v7775
      %v8072 = vunpack.c.l.b16 %v7776
      %v8073 = vunpack.c.l.b16 %v7777
      %v8074 = vunpack.c.l.b16 %v7778
      %v8075 = vunpack.c.l.b16 %v7779
      %v8076 = vunpack.c.l.b16 %v7780
      %v8077 = vunpack.c.l.b16 %v7781
      %v8078 = vunpack.c.l.b16 %v7782
      %v8079 = vunpack.c.l.b16 %v7783
      %v8080 = vunpack.c.l.b16 %v7784
      %v8081 = vunpack.c.l.b16 %v7785
      %v8082 = vunpack.c.l.b16 %v7786
      %v8083 = vunpack.c.l.b16 %v7787
      %v8084 = vunpack.c.l.b16 %v7788
      %v8085 = vunpack.c.l.b16 %v7789
      %v8086 = vunpack.c.l.b16 %v7790
      %v8087 = vunpack.c.l.b16 %v7791
      %v8088 = vunpack.c.l.b16 %v7792
      %v8089 = vunpack.c.l.b16 %v7793
      %v8090 = vunpack.c.l.b16 %v7794
      %v8091 = vunpack.c.l.b16 %v7795
      %v8092 = vunpack.c.l.b16 %v7796
      %v8093 = vunpack.c.l.b16 %v7797
      %v8094 = vunpack.c.l.b16 %v7798
      %v8095 = vunpack.c.l.b16 %v7799
      %v8096 = vunpack.c.l.b16 %v7800
      %v8097 = vunpack.c.l.b16 %v7801
      %v8098 = vunpack.c.l.b16 %v7802
      %v8099 = vunpack.c.l.b16 %v7803
      %v8100 = vunpack.c.l.b16 %v7804
      %v8101 = vunpack.c.l.b16 %v7805
      %v8102 = vunpack.c.l.b16 %v7806
      %v8103 = vunpack.c.l.b16 %v7807
      %v8104 = vunpack.c.l.b16 %v7808
      %v8105 = vunpack.c.l.b16 %v7809
      %v8106 = vunpack.c.l.b16 %v7810
      %v8107 = vunpack.c.l.b16 %v7811
      %v8108 = vunpack.c.l.b16 %v7812
      %v8109 = vunpack.c.l.b16 %v7813
      %v8110 = vunpack.c.l.b16 %v7814
      %v8111 = vunpack.c.l.b16 %v7815
      %v8112 = vunpack.c.l.b16 %v7816
      %v8113 = vunpack.c.l.b16 %v7817
      %v8114 = vunpack.c.l.b16 %v7818
      %v8115 = vunpack.c.l.b16 %v7819
      %v8116 = vunpack.c.l.b16 %v7820
      %v8117 = vunpack.c.l.b16 %v7821
      %v8118 = vunpack.c.l.b16 %v7822
      %v8119 = vunpack.c.l.b16 %v7823
      %v8120 = vunpack.c.l.b16 %v7824
      %v8121 = vunpack.c.l.b16 %v7825
      %v8122 = vunpack.c.l.b16 %v7826
      %v8123 = vunpack.c.l.b16 %v7827
      %v8124 = vunpack.c.l.b16 %v7828
      %v8125 = vunpack.c.l.b16 %v7829
      %v8126 = vunpack.c.l.b16 %v7830
      %v8127 = vunpack.c.l.b16 %v7831
      %v8128 = vunpack.c.l.b16 %v7832
      %v8129 = vunpack.c.l.b16 %v7833
      %v8130 = vunpack.c.l.b16 %v7834
      %v8131 = vunpack.c.l.b16 %v7835
      %v8132 = vunpack.c.l.b16 %v7836
      %v8133 = vunpack.c.l.b16 %v7837
      %v8134 = vunpack.c.l.b16 %v7838
      %v8135 = vunpack.c.l.b16 %v7839
      %v8136 = vunpack.c.l.b16 %v7840
      %v8137 = vunpack.c.l.b16 %v7841
      %v8138 = vunpack.c.l.b16 %v7842
      %v8139 = vunpack.c.l.b16 %v7843
      %v8140 = vunpack.c.l.b16 %v7844
      %v8141 = vunpack.c.l.b16 %v7845
      %v8142 = vunpack.c.l.b16 %v7846
      %v8143 = vunpack.c.l.b16 %v7847
      %v8144 = vunpack.c.l.b16 %v7848
      %v8145 = vunpack.c.l.b16 %v7849
      %v8146 = vunpack.c.l.b16 %v7850
      %v8147 = vunpack.c.l.b16 %v7851
      %v8148 = vunpack.c.l.b16 %v7852
      %v8149 = vunpack.c.l.b16 %v7853
      %v8150 = vunpack.c.l.b16 %v7854
      %v8151 = vunpack.c.l.b16 %v7855
      %v8152 = vunpack.c.l.b16 %v7856
      %v8153 = vunpack.c.l.b16 %v7857
      %v8154 = vunpack.c.l.b16 %v7858
      %v8155 = vunpack.c.l.b16 %v7859
      %v8156 = vunpack.c.l.b16 %v7860
      %v8157 = vunpack.c.l.b16 %v7861
      %v8158 = vunpack.c.l.b16 %v7862
      %v8159 = vunpack.c.l.b16 %v7863
      %v8160 = vunpack.c.l.b16 %v7864
      %v8161 = vunpack.c.l.b16 %v7865
      %v8162 = vunpack.c.l.b16 %v7866
      %v8163 = vunpack.c.l.b16 %v7867
      %v8164 = vunpack.c.l.b16 %v7868
      %v8165 = vunpack.c.l.b16 %v7869
      %v8166 = vunpack.c.l.b16 %v7870
      %v8167 = vunpack.c.l.b16 %v7871
      %v8168 = vunpack.c.l.b16 %v7872
      %v8169 = vunpack.c.l.b16 %v7873
      %v8170 = vunpack.c.l.b16 %v7874
      %v8171 = vunpack.c.l.b16 %v7875
      %v8172 = vunpack.c.l.b16 %v7876
      %v8173 = vunpack.c.l.b16 %v7877
      %v8174 = vunpack.c.l.b16 %v7878
      %v8175 = vunpack.c.l.b16 %v7879
      %v8176 = vunpack.c.l.b16 %v7880
      %v8177 = vunpack.c.l.b16 %v7881
      %v8178 = vunpack.c.l.b16 %v7882
      %v8179 = vunpack.c.l.b16 %v7883
      %v8180 = vunpack.c.l.b16 %v7884
      %v8181 = vunpack.c.l.b16 %v7885
      %v8182 = vunpack.c.l.b16 %v7886
      %v8183 = vunpack.c.l.b16 %v7887
      %v8184 = vunpack.c.l.b16 %v7888
      %v8185 = vunpack.c.l.b16 %v7889
      %v8186 = vunpack.c.l.b16 %v7890
      %v8187 = vunpack.c.l.b16 %v7891
      %v8188 = vunpack.c.l.b16 %v7892
      %v8189 = vunpack.c.l.b16 %v7893
      %v8190 = vunpack.c.l.b16 %v7894
      %v8191 = vunpack.c.l.b16 %v7895
      %v8192 = vunpack.c.l.b16 %v7896
      %v8193 = vunpack.c.l.b16 %v7897
      %v8194 = vpack.c.b16 %v8051, %v8050
      %v8195 = vpack.c.b16 %v8053, %v8052
      %v8196 = vpack.c.b16 %v8055, %v8054
      %v8197 = vpack.c.b16 %v8057, %v8056
      %v8198 = vpack.c.b16 %v8059, %v8058
      %v8199 = vpack.c.b16 %v8061, %v8060
      %v8200 = vpack.c.b16 %v8063, %v8062
      %v8201 = vpack.c.b16 %v8065, %v8064
      %v8202 = vpack.c.b16 %v8067, %v8066
      %v8203 = vpack.c.b16 %v8069, %v8068
      %v8204 = vpack.c.b16 %v8071, %v8070
      %v8205 = vpack.c.b16 %v8073, %v8072
      %v8206 = vpack.c.b16 %v8075, %v8074
      %v8207 = vpack.c.b16 %v8077, %v8076
      %v8208 = vpack.c.b16 %v8079, %v8078
      %v8209 = vpack.c.b16 %v8081, %v8080
      %v8210 = vpack.c.b16 %v8083, %v8082
      %v8211 = vpack.c.b16 %v8085, %v8084
      %v8212 = vpack.c.b16 %v8087, %v8086
      %v8213 = vpack.c.b16 %v8089, %v8088
      %v8214 = vpack.c.b16 %v8091, %v8090
      %v8215 = vpack.c.b16 %v8093, %v8092
      %v8216 = vpack.c.b16 %v8095, %v8094
      %v8217 = vpack.c.b16 %v8097, %v8096
      %v8218 = vpack.c.b16 %v8099, %v8098
      %v8219 = vpack.c.b16 %v8101, %v8100
      %v8220 = vpack.c.b16 %v8103, %v8102
      %v8221 = vpack.c.b16 %v8105, %v8104
      %v8222 = vpack.c.b16 %v8107, %v8106
      %v8223 = vpack.c.b16 %v8109, %v8108
      %v8224 = vpack.c.b16 %v8111, %v8110
      %v8225 = vpack.c.b16 %v8113, %v8112
      %v8226 = vpack.c.b16 %v8115, %v8114
      %v8227 = vpack.c.b16 %v8117, %v8116
      %v8228 = vpack.c.b16 %v8119, %v8118
      %v8229 = vpack.c.b16 %v8121, %v8120
      %v8230 = vpack.c.b16 %v8123, %v8122
      %v8231 = vpack.c.b16 %v8125, %v8124
      %v8232 = vpack.c.b16 %v8127, %v8126
      %v8233 = vpack.c.b16 %v8129, %v8128
      %v8234 = vpack.c.b16 %v8131, %v8130
      %v8235 = vpack.c.b16 %v8133, %v8132
      %v8236 = vpack.c.b16 %v8135, %v8134
      %v8237 = vpack.c.b16 %v8137, %v8136
      %v8238 = vpack.c.b16 %v8139, %v8138
      %v8239 = vpack.c.b16 %v8141, %v8140
      %v8240 = vpack.c.b16 %v8143, %v8142
      %v8241 = vpack.c.b16 %v8145, %v8144
      %v8242 = vpack.c.b16 %v8147, %v8146
      %v8243 = vpack.c.b16 %v8149, %v8148
      %v8244 = vpack.c.b16 %v8151, %v8150
      %v8245 = vpack.c.b16 %v8153, %v8152
      %v8246 = vpack.c.b16 %v8155, %v8154
      %v8247 = vpack.c.b16 %v8157, %v8156
      %v8248 = vpack.c.b16 %v8159, %v8158
      %v8249 = vpack.c.b16 %v8161, %v8160
      %v8250 = vpack.c.b16 %v8163, %v8162
      %v8251 = vpack.c.b16 %v8165, %v8164
      %v8252 = vpack.c.b16 %v8167, %v8166
      %v8253 = vpack.c.b16 %v8169, %v8168
      %v8254 = vpack.c.b16 %v8171, %v8170
      %v8255 = vpack.c.b16 %v8173, %v8172
      %v8256 = vpack.c.b16 %v8175, %v8174
      %v8257 = vpack.c.b16 %v8177, %v8176
      %v8258 = vpack.c.b16 %v8179, %v8178
      %v8259 = vpack.c.b16 %v8181, %v8180
      %v8260 = vpack.c.b16 %v8183, %v8182
      %v8261 = vpack.c.b16 %v8185, %v8184
      %v8262 = vpack.c.b16 %v8187, %v8186
      %v8263 = vpack.c.b16 %v8189, %v8188
      %v8264 = vpack.c.b16 %v8191, %v8190
      %v8265 = vpack.c.b16 %v8193, %v8192
      %8338 = vmatprep.subr.bf16.mxu0 0
      %8339 = vmatpush1.bf16.msra.mxu0 %v8194
      %8340 = vmatprep.subr.bf16.mxu0 0
      %8341 = vmatpush1.bf16.msra.mxu0 %v8195
      %8342 = vmatprep.subr.bf16.mxu0 0
      %8343 = vmatpush1.bf16.msra.mxu0 %v8196
      %8344 = vmatprep.subr.bf16.mxu0 0
      %8345 = vmatpush1.bf16.msra.mxu0 %v8197
      %8346 = vmatprep.subr.bf16.mxu0 0
      %8347 = vmatpush1.bf16.msra.mxu0 %v8198
      %8348 = vmatprep.subr.bf16.mxu0 0
      %8349 = vmatpush1.bf16.msra.mxu0 %v8199
      %8350 = vmatprep.subr.bf16.mxu0 0
      %8351 = vmatpush1.bf16.msra.mxu0 %v8200
      %8352 = vmatprep.subr.bf16.mxu0 0
      %8353 = vmatpush1.bf16.msra.mxu0 %v8201
      %8354 = vmatprep.subr.bf16.mxu0 0
      %8355 = vmatpush1.bf16.msra.mxu0 %v8202
      %8356 = vmatprep.subr.bf16.mxu0 0
      %8357 = vmatpush1.bf16.msra.mxu0 %v8203
      %8358 = vmatprep.subr.bf16.mxu0 0
      %8359 = vmatpush1.bf16.msra.mxu0 %v8204
      %8360 = vmatprep.subr.bf16.mxu0 0
      %8361 = vmatpush1.bf16.msra.mxu0 %v8205
      %8362 = vmatprep.subr.bf16.mxu0 0
      %8363 = vmatpush1.bf16.msra.mxu0 %v8206
      %8364 = vmatprep.subr.bf16.mxu0 0
      %8365 = vmatpush1.bf16.msra.mxu0 %v8207
      %8366 = vmatprep.subr.bf16.mxu0 0
      %8367 = vmatpush1.bf16.msra.mxu0 %v8208
      %8368 = vmatprep.subr.bf16.mxu0 0
      %8369 = vmatpush1.bf16.msra.mxu0 %v8209
      %8370 = vmatprep.mubr.bf16.mxu0 %v7738
      %8371 = vmatmul.mubr.bf16.gmra.mrb[0].mxu0 %v7736
      %v8372 = vpop.f32.mrb[0].mxu0
      %v8373 = vadd.f32 %v7904, %v8372
      %v8374 = vpop.f32.mrb[0].mxu0
      %v8375 = vpop.f32.mrb[0].mxu0
      %v8376 = vpop.f32.mrb[0].mxu0
      %8377 = vdwg.mxu0
      %8378 = vmatprep.subr.bf16.mxu0 0
      %8379 = vmatpush1.bf16.msra.mxu0 %v8210
      %8380 = vmatprep.subr.bf16.mxu0 0
      %8381 = vmatpush1.bf16.msra.mxu0 %v8211
      %8382 = vmatprep.subr.bf16.mxu0 0
      %8383 = vmatpush1.bf16.msra.mxu0 %v8212
      %8384 = vmatprep.subr.bf16.mxu0 0
      %8385 = vmatpush1.bf16.msra.mxu0 %v8213
      %8386 = vmatprep.subr.bf16.mxu0 0
      %8387 = vmatpush1.bf16.msra.mxu0 %v8214
      %8388 = vmatprep.subr.bf16.mxu0 0
      %8389 = vmatpush1.bf16.msra.mxu0 %v8215
      %8390 = vmatprep.subr.bf16.mxu0 0
      %8391 = vmatpush1.bf16.msra.mxu0 %v8216
      %8392 = vmatprep.subr.bf16.mxu0 0
      %8393 = vmatpush1.bf16.msra.mxu0 %v8217
      %8394 = vmatprep.subr.bf16.mxu0 0
      %8395 = vmatpush1.bf16.msra.mxu0 %v8218
      %8396 = vmatprep.subr.bf16.mxu0 0
      %8397 = vmatpush1.bf16.msra.mxu0 %v8219
      %8398 = vmatprep.subr.bf16.mxu0 0
      %8399 = vmatpush1.bf16.msra.mxu0 %v8220
      %8400 = vmatprep.subr.bf16.mxu0 0
      %8401 = vmatpush1.bf16.msra.mxu0 %v8221
      %8402 = vmatprep.subr.bf16.mxu0 0
      %8403 = vmatpush1.bf16.msra.mxu0 %v8222
      %8404 = vmatprep.subr.bf16.mxu0 0
      %8405 = vmatpush1.bf16.msra.mxu0 %v8223
      %8406 = vmatprep.subr.bf16.mxu0 0
      %8407 = vmatpush1.bf16.msra.mxu0 %v8224
      %8408 = vmatprep.subr.bf16.mxu0 0
      %8409 = vmatpush1.bf16.msra.mxu0 %v8225
      %8410 = vmatprep.mubr.bf16.mxu0 %v7742
      %8411 = vmatmul.mubr.bf16.gmra.mrb[0].mxu0 %v7740
      %v8412 = vpop.f32.mrb[0].mxu0
      %v8413 = vadd.f32 %v8373, %v8412
      %v8414 = vpop.f32.mrb[0].mxu0
      %v8415 = vpop.f32.mrb[0].mxu0
      %v8416 = vpop.f32.mrb[0].mxu0
      %8417 = vdwg.mxu0
      %8418 = vmatprep.subr.bf16.mxu0 0
      %8419 = vmatpush1.bf16.msra.mxu0 %v8226
      %8420 = vmatprep.subr.bf16.mxu0 0
      %8421 = vmatpush1.bf16.msra.mxu0 %v8227
      %8422 = vmatprep.subr.bf16.mxu0 0
      %8423 = vmatpush1.bf16.msra.mxu0 %v8228
      %8424 = vmatprep.subr.bf16.mxu0 0
      %8425 = vmatpush1.bf16.msra.mxu0 %v8229
      %8426 = vmatprep.subr.bf16.mxu0 0
      %8427 = vmatpush1.bf16.msra.mxu0 %v8230
      %8428 = vmatprep.subr.bf16.mxu0 0
      %8429 = vmatpush1.bf16.msra.mxu0 %v8231
      %8430 = vmatprep.subr.bf16.mxu0 0
      %8431 = vmatpush1.bf16.msra.mxu0 %v8232
      %8432 = vmatprep.subr.bf16.mxu0 0
      %8433 = vmatpush1.bf16.msra.mxu0 %v8233
      %8434 = vmatprep.subr.bf16.mxu0 0
      %8435 = vmatpush1.bf16.msra.mxu0 %v8234
      %8436 = vmatprep.subr.bf16.mxu0 0
      %8437 = vmatpush1.bf16.msra.mxu0 %v8235
      %8438 = vmatprep.subr.bf16.mxu0 0
      %8439 = vmatpush1.bf16.msra.mxu0 %v8236
      %8440 = vmatprep.subr.bf16.mxu0 0
      %8441 = vmatpush1.bf16.msra.mxu0 %v8237
      %8442 = vmatprep.subr.bf16.mxu0 0
      %8443 = vmatpush1.bf16.msra.mxu0 %v8238
      %8444 = vmatprep.subr.bf16.mxu0 0
      %8445 = vmatpush1.bf16.msra.mxu0 %v8239
      %8446 = vmatprep.subr.bf16.mxu0 0
      %8447 = vmatpush1.bf16.msra.mxu0 %v8240
      %8448 = vmatprep.subr.bf16.mxu0 0
      %8449 = vmatpush1.bf16.msra.mxu0 %v8241
      %8450 = vmatprep.mubr.bf16.mxu0 %v7746
      %8451 = vmatmul.mubr.bf16.gmra.mrb[0].mxu0 %v7744
      %v8452 = vpop.f32.mrb[0].mxu0
      %v8453 = vadd.f32 %v8413, %v8452
      %v8454 = vpop.f32.mrb[0].mxu0
      %v8455 = vpop.f32.mrb[0].mxu0
      %v8456 = vpop.f32.mrb[0].mxu0
      %8457 = vdwg.mxu0
      %8458 = vmatprep.subr.bf16.mxu0 0
      %8459 = vmatpush1.bf16.msra.mxu0 %v8242
      %8460 = vmatprep.subr.bf16.mxu0 0
      %8461 = vmatpush1.bf16.msra.mxu0 %v8243
      %8462 = vmatprep.subr.bf16.mxu0 0
      %8463 = vmatpush1.bf16.msra.mxu0 %v8244
      %8464 = vmatprep.subr.bf16.mxu0 0
      %8465 = vmatpush1.bf16.msra.mxu0 %v8245
      %8466 = vmatprep.subr.bf16.mxu0 0
      %8467 = vmatpush1.bf16.msra.mxu0 %v8246
      %8468 = vmatprep.subr.bf16.mxu0 0
      %8469 = vmatpush1.bf16.msra.mxu0 %v8247
      %8470 = vmatprep.subr.bf16.mxu0 0
      %8471 = vmatpush1.bf16.msra.mxu0 %v8248
      %8472 = vmatprep.subr.bf16.mxu0 0
      %8473 = vmatpush1.bf16.msra.mxu0 %v8249
      %8474 = vmatprep.subr.bf16.mxu0 0
      %8475 = vmatpush1.bf16.msra.mxu0 %v8250
      %8476 = vmatprep.subr.bf16.mxu0 0
      %8477 = vmatpush1.bf16.msra.mxu0 %v8251
      %8478 = vmatprep.subr.bf16.mxu0 0
      %8479 = vmatpush1.bf16.msra.mxu0 %v8252
      %8480 = vmatprep.subr.bf16.mxu0 0
      %8481 = vmatpush1.bf16.msra.mxu0 %v8253
      %8482 = vmatprep.subr.bf16.mxu0 0
      %8483 = vmatpush1.bf16.msra.mxu0 %v8254
      %8484 = vmatprep.subr.bf16.mxu0 0
      %8485 = vmatpush1.bf16.msra.mxu0 %v8255
      %8486 = vmatprep.subr.bf16.mxu0 0
      %8487 = vmatpush1.bf16.msra.mxu0 %v8256
      %8488 = vmatprep.subr.bf16.mxu0 0
      %8489 = vmatpush1.bf16.msra.mxu0 %v8257
      %8490 = vmatprep.mubr.bf16.mxu0 %v7750
      %8491 = vmatmul.mubr.bf16.gmra.mrb[0].mxu0 %v7748
      %v8492 = vpop.f32.mrb[0].mxu0
      %v8493 = vadd.f32 %v8453, %v8492
      %v8494 = vpop.f32.mrb[0].mxu0
      %v8495 = vpop.f32.mrb[0].mxu0
      %v8496 = vpop.f32.mrb[0].mxu0
      %8497 = vdwg.mxu0
      %8498 = vmatprep.subr.bf16.mxu0 0
      %8499 = vmatpush1.bf16.msra.mxu0 %v8258
      %8500 = vmatprep.subr.bf16.mxu0 0
      %8501 = vmatpush1.bf16.msra.mxu0 %v8259
      %8502 = vmatprep.subr.bf16.mxu0 0
      %8503 = vmatpush1.bf16.msra.mxu0 %v8260
      %8504 = vmatprep.subr.bf16.mxu0 0
      %8505 = vmatpush1.bf16.msra.mxu0 %v8261
      %8506 = vmatprep.subr.bf16.mxu0 0
      %8507 = vmatpush1.bf16.msra.mxu0 %v8262
      %8508 = vmatprep.subr.bf16.mxu0 0
      %8509 = vmatpush1.bf16.msra.mxu0 %v8263
      %8510 = vmatprep.subr.bf16.mxu0 0
      %8511 = vmatpush1.bf16.msra.mxu0 %v8264
      %8512 = vmatprep.subr.bf16.mxu0 0
      %8513 = vmatpush1.bf16.msra.mxu0 %v8265
      %8514 = vmatprep.subr.bf16.mxu0 0
      %8515 = vmatpush1.bf16.msra.mxu0 0
      %8516 = vmatprep.subr.bf16.mxu0 0
      %8517 = vmatpush1.bf16.msra.mxu0 0
      %8518 = vmatprep.subr.bf16.mxu0 0
      %8519 = vmatpush1.bf16.msra.mxu0 0
      %8520 = vmatprep.subr.bf16.mxu0 0
      %8521 = vmatpush1.bf16.msra.mxu0 0
      %8522 = vmatprep.subr.bf16.mxu0 0
      %8523 = vmatpush1.bf16.msra.mxu0 0
      %8524 = vmatprep.subr.bf16.mxu0 0
      %8525 = vmatpush1.bf16.msra.mxu0 0
      %8526 = vmatprep.subr.bf16.mxu0 0
      %8527 = vmatpush1.bf16.msra.mxu0 0
      %8528 = vmatprep.subr.bf16.mxu0 0
      %8529 = vmatpush1.bf16.msra.mxu0 0
      %8530 = vmatprep.mubr.bf16.mxu0 0
      %8531 = vmatmul.mubr.bf16.gmra.mrb[0].mxu0 %v7752
      %v8532 = vpop.f32.mrb[0].mxu0
      %v8533 = vadd.f32 %v8493, %v8532
      %v8534 = vpop.f32.mrb[0].mxu0
      %v8535 = vpop.f32.mrb[0].mxu0
      %v8536 = vpop.f32.mrb[0].mxu0
      %8537 = vdwg.mxu0
      %v8538 = vxor.u32 %v8533, 2147483648
      %v8539 = vmul.f32 %v8538, 1.442695
      %v8540 = vpow.pop %v8539
      %v8541 = vadd.f32 %v8540, 1.0
      %v8542 = vrcp.pop %v8541
      %v8543 = vmul.f32 1.0, %v8542
      %v8544 = vmul.f32 %v8533, %v8543
      %v8545 = vld [vmem:[%s12] sm:$0x1]
      %vm8546 = vcmask 48128
      %v8548 = vsel %vm8546, %v8545, 0
      %v8551 = vsel %vm2654, %v8544, 0
      %8553 = vmatprep.subr.mxu0 0.0
      %8554 = vmatpush1.msra.mxu0 %v8551
      %8555 = vmatprep.subr.mxu0 0.0
      %8556 = vmatpush1.msra.mxu0 0.0
      %8557 = vmatprep.subr.mxu0 0.0
      %8558 = vmatpush1.msra.mxu0 0.0
      %8559 = vmatprep.subr.mxu0 0.0
      %8560 = vmatpush1.msra.mxu0 0.0
      %8561 = vmatprep.subr.mxu0 0.0
      %8562 = vmatpush1.msra.mxu0 0.0
      %8563 = vmatprep.subr.mxu0 0.0
      %8564 = vmatpush1.msra.mxu0 0.0
      %8565 = vmatprep.subr.mxu0 0.0
      %8566 = vmatpush1.msra.mxu0 0.0
      %8567 = vmatprep.subr.mxu0 0.0
      %8568 = vmatpush1.msra.mxu0 0.0
      %8569 = vmatprep.subr.mxu0 0.0
      %8570 = vmatpush1.msra.mxu0 0.0
      %8571 = vmatprep.subr.mxu0 0.0
      %8572 = vmatpush1.msra.mxu0 0.0
      %8573 = vmatprep.subr.mxu0 0.0
      %8574 = vmatpush1.msra.mxu0 0.0
      %8575 = vmatprep.subr.mxu0 0.0
      %8576 = vmatpush1.msra.mxu0 0.0
      %8577 = vmatprep.subr.mxu0 0.0
      %8578 = vmatpush1.msra.mxu0 0.0
      %8579 = vmatprep.subr.mxu0 0.0
      %8580 = vmatpush1.msra.mxu0 0.0
      %8581 = vmatprep.subr.mxu0 0.0
      %8582 = vmatpush1.msra.mxu0 0.0
      %8583 = vmatprep.subr.mxu0 0.0
      %8584 = vmatpush1.msra.mxu0 0.0
      %8585 = vmatprep.subr.mxu0 0.0
      %8586 = vmatpush1.msra.mxu0 0.0
      %8587 = vmatprep.subr.mxu0 0.0
      %8588 = vmatpush1.msra.mxu0 0.0
      %8589 = vmatprep.subr.mxu0 0.0
      %8590 = vmatpush1.msra.mxu0 0.0
      %8591 = vmatprep.subr.mxu0 0.0
      %8592 = vmatpush1.msra.mxu0 0.0
      %8593 = vmatprep.subr.mxu0 0.0
      %8594 = vmatpush1.msra.mxu0 0.0
      %8595 = vmatprep.subr.mxu0 0.0
      %8596 = vmatpush1.msra.mxu0 0.0
      %8597 = vmatprep.subr.mxu0 0.0
      %8598 = vmatpush1.msra.mxu0 0.0
      %8599 = vmatprep.subr.mxu0 0.0
      %8600 = vmatpush1.msra.mxu0 0.0
      %8601 = vmatprep.subr.mxu0 0.0
      %8602 = vmatpush1.msra.mxu0 0.0
      %8603 = vmatprep.subr.mxu0 0.0
      %8604 = vmatpush1.msra.mxu0 0.0
      %8605 = vmatprep.subr.mxu0 0.0
      %8606 = vmatpush1.msra.mxu0 0.0
      %8607 = vmatprep.subr.mxu0 0.0
      %8608 = vmatpush1.msra.mxu0 0.0
      %8609 = vmatprep.subr.mxu0 0.0
      %8610 = vmatpush1.msra.mxu0 0.0
      %8611 = vmatprep.subr.mxu0 0.0
      %8612 = vmatpush1.msra.mxu0 0.0
      %8613 = vmatprep.subr.mxu0 0.0
      %8614 = vmatpush1.msra.mxu0 0.0
      %8615 = vmatprep.subr.mxu0 0.0
      %8616 = vmatpush1.msra.mxu0 0.0
      %8617 = vmatprep.mubr.f32.mxu0 0.0
      %8618 = vmatmul.mubr.f32.gmra.mrb[0].mxu0 %v8548
      %v8619 = vpop.f32.mrb[0].mxu0
      %v8620 = vadd.f32 0.0, %v8619
      %v8621 = vpop.f32.mrb[0].mxu0
      %8622 = vdwg.mxu0
      %v8623 = vld [vmem:[%s8] sm:$0xff]
      %v8624 = vld [vmem:[%s8 + $0x8] sm:$0xff]
      %v8626 = vsel %vm8546, %v8623, 0
      %v8629 = vsel %vm8546, %v8624, 0
      %8631 = vmatprep.subr.mxu0 0.0
      %8632 = vmatpush1.msra.mxu0 %v8551
      %8633 = vmatprep.subr.mxu0 0.0
      %8634 = vmatpush1.msra.mxu0 0.0
      %8635 = vmatprep.subr.mxu0 0.0
      %8636 = vmatpush1.msra.mxu0 0.0
      %8637 = vmatprep.subr.mxu0 0.0
      %8638 = vmatpush1.msra.mxu0 0.0
      %8639 = vmatprep.subr.mxu0 0.0
      %8640 = vmatpush1.msra.mxu0 0.0
      %8641 = vmatprep.subr.mxu0 0.0
      %8642 = vmatpush1.msra.mxu0 0.0
      %8643 = vmatprep.subr.mxu0 0.0
      %8644 = vmatpush1.msra.mxu0 0.0
      %8645 = vmatprep.subr.mxu0 0.0
      %8646 = vmatpush1.msra.mxu0 0.0
      %8647 = vmatprep.subr.mxu0 0.0
      %8648 = vmatpush1.msra.mxu0 0.0
      %8649 = vmatprep.subr.mxu0 0.0
      %8650 = vmatpush1.msra.mxu0 0.0
      %8651 = vmatprep.subr.mxu0 0.0
      %8652 = vmatpush1.msra.mxu0 0.0
      %8653 = vmatprep.subr.mxu0 0.0
      %8654 = vmatpush1.msra.mxu0 0.0
      %8655 = vmatprep.subr.mxu0 0.0
      %8656 = vmatpush1.msra.mxu0 0.0
      %8657 = vmatprep.subr.mxu0 0.0
      %8658 = vmatpush1.msra.mxu0 0.0
      %8659 = vmatprep.subr.mxu0 0.0
      %8660 = vmatpush1.msra.mxu0 0.0
      %8661 = vmatprep.subr.mxu0 0.0
      %8662 = vmatpush1.msra.mxu0 0.0
      %8663 = vmatprep.subr.mxu0 0.0
      %8664 = vmatpush1.msra.mxu0 0.0
      %8665 = vmatprep.subr.mxu0 0.0
      %8666 = vmatpush1.msra.mxu0 0.0
      %8667 = vmatprep.subr.mxu0 0.0
      %8668 = vmatpush1.msra.mxu0 0.0
      %8669 = vmatprep.subr.mxu0 0.0
      %8670 = vmatpush1.msra.mxu0 0.0
      %8671 = vmatprep.subr.mxu0 0.0
      %8672 = vmatpush1.msra.mxu0 0.0
      %8673 = vmatprep.subr.mxu0 0.0
      %8674 = vmatpush1.msra.mxu0 0.0
      %8675 = vmatprep.subr.mxu0 0.0
      %8676 = vmatpush1.msra.mxu0 0.0
      %8677 = vmatprep.subr.mxu0 0.0
      %8678 = vmatpush1.msra.mxu0 0.0
      %8679 = vmatprep.subr.mxu0 0.0
      %8680 = vmatpush1.msra.mxu0 0.0
      %8681 = vmatprep.subr.mxu0 0.0
      %8682 = vmatpush1.msra.mxu0 0.0
      %8683 = vmatprep.subr.mxu0 0.0
      %8684 = vmatpush1.msra.mxu0 0.0
      %8685 = vmatprep.subr.mxu0 0.0
      %8686 = vmatpush1.msra.mxu0 0.0
      %8687 = vmatprep.subr.mxu0 0.0
      %8688 = vmatpush1.msra.mxu0 0.0
      %8689 = vmatprep.subr.mxu0 0.0
      %8690 = vmatpush1.msra.mxu0 0.0
      %8691 = vmatprep.subr.mxu0 0.0
      %8692 = vmatpush1.msra.mxu0 0.0
      %8693 = vmatprep.subr.mxu0 0.0
      %8694 = vmatpush1.msra.mxu0 0.0
      %8695 = vmatprep.mubr.f32.mxu0 0.0
      %8696 = vmatmul.mubr.f32.gmra.mrb[0].mxu0 %v8626
      %v8697 = vpop.f32.mrb[0].mxu0
      %v8698 = vadd.f32 0.0, %v8697
      %v8699 = vpop.f32.mrb[0].mxu0
      %8700 = vmatprep.mubr.f32.mxu0 0.0
      %8701 = vmatmul.mubr.f32.gmra.mrb[0].mxu0 %v8629
      %v8702 = vpop.f32.mrb[0].mxu0
      %v8703 = vadd.f32 0.0, %v8702
      %v8704 = vpop.f32.mrb[0].mxu0
      %8705 = vdwg.mxu0
      %8706 = vst [vmem:[#allocation7] sm:$0xff] %v8698
      %8707 = vst [vmem:[#allocation7 + $0x8] sm:$0xff] %v8703
      %v8708 = vld [vmem:[#allocation7] sm:$0x3f]
      %v8709 = vpack.c.bf16 %v8708, %v8708
      %v8710 = vld [vmem:[#allocation7 + $0x1] sm:$0x3f]
      %v8711 = vpack.c.bf16 %v8710, %v8710
      %v8712 = vld [vmem:[#allocation7 + $0x2] sm:$0x3f]
      %v8713 = vpack.c.bf16 %v8712, %v8712
      %v8714 = vld [vmem:[#allocation7 + $0x4] sm:$0x3f]
      %v8715 = vpack.c.bf16 %v8714, %v8714
      %v8716 = vld [vmem:[#allocation7 + $0x5] sm:$0x3f]
      %v8717 = vpack.c.bf16 %v8716, %v8716
      %v8718 = vld [vmem:[#allocation7 + $0x6] sm:$0x3f]
      %v8719 = vpack.c.bf16 %v8718, %v8718
      %v8720 = vld [vmem:[#allocation7 + $0x8] sm:$0x3f]
      %v8721 = vpack.c.bf16 %v8720, %v8720
      %v8722 = vld [vmem:[#allocation7 + $0x9] sm:$0x3f]
      %v8723 = vpack.c.bf16 %v8722, %v8722
      %v8724 = vld [vmem:[#allocation7 + $0xa] sm:$0x3f]
      %v8725 = vpack.c.bf16 %v8724, %v8724
      %s8726 = scalar_lea.vmem %s1, 3456
      %v8727 = vld [vmem:[%s8726] sm:$0xf]
      %v8728 = vld [vmem:[%s8726 + $0x4] sm:$0xf]
      %v8729 = vld [vmem:[%s8726 + $0x8] sm:$0xf]
      %v8730 = vld [vmem:[%s8726 + $0xc] sm:$0xf]
      %v8731 = vld [vmem:[%s8726 + $0x10] sm:$0xf]
      %v8732 = vld [vmem:[%s8726 + $0x14] sm:$0xf]
      %v8733 = vld [vmem:[%s8726 + $0x18] sm:$0xf]
      %v8734 = vld [vmem:[%s8726 + $0x1c] sm:$0xf]
      %v8735 = vld [vmem:[%s8726 + $0x20] sm:$0xf]
      %v8736 = vld [vmem:[%s8726 + $0x24] sm:$0xf]
      %v8737 = vld [vmem:[%s8726 + $0x28] sm:$0xf]
      %v8738 = vld [vmem:[%s8726 + $0x2c] sm:$0xf]
      %v8739 = vld [vmem:[%s8726 + $0x30] sm:$0xf]
      %v8740 = vld [vmem:[%s8726 + $0x34] sm:$0xf]
      %v8741 = vld [vmem:[%s8726 + $0x38] sm:$0xf]
      %v8742 = vld [vmem:[%s8726 + $0x3c] sm:$0xf]
      %v8743 = vld [vmem:[%s8726 + $0x40] sm:$0xf]
      %v8744 = vld [vmem:[%s8726 + $0x44] sm:$0xf]
      %v8745 = vld [vmem:[%s8726 + $0x48] sm:$0xf]
      %v8746 = vld [vmem:[%s8726 + $0x4c] sm:$0xf]
      %v8747 = vld [vmem:[%s8726 + $0x50] sm:$0xf]
      %v8748 = vld [vmem:[%s8726 + $0x54] sm:$0xf]
      %v8749 = vld [vmem:[%s8726 + $0x58] sm:$0xf]
      %v8750 = vld [vmem:[%s8726 + $0x5c] sm:$0xf]
      %v8751 = vld [vmem:[%s8726 + $0x60] sm:$0xf]
      %v8752 = vld [vmem:[%s8726 + $0x64] sm:$0xf]
      %v8753 = vld [vmem:[%s8726 + $0x68] sm:$0xf]
      %v8754 = vld [vmem:[%s8726 + $0x6c] sm:$0xf]
      %v8755 = vld [vmem:[%s8726 + $0x70] sm:$0xf]
      %v8756 = vld [vmem:[%s8726 + $0x74] sm:$0xf]
      %v8757 = vld [vmem:[%s8726 + $0x78] sm:$0xf]
      %v8758 = vld [vmem:[%s8726 + $0x7c] sm:$0xf]
      %v8759 = vld [vmem:[%s8726 + $0x80] sm:$0xf]
      %v8760 = vld [vmem:[%s8726 + $0x84] sm:$0xf]
      %v8761 = vld [vmem:[%s8726 + $0x88] sm:$0xf]
      %v8762 = vld [vmem:[%s8726 + $0x8c] sm:$0xf]
      %v8763 = vld [vmem:[%s8726 + $0x90] sm:$0xf]
      %v8764 = vld [vmem:[%s8726 + $0x94] sm:$0xf]
      %v8765 = vld [vmem:[%s8726 + $0x98] sm:$0xf]
      %v8766 = vld [vmem:[%s8726 + $0x9c] sm:$0xf]
      %v8767 = vld [vmem:[%s8726 + $0xa0] sm:$0xf]
      %v8768 = vld [vmem:[%s8726 + $0xa4] sm:$0xf]
      %v8769 = vld [vmem:[%s8726 + $0xa8] sm:$0xf]
      %v8770 = vld [vmem:[%s8726 + $0xac] sm:$0xf]
      %v8771 = vld [vmem:[%s8726 + $0xb0] sm:$0xf]
      %v8772 = vld [vmem:[%s8726 + $0xb4] sm:$0xf]
      %v8773 = vld [vmem:[%s8726 + $0xb8] sm:$0xf]
      %v8774 = vld [vmem:[%s8726 + $0xbc] sm:$0xf]
      %v8775 = vld [vmem:[%s8726 + $0xc0] sm:$0xf]
      %v8776 = vld [vmem:[%s8726 + $0xc4] sm:$0xf]
      %v8777 = vld [vmem:[%s8726 + $0xc8] sm:$0xf]
      %v8778 = vld [vmem:[%s8726 + $0xcc] sm:$0xf]
      %v8779 = vld [vmem:[%s8726 + $0xd0] sm:$0xf]
      %v8780 = vld [vmem:[%s8726 + $0xd4] sm:$0xf]
      %v8781 = vld [vmem:[%s8726 + $0xd8] sm:$0xf]
      %v8782 = vld [vmem:[%s8726 + $0xdc] sm:$0xf]
      %v8783 = vld [vmem:[%s8726 + $0xe0] sm:$0xf]
      %v8784 = vld [vmem:[%s8726 + $0xe4] sm:$0xf]
      %v8785 = vld [vmem:[%s8726 + $0xe8] sm:$0xf]
      %v8786 = vld [vmem:[%s8726 + $0xec] sm:$0xf]
      %v8787 = vld [vmem:[%s8726 + $0xf0] sm:$0xf]
      %v8788 = vld [vmem:[%s8726 + $0xf4] sm:$0xf]
      %v8789 = vld [vmem:[%s8726 + $0xf8] sm:$0xf]
      %v8790 = vld [vmem:[%s8726 + $0xfc] sm:$0xf]
      %v8791 = vld [vmem:[%s8726 + $0x100] sm:$0xf]
      %v8792 = vld [vmem:[%s8726 + $0x104] sm:$0xf]
      %v8793 = vld [vmem:[%s8726 + $0x108] sm:$0xf]
      %v8794 = vld [vmem:[%s8726 + $0x10c] sm:$0xf]
      %v8795 = vld [vmem:[%s8726 + $0x110] sm:$0xf]
      %v8796 = vld [vmem:[%s8726 + $0x114] sm:$0xf]
      %v8797 = vld [vmem:[%s8726 + $0x118] sm:$0xf]
      %v8798 = vld [vmem:[%s8726 + $0x11c] sm:$0xf]
      %v8799 = vld [vmem:[%s8726 + $0x120] sm:$0xf]
      %v8800 = vld [vmem:[%s8726 + $0x124] sm:$0xf]
      %v8801 = vld [vmem:[%s8726 + $0x128] sm:$0xf]
      %v8802 = vld [vmem:[%s8726 + $0x12c] sm:$0xf]
      %v8803 = vld [vmem:[%s8726 + $0x130] sm:$0xf]
      %v8804 = vld [vmem:[%s8726 + $0x134] sm:$0xf]
      %v8805 = vld [vmem:[%s8726 + $0x138] sm:$0xf]
      %v8806 = vld [vmem:[%s8726 + $0x13c] sm:$0xf]
      %v8807 = vld [vmem:[%s8726 + $0x140] sm:$0xf]
      %v8808 = vld [vmem:[%s8726 + $0x144] sm:$0xf]
      %v8809 = vld [vmem:[%s8726 + $0x148] sm:$0xf]
      %v8810 = vld [vmem:[%s8726 + $0x14c] sm:$0xf]
      %v8811 = vld [vmem:[%s8726 + $0x150] sm:$0xf]
      %v8812 = vld [vmem:[%s8726 + $0x154] sm:$0xf]
      %v8813 = vld [vmem:[%s8726 + $0x158] sm:$0xf]
      %v8814 = vld [vmem:[%s8726 + $0x15c] sm:$0xf]
      %v8815 = vld [vmem:[%s8726 + $0x160] sm:$0xf]
      %v8816 = vld [vmem:[%s8726 + $0x164] sm:$0xf]
      %v8817 = vld [vmem:[%s8726 + $0x168] sm:$0xf]
      %v8818 = vld [vmem:[%s8726 + $0x16c] sm:$0xf]
      %v8819 = vld [vmem:[%s8726 + $0x170] sm:$0xf]
      %v8820 = vld [vmem:[%s8726 + $0x174] sm:$0xf]
      %v8821 = vld [vmem:[%s8726 + $0x178] sm:$0xf]
      %v8822 = vld [vmem:[%s8726 + $0x17c] sm:$0xf]
      %v8823 = vld [vmem:[%s8726 + $0x180] sm:$0xf]
      %v8824 = vld [vmem:[%s8726 + $0x184] sm:$0xf]
      %v8825 = vld [vmem:[%s8726 + $0x188] sm:$0xf]
      %v8826 = vld [vmem:[%s8726 + $0x18c] sm:$0xf]
      %v8827 = vld [vmem:[%s8726 + $0x190] sm:$0xf]
      %v8828 = vld [vmem:[%s8726 + $0x194] sm:$0xf]
      %v8829 = vld [vmem:[%s8726 + $0x198] sm:$0xf]
      %v8830 = vld [vmem:[%s8726 + $0x19c] sm:$0xf]
      %v8831 = vld [vmem:[%s8726 + $0x1a0] sm:$0xf]
      %v8832 = vld [vmem:[%s8726 + $0x1a4] sm:$0xf]
      %v8833 = vld [vmem:[%s8726 + $0x1a8] sm:$0xf]
      %v8834 = vld [vmem:[%s8726 + $0x1ac] sm:$0xf]
      %v8835 = vld [vmem:[%s8726 + $0x1b0] sm:$0xf]
      %v8836 = vld [vmem:[%s8726 + $0x1b4] sm:$0xf]
      %v8837 = vld [vmem:[%s8726 + $0x1b8] sm:$0xf]
      %v8838 = vld [vmem:[%s8726 + $0x1bc] sm:$0xf]
      %v8839 = vld [vmem:[%s8726 + $0x1c0] sm:$0xf]
      %v8840 = vld [vmem:[%s8726 + $0x1c4] sm:$0xf]
      %v8841 = vld [vmem:[%s8726 + $0x1c8] sm:$0xf]
      %v8842 = vld [vmem:[%s8726 + $0x1cc] sm:$0xf]
      %v8843 = vld [vmem:[%s8726 + $0x1d0] sm:$0xf]
      %v8844 = vld [vmem:[%s8726 + $0x1d4] sm:$0xf]
      %v8845 = vld [vmem:[%s8726 + $0x1d8] sm:$0xf]
      %v8846 = vld [vmem:[%s8726 + $0x1dc] sm:$0xf]
      %v8847 = vld [vmem:[%s8726 + $0x1e0] sm:$0xf]
      %v8848 = vld [vmem:[%s8726 + $0x1e4] sm:$0xf]
      %v8849 = vld [vmem:[%s8726 + $0x1e8] sm:$0xf]
      %v8850 = vld [vmem:[%s8726 + $0x1ec] sm:$0xf]
      %v8851 = vld [vmem:[%s8726 + $0x1f0] sm:$0xf]
      %v8852 = vld [vmem:[%s8726 + $0x1f4] sm:$0xf]
      %v8853 = vld [vmem:[%s8726 + $0x1f8] sm:$0xf]
      %v8854 = vld [vmem:[%s8726 + $0x1fc] sm:$0xf]
      %v8855 = vld [vmem:[%s8726 + $0x200] sm:$0xf]
      %v8856 = vld [vmem:[%s8726 + $0x204] sm:$0xf]
      %v8857 = vld [vmem:[%s8726 + $0x208] sm:$0xf]
      %v8858 = vld [vmem:[%s8726 + $0x20c] sm:$0xf]
      %v8859 = vld [vmem:[%s8726 + $0x210] sm:$0xf]
      %v8860 = vld [vmem:[%s8726 + $0x214] sm:$0xf]
      %v8861 = vld [vmem:[%s8726 + $0x218] sm:$0xf]
      %v8862 = vld [vmem:[%s8726 + $0x21c] sm:$0xf]
      %v8863 = vld [vmem:[%s8726 + $0x220] sm:$0xf]
      %v8864 = vld [vmem:[%s8726 + $0x224] sm:$0xf]
      %v8865 = vld [vmem:[%s8726 + $0x228] sm:$0xf]
      %v8866 = vld [vmem:[%s8726 + $0x22c] sm:$0xf]
      %v8867 = vld [vmem:[%s8726 + $0x230] sm:$0xf]
      %v8868 = vld [vmem:[%s8726 + $0x234] sm:$0xf]
      %v8869 = vld [vmem:[%s8726 + $0x238] sm:$0xf]
      %v8870 = vld [vmem:[%s8726 + $0x23c] sm:$0xf]
      %s8871 = scalar_lea.vmem %s2, 6
      %v8872 = vld [vmem:[%s8871] sm:$0x1]
      %v8874 = vlaneseq
      %v8875 = vshrl.u32 %v8874, 7
      %v8876 = vsub.s32 0, %v8875
      %v8877 = vrot.slane %v8872, %v8876
      %v9023 = vunpack.c.l.b16 %v8727
      %v9024 = vunpack.c.l.b16 %v8728
      %v9025 = vunpack.c.l.b16 %v8729
      %v9026 = vunpack.c.l.b16 %v8730
      %v9027 = vunpack.c.l.b16 %v8731
      %v9028 = vunpack.c.l.b16 %v8732
      %v9029 = vunpack.c.l.b16 %v8733
      %v9030 = vunpack.c.l.b16 %v8734
      %v9031 = vunpack.c.l.b16 %v8735
      %v9032 = vunpack.c.l.b16 %v8736
      %v9033 = vunpack.c.l.b16 %v8737
      %v9034 = vunpack.c.l.b16 %v8738
      %v9035 = vunpack.c.l.b16 %v8739
      %v9036 = vunpack.c.l.b16 %v8740
      %v9037 = vunpack.c.l.b16 %v8741
      %v9038 = vunpack.c.l.b16 %v8742
      %v9039 = vunpack.c.l.b16 %v8743
      %v9040 = vunpack.c.l.b16 %v8744
      %v9041 = vunpack.c.l.b16 %v8745
      %v9042 = vunpack.c.l.b16 %v8746
      %v9043 = vunpack.c.l.b16 %v8747
      %v9044 = vunpack.c.l.b16 %v8748
      %v9045 = vunpack.c.l.b16 %v8749
      %v9046 = vunpack.c.l.b16 %v8750
      %v9047 = vunpack.c.l.b16 %v8751
      %v9048 = vunpack.c.l.b16 %v8752
      %v9049 = vunpack.c.l.b16 %v8753
      %v9050 = vunpack.c.l.b16 %v8754
      %v9051 = vunpack.c.l.b16 %v8755
      %v9052 = vunpack.c.l.b16 %v8756
      %v9053 = vunpack.c.l.b16 %v8757
      %v9054 = vunpack.c.l.b16 %v8758
      %v9055 = vunpack.c.l.b16 %v8759
      %v9056 = vunpack.c.l.b16 %v8760
      %v9057 = vunpack.c.l.b16 %v8761
      %v9058 = vunpack.c.l.b16 %v8762
      %v9059 = vunpack.c.l.b16 %v8763
      %v9060 = vunpack.c.l.b16 %v8764
      %v9061 = vunpack.c.l.b16 %v8765
      %v9062 = vunpack.c.l.b16 %v8766
      %v9063 = vunpack.c.l.b16 %v8767
      %v9064 = vunpack.c.l.b16 %v8768
      %v9065 = vunpack.c.l.b16 %v8769
      %v9066 = vunpack.c.l.b16 %v8770
      %v9067 = vunpack.c.l.b16 %v8771
      %v9068 = vunpack.c.l.b16 %v8772
      %v9069 = vunpack.c.l.b16 %v8773
      %v9070 = vunpack.c.l.b16 %v8774
      %v9071 = vunpack.c.l.b16 %v8775
      %v9072 = vunpack.c.l.b16 %v8776
      %v9073 = vunpack.c.l.b16 %v8777
      %v9074 = vunpack.c.l.b16 %v8778
      %v9075 = vunpack.c.l.b16 %v8779
      %v9076 = vunpack.c.l.b16 %v8780
      %v9077 = vunpack.c.l.b16 %v8781
      %v9078 = vunpack.c.l.b16 %v8782
      %v9079 = vunpack.c.l.b16 %v8783
      %v9080 = vunpack.c.l.b16 %v8784
      %v9081 = vunpack.c.l.b16 %v8785
      %v9082 = vunpack.c.l.b16 %v8786
      %v9083 = vunpack.c.l.b16 %v8787
      %v9084 = vunpack.c.l.b16 %v8788
      %v9085 = vunpack.c.l.b16 %v8789
      %v9086 = vunpack.c.l.b16 %v8790
      %v9087 = vunpack.c.l.b16 %v8791
      %v9088 = vunpack.c.l.b16 %v8792
      %v9089 = vunpack.c.l.b16 %v8793
      %v9090 = vunpack.c.l.b16 %v8794
      %v9091 = vunpack.c.l.b16 %v8795
      %v9092 = vunpack.c.l.b16 %v8796
      %v9093 = vunpack.c.l.b16 %v8797
      %v9094 = vunpack.c.l.b16 %v8798
      %v9095 = vunpack.c.l.b16 %v8799
      %v9096 = vunpack.c.l.b16 %v8800
      %v9097 = vunpack.c.l.b16 %v8801
      %v9098 = vunpack.c.l.b16 %v8802
      %v9099 = vunpack.c.l.b16 %v8803
      %v9100 = vunpack.c.l.b16 %v8804
      %v9101 = vunpack.c.l.b16 %v8805
      %v9102 = vunpack.c.l.b16 %v8806
      %v9103 = vunpack.c.l.b16 %v8807
      %v9104 = vunpack.c.l.b16 %v8808
      %v9105 = vunpack.c.l.b16 %v8809
      %v9106 = vunpack.c.l.b16 %v8810
      %v9107 = vunpack.c.l.b16 %v8811
      %v9108 = vunpack.c.l.b16 %v8812
      %v9109 = vunpack.c.l.b16 %v8813
      %v9110 = vunpack.c.l.b16 %v8814
      %v9111 = vunpack.c.l.b16 %v8815
      %v9112 = vunpack.c.l.b16 %v8816
      %v9113 = vunpack.c.l.b16 %v8817
      %v9114 = vunpack.c.l.b16 %v8818
      %v9115 = vunpack.c.l.b16 %v8819
      %v9116 = vunpack.c.l.b16 %v8820
      %v9117 = vunpack.c.l.b16 %v8821
      %v9118 = vunpack.c.l.b16 %v8822
      %v9119 = vunpack.c.l.b16 %v8823
      %v9120 = vunpack.c.l.b16 %v8824
      %v9121 = vunpack.c.l.b16 %v8825
      %v9122 = vunpack.c.l.b16 %v8826
      %v9123 = vunpack.c.l.b16 %v8827
      %v9124 = vunpack.c.l.b16 %v8828
      %v9125 = vunpack.c.l.b16 %v8829
      %v9126 = vunpack.c.l.b16 %v8830
      %v9127 = vunpack.c.l.b16 %v8831
      %v9128 = vunpack.c.l.b16 %v8832
      %v9129 = vunpack.c.l.b16 %v8833
      %v9130 = vunpack.c.l.b16 %v8834
      %v9131 = vunpack.c.l.b16 %v8835
      %v9132 = vunpack.c.l.b16 %v8836
      %v9133 = vunpack.c.l.b16 %v8837
      %v9134 = vunpack.c.l.b16 %v8838
      %v9135 = vunpack.c.l.b16 %v8839
      %v9136 = vunpack.c.l.b16 %v8840
      %v9137 = vunpack.c.l.b16 %v8841
      %v9138 = vunpack.c.l.b16 %v8842
      %v9139 = vunpack.c.l.b16 %v8843
      %v9140 = vunpack.c.l.b16 %v8844
      %v9141 = vunpack.c.l.b16 %v8845
      %v9142 = vunpack.c.l.b16 %v8846
      %v9143 = vunpack.c.l.b16 %v8847
      %v9144 = vunpack.c.l.b16 %v8848
      %v9145 = vunpack.c.l.b16 %v8849
      %v9146 = vunpack.c.l.b16 %v8850
      %v9147 = vunpack.c.l.b16 %v8851
      %v9148 = vunpack.c.l.b16 %v8852
      %v9149 = vunpack.c.l.b16 %v8853
      %v9150 = vunpack.c.l.b16 %v8854
      %v9151 = vunpack.c.l.b16 %v8855
      %v9152 = vunpack.c.l.b16 %v8856
      %v9153 = vunpack.c.l.b16 %v8857
      %v9154 = vunpack.c.l.b16 %v8858
      %v9155 = vunpack.c.l.b16 %v8859
      %v9156 = vunpack.c.l.b16 %v8860
      %v9157 = vunpack.c.l.b16 %v8861
      %v9158 = vunpack.c.l.b16 %v8862
      %v9159 = vunpack.c.l.b16 %v8863
      %v9160 = vunpack.c.l.b16 %v8864
      %v9161 = vunpack.c.l.b16 %v8865
      %v9162 = vunpack.c.l.b16 %v8866
      %v9163 = vunpack.c.l.b16 %v8867
      %v9164 = vunpack.c.l.b16 %v8868
      %v9165 = vunpack.c.l.b16 %v8869
      %v9166 = vunpack.c.l.b16 %v8870
      %v9167 = vpack.c.b16 %v9024, %v9023
      %v9168 = vpack.c.b16 %v9026, %v9025
      %v9169 = vpack.c.b16 %v9028, %v9027
      %v9170 = vpack.c.b16 %v9030, %v9029
      %v9171 = vpack.c.b16 %v9032, %v9031
      %v9172 = vpack.c.b16 %v9034, %v9033
      %v9173 = vpack.c.b16 %v9036, %v9035
      %v9174 = vpack.c.b16 %v9038, %v9037
      %v9175 = vpack.c.b16 %v9040, %v9039
      %v9176 = vpack.c.b16 %v9042, %v9041
      %v9177 = vpack.c.b16 %v9044, %v9043
      %v9178 = vpack.c.b16 %v9046, %v9045
      %v9179 = vpack.c.b16 %v9048, %v9047
      %v9180 = vpack.c.b16 %v9050, %v9049
      %v9181 = vpack.c.b16 %v9052, %v9051
      %v9182 = vpack.c.b16 %v9054, %v9053
      %v9183 = vpack.c.b16 %v9056, %v9055
      %v9184 = vpack.c.b16 %v9058, %v9057
      %v9185 = vpack.c.b16 %v9060, %v9059
      %v9186 = vpack.c.b16 %v9062, %v9061
      %v9187 = vpack.c.b16 %v9064, %v9063
      %v9188 = vpack.c.b16 %v9066, %v9065
      %v9189 = vpack.c.b16 %v9068, %v9067
      %v9190 = vpack.c.b16 %v9070, %v9069
      %v9191 = vpack.c.b16 %v9072, %v9071
      %v9192 = vpack.c.b16 %v9074, %v9073
      %v9193 = vpack.c.b16 %v9076, %v9075
      %v9194 = vpack.c.b16 %v9078, %v9077
      %v9195 = vpack.c.b16 %v9080, %v9079
      %v9196 = vpack.c.b16 %v9082, %v9081
      %v9197 = vpack.c.b16 %v9084, %v9083
      %v9198 = vpack.c.b16 %v9086, %v9085
      %v9199 = vpack.c.b16 %v9088, %v9087
      %v9200 = vpack.c.b16 %v9090, %v9089
      %v9201 = vpack.c.b16 %v9092, %v9091
      %v9202 = vpack.c.b16 %v9094, %v9093
      %v9203 = vpack.c.b16 %v9096, %v9095
      %v9204 = vpack.c.b16 %v9098, %v9097
      %v9205 = vpack.c.b16 %v9100, %v9099
      %v9206 = vpack.c.b16 %v9102, %v9101
      %v9207 = vpack.c.b16 %v9104, %v9103
      %v9208 = vpack.c.b16 %v9106, %v9105
      %v9209 = vpack.c.b16 %v9108, %v9107
      %v9210 = vpack.c.b16 %v9110, %v9109
      %v9211 = vpack.c.b16 %v9112, %v9111
      %v9212 = vpack.c.b16 %v9114, %v9113
      %v9213 = vpack.c.b16 %v9116, %v9115
      %v9214 = vpack.c.b16 %v9118, %v9117
      %v9215 = vpack.c.b16 %v9120, %v9119
      %v9216 = vpack.c.b16 %v9122, %v9121
      %v9217 = vpack.c.b16 %v9124, %v9123
      %v9218 = vpack.c.b16 %v9126, %v9125
      %v9219 = vpack.c.b16 %v9128, %v9127
      %v9220 = vpack.c.b16 %v9130, %v9129
      %v9221 = vpack.c.b16 %v9132, %v9131
      %v9222 = vpack.c.b16 %v9134, %v9133
      %v9223 = vpack.c.b16 %v9136, %v9135
      %v9224 = vpack.c.b16 %v9138, %v9137
      %v9225 = vpack.c.b16 %v9140, %v9139
      %v9226 = vpack.c.b16 %v9142, %v9141
      %v9227 = vpack.c.b16 %v9144, %v9143
      %v9228 = vpack.c.b16 %v9146, %v9145
      %v9229 = vpack.c.b16 %v9148, %v9147
      %v9230 = vpack.c.b16 %v9150, %v9149
      %v9231 = vpack.c.b16 %v9152, %v9151
      %v9232 = vpack.c.b16 %v9154, %v9153
      %v9233 = vpack.c.b16 %v9156, %v9155
      %v9234 = vpack.c.b16 %v9158, %v9157
      %v9235 = vpack.c.b16 %v9160, %v9159
      %v9236 = vpack.c.b16 %v9162, %v9161
      %v9237 = vpack.c.b16 %v9164, %v9163
      %v9238 = vpack.c.b16 %v9166, %v9165
      %9311 = vmatprep.subr.bf16.mxu0 0
      %9312 = vmatpush1.bf16.msra.mxu0 %v9167
      %9313 = vmatprep.subr.bf16.mxu0 0
      %9314 = vmatpush1.bf16.msra.mxu0 %v9168
      %9315 = vmatprep.subr.bf16.mxu0 0
      %9316 = vmatpush1.bf16.msra.mxu0 %v9169
      %9317 = vmatprep.subr.bf16.mxu0 0
      %9318 = vmatpush1.bf16.msra.mxu0 %v9170
      %9319 = vmatprep.subr.bf16.mxu0 0
      %9320 = vmatpush1.bf16.msra.mxu0 %v9171
      %9321 = vmatprep.subr.bf16.mxu0 0
      %9322 = vmatpush1.bf16.msra.mxu0 %v9172
      %9323 = vmatprep.subr.bf16.mxu0 0
      %9324 = vmatpush1.bf16.msra.mxu0 %v9173
      %9325 = vmatprep.subr.bf16.mxu0 0
      %9326 = vmatpush1.bf16.msra.mxu0 %v9174
      %9327 = vmatprep.subr.bf16.mxu0 0
      %9328 = vmatpush1.bf16.msra.mxu0 %v9175
      %9329 = vmatprep.subr.bf16.mxu0 0
      %9330 = vmatpush1.bf16.msra.mxu0 %v9176
      %9331 = vmatprep.subr.bf16.mxu0 0
      %9332 = vmatpush1.bf16.msra.mxu0 %v9177
      %9333 = vmatprep.subr.bf16.mxu0 0
      %9334 = vmatpush1.bf16.msra.mxu0 %v9178
      %9335 = vmatprep.subr.bf16.mxu0 0
      %9336 = vmatpush1.bf16.msra.mxu0 %v9179
      %9337 = vmatprep.subr.bf16.mxu0 0
      %9338 = vmatpush1.bf16.msra.mxu0 %v9180
      %9339 = vmatprep.subr.bf16.mxu0 0
      %9340 = vmatpush1.bf16.msra.mxu0 %v9181
      %9341 = vmatprep.subr.bf16.mxu0 0
      %9342 = vmatpush1.bf16.msra.mxu0 %v9182
      %9343 = vmatprep.mubr.bf16.mxu0 %v8711
      %9344 = vmatmul.mubr.bf16.gmra.mrb[0].mxu0 %v8709
      %v9345 = vpop.f32.mrb[0].mxu0
      %v9346 = vadd.f32 %v8877, %v9345
      %v9347 = vpop.f32.mrb[0].mxu0
      %v9348 = vpop.f32.mrb[0].mxu0
      %v9349 = vpop.f32.mrb[0].mxu0
      %9350 = vdwg.mxu0
      %9351 = vmatprep.subr.bf16.mxu0 0
      %9352 = vmatpush1.bf16.msra.mxu0 %v9183
      %9353 = vmatprep.subr.bf16.mxu0 0
      %9354 = vmatpush1.bf16.msra.mxu0 %v9184
      %9355 = vmatprep.subr.bf16.mxu0 0
      %9356 = vmatpush1.bf16.msra.mxu0 %v9185
      %9357 = vmatprep.subr.bf16.mxu0 0
      %9358 = vmatpush1.bf16.msra.mxu0 %v9186
      %9359 = vmatprep.subr.bf16.mxu0 0
      %9360 = vmatpush1.bf16.msra.mxu0 %v9187
      %9361 = vmatprep.subr.bf16.mxu0 0
      %9362 = vmatpush1.bf16.msra.mxu0 %v9188
      %9363 = vmatprep.subr.bf16.mxu0 0
      %9364 = vmatpush1.bf16.msra.mxu0 %v9189
      %9365 = vmatprep.subr.bf16.mxu0 0
      %9366 = vmatpush1.bf16.msra.mxu0 %v9190
      %9367 = vmatprep.subr.bf16.mxu0 0
      %9368 = vmatpush1.bf16.msra.mxu0 %v9191
      %9369 = vmatprep.subr.bf16.mxu0 0
      %9370 = vmatpush1.bf16.msra.mxu0 %v9192
      %9371 = vmatprep.subr.bf16.mxu0 0
      %9372 = vmatpush1.bf16.msra.mxu0 %v9193
      %9373 = vmatprep.subr.bf16.mxu0 0
      %9374 = vmatpush1.bf16.msra.mxu0 %v9194
      %9375 = vmatprep.subr.bf16.mxu0 0
      %9376 = vmatpush1.bf16.msra.mxu0 %v9195
      %9377 = vmatprep.subr.bf16.mxu0 0
      %9378 = vmatpush1.bf16.msra.mxu0 %v9196
      %9379 = vmatprep.subr.bf16.mxu0 0
      %9380 = vmatpush1.bf16.msra.mxu0 %v9197
      %9381 = vmatprep.subr.bf16.mxu0 0
      %9382 = vmatpush1.bf16.msra.mxu0 %v9198
      %9383 = vmatprep.mubr.bf16.mxu0 %v8715
      %9384 = vmatmul.mubr.bf16.gmra.mrb[0].mxu0 %v8713
      %v9385 = vpop.f32.mrb[0].mxu0
      %v9386 = vadd.f32 %v9346, %v9385
      %v9387 = vpop.f32.mrb[0].mxu0
      %v9388 = vpop.f32.mrb[0].mxu0
      %v9389 = vpop.f32.mrb[0].mxu0
      %9390 = vdwg.mxu0
      %9391 = vmatprep.subr.bf16.mxu0 0
      %9392 = vmatpush1.bf16.msra.mxu0 %v9199
      %9393 = vmatprep.subr.bf16.mxu0 0
      %9394 = vmatpush1.bf16.msra.mxu0 %v9200
      %9395 = vmatprep.subr.bf16.mxu0 0
      %9396 = vmatpush1.bf16.msra.mxu0 %v9201
      %9397 = vmatprep.subr.bf16.mxu0 0
      %9398 = vmatpush1.bf16.msra.mxu0 %v9202
      %9399 = vmatprep.subr.bf16.mxu0 0
      %9400 = vmatpush1.bf16.msra.mxu0 %v9203
      %9401 = vmatprep.subr.bf16.mxu0 0
      %9402 = vmatpush1.bf16.msra.mxu0 %v9204
      %9403 = vmatprep.subr.bf16.mxu0 0
      %9404 = vmatpush1.bf16.msra.mxu0 %v9205
      %9405 = vmatprep.subr.bf16.mxu0 0
      %9406 = vmatpush1.bf16.msra.mxu0 %v9206
      %9407 = vmatprep.subr.bf16.mxu0 0
      %9408 = vmatpush1.bf16.msra.mxu0 %v9207
      %9409 = vmatprep.subr.bf16.mxu0 0
      %9410 = vmatpush1.bf16.msra.mxu0 %v9208
      %9411 = vmatprep.subr.bf16.mxu0 0
      %9412 = vmatpush1.bf16.msra.mxu0 %v9209
      %9413 = vmatprep.subr.bf16.mxu0 0
      %9414 = vmatpush1.bf16.msra.mxu0 %v9210
      %9415 = vmatprep.subr.bf16.mxu0 0
      %9416 = vmatpush1.bf16.msra.mxu0 %v9211
      %9417 = vmatprep.subr.bf16.mxu0 0
      %9418 = vmatpush1.bf16.msra.mxu0 %v9212
      %9419 = vmatprep.subr.bf16.mxu0 0
      %9420 = vmatpush1.bf16.msra.mxu0 %v9213
      %9421 = vmatprep.subr.bf16.mxu0 0
      %9422 = vmatpush1.bf16.msra.mxu0 %v9214
      %9423 = vmatprep.mubr.bf16.mxu0 %v8719
      %9424 = vmatmul.mubr.bf16.gmra.mrb[0].mxu0 %v8717
      %v9425 = vpop.f32.mrb[0].mxu0
      %v9426 = vadd.f32 %v9386, %v9425
      %v9427 = vpop.f32.mrb[0].mxu0
      %v9428 = vpop.f32.mrb[0].mxu0
      %v9429 = vpop.f32.mrb[0].mxu0
      %9430 = vdwg.mxu0
      %9431 = vmatprep.subr.bf16.mxu0 0
      %9432 = vmatpush1.bf16.msra.mxu0 %v9215
      %9433 = vmatprep.subr.bf16.mxu0 0
      %9434 = vmatpush1.bf16.msra.mxu0 %v9216
      %9435 = vmatprep.subr.bf16.mxu0 0
      %9436 = vmatpush1.bf16.msra.mxu0 %v9217
      %9437 = vmatprep.subr.bf16.mxu0 0
      %9438 = vmatpush1.bf16.msra.mxu0 %v9218
      %9439 = vmatprep.subr.bf16.mxu0 0
      %9440 = vmatpush1.bf16.msra.mxu0 %v9219
      %9441 = vmatprep.subr.bf16.mxu0 0
      %9442 = vmatpush1.bf16.msra.mxu0 %v9220
      %9443 = vmatprep.subr.bf16.mxu0 0
      %9444 = vmatpush1.bf16.msra.mxu0 %v9221
      %9445 = vmatprep.subr.bf16.mxu0 0
      %9446 = vmatpush1.bf16.msra.mxu0 %v9222
      %9447 = vmatprep.subr.bf16.mxu0 0
      %9448 = vmatpush1.bf16.msra.mxu0 %v9223
      %9449 = vmatprep.subr.bf16.mxu0 0
      %9450 = vmatpush1.bf16.msra.mxu0 %v9224
      %9451 = vmatprep.subr.bf16.mxu0 0
      %9452 = vmatpush1.bf16.msra.mxu0 %v9225
      %9453 = vmatprep.subr.bf16.mxu0 0
      %9454 = vmatpush1.bf16.msra.mxu0 %v9226
      %9455 = vmatprep.subr.bf16.mxu0 0
      %9456 = vmatpush1.bf16.msra.mxu0 %v9227
      %9457 = vmatprep.subr.bf16.mxu0 0
      %9458 = vmatpush1.bf16.msra.mxu0 %v9228
      %9459 = vmatprep.subr.bf16.mxu0 0
      %9460 = vmatpush1.bf16.msra.mxu0 %v9229
      %9461 = vmatprep.subr.bf16.mxu0 0
      %9462 = vmatpush1.bf16.msra.mxu0 %v9230
      %9463 = vmatprep.mubr.bf16.mxu0 %v8723
      %9464 = vmatmul.mubr.bf16.gmra.mrb[0].mxu0 %v8721
      %v9465 = vpop.f32.mrb[0].mxu0
      %v9466 = vadd.f32 %v9426, %v9465
      %v9467 = vpop.f32.mrb[0].mxu0
      %v9468 = vpop.f32.mrb[0].mxu0
      %v9469 = vpop.f32.mrb[0].mxu0
      %9470 = vdwg.mxu0
      %9471 = vmatprep.subr.bf16.mxu0 0
      %9472 = vmatpush1.bf16.msra.mxu0 %v9231
      %9473 = vmatprep.subr.bf16.mxu0 0
      %9474 = vmatpush1.bf16.msra.mxu0 %v9232
      %9475 = vmatprep.subr.bf16.mxu0 0
      %9476 = vmatpush1.bf16.msra.mxu0 %v9233
      %9477 = vmatprep.subr.bf16.mxu0 0
      %9478 = vmatpush1.bf16.msra.mxu0 %v9234
      %9479 = vmatprep.subr.bf16.mxu0 0
      %9480 = vmatpush1.bf16.msra.mxu0 %v9235
      %9481 = vmatprep.subr.bf16.mxu0 0
      %9482 = vmatpush1.bf16.msra.mxu0 %v9236
      %9483 = vmatprep.subr.bf16.mxu0 0
      %9484 = vmatpush1.bf16.msra.mxu0 %v9237
      %9485 = vmatprep.subr.bf16.mxu0 0
      %9486 = vmatpush1.bf16.msra.mxu0 %v9238
      %9487 = vmatprep.subr.bf16.mxu0 0
      %9488 = vmatpush1.bf16.msra.mxu0 0
      %9489 = vmatprep.subr.bf16.mxu0 0
      %9490 = vmatpush1.bf16.msra.mxu0 0
      %9491 = vmatprep.subr.bf16.mxu0 0
      %9492 = vmatpush1.bf16.msra.mxu0 0
      %9493 = vmatprep.subr.bf16.mxu0 0
      %9494 = vmatpush1.bf16.msra.mxu0 0
      %9495 = vmatprep.subr.bf16.mxu0 0
      %9496 = vmatpush1.bf16.msra.mxu0 0
      %9497 = vmatprep.subr.bf16.mxu0 0
      %9498 = vmatpush1.bf16.msra.mxu0 0
      %9499 = vmatprep.subr.bf16.mxu0 0
      %9500 = vmatpush1.bf16.msra.mxu0 0
      %9501 = vmatprep.subr.bf16.mxu0 0
      %9502 = vmatpush1.bf16.msra.mxu0 0
      %9503 = vmatprep.mubr.bf16.mxu0 0
      %9504 = vmatmul.mubr.bf16.gmra.mrb[0].mxu0 %v8725
      %v9505 = vpop.f32.mrb[0].mxu0
      %v9506 = vadd.f32 %v9466, %v9505
      %v9507 = vpop.f32.mrb[0].mxu0
      %v9508 = vpop.f32.mrb[0].mxu0
      %v9509 = vpop.f32.mrb[0].mxu0
      %9510 = vdwg.mxu0
      %v9511 = vxor.u32 %v9506, 2147483648
      %v9512 = vmul.f32 %v9511, 1.442695
      %v9513 = vpow.pop %v9512
      %v9514 = vadd.f32 %v9513, 1.0
      %v9515 = vrcp.pop %v9514
      %v9516 = vmul.f32 1.0, %v9515
      %v9517 = vmul.f32 %v9506, %v9516
      %v9518 = vld [vmem:[%s13] sm:$0x1]
      %v9520 = vsel %vm8546, %v9518, 0
      %v9523 = vsel %vm2654, %v9517, 0
      %9525 = vmatprep.subr.mxu0 0.0
      %9526 = vmatpush1.msra.mxu0 %v9523
      %9527 = vmatprep.subr.mxu0 0.0
      %9528 = vmatpush1.msra.mxu0 0.0
      %9529 = vmatprep.subr.mxu0 0.0
      %9530 = vmatpush1.msra.mxu0 0.0
      %9531 = vmatprep.subr.mxu0 0.0
      %9532 = vmatpush1.msra.mxu0 0.0
      %9533 = vmatprep.subr.mxu0 0.0
      %9534 = vmatpush1.msra.mxu0 0.0
      %9535 = vmatprep.subr.mxu0 0.0
      %9536 = vmatpush1.msra.mxu0 0.0
      %9537 = vmatprep.subr.mxu0 0.0
      %9538 = vmatpush1.msra.mxu0 0.0
      %9539 = vmatprep.subr.mxu0 0.0
      %9540 = vmatpush1.msra.mxu0 0.0
      %9541 = vmatprep.subr.mxu0 0.0
      %9542 = vmatpush1.msra.mxu0 0.0
      %9543 = vmatprep.subr.mxu0 0.0
      %9544 = vmatpush1.msra.mxu0 0.0
      %9545 = vmatprep.subr.mxu0 0.0
      %9546 = vmatpush1.msra.mxu0 0.0
      %9547 = vmatprep.subr.mxu0 0.0
      %9548 = vmatpush1.msra.mxu0 0.0
      %9549 = vmatprep.subr.mxu0 0.0
      %9550 = vmatpush1.msra.mxu0 0.0
      %9551 = vmatprep.subr.mxu0 0.0
      %9552 = vmatpush1.msra.mxu0 0.0
      %9553 = vmatprep.subr.mxu0 0.0
      %9554 = vmatpush1.msra.mxu0 0.0
      %9555 = vmatprep.subr.mxu0 0.0
      %9556 = vmatpush1.msra.mxu0 0.0
      %9557 = vmatprep.subr.mxu0 0.0
      %9558 = vmatpush1.msra.mxu0 0.0
      %9559 = vmatprep.subr.mxu0 0.0
      %9560 = vmatpush1.msra.mxu0 0.0
      %9561 = vmatprep.subr.mxu0 0.0
      %9562 = vmatpush1.msra.mxu0 0.0
      %9563 = vmatprep.subr.mxu0 0.0
      %9564 = vmatpush1.msra.mxu0 0.0
      %9565 = vmatprep.subr.mxu0 0.0
      %9566 = vmatpush1.msra.mxu0 0.0
      %9567 = vmatprep.subr.mxu0 0.0
      %9568 = vmatpush1.msra.mxu0 0.0
      %9569 = vmatprep.subr.mxu0 0.0
      %9570 = vmatpush1.msra.mxu0 0.0
      %9571 = vmatprep.subr.mxu0 0.0
      %9572 = vmatpush1.msra.mxu0 0.0
      %9573 = vmatprep.subr.mxu0 0.0
      %9574 = vmatpush1.msra.mxu0 0.0
      %9575 = vmatprep.subr.mxu0 0.0
      %9576 = vmatpush1.msra.mxu0 0.0
      %9577 = vmatprep.subr.mxu0 0.0
      %9578 = vmatpush1.msra.mxu0 0.0
      %9579 = vmatprep.subr.mxu0 0.0
      %9580 = vmatpush1.msra.mxu0 0.0
      %9581 = vmatprep.subr.mxu0 0.0
      %9582 = vmatpush1.msra.mxu0 0.0
      %9583 = vmatprep.subr.mxu0 0.0
      %9584 = vmatpush1.msra.mxu0 0.0
      %9585 = vmatprep.subr.mxu0 0.0
      %9586 = vmatpush1.msra.mxu0 0.0
      %9587 = vmatprep.subr.mxu0 0.0
      %9588 = vmatpush1.msra.mxu0 0.0
      %9589 = vmatprep.mubr.f32.mxu0 0.0
      %9590 = vmatmul.mubr.f32.gmra.mrb[0].mxu0 %v9520
      %v9591 = vpop.f32.mrb[0].mxu0
      %v9592 = vadd.f32 0.0, %v9591
      %v9593 = vpop.f32.mrb[0].mxu0
      %9594 = vdwg.mxu0
      %v9596 = vrot.slane %v6565, 7
      %v9599 = vrot.slane %v7647, 6
      %v9602 = vrot.slane %v8620, 5
      %v9605 = vrot.slane %v9592, 4
      %vm9607 = vcmask 1040384
      %v9608 = vsel %vm9607, %v5482, %v9596
      %vm9609 = vcmask 1041408
      %v9610 = vsel %vm9609, %v9608, %v9599
      %vm9611 = vcmask 1042432
      %v9612 = vsel %vm9611, %v9610, %v9602
      %vm9613 = vcmask 1043456
      %v9614 = vsel %vm9613, %v9612, %v9605
      %vm9615 = vcmask 1044480
      %v9616 = vsel %vm9615, %v9614, 0.0
      %9617 = vst [vmem:[%s465] sm:$0xff] %v9616
      %p9618 = scmp.lt.s32.totalorder %s25, 1
      %s9619 = scalar_select %p9618, %s25, 1
      %s9620 = smul.addr %s9619, 8
      %s9621 = scalar_lea.vmem %s14, %s9620
      // Predicated region
      $region77: #{efficientnetv2_multilevel_forward.1} parent=75 // pred_check
        %p9622 = pneg %p342
      $region78: #{efficientnetv2_multilevel_forward.1} parent=75 // pred_check_branch
        %9624 = sbr.rel (%p9622) target = $region80
      $region79: #{efficientnetv2_multilevel_forward.1} parent=75 // pred_region
        _
      $region80: #{efficientnetv2_multilevel_forward.1} parent=75 // pred_fallthru
        _
    $region76: #{efficientnetv2_multilevel_forward.1} parent=5 // pred_fallthru
      _
    %p9625 = scmp.le.s32.totalorder 2, %s20
    // Predicated region
    $region81: #{efficientnetv2_multilevel_forward.1} parent=5 // pred_check
      %p9626 = pneg %p9625
    $region82: #{efficientnetv2_multilevel_forward.1} parent=5 // pred_check_branch
      %9628 = sbr.rel (%p9626) target = $region84
    $region83: #{efficientnetv2_multilevel_forward.1} parent=5 // pred_region
      %s9629 = ssub.s32 %s20, 2
      // Predicated region
      $region85: #{efficientnetv2_multilevel_forward.1} parent=83 // pred_check
        %p9630 = pneg %p348
      $region86: #{efficientnetv2_multilevel_forward.1} parent=83 // pred_check_branch
        %9632 = sbr.rel (%p9630) target = $region88
      $region87: #{efficientnetv2_multilevel_forward.1} parent=83 // pred_region
        %p9633 = scmp.lt.s32.totalorder %s26, 1
        %s9634 = scalar_select %p9633, %s26, 1
        %s9635 = smul.addr %s9634, 8
        %s9636 = scalar_lea.vmem %s14, %s9635
      $region88: #{efficientnetv2_multilevel_forward.1} parent=83 // pred_fallthru
        _
    $region84: #{efficientnetv2_multilevel_forward.1} parent=5 // pred_fallthru
      _
  $region6: #{efficientnetv2_multilevel_forward.1} parent=0 // loop_footer
    %s24 = sadd.s32 1, %s20
  $region7: #{efficientnetv2_multilevel_forward.1} parent=0 // loop_footer_branch
    %19 = sbr.rel target = $region3
  $region8: #{efficientnetv2_multilevel_forward.1} parent=0 // loop_exit
    _

</llo_original>
